<compile_context>
chip_gen: v7x
topology: tpu7x:2x2x1
jax: 0.10.0
libtpu: 0.0.40
codegen_flags: <defaults>
</compile_context>

<pallas_src>
import jax
import jax.numpy as jnp
from jax.experimental import pallas as pl
from jax.experimental.pallas import tpu as pltpu

# ----------------------------- model dimensions -----------------------------
B, T, F = 4, 8, 6        # batch, seq_len, input feature dim (out_dim in torch)
PRE_HID = 16             # DgaPreNet hidden width
S = 8                    # DgaPreNet output width == LTC sensory size
U = 16                   # LTC state_size (number of neurons)
MOTOR = 3                # LTC motor size (matches outputs * std[:, :, 0:3])
ODE_UNFOLDS = 6
EPS = 1e-8

BU = B * U               # packed lane width: lane c = b*U + i  (= 64)
W2 = 2 * BU              # fused [num | den] lane width          (= 128)
TB = T * B               # flattened (time, batch) rows          (= 32)
TW = T * W2              # all-timestep fused lane width         (= 1024)
VW = 16                  # column-slab height (max of F, PRE_HID, S)


# --------------------------------- kernel -----------------------------------
def dga_win_kernel(x_ref, w1_ref, w2_ref, vcol_ref, spread_ref, sens_ref,
                   cnd_ref, rec_ref, pk_ref, dmask_ref, bsel_ref, out_ref):
    f32 = jnp.float32

    xT = x_ref[...]                       # (F, T*B)   column t*B + b
    w1t = w1_ref[...]                     # (PRE_HID, F)
    w2t = w2_ref[...]                     # (S, PRE_HID)
    vcol = vcol_ref[...]                  # (VW, 8)    column vectors
    spread = spread_ref[...]              # (T*B, T*128) 0/1 lane-spread matrix
    smu_t, ssig_t, swf_t = sens_ref[0], sens_ref[1], sens_ref[2]   # (S, T*128)
    cnd = cnd_ref[...]                    # (1, T*128) [gl*vl | cm_t+gl+EPS] per t
    mu128, sig128, wf128 = rec_ref[0], rec_ref[1], rec_ref[2]      # (U, 128)
    pk = pk_ref[...]                      # (2, 128)
    dmask = dmask_ref[...]                # (U, BU)   DiagMask[j, b*U+i] = (i==j)
    bsel = bsel_ref[...]                  # (BU, 128) BlockSel, both halves

    cmt_p = pk[0:1, 0:BU]                 # cm * ODE_UNFOLDS, packed lanes
    scale_p = pk[1:2, 0:BU]               # out_w * std3, packed (0 for i>=MOTOR)
    shift_p = pk[1:2, BU:W2]              # out_b * std3 + mean3, packed

    mean_c = vcol[0:F, 0:1]
    istd_c = vcol[0:F, 1:2]               # 1/std precomputed host-side
    b1_c = vcol[:, 2:3]
    b2_c = vcol[0:S, 3:4]
    inw_c = vcol[0:S, 4:5]
    inb_c = vcol[0:S, 5:6]

    # ---- pre-net for ALL timesteps (transposed layout, two MXU matmuls) ----
    xn = (xT - mean_c) * istd_c                                        # (F, TB)
    h1 = jnp.tanh(jnp.dot(w1t, xn, preferred_element_type=f32) + b1_c)  # (16, TB)
    ft = jnp.tanh(jnp.dot(w2t, h1, preferred_element_type=f32) + b2_c)  # (S, TB)
    inp = ft * inw_c + inb_c                                           # (S, TB)

    # ---- sensory synapses for ALL timesteps, hoisted out of the time loop ----
    # inp_sp[s, t*128 + h*64 + b*U + i] = inp[s, t*B + b]
    inp_sp = jnp.dot(inp, spread, preferred_element_type=f32)         # (S, TW)
    s_act = swf_t * jax.nn.sigmoid((inp_sp - smu_t) * ssig_t)
    # lanes [t*128 : t*128+64] = gl*vl + s_num[t],  [.. +64 : +128] = denb + s_den[t]
    nd_all = jnp.sum(s_act, axis=0, keepdims=True) + cnd               # (1, TW)

    # ---- unrolled LTC recurrence; state stays packed as (1, B*U) ----
    vp = jnp.zeros((1, BU), f32)
    rows = []
    for t in range(T):
        ndc = nd_all[:, t * W2:(t + 1) * W2]                           # (1, 128)
        num_c = ndc[:, 0:BU]
        den_c = ndc[:, BU:W2]
        for _ in range(ODE_UNFOLDS):
            # packed state -> replicated pre-synaptic tile via one MXU matmul
            v_rep = jnp.dot(vp * dmask, bsel, preferred_element_type=f32)  # (U,128)
            # fused [num | den] synapse activation + ONE 128-lane-wide reduce
            act = wf128 * jax.nn.sigmoid((v_rep - mu128) * sig128)
            red = jnp.sum(act, axis=0, keepdims=True)                      # (1,128)
            num = cmt_p * vp + num_c + red[:, 0:BU]
            den = den_c + red[:, BU:W2]
            # approx reciprocal (EUP) + one Newton step; EPS folded into den_c
            r = pl.reciprocal(den, approx=True)
            r = r * (2.0 - den * r)
            vp = num * r
        rows.append(vp)

    # ---- single lane-dense output pass + single store ----
    vps = jnp.concatenate(rows, axis=0)                                # (T, BU)
    out_ref[...] = vps * scale_p + shift_p


# -------------------------- host-side parameter packing ----------------------
def pack_inputs(x_btf, p):
    f32 = jnp.float32

    # input, time-major columns: xT[f, t*B + b] = x[b, t, f]
    xT = jnp.transpose(x_btf.astype(f32), (2, 1, 0)).reshape(F, TB)
    w1t = jnp.transpose(p["w1"]).astype(f32)             # (PRE_HID, F)
    w2t = jnp.transpose(p["w2"]).astype(f32)             # (S, PRE_HID)

    def col(v, rows=VW):
        v = jnp.asarray(v, f32).reshape(-1, 1)
        return jnp.pad(v, ((0, rows - v.shape[0]), (0, 0)))

    vcol = jnp.concatenate([
        col(p["mean"]), col(1.0 / p["std"]), col(p["b1"]), col(p["b2"]),
        col(p["in_w"]), col(p["in_b"]), jnp.zeros((VW, 2), f32)], axis=1)   # (16, 8)

    tile_b = lambda a: jnp.tile(jnp.asarray(a, f32), (1, B))     # (K,U) -> (K,B*U)
    dup2 = lambda a: jnp.concatenate([a, a], axis=1)             # duplicate halves

    # recurrent fused slabs (U, 128): [num-half | den-half]
    rec = jnp.stack([
        dup2(tile_b(p["mu"])),
        dup2(tile_b(p["sig"])),
        jnp.concatenate([tile_b(p["w"] * p["erev"]), tile_b(p["w"])], axis=1),
    ], axis=0)                                                    # (3, U, 128)

    # sensory fused slabs, tiled over all T timesteps: (S, T*128)
    sens = jnp.stack([
        jnp.tile(dup2(tile_b(p["smu"])), (1, T)),
        jnp.tile(dup2(tile_b(p["ssig"])), (1, T)),
        jnp.tile(jnp.concatenate([tile_b(p["sw"] * p["serev"]),
                                  tile_b(p["sw"])], axis=1), (1, T)),
    ], axis=0)                                                    # (3, S, T*128)

    # per-timestep packed constants: [gleak*vleak | cm_t+gleak+EPS] per 128 block
    cmt = p["cm"].astype(f32) * float(ODE_UNFOLDS)                # (1, U)
    glvl = p["gleak"] * p["vleak"]
    denb = cmt + p["gleak"] + EPS                                 # EPS folded in
    const_nd = jnp.tile(
        jnp.concatenate([tile_b(glvl), tile_b(denb)], axis=1), (1, T))  # (1, T*128)

    # lane-spread 0/1 matrix: spread[t*B+b, t'*128 + h*64 + b'*U + i] = (t==t')(b==b')
    q = jnp.tile(jnp.kron(jnp.eye(B, dtype=f32), jnp.ones((1, U), f32)), (1, 2))
    spread = jnp.kron(jnp.eye(T, dtype=f32), q)                   # (T*B, T*128)

    # packed per-lane constants + output affine (out_w/out_b/std3/mean3 folded)
    std3 = p["std"][:, 0:MOTOR]
    mean3 = p["mean"][:, 0:MOTOR]
    pad_u = lambda v: jnp.pad(jnp.asarray(v, f32), ((0, 0), (0, U - v.shape[1])))
    scale_p = jnp.tile(pad_u(p["out_w"] * std3), (1, B))          # (1, BU)
    shift_p = jnp.tile(pad_u(p["out_b"] * std3 + mean3), (1, B))  # (1, BU)
    cmt_p = tile_b(cmt)                                           # (1, BU)
    pk = jnp.concatenate([
        jnp.concatenate([cmt_p, cmt_p], axis=1),
        jnp.concatenate([scale_p, shift_p], axis=1)], axis=0)     # (2, 128)

    # relayout constants for the packed-state -> replicated-tile matmul
    diagmask = jnp.tile(jnp.eye(U, dtype=f32), (1, B))            # (U, BU)
    blocksel = jnp.tile(jnp.kron(jnp.eye(B, dtype=f32),
                                 jnp.ones((U, U), f32)), (1, 2))  # (BU, 128)

    return xT, w1t, w2t, vcol, spread, sens, const_nd, rec, pk, diagmask, blocksel


# -------------------------------- wrapper ------------------------------------
def dga_win_sequence(x_btf, params):
    """x_btf: (B, T, F) float32 -> (B, T, MOTOR) float32."""
    ins = pack_inputs(x_btf, params)

    out_t64 = pl.pallas_call(
        dga_win_kernel,
        out_shape=jax.ShapeDtypeStruct((T, BU), jnp.float32),
        grid_spec=pltpu.PrefetchScalarGridSpec(
            num_scalar_prefetch=0,
            grid=(1,),                            # single invocation
            in_specs=[
                pl.BlockSpec((F, TB), lambda i: (0, 0)),
                pl.BlockSpec((PRE_HID, F), lambda i: (0, 0)),
                pl.BlockSpec((S, PRE_HID), lambda i: (0, 0)),
                pl.BlockSpec((VW, 8), lambda i: (0, 0)),
                pl.BlockSpec((TB, TW), lambda i: (0, 0)),
                pl.BlockSpec((3, S, TW), lambda i: (0, 0, 0)),
                pl.BlockSpec((1, TW), lambda i: (0, 0)),
                pl.BlockSpec((3, U, W2), lambda i: (0, 0, 0)),
                pl.BlockSpec((2, W2), lambda i: (0, 0)),
                pl.BlockSpec((U, BU), lambda i: (0, 0)),
                pl.BlockSpec((BU, W2), lambda i: (0, 0)),
            ],
            out_specs=pl.BlockSpec((T, BU), lambda i: (0, 0)),
        ),
        compiler_params=pltpu.CompilerParams(
            dimension_semantics=("arbitrary",),   # time recursion is sequential
        ),
    )(*ins)

    # lane-dense kernel output -> (B, T, MOTOR)
    out = out_t64.reshape(T, B, U)[:, :, 0:MOTOR]
    return jnp.transpose(out, (1, 0, 2))


# -------------------------- pure-JAX reference --------------------------------
def dga_win_reference(x, p):
    xn = (x - p["mean"][None]) / p["std"][None]                    # (B, T, F)
    h1 = jnp.tanh(xn @ p["w1"] + p["b1"][None])
    feats = jnp.tanh(h1 @ p["w2"] + p["b2"][None])                 # (B, T, S)

    cm_t = p["cm"] * float(ODE_UNFOLDS)

    def cell(v, inp):
        inputs = inp * p["in_w"] + p["in_b"]
        s_act = p["sw"][None] * jax.nn.sigmoid(
            (inputs[:, :, None] - p["smu"][None]) * p["ssig"][None])
        w_num_s = jnp.sum(s_act * p["serev"][None], axis=1)
        w_den_s = jnp.sum(s_act, axis=1)
        for _ in range(ODE_UNFOLDS):
            w_act = p["w"][None] * jax.nn.sigmoid(
                (v[:, :, None] - p["mu"][None]) * p["sig"][None])
            w_num = jnp.sum(w_act * p["erev"][None], axis=1) + w_num_s
            w_den = jnp.sum(w_act, axis=1) + w_den_s
            num = cm_t * v + p["gleak"] * p["vleak"] + w_num
            den = cm_t + p["gleak"] + w_den
            v = num / (den + EPS)
        out = v[:, 0:MOTOR] * p["out_w"] + p["out_b"]
        return v, out

    v = jnp.zeros((B, U), jnp.float32)
    outs = []
    for t in range(T):
        v, o = cell(v, feats[:, t])
        outs.append(o)
    outs = jnp.stack(outs, axis=1)                                  # (B, T, 3)
    return outs * p["std"][None][:, :, 0:MOTOR] + p["mean"][None][:, :, 0:MOTOR]


# ---------------------------------- main --------------------------------------
def make_params(key):
    ks = jax.random.split(key, 20)
    u = jax.random.uniform
    sign = lambda k, shape: jnp.where(u(k, shape) < 0.5, -1.0, 1.0).astype(jnp.float32)
    p = {
        "mean": u(ks[0], (1, F), minval=-0.1, maxval=0.1),
        "std": u(ks[1], (1, F), minval=0.5, maxval=1.5),
        "w1": 0.3 * jax.random.normal(ks[2], (F, PRE_HID)),
        "b1": 0.05 * jax.random.normal(ks[3], (1, PRE_HID)),
        "w2": 0.3 * jax.random.normal(ks[4], (PRE_HID, S)),
        "b2": 0.05 * jax.random.normal(ks[5], (1, S)),
        "in_w": u(ks[6], (1, S), minval=0.8, maxval=1.2),
        "in_b": 0.05 * jax.random.normal(ks[7], (1, S)),
        "sw": u(ks[8], (S, U), minval=0.001, maxval=1.0),
        "smu": u(ks[9], (S, U), minval=0.3, maxval=0.8),
        "ssig": u(ks[10], (S, U), minval=3.0, maxval=8.0),
        "serev": sign(ks[11], (S, U)),
        "w": u(ks[12], (U, U), minval=0.001, maxval=1.0),
        "mu": u(ks[13], (U, U), minval=0.3, maxval=0.8),
        "sig": u(ks[14], (U, U), minval=3.0, maxval=8.0),
        "erev": sign(ks[15], (U, U)),
        "gleak": u(ks[16], (1, U), minval=0.001, maxval=1.0),
        "vleak": u(ks[17], (1, U), minval=-0.2, maxval=0.2),
        "cm": u(ks[18], (1, U), minval=0.4, maxval=0.6),
        "out_w": u(ks[19], (1, MOTOR), minval=0.8, maxval=1.2),
        "out_b": jnp.zeros((1, MOTOR), jnp.float32),
    }
    return {k: v.astype(jnp.float32) for k, v in p.items()}


if __name__ == "__main__":
    key = jax.random.PRNGKey(0)
    kx, kp = jax.random.split(key)
    x = jax.random.normal(kx, (B, T, F), dtype=jnp.float32)
    params = make_params(kp)

    out = dga_win_sequence(x, params)
    out = jax.block_until_ready(out)

    ref = jax.block_until_ready(dga_win_reference(x, params))
    assert out.shape == (B, T, MOTOR), out.shape
    max_err = float(jnp.max(jnp.abs(out - ref)))
    assert max_err < 1e-3, f"mismatch vs reference: max abs err = {max_err}"

    print("KERNEL_OK")
</pallas_src>

<mosaic_0001>
module attributes {stable_mosaic.version = 11 : i64} {
  func.func @dga_win_kernel(%arg0: i32, %arg1: memref<6x32xf32, #tpu.memory_space<vmem>>, %arg2: memref<16x6xf32, #tpu.memory_space<vmem>>, %arg3: memref<8x16xf32, #tpu.memory_space<vmem>>, %arg4: memref<16x8xf32, #tpu.memory_space<vmem>>, %arg5: memref<32x1024xf32, #tpu.memory_space<vmem>>, %arg6: memref<3x8x1024xf32, #tpu.memory_space<vmem>>, %arg7: memref<1x1024xf32, #tpu.memory_space<vmem>>, %arg8: memref<3x16x128xf32, #tpu.memory_space<vmem>>, %arg9: memref<2x128xf32, #tpu.memory_space<vmem>>, %arg10: memref<16x64xf32, #tpu.memory_space<vmem>>, %arg11: memref<64x128xf32, #tpu.memory_space<vmem>>, %arg12: memref<8x64xf32, #tpu.memory_space<vmem>>) attributes {dimension_semantics = [#tpu.dimension_semantics<arbitrary>], iteration_bounds = array<i64: 1>, scalar_prefetch = 0 : i64, scratch_operands = 0 : i64, tpu.core_type = #tpu.core_type<tc>, window_params = [{pipeline_mode = #tpu.pipeline_mode<synchronous>, transform_indices = @transform_0, window_bounds = array<i64: 6, 32>}, {pipeline_mode = #tpu.pipeline_mode<synchronous>, transform_indices = @transform_1, window_bounds = array<i64: 16, 6>}, {pipeline_mode = #tpu.pipeline_mode<synchronous>, transform_indices = @transform_2, window_bounds = array<i64: 8, 16>}, {pipeline_mode = #tpu.pipeline_mode<synchronous>, transform_indices = @transform_3, window_bounds = array<i64: 16, 8>}, {pipeline_mode = #tpu.pipeline_mode<synchronous>, transform_indices = @transform_4, window_bounds = array<i64: 32, 1024>}, {pipeline_mode = #tpu.pipeline_mode<synchronous>, transform_indices = @transform_5, window_bounds = array<i64: 3, 8, 1024>}, {pipeline_mode = #tpu.pipeline_mode<synchronous>, transform_indices = @transform_6, window_bounds = array<i64: 1, 1024>}, {pipeline_mode = #tpu.pipeline_mode<synchronous>, transform_indices = @transform_7, window_bounds = array<i64: 3, 16, 128>}, {pipeline_mode = #tpu.pipeline_mode<synchronous>, transform_indices = @transform_8, window_bounds = array<i64: 2, 128>}, {pipeline_mode = #tpu.pipeline_mode<synchronous>, transform_indices = @transform_9, window_bounds = array<i64: 16, 64>}, {pipeline_mode = #tpu.pipeline_mode<synchronous>, transform_indices = @transform_10, window_bounds = array<i64: 64, 128>}, {pipeline_mode = #tpu.pipeline_mode<synchronous>, transform_indices = @transform_11, window_bounds = array<i64: 8, 64>}]} {
    %c0 = arith.constant 0 : index
    %c0_0 = arith.constant 0 : index
    %0 = vector.load %arg1[%c0, %c0_0] : memref<6x32xf32, #tpu.memory_space<vmem>>, vector<6x32xf32>
    %c0_1 = arith.constant 0 : index
    %c0_2 = arith.constant 0 : index
    %1 = vector.load %arg2[%c0_1, %c0_2] : memref<16x6xf32, #tpu.memory_space<vmem>>, vector<16x6xf32>
    %c0_3 = arith.constant 0 : index
    %c0_4 = arith.constant 0 : index
    %2 = vector.load %arg3[%c0_3, %c0_4] : memref<8x16xf32, #tpu.memory_space<vmem>>, vector<8x16xf32>
    %c0_5 = arith.constant 0 : index
    %c0_6 = arith.constant 0 : index
    %3 = vector.load %arg4[%c0_5, %c0_6] : memref<16x8xf32, #tpu.memory_space<vmem>>, vector<16x8xf32>
    %c0_7 = arith.constant 0 : index
    %c0_8 = arith.constant 0 : index
    %4 = vector.load %arg5[%c0_7, %c0_8] : memref<32x1024xf32, #tpu.memory_space<vmem>>, vector<32x1024xf32>
    %c0_9 = arith.constant 0 : index
    %c0_10 = arith.constant 0 : index
    %c0_11 = arith.constant 0 : index
    %5 = vector.load %arg6[%c0_9, %c0_10, %c0_11] : memref<3x8x1024xf32, #tpu.memory_space<vmem>>, vector<1x8x1024xf32>
    %6 = vector.shape_cast %5 : vector<1x8x1024xf32> to vector<8x1024xf32>
    %c1 = arith.constant 1 : index
    %c0_12 = arith.constant 0 : index
    %c0_13 = arith.constant 0 : index
    %7 = vector.load %arg6[%c1, %c0_12, %c0_13] : memref<3x8x1024xf32, #tpu.memory_space<vmem>>, vector<1x8x1024xf32>
    %8 = vector.shape_cast %7 : vector<1x8x1024xf32> to vector<8x1024xf32>
    %c2 = arith.constant 2 : index
    %c0_14 = arith.constant 0 : index
    %c0_15 = arith.constant 0 : index
    %9 = vector.load %arg6[%c2, %c0_14, %c0_15] : memref<3x8x1024xf32, #tpu.memory_space<vmem>>, vector<1x8x1024xf32>
    %10 = vector.shape_cast %9 : vector<1x8x1024xf32> to vector<8x1024xf32>
    %c0_16 = arith.constant 0 : index
    %c0_17 = arith.constant 0 : index
    %11 = vector.load %arg7[%c0_16, %c0_17] : memref<1x1024xf32, #tpu.memory_space<vmem>>, vector<1x1024xf32>
    %c0_18 = arith.constant 0 : index
    %c0_19 = arith.constant 0 : index
    %c0_20 = arith.constant 0 : index
    %12 = vector.load %arg8[%c0_18, %c0_19, %c0_20] : memref<3x16x128xf32, #tpu.memory_space<vmem>>, vector<1x16x128xf32>
    %13 = vector.shape_cast %12 : vector<1x16x128xf32> to vector<16x128xf32>
    %c1_21 = arith.constant 1 : index
    %c0_22 = arith.constant 0 : index
    %c0_23 = arith.constant 0 : index
    %14 = vector.load %arg8[%c1_21, %c0_22, %c0_23] : memref<3x16x128xf32, #tpu.memory_space<vmem>>, vector<1x16x128xf32>
    %15 = vector.shape_cast %14 : vector<1x16x128xf32> to vector<16x128xf32>
    %c2_24 = arith.constant 2 : index
    %c0_25 = arith.constant 0 : index
    %c0_26 = arith.constant 0 : index
    %16 = vector.load %arg8[%c2_24, %c0_25, %c0_26] : memref<3x16x128xf32, #tpu.memory_space<vmem>>, vector<1x16x128xf32>
    %17 = vector.shape_cast %16 : vector<1x16x128xf32> to vector<16x128xf32>
    %c0_27 = arith.constant 0 : index
    %c0_28 = arith.constant 0 : index
    %18 = vector.load %arg9[%c0_27, %c0_28] : memref<2x128xf32, #tpu.memory_space<vmem>>, vector<2x128xf32>
    %c0_29 = arith.constant 0 : index
    %c0_30 = arith.constant 0 : index
    %19 = vector.load %arg10[%c0_29, %c0_30] : memref<16x64xf32, #tpu.memory_space<vmem>>, vector<16x64xf32>
    %c0_31 = arith.constant 0 : index
    %c0_32 = arith.constant 0 : index
    %20 = vector.load %arg11[%c0_31, %c0_32] : memref<64x128xf32, #tpu.memory_space<vmem>>, vector<64x128xf32>
    %21 = vector.extract_strided_slice %18 {offsets = [0, 0], sizes = [1, 64], strides = [1, 1]} : vector<2x128xf32> to vector<1x64xf32>
    %22 = vector.extract_strided_slice %18 {offsets = [1, 0], sizes = [1, 64], strides = [1, 1]} : vector<2x128xf32> to vector<1x64xf32>
    %23 = vector.extract_strided_slice %18 {offsets = [1, 64], sizes = [1, 64], strides = [1, 1]} : vector<2x128xf32> to vector<1x64xf32>
    %24 = vector.extract_strided_slice %3 {offsets = [0, 0], sizes = [6, 1], strides = [1, 1]} : vector<16x8xf32> to vector<6x1xf32>
    %25 = vector.extract_strided_slice %3 {offsets = [0, 1], sizes = [6, 1], strides = [1, 1]} : vector<16x8xf32> to vector<6x1xf32>
    %26 = vector.extract_strided_slice %3 {offsets = [0, 2], sizes = [16, 1], strides = [1, 1]} : vector<16x8xf32> to vector<16x1xf32>
    %27 = vector.extract_strided_slice %3 {offsets = [0, 3], sizes = [8, 1], strides = [1, 1]} : vector<16x8xf32> to vector<8x1xf32>
    %28 = vector.extract_strided_slice %3 {offsets = [0, 4], sizes = [8, 1], strides = [1, 1]} : vector<16x8xf32> to vector<8x1xf32>
    %29 = vector.extract_strided_slice %3 {offsets = [0, 5], sizes = [8, 1], strides = [1, 1]} : vector<16x8xf32> to vector<8x1xf32>
    %30 = vector.broadcast %24 : vector<6x1xf32> to vector<6x32xf32>
    %31 = arith.subf %0, %30 : vector<6x32xf32>
    %32 = vector.broadcast %25 : vector<6x1xf32> to vector<6x32xf32>
    %33 = arith.mulf %31, %32 : vector<6x32xf32>
    %cst = arith.constant dense<0.000000e+00> : vector<16x32xf32>
    %34 = tpu.matmul %1, %33, %cst {dimension_numbers = #tpu.dot_dimension_numbers<[1], [0], [0], [1], [0, 0, 1, 1], [], []>} : vector<16x6xf32>, vector<6x32xf32>, vector<16x32xf32> -> vector<16x32xf32>
    %35 = vector.broadcast %26 : vector<16x1xf32> to vector<16x32xf32>
    %36 = arith.addf %34, %35 : vector<16x32xf32>
    %37 = math.tanh %36 : vector<16x32xf32>
    %cst_33 = arith.constant dense<0.000000e+00> : vector<8x32xf32>
    %38 = tpu.matmul %2, %37, %cst_33 {dimension_numbers = #tpu.dot_dimension_numbers<[1], [0], [0], [1], [0, 0, 1, 1], [], []>} : vector<8x16xf32>, vector<16x32xf32>, vector<8x32xf32> -> vector<8x32xf32>
    %39 = vector.broadcast %27 : vector<8x1xf32> to vector<8x32xf32>
    %40 = arith.addf %38, %39 : vector<8x32xf32>
    %41 = math.tanh %40 : vector<8x32xf32>
    %42 = vector.broadcast %28 : vector<8x1xf32> to vector<8x32xf32>
    %43 = arith.mulf %41, %42 : vector<8x32xf32>
    %44 = vector.broadcast %29 : vector<8x1xf32> to vector<8x32xf32>
    %45 = arith.addf %43, %44 : vector<8x32xf32>
    %cst_34 = arith.constant dense<0.000000e+00> : vector<8x1024xf32>
    %46 = tpu.matmul %45, %4, %cst_34 {dimension_numbers = #tpu.dot_dimension_numbers<[1], [0], [0], [1], [0, 0, 1, 1], [], []>} : vector<8x32xf32>, vector<32x1024xf32>, vector<8x1024xf32> -> vector<8x1024xf32>
    %47 = arith.subf %46, %6 : vector<8x1024xf32>
    %48 = arith.mulf %47, %8 : vector<8x1024xf32>
    %49 = arith.negf %48 : vector<8x1024xf32>
    %50 = math.exp %49 : vector<8x1024xf32>
    %cst_35 = arith.constant 1.000000e+00 : f32
    %51 = vector.broadcast %cst_35 : f32 to vector<8x1024xf32>
    %52 = arith.addf %51, %50 : vector<8x1024xf32>
    %53 = arith.divf %51, %52 : vector<8x1024xf32>
    %54 = arith.mulf %10, %53 : vector<8x1024xf32>
    %cst_36 = arith.constant dense<0.000000e+00> : vector<1024xf32>
    %55 = vector.multi_reduction <add>, %54, %cst_36 [0] : vector<8x1024xf32> to vector<1024xf32>
    %56 = vector.shape_cast %55 : vector<1024xf32> to vector<1x1024xf32>
    %57 = arith.addf %56, %11 : vector<1x1024xf32>
    %cst_37 = arith.constant 0.000000e+00 : f32
    %58 = vector.broadcast %cst_37 : f32 to vector<1x64xf32>
    %59 = vector.extract_strided_slice %57 {offsets = [0, 0], sizes = [1, 128], strides = [1, 1]} : vector<1x1024xf32> to vector<1x128xf32>
    %60 = vector.extract_strided_slice %59 {offsets = [0, 0], sizes = [1, 64], strides = [1, 1]} : vector<1x128xf32> to vector<1x64xf32>
    %61 = vector.extract_strided_slice %59 {offsets = [0, 64], sizes = [1, 64], strides = [1, 1]} : vector<1x128xf32> to vector<1x64xf32>
    %62 = vector.broadcast %58 : vector<1x64xf32> to vector<16x64xf32>
    %63 = arith.mulf %62, %19 : vector<16x64xf32>
    %cst_38 = arith.constant dense<0.000000e+00> : vector<16x128xf32>
    %64 = tpu.matmul %63, %20, %cst_38 {dimension_numbers = #tpu.dot_dimension_numbers<[1], [0], [0], [1], [0, 0, 1, 1], [], []>} : vector<16x64xf32>, vector<64x128xf32>, vector<16x128xf32> -> vector<16x128xf32>
    %65 = arith.subf %64, %13 : vector<16x128xf32>
    %66 = arith.mulf %65, %15 : vector<16x128xf32>
    %67 = arith.negf %66 : vector<16x128xf32>
    %68 = math.exp %67 : vector<16x128xf32>
    %cst_39 = arith.constant 1.000000e+00 : f32
    %69 = vector.broadcast %cst_39 : f32 to vector<16x128xf32>
    %70 = arith.addf %69, %68 : vector<16x128xf32>
    %71 = arith.divf %69, %70 : vector<16x128xf32>
    %72 = arith.mulf %17, %71 : vector<16x128xf32>
    %cst_40 = arith.constant dense<0.000000e+00> : vector<128xf32>
    %73 = vector.multi_reduction <add>, %72, %cst_40 [0] : vector<16x128xf32> to vector<128xf32>
    %74 = vector.shape_cast %73 : vector<128xf32> to vector<1x128xf32>
    %75 = arith.mulf %21, %58 : vector<1x64xf32>
    %76 = arith.addf %75, %60 : vector<1x64xf32>
    %77 = vector.extract_strided_slice %74 {offsets = [0, 0], sizes = [1, 64], strides = [1, 1]} : vector<1x128xf32> to vector<1x64xf32>
    %78 = arith.addf %76, %77 : vector<1x64xf32>
    %79 = vector.extract_strided_slice %74 {offsets = [0, 64], sizes = [1, 64], strides = [1, 1]} : vector<1x128xf32> to vector<1x64xf32>
    %80 = arith.addf %61, %79 : vector<1x64xf32>
    %81 = tpu.reciprocal %80 {approx = true} : vector<1x64xf32> -> vector<1x64xf32>
    %82 = arith.mulf %80, %81 : vector<1x64xf32>
    %cst_41 = arith.constant 2.000000e+00 : f32
    %83 = vector.broadcast %cst_41 : f32 to vector<1x64xf32>
    %84 = arith.subf %83, %82 : vector<1x64xf32>
    %85 = arith.mulf %81, %84 : vector<1x64xf32>
    %86 = arith.mulf %78, %85 : vector<1x64xf32>
    %87 = vector.broadcast %86 : vector<1x64xf32> to vector<16x64xf32>
    %88 = arith.mulf %87, %19 : vector<16x64xf32>
    %cst_42 = arith.constant dense<0.000000e+00> : vector<16x128xf32>
    %89 = tpu.matmul %88, %20, %cst_42 {dimension_numbers = #tpu.dot_dimension_numbers<[1], [0], [0], [1], [0, 0, 1, 1], [], []>} : vector<16x64xf32>, vector<64x128xf32>, vector<16x128xf32> -> vector<16x128xf32>
    %90 = arith.subf %89, %13 : vector<16x128xf32>
    %91 = arith.mulf %90, %15 : vector<16x128xf32>
    %92 = arith.negf %91 : vector<16x128xf32>
    %93 = math.exp %92 : vector<16x128xf32>
    %cst_43 = arith.constant 1.000000e+00 : f32
    %94 = vector.broadcast %cst_43 : f32 to vector<16x128xf32>
    %95 = arith.addf %94, %93 : vector<16x128xf32>
    %96 = arith.divf %94, %95 : vector<16x128xf32>
    %97 = arith.mulf %17, %96 : vector<16x128xf32>
    %cst_44 = arith.constant dense<0.000000e+00> : vector<128xf32>
    %98 = vector.multi_reduction <add>, %97, %cst_44 [0] : vector<16x128xf32> to vector<128xf32>
    %99 = vector.shape_cast %98 : vector<128xf32> to vector<1x128xf32>
    %100 = arith.mulf %21, %86 : vector<1x64xf32>
    %101 = arith.addf %100, %60 : vector<1x64xf32>
    %102 = vector.extract_strided_slice %99 {offsets = [0, 0], sizes = [1, 64], strides = [1, 1]} : vector<1x128xf32> to vector<1x64xf32>
    %103 = arith.addf %101, %102 : vector<1x64xf32>
    %104 = vector.extract_strided_slice %99 {offsets = [0, 64], sizes = [1, 64], strides = [1, 1]} : vector<1x128xf32> to vector<1x64xf32>
    %105 = arith.addf %61, %104 : vector<1x64xf32>
    %106 = tpu.reciprocal %105 {approx = true} : vector<1x64xf32> -> vector<1x64xf32>
    %107 = arith.mulf %105, %106 : vector<1x64xf32>
    %cst_45 = arith.constant 2.000000e+00 : f32
    %108 = vector.broadcast %cst_45 : f32 to vector<1x64xf32>
    %109 = arith.subf %108, %107 : vector<1x64xf32>
    %110 = arith.mulf %106, %109 : vector<1x64xf32>
    %111 = arith.mulf %103, %110 : vector<1x64xf32>
    %112 = vector.broadcast %111 : vector<1x64xf32> to vector<16x64xf32>
    %113 = arith.mulf %112, %19 : vector<16x64xf32>
    %cst_46 = arith.constant dense<0.000000e+00> : vector<16x128xf32>
    %114 = tpu.matmul %113, %20, %cst_46 {dimension_numbers = #tpu.dot_dimension_numbers<[1], [0], [0], [1], [0, 0, 1, 1], [], []>} : vector<16x64xf32>, vector<64x128xf32>, vector<16x128xf32> -> vector<16x128xf32>
    %115 = arith.subf %114, %13 : vector<16x128xf32>
    %116 = arith.mulf %115, %15 : vector<16x128xf32>
    %117 = arith.negf %116 : vector<16x128xf32>
    %118 = math.exp %117 : vector<16x128xf32>
    %cst_47 = arith.constant 1.000000e+00 : f32
    %119 = vector.broadcast %cst_47 : f32 to vector<16x128xf32>
    %120 = arith.addf %119, %118 : vector<16x128xf32>
    %121 = arith.divf %119, %120 : vector<16x128xf32>
    %122 = arith.mulf %17, %121 : vector<16x128xf32>
    %cst_48 = arith.constant dense<0.000000e+00> : vector<128xf32>
    %123 = vector.multi_reduction <add>, %122, %cst_48 [0] : vector<16x128xf32> to vector<128xf32>
    %124 = vector.shape_cast %123 : vector<128xf32> to vector<1x128xf32>
    %125 = arith.mulf %21, %111 : vector<1x64xf32>
    %126 = arith.addf %125, %60 : vector<1x64xf32>
    %127 = vector.extract_strided_slice %124 {offsets = [0, 0], sizes = [1, 64], strides = [1, 1]} : vector<1x128xf32> to vector<1x64xf32>
    %128 = arith.addf %126, %127 : vector<1x64xf32>
    %129 = vector.extract_strided_slice %124 {offsets = [0, 64], sizes = [1, 64], strides = [1, 1]} : vector<1x128xf32> to vector<1x64xf32>
    %130 = arith.addf %61, %129 : vector<1x64xf32>
    %131 = tpu.reciprocal %130 {approx = true} : vector<1x64xf32> -> vector<1x64xf32>
    %132 = arith.mulf %130, %131 : vector<1x64xf32>
    %cst_49 = arith.constant 2.000000e+00 : f32
    %133 = vector.broadcast %cst_49 : f32 to vector<1x64xf32>
    %134 = arith.subf %133, %132 : vector<1x64xf32>
    %135 = arith.mulf %131, %134 : vector<1x64xf32>
    %136 = arith.mulf %128, %135 : vector<1x64xf32>
    %137 = vector.broadcast %136 : vector<1x64xf32> to vector<16x64xf32>
    %138 = arith.mulf %137, %19 : vector<16x64xf32>
    %cst_50 = arith.constant dense<0.000000e+00> : vector<16x128xf32>
    %139 = tpu.matmul %138, %20, %cst_50 {dimension_numbers = #tpu.dot_dimension_numbers<[1], [0], [0], [1], [0, 0, 1, 1], [], []>} : vector<16x64xf32>, vector<64x128xf32>, vector<16x128xf32> -> vector<16x128xf32>
    %140 = arith.subf %139, %13 : vector<16x128xf32>
    %141 = arith.mulf %140, %15 : vector<16x128xf32>
    %142 = arith.negf %141 : vector<16x128xf32>
    %143 = math.exp %142 : vector<16x128xf32>
    %cst_51 = arith.constant 1.000000e+00 : f32
    %144 = vector.broadcast %cst_51 : f32 to vector<16x128xf32>
    %145 = arith.addf %144, %143 : vector<16x128xf32>
    %146 = arith.divf %144, %145 : vector<16x128xf32>
    %147 = arith.mulf %17, %146 : vector<16x128xf32>
    %cst_52 = arith.constant dense<0.000000e+00> : vector<128xf32>
    %148 = vector.multi_reduction <add>, %147, %cst_52 [0] : vector<16x128xf32> to vector<128xf32>
    %149 = vector.shape_cast %148 : vector<128xf32> to vector<1x128xf32>
    %150 = arith.mulf %21, %136 : vector<1x64xf32>
    %151 = arith.addf %150, %60 : vector<1x64xf32>
    %152 = vector.extract_strided_slice %149 {offsets = [0, 0], sizes = [1, 64], strides = [1, 1]} : vector<1x128xf32> to vector<1x64xf32>
    %153 = arith.addf %151, %152 : vector<1x64xf32>
    %154 = vector.extract_strided_slice %149 {offsets = [0, 64], sizes = [1, 64], strides = [1, 1]} : vector<1x128xf32> to vector<1x64xf32>
    %155 = arith.addf %61, %154 : vector<1x64xf32>
    %156 = tpu.reciprocal %155 {approx = true} : vector<1x64xf32> -> vector<1x64xf32>
    %157 = arith.mulf %155, %156 : vector<1x64xf32>
    %cst_53 = arith.constant 2.000000e+00 : f32
    %158 = vector.broadcast %cst_53 : f32 to vector<1x64xf32>
    %159 = arith.subf %158, %157 : vector<1x64xf32>
    %160 = arith.mulf %156, %159 : vector<1x64xf32>
    %161 = arith.mulf %153, %160 : vector<1x64xf32>
    %162 = vector.broadcast %161 : vector<1x64xf32> to vector<16x64xf32>
    %163 = arith.mulf %162, %19 : vector<16x64xf32>
    %cst_54 = arith.constant dense<0.000000e+00> : vector<16x128xf32>
    %164 = tpu.matmul %163, %20, %cst_54 {dimension_numbers = #tpu.dot_dimension_numbers<[1], [0], [0], [1], [0, 0, 1, 1], [], []>} : vector<16x64xf32>, vector<64x128xf32>, vector<16x128xf32> -> vector<16x128xf32>
    %165 = arith.subf %164, %13 : vector<16x128xf32>
    %166 = arith.mulf %165, %15 : vector<16x128xf32>
    %167 = arith.negf %166 : vector<16x128xf32>
    %168 = math.exp %167 : vector<16x128xf32>
    %cst_55 = arith.constant 1.000000e+00 : f32
    %169 = vector.broadcast %cst_55 : f32 to vector<16x128xf32>
    %170 = arith.addf %169, %168 : vector<16x128xf32>
    %171 = arith.divf %169, %170 : vector<16x128xf32>
    %172 = arith.mulf %17, %171 : vector<16x128xf32>
    %cst_56 = arith.constant dense<0.000000e+00> : vector<128xf32>
    %173 = vector.multi_reduction <add>, %172, %cst_56 [0] : vector<16x128xf32> to vector<128xf32>
    %174 = vector.shape_cast %173 : vector<128xf32> to vector<1x128xf32>
    %175 = arith.mulf %21, %161 : vector<1x64xf32>
    %176 = arith.addf %175, %60 : vector<1x64xf32>
    %177 = vector.extract_strided_slice %174 {offsets = [0, 0], sizes = [1, 64], strides = [1, 1]} : vector<1x128xf32> to vector<1x64xf32>
    %178 = arith.addf %176, %177 : vector<1x64xf32>
    %179 = vector.extract_strided_slice %174 {offsets = [0, 64], sizes = [1, 64], strides = [1, 1]} : vector<1x128xf32> to vector<1x64xf32>
    %180 = arith.addf %61, %179 : vector<1x64xf32>
    %181 = tpu.reciprocal %180 {approx = true} : vector<1x64xf32> -> vector<1x64xf32>
    %182 = arith.mulf %180, %181 : vector<1x64xf32>
    %cst_57 = arith.constant 2.000000e+00 : f32
    %183 = vector.broadcast %cst_57 : f32 to vector<1x64xf32>
    %184 = arith.subf %183, %182 : vector<1x64xf32>
    %185 = arith.mulf %181, %184 : vector<1x64xf32>
    %186 = arith.mulf %178, %185 : vector<1x64xf32>
    %187 = vector.broadcast %186 : vector<1x64xf32> to vector<16x64xf32>
    %188 = arith.mulf %187, %19 : vector<16x64xf32>
    %cst_58 = arith.constant dense<0.000000e+00> : vector<16x128xf32>
    %189 = tpu.matmul %188, %20, %cst_58 {dimension_numbers = #tpu.dot_dimension_numbers<[1], [0], [0], [1], [0, 0, 1, 1], [], []>} : vector<16x64xf32>, vector<64x128xf32>, vector<16x128xf32> -> vector<16x128xf32>
    %190 = arith.subf %189, %13 : vector<16x128xf32>
    %191 = arith.mulf %190, %15 : vector<16x128xf32>
    %192 = arith.negf %191 : vector<16x128xf32>
    %193 = math.exp %192 : vector<16x128xf32>
    %cst_59 = arith.constant 1.000000e+00 : f32
    %194 = vector.broadcast %cst_59 : f32 to vector<16x128xf32>
    %195 = arith.addf %194, %193 : vector<16x128xf32>
    %196 = arith.divf %194, %195 : vector<16x128xf32>
    %197 = arith.mulf %17, %196 : vector<16x128xf32>
    %cst_60 = arith.constant dense<0.000000e+00> : vector<128xf32>
    %198 = vector.multi_reduction <add>, %197, %cst_60 [0] : vector<16x128xf32> to vector<128xf32>
    %199 = vector.shape_cast %198 : vector<128xf32> to vector<1x128xf32>
    %200 = arith.mulf %21, %186 : vector<1x64xf32>
    %201 = arith.addf %200, %60 : vector<1x64xf32>
    %202 = vector.extract_strided_slice %199 {offsets = [0, 0], sizes = [1, 64], strides = [1, 1]} : vector<1x128xf32> to vector<1x64xf32>
    %203 = arith.addf %201, %202 : vector<1x64xf32>
    %204 = vector.extract_strided_slice %199 {offsets = [0, 64], sizes = [1, 64], strides = [1, 1]} : vector<1x128xf32> to vector<1x64xf32>
    %205 = arith.addf %61, %204 : vector<1x64xf32>
    %206 = tpu.reciprocal %205 {approx = true} : vector<1x64xf32> -> vector<1x64xf32>
    %207 = arith.mulf %205, %206 : vector<1x64xf32>
    %cst_61 = arith.constant 2.000000e+00 : f32
    %208 = vector.broadcast %cst_61 : f32 to vector<1x64xf32>
    %209 = arith.subf %208, %207 : vector<1x64xf32>
    %210 = arith.mulf %206, %209 : vector<1x64xf32>
    %211 = arith.mulf %203, %210 : vector<1x64xf32>
    %212 = vector.extract_strided_slice %57 {offsets = [0, 128], sizes = [1, 128], strides = [1, 1]} : vector<1x1024xf32> to vector<1x128xf32>
    %213 = vector.extract_strided_slice %212 {offsets = [0, 0], sizes = [1, 64], strides = [1, 1]} : vector<1x128xf32> to vector<1x64xf32>
    %214 = vector.extract_strided_slice %212 {offsets = [0, 64], sizes = [1, 64], strides = [1, 1]} : vector<1x128xf32> to vector<1x64xf32>
    %215 = vector.broadcast %211 : vector<1x64xf32> to vector<16x64xf32>
    %216 = arith.mulf %215, %19 : vector<16x64xf32>
    %cst_62 = arith.constant dense<0.000000e+00> : vector<16x128xf32>
    %217 = tpu.matmul %216, %20, %cst_62 {dimension_numbers = #tpu.dot_dimension_numbers<[1], [0], [0], [1], [0, 0, 1, 1], [], []>} : vector<16x64xf32>, vector<64x128xf32>, vector<16x128xf32> -> vector<16x128xf32>
    %218 = arith.subf %217, %13 : vector<16x128xf32>
    %219 = arith.mulf %218, %15 : vector<16x128xf32>
    %220 = arith.negf %219 : vector<16x128xf32>
    %221 = math.exp %220 : vector<16x128xf32>
    %cst_63 = arith.constant 1.000000e+00 : f32
    %222 = vector.broadcast %cst_63 : f32 to vector<16x128xf32>
    %223 = arith.addf %222, %221 : vector<16x128xf32>
    %224 = arith.divf %222, %223 : vector<16x128xf32>
    %225 = arith.mulf %17, %224 : vector<16x128xf32>
    %cst_64 = arith.constant dense<0.000000e+00> : vector<128xf32>
    %226 = vector.multi_reduction <add>, %225, %cst_64 [0] : vector<16x128xf32> to vector<128xf32>
    %227 = vector.shape_cast %226 : vector<128xf32> to vector<1x128xf32>
    %228 = arith.mulf %21, %211 : vector<1x64xf32>
    %229 = arith.addf %228, %213 : vector<1x64xf32>
    %230 = vector.extract_strided_slice %227 {offsets = [0, 0], sizes = [1, 64], strides = [1, 1]} : vector<1x128xf32> to vector<1x64xf32>
    %231 = arith.addf %229, %230 : vector<1x64xf32>
    %232 = vector.extract_strided_slice %227 {offsets = [0, 64], sizes = [1, 64], strides = [1, 1]} : vector<1x128xf32> to vector<1x64xf32>
    %233 = arith.addf %214, %232 : vector<1x64xf32>
    %234 = tpu.reciprocal %233 {approx = true} : vector<1x64xf32> -> vector<1x64xf32>
    %235 = arith.mulf %233, %234 : vector<1x64xf32>
    %cst_65 = arith.constant 2.000000e+00 : f32
    %236 = vector.broadcast %cst_65 : f32 to vector<1x64xf32>
    %237 = arith.subf %236, %235 : vector<1x64xf32>
    %238 = arith.mulf %234, %237 : vector<1x64xf32>
    %239 = arith.mulf %231, %238 : vector<1x64xf32>
    %240 = vector.broadcast %239 : vector<1x64xf32> to vector<16x64xf32>
    %241 = arith.mulf %240, %19 : vector<16x64xf32>
    %cst_66 = arith.constant dense<0.000000e+00> : vector<16x128xf32>
    %242 = tpu.matmul %241, %20, %cst_66 {dimension_numbers = #tpu.dot_dimension_numbers<[1], [0], [0], [1], [0, 0, 1, 1], [], []>} : vector<16x64xf32>, vector<64x128xf32>, vector<16x128xf32> -> vector<16x128xf32>
    %243 = arith.subf %242, %13 : vector<16x128xf32>
    %244 = arith.mulf %243, %15 : vector<16x128xf32>
    %245 = arith.negf %244 : vector<16x128xf32>
    %246 = math.exp %245 : vector<16x128xf32>
    %cst_67 = arith.constant 1.000000e+00 : f32
    %247 = vector.broadcast %cst_67 : f32 to vector<16x128xf32>
    %248 = arith.addf %247, %246 : vector<16x128xf32>
    %249 = arith.divf %247, %248 : vector<16x128xf32>
    %250 = arith.mulf %17, %249 : vector<16x128xf32>
    %cst_68 = arith.constant dense<0.000000e+00> : vector<128xf32>
    %251 = vector.multi_reduction <add>, %250, %cst_68 [0] : vector<16x128xf32> to vector<128xf32>
    %252 = vector.shape_cast %251 : vector<128xf32> to vector<1x128xf32>
    %253 = arith.mulf %21, %239 : vector<1x64xf32>
    %254 = arith.addf %253, %213 : vector<1x64xf32>
    %255 = vector.extract_strided_slice %252 {offsets = [0, 0], sizes = [1, 64], strides = [1, 1]} : vector<1x128xf32> to vector<1x64xf32>
    %256 = arith.addf %254, %255 : vector<1x64xf32>
    %257 = vector.extract_strided_slice %252 {offsets = [0, 64], sizes = [1, 64], strides = [1, 1]} : vector<1x128xf32> to vector<1x64xf32>
    %258 = arith.addf %214, %257 : vector<1x64xf32>
    %259 = tpu.reciprocal %258 {approx = true} : vector<1x64xf32> -> vector<1x64xf32>
    %260 = arith.mulf %258, %259 : vector<1x64xf32>
    %cst_69 = arith.constant 2.000000e+00 : f32
    %261 = vector.broadcast %cst_69 : f32 to vector<1x64xf32>
    %262 = arith.subf %261, %260 : vector<1x64xf32>
    %263 = arith.mulf %259, %262 : vector<1x64xf32>
    %264 = arith.mulf %256, %263 : vector<1x64xf32>
    %265 = vector.broadcast %264 : vector<1x64xf32> to vector<16x64xf32>
    %266 = arith.mulf %265, %19 : vector<16x64xf32>
    %cst_70 = arith.constant dense<0.000000e+00> : vector<16x128xf32>
    %267 = tpu.matmul %266, %20, %cst_70 {dimension_numbers = #tpu.dot_dimension_numbers<[1], [0], [0], [1], [0, 0, 1, 1], [], []>} : vector<16x64xf32>, vector<64x128xf32>, vector<16x128xf32> -> vector<16x128xf32>
    %268 = arith.subf %267, %13 : vector<16x128xf32>
    %269 = arith.mulf %268, %15 : vector<16x128xf32>
    %270 = arith.negf %269 : vector<16x128xf32>
    %271 = math.exp %270 : vector<16x128xf32>
    %cst_71 = arith.constant 1.000000e+00 : f32
    %272 = vector.broadcast %cst_71 : f32 to vector<16x128xf32>
    %273 = arith.addf %272, %271 : vector<16x128xf32>
    %274 = arith.divf %272, %273 : vector<16x128xf32>
    %275 = arith.mulf %17, %274 : vector<16x128xf32>
    %cst_72 = arith.constant dense<0.000000e+00> : vector<128xf32>
    %276 = vector.multi_reduction <add>, %275, %cst_72 [0] : vector<16x128xf32> to vector<128xf32>
    %277 = vector.shape_cast %276 : vector<128xf32> to vector<1x128xf32>
    %278 = arith.mulf %21, %264 : vector<1x64xf32>
    %279 = arith.addf %278, %213 : vector<1x64xf32>
    %280 = vector.extract_strided_slice %277 {offsets = [0, 0], sizes = [1, 64], strides = [1, 1]} : vector<1x128xf32> to vector<1x64xf32>
    %281 = arith.addf %279, %280 : vector<1x64xf32>
    %282 = vector.extract_strided_slice %277 {offsets = [0, 64], sizes = [1, 64], strides = [1, 1]} : vector<1x128xf32> to vector<1x64xf32>
    %283 = arith.addf %214, %282 : vector<1x64xf32>
    %284 = tpu.reciprocal %283 {approx = true} : vector<1x64xf32> -> vector<1x64xf32>
    %285 = arith.mulf %283, %284 : vector<1x64xf32>
    %cst_73 = arith.constant 2.000000e+00 : f32
    %286 = vector.broadcast %cst_73 : f32 to vector<1x64xf32>
    %287 = arith.subf %286, %285 : vector<1x64xf32>
    %288 = arith.mulf %284, %287 : vector<1x64xf32>
    %289 = arith.mulf %281, %288 : vector<1x64xf32>
    %290 = vector.broadcast %289 : vector<1x64xf32> to vector<16x64xf32>
    %291 = arith.mulf %290, %19 : vector<16x64xf32>
    %cst_74 = arith.constant dense<0.000000e+00> : vector<16x128xf32>
    %292 = tpu.matmul %291, %20, %cst_74 {dimension_numbers = #tpu.dot_dimension_numbers<[1], [0], [0], [1], [0, 0, 1, 1], [], []>} : vector<16x64xf32>, vector<64x128xf32>, vector<16x128xf32> -> vector<16x128xf32>
    %293 = arith.subf %292, %13 : vector<16x128xf32>
    %294 = arith.mulf %293, %15 : vector<16x128xf32>
    %295 = arith.negf %294 : vector<16x128xf32>
    %296 = math.exp %295 : vector<16x128xf32>
    %cst_75 = arith.constant 1.000000e+00 : f32
    %297 = vector.broadcast %cst_75 : f32 to vector<16x128xf32>
    %298 = arith.addf %297, %296 : vector<16x128xf32>
    %299 = arith.divf %297, %298 : vector<16x128xf32>
    %300 = arith.mulf %17, %299 : vector<16x128xf32>
    %cst_76 = arith.constant dense<0.000000e+00> : vector<128xf32>
    %301 = vector.multi_reduction <add>, %300, %cst_76 [0] : vector<16x128xf32> to vector<128xf32>
    %302 = vector.shape_cast %301 : vector<128xf32> to vector<1x128xf32>
    %303 = arith.mulf %21, %289 : vector<1x64xf32>
    %304 = arith.addf %303, %213 : vector<1x64xf32>
    %305 = vector.extract_strided_slice %302 {offsets = [0, 0], sizes = [1, 64], strides = [1, 1]} : vector<1x128xf32> to vector<1x64xf32>
    %306 = arith.addf %304, %305 : vector<1x64xf32>
    %307 = vector.extract_strided_slice %302 {offsets = [0, 64], sizes = [1, 64], strides = [1, 1]} : vector<1x128xf32> to vector<1x64xf32>
    %308 = arith.addf %214, %307 : vector<1x64xf32>
    %309 = tpu.reciprocal %308 {approx = true} : vector<1x64xf32> -> vector<1x64xf32>
    %310 = arith.mulf %308, %309 : vector<1x64xf32>
    %cst_77 = arith.constant 2.000000e+00 : f32
    %311 = vector.broadcast %cst_77 : f32 to vector<1x64xf32>
    %312 = arith.subf %311, %310 : vector<1x64xf32>
    %313 = arith.mulf %309, %312 : vector<1x64xf32>
    %314 = arith.mulf %306, %313 : vector<1x64xf32>
    %315 = vector.broadcast %314 : vector<1x64xf32> to vector<16x64xf32>
    %316 = arith.mulf %315, %19 : vector<16x64xf32>
    %cst_78 = arith.constant dense<0.000000e+00> : vector<16x128xf32>
    %317 = tpu.matmul %316, %20, %cst_78 {dimension_numbers = #tpu.dot_dimension_numbers<[1], [0], [0], [1], [0, 0, 1, 1], [], []>} : vector<16x64xf32>, vector<64x128xf32>, vector<16x128xf32> -> vector<16x128xf32>
    %318 = arith.subf %317, %13 : vector<16x128xf32>
    %319 = arith.mulf %318, %15 : vector<16x128xf32>
    %320 = arith.negf %319 : vector<16x128xf32>
    %321 = math.exp %320 : vector<16x128xf32>
    %cst_79 = arith.constant 1.000000e+00 : f32
    %322 = vector.broadcast %cst_79 : f32 to vector<16x128xf32>
    %323 = arith.addf %322, %321 : vector<16x128xf32>
    %324 = arith.divf %322, %323 : vector<16x128xf32>
    %325 = arith.mulf %17, %324 : vector<16x128xf32>
    %cst_80 = arith.constant dense<0.000000e+00> : vector<128xf32>
    %326 = vector.multi_reduction <add>, %325, %cst_80 [0] : vector<16x128xf32> to vector<128xf32>
    %327 = vector.shape_cast %326 : vector<128xf32> to vector<1x128xf32>
    %328 = arith.mulf %21, %314 : vector<1x64xf32>
    %329 = arith.addf %328, %213 : vector<1x64xf32>
    %330 = vector.extract_strided_slice %327 {offsets = [0, 0], sizes = [1, 64], strides = [1, 1]} : vector<1x128xf32> to vector<1x64xf32>
    %331 = arith.addf %329, %330 : vector<1x64xf32>
    %332 = vector.extract_strided_slice %327 {offsets = [0, 64], sizes = [1, 64], strides = [1, 1]} : vector<1x128xf32> to vector<1x64xf32>
    %333 = arith.addf %214, %332 : vector<1x64xf32>
    %334 = tpu.reciprocal %333 {approx = true} : vector<1x64xf32> -> vector<1x64xf32>
    %335 = arith.mulf %333, %334 : vector<1x64xf32>
    %cst_81 = arith.constant 2.000000e+00 : f32
    %336 = vector.broadcast %cst_81 : f32 to vector<1x64xf32>
    %337 = arith.subf %336, %335 : vector<1x64xf32>
    %338 = arith.mulf %334, %337 : vector<1x64xf32>
    %339 = arith.mulf %331, %338 : vector<1x64xf32>
    %340 = vector.broadcast %339 : vector<1x64xf32> to vector<16x64xf32>
    %341 = arith.mulf %340, %19 : vector<16x64xf32>
    %cst_82 = arith.constant dense<0.000000e+00> : vector<16x128xf32>
    %342 = tpu.matmul %341, %20, %cst_82 {dimension_numbers = #tpu.dot_dimension_numbers<[1], [0], [0], [1], [0, 0, 1, 1], [], []>} : vector<16x64xf32>, vector<64x128xf32>, vector<16x128xf32> -> vector<16x128xf32>
    %343 = arith.subf %342, %13 : vector<16x128xf32>
    %344 = arith.mulf %343, %15 : vector<16x128xf32>
    %345 = arith.negf %344 : vector<16x128xf32>
    %346 = math.exp %345 : vector<16x128xf32>
    %cst_83 = arith.constant 1.000000e+00 : f32
    %347 = vector.broadcast %cst_83 : f32 to vector<16x128xf32>
    %348 = arith.addf %347, %346 : vector<16x128xf32>
    %349 = arith.divf %347, %348 : vector<16x128xf32>
    %350 = arith.mulf %17, %349 : vector<16x128xf32>
    %cst_84 = arith.constant dense<0.000000e+00> : vector<128xf32>
    %351 = vector.multi_reduction <add>, %350, %cst_84 [0] : vector<16x128xf32> to vector<128xf32>
    %352 = vector.shape_cast %351 : vector<128xf32> to vector<1x128xf32>
    %353 = arith.mulf %21, %339 : vector<1x64xf32>
    %354 = arith.addf %353, %213 : vector<1x64xf32>
    %355 = vector.extract_strided_slice %352 {offsets = [0, 0], sizes = [1, 64], strides = [1, 1]} : vector<1x128xf32> to vector<1x64xf32>
    %356 = arith.addf %354, %355 : vector<1x64xf32>
    %357 = vector.extract_strided_slice %352 {offsets = [0, 64], sizes = [1, 64], strides = [1, 1]} : vector<1x128xf32> to vector<1x64xf32>
    %358 = arith.addf %214, %357 : vector<1x64xf32>
    %359 = tpu.reciprocal %358 {approx = true} : vector<1x64xf32> -> vector<1x64xf32>
    %360 = arith.mulf %358, %359 : vector<1x64xf32>
    %cst_85 = arith.constant 2.000000e+00 : f32
    %361 = vector.broadcast %cst_85 : f32 to vector<1x64xf32>
    %362 = arith.subf %361, %360 : vector<1x64xf32>
    %363 = arith.mulf %359, %362 : vector<1x64xf32>
    %364 = arith.mulf %356, %363 : vector<1x64xf32>
    %365 = vector.extract_strided_slice %57 {offsets = [0, 256], sizes = [1, 128], strides = [1, 1]} : vector<1x1024xf32> to vector<1x128xf32>
    %366 = vector.extract_strided_slice %365 {offsets = [0, 0], sizes = [1, 64], strides = [1, 1]} : vector<1x128xf32> to vector<1x64xf32>
    %367 = vector.extract_strided_slice %365 {offsets = [0, 64], sizes = [1, 64], strides = [1, 1]} : vector<1x128xf32> to vector<1x64xf32>
    %368 = vector.broadcast %364 : vector<1x64xf32> to vector<16x64xf32>
    %369 = arith.mulf %368, %19 : vector<16x64xf32>
    %cst_86 = arith.constant dense<0.000000e+00> : vector<16x128xf32>
    %370 = tpu.matmul %369, %20, %cst_86 {dimension_numbers = #tpu.dot_dimension_numbers<[1], [0], [0], [1], [0, 0, 1, 1], [], []>} : vector<16x64xf32>, vector<64x128xf32>, vector<16x128xf32> -> vector<16x128xf32>
    %371 = arith.subf %370, %13 : vector<16x128xf32>
    %372 = arith.mulf %371, %15 : vector<16x128xf32>
    %373 = arith.negf %372 : vector<16x128xf32>
    %374 = math.exp %373 : vector<16x128xf32>
    %cst_87 = arith.constant 1.000000e+00 : f32
    %375 = vector.broadcast %cst_87 : f32 to vector<16x128xf32>
    %376 = arith.addf %375, %374 : vector<16x128xf32>
    %377 = arith.divf %375, %376 : vector<16x128xf32>
    %378 = arith.mulf %17, %377 : vector<16x128xf32>
    %cst_88 = arith.constant dense<0.000000e+00> : vector<128xf32>
    %379 = vector.multi_reduction <add>, %378, %cst_88 [0] : vector<16x128xf32> to vector<128xf32>
    %380 = vector.shape_cast %379 : vector<128xf32> to vector<1x128xf32>
    %381 = arith.mulf %21, %364 : vector<1x64xf32>
    %382 = arith.addf %381, %366 : vector<1x64xf32>
    %383 = vector.extract_strided_slice %380 {offsets = [0, 0], sizes = [1, 64], strides = [1, 1]} : vector<1x128xf32> to vector<1x64xf32>
    %384 = arith.addf %382, %383 : vector<1x64xf32>
    %385 = vector.extract_strided_slice %380 {offsets = [0, 64], sizes = [1, 64], strides = [1, 1]} : vector<1x128xf32> to vector<1x64xf32>
    %386 = arith.addf %367, %385 : vector<1x64xf32>
    %387 = tpu.reciprocal %386 {approx = true} : vector<1x64xf32> -> vector<1x64xf32>
    %388 = arith.mulf %386, %387 : vector<1x64xf32>
    %cst_89 = arith.constant 2.000000e+00 : f32
    %389 = vector.broadcast %cst_89 : f32 to vector<1x64xf32>
    %390 = arith.subf %389, %388 : vector<1x64xf32>
    %391 = arith.mulf %387, %390 : vector<1x64xf32>
    %392 = arith.mulf %384, %391 : vector<1x64xf32>
    %393 = vector.broadcast %392 : vector<1x64xf32> to vector<16x64xf32>
    %394 = arith.mulf %393, %19 : vector<16x64xf32>
    %cst_90 = arith.constant dense<0.000000e+00> : vector<16x128xf32>
    %395 = tpu.matmul %394, %20, %cst_90 {dimension_numbers = #tpu.dot_dimension_numbers<[1], [0], [0], [1], [0, 0, 1, 1], [], []>} : vector<16x64xf32>, vector<64x128xf32>, vector<16x128xf32> -> vector<16x128xf32>
    %396 = arith.subf %395, %13 : vector<16x128xf32>
    %397 = arith.mulf %396, %15 : vector<16x128xf32>
    %398 = arith.negf %397 : vector<16x128xf32>
    %399 = math.exp %398 : vector<16x128xf32>
    %cst_91 = arith.constant 1.000000e+00 : f32
    %400 = vector.broadcast %cst_91 : f32 to vector<16x128xf32>
    %401 = arith.addf %400, %399 : vector<16x128xf32>
    %402 = arith.divf %400, %401 : vector<16x128xf32>
    %403 = arith.mulf %17, %402 : vector<16x128xf32>
    %cst_92 = arith.constant dense<0.000000e+00> : vector<128xf32>
    %404 = vector.multi_reduction <add>, %403, %cst_92 [0] : vector<16x128xf32> to vector<128xf32>
    %405 = vector.shape_cast %404 : vector<128xf32> to vector<1x128xf32>
    %406 = arith.mulf %21, %392 : vector<1x64xf32>
    %407 = arith.addf %406, %366 : vector<1x64xf32>
    %408 = vector.extract_strided_slice %405 {offsets = [0, 0], sizes = [1, 64], strides = [1, 1]} : vector<1x128xf32> to vector<1x64xf32>
    %409 = arith.addf %407, %408 : vector<1x64xf32>
    %410 = vector.extract_strided_slice %405 {offsets = [0, 64], sizes = [1, 64], strides = [1, 1]} : vector<1x128xf32> to vector<1x64xf32>
    %411 = arith.addf %367, %410 : vector<1x64xf32>
    %412 = tpu.reciprocal %411 {approx = true} : vector<1x64xf32> -> vector<1x64xf32>
    %413 = arith.mulf %411, %412 : vector<1x64xf32>
    %cst_93 = arith.constant 2.000000e+00 : f32
    %414 = vector.broadcast %cst_93 : f32 to vector<1x64xf32>
    %415 = arith.subf %414, %413 : vector<1x64xf32>
    %416 = arith.mulf %412, %415 : vector<1x64xf32>
    %417 = arith.mulf %409, %416 : vector<1x64xf32>
    %418 = vector.broadcast %417 : vector<1x64xf32> to vector<16x64xf32>
    %419 = arith.mulf %418, %19 : vector<16x64xf32>
    %cst_94 = arith.constant dense<0.000000e+00> : vector<16x128xf32>
    %420 = tpu.matmul %419, %20, %cst_94 {dimension_numbers = #tpu.dot_dimension_numbers<[1], [0], [0], [1], [0, 0, 1, 1], [], []>} : vector<16x64xf32>, vector<64x128xf32>, vector<16x128xf32> -> vector<16x128xf32>
    %421 = arith.subf %420, %13 : vector<16x128xf32>
    %422 = arith.mulf %421, %15 : vector<16x128xf32>
    %423 = arith.negf %422 : vector<16x128xf32>
    %424 = math.exp %423 : vector<16x128xf32>
    %cst_95 = arith.constant 1.000000e+00 : f32
    %425 = vector.broadcast %cst_95 : f32 to vector<16x128xf32>
    %426 = arith.addf %425, %424 : vector<16x128xf32>
    %427 = arith.divf %425, %426 : vector<16x128xf32>
    %428 = arith.mulf %17, %427 : vector<16x128xf32>
    %cst_96 = arith.constant dense<0.000000e+00> : vector<128xf32>
    %429 = vector.multi_reduction <add>, %428, %cst_96 [0] : vector<16x128xf32> to vector<128xf32>
    %430 = vector.shape_cast %429 : vector<128xf32> to vector<1x128xf32>
    %431 = arith.mulf %21, %417 : vector<1x64xf32>
    %432 = arith.addf %431, %366 : vector<1x64xf32>
    %433 = vector.extract_strided_slice %430 {offsets = [0, 0], sizes = [1, 64], strides = [1, 1]} : vector<1x128xf32> to vector<1x64xf32>
    %434 = arith.addf %432, %433 : vector<1x64xf32>
    %435 = vector.extract_strided_slice %430 {offsets = [0, 64], sizes = [1, 64], strides = [1, 1]} : vector<1x128xf32> to vector<1x64xf32>
    %436 = arith.addf %367, %435 : vector<1x64xf32>
    %437 = tpu.reciprocal %436 {approx = true} : vector<1x64xf32> -> vector<1x64xf32>
    %438 = arith.mulf %436, %437 : vector<1x64xf32>
    %cst_97 = arith.constant 2.000000e+00 : f32
    %439 = vector.broadcast %cst_97 : f32 to vector<1x64xf32>
    %440 = arith.subf %439, %438 : vector<1x64xf32>
    %441 = arith.mulf %437, %440 : vector<1x64xf32>
    %442 = arith.mulf %434, %441 : vector<1x64xf32>
    %443 = vector.broadcast %442 : vector<1x64xf32> to vector<16x64xf32>
    %444 = arith.mulf %443, %19 : vector<16x64xf32>
    %cst_98 = arith.constant dense<0.000000e+00> : vector<16x128xf32>
    %445 = tpu.matmul %444, %20, %cst_98 {dimension_numbers = #tpu.dot_dimension_numbers<[1], [0], [0], [1], [0, 0, 1, 1], [], []>} : vector<16x64xf32>, vector<64x128xf32>, vector<16x128xf32> -> vector<16x128xf32>
    %446 = arith.subf %445, %13 : vector<16x128xf32>
    %447 = arith.mulf %446, %15 : vector<16x128xf32>
    %448 = arith.negf %447 : vector<16x128xf32>
    %449 = math.exp %448 : vector<16x128xf32>
    %cst_99 = arith.constant 1.000000e+00 : f32
    %450 = vector.broadcast %cst_99 : f32 to vector<16x128xf32>
    %451 = arith.addf %450, %449 : vector<16x128xf32>
    %452 = arith.divf %450, %451 : vector<16x128xf32>
    %453 = arith.mulf %17, %452 : vector<16x128xf32>
    %cst_100 = arith.constant dense<0.000000e+00> : vector<128xf32>
    %454 = vector.multi_reduction <add>, %453, %cst_100 [0] : vector<16x128xf32> to vector<128xf32>
    %455 = vector.shape_cast %454 : vector<128xf32> to vector<1x128xf32>
    %456 = arith.mulf %21, %442 : vector<1x64xf32>
    %457 = arith.addf %456, %366 : vector<1x64xf32>
    %458 = vector.extract_strided_slice %455 {offsets = [0, 0], sizes = [1, 64], strides = [1, 1]} : vector<1x128xf32> to vector<1x64xf32>
    %459 = arith.addf %457, %458 : vector<1x64xf32>
    %460 = vector.extract_strided_slice %455 {offsets = [0, 64], sizes = [1, 64], strides = [1, 1]} : vector<1x128xf32> to vector<1x64xf32>
    %461 = arith.addf %367, %460 : vector<1x64xf32>
    %462 = tpu.reciprocal %461 {approx = true} : vector<1x64xf32> -> vector<1x64xf32>
    %463 = arith.mulf %461, %462 : vector<1x64xf32>
    %cst_101 = arith.constant 2.000000e+00 : f32
    %464 = vector.broadcast %cst_101 : f32 to vector<1x64xf32>
    %465 = arith.subf %464, %463 : vector<1x64xf32>
    %466 = arith.mulf %462, %465 : vector<1x64xf32>
    %467 = arith.mulf %459, %466 : vector<1x64xf32>
    %468 = vector.broadcast %467 : vector<1x64xf32> to vector<16x64xf32>
    %469 = arith.mulf %468, %19 : vector<16x64xf32>
    %cst_102 = arith.constant dense<0.000000e+00> : vector<16x128xf32>
    %470 = tpu.matmul %469, %20, %cst_102 {dimension_numbers = #tpu.dot_dimension_numbers<[1], [0], [0], [1], [0, 0, 1, 1], [], []>} : vector<16x64xf32>, vector<64x128xf32>, vector<16x128xf32> -> vector<16x128xf32>
    %471 = arith.subf %470, %13 : vector<16x128xf32>
    %472 = arith.mulf %471, %15 : vector<16x128xf32>
    %473 = arith.negf %472 : vector<16x128xf32>
    %474 = math.exp %473 : vector<16x128xf32>
    %cst_103 = arith.constant 1.000000e+00 : f32
    %475 = vector.broadcast %cst_103 : f32 to vector<16x128xf32>
    %476 = arith.addf %475, %474 : vector<16x128xf32>
    %477 = arith.divf %475, %476 : vector<16x128xf32>
    %478 = arith.mulf %17, %477 : vector<16x128xf32>
    %cst_104 = arith.constant dense<0.000000e+00> : vector<128xf32>
    %479 = vector.multi_reduction <add>, %478, %cst_104 [0] : vector<16x128xf32> to vector<128xf32>
    %480 = vector.shape_cast %479 : vector<128xf32> to vector<1x128xf32>
    %481 = arith.mulf %21, %467 : vector<1x64xf32>
    %482 = arith.addf %481, %366 : vector<1x64xf32>
    %483 = vector.extract_strided_slice %480 {offsets = [0, 0], sizes = [1, 64], strides = [1, 1]} : vector<1x128xf32> to vector<1x64xf32>
    %484 = arith.addf %482, %483 : vector<1x64xf32>
    %485 = vector.extract_strided_slice %480 {offsets = [0, 64], sizes = [1, 64], strides = [1, 1]} : vector<1x128xf32> to vector<1x64xf32>
    %486 = arith.addf %367, %485 : vector<1x64xf32>
    %487 = tpu.reciprocal %486 {approx = true} : vector<1x64xf32> -> vector<1x64xf32>
    %488 = arith.mulf %486, %487 : vector<1x64xf32>
    %cst_105 = arith.constant 2.000000e+00 : f32
    %489 = vector.broadcast %cst_105 : f32 to vector<1x64xf32>
    %490 = arith.subf %489, %488 : vector<1x64xf32>
    %491 = arith.mulf %487, %490 : vector<1x64xf32>
    %492 = arith.mulf %484, %491 : vector<1x64xf32>
    %493 = vector.broadcast %492 : vector<1x64xf32> to vector<16x64xf32>
    %494 = arith.mulf %493, %19 : vector<16x64xf32>
    %cst_106 = arith.constant dense<0.000000e+00> : vector<16x128xf32>
    %495 = tpu.matmul %494, %20, %cst_106 {dimension_numbers = #tpu.dot_dimension_numbers<[1], [0], [0], [1], [0, 0, 1, 1], [], []>} : vector<16x64xf32>, vector<64x128xf32>, vector<16x128xf32> -> vector<16x128xf32>
    %496 = arith.subf %495, %13 : vector<16x128xf32>
    %497 = arith.mulf %496, %15 : vector<16x128xf32>
    %498 = arith.negf %497 : vector<16x128xf32>
    %499 = math.exp %498 : vector<16x128xf32>
    %cst_107 = arith.constant 1.000000e+00 : f32
    %500 = vector.broadcast %cst_107 : f32 to vector<16x128xf32>
    %501 = arith.addf %500, %499 : vector<16x128xf32>
    %502 = arith.divf %500, %501 : vector<16x128xf32>
    %503 = arith.mulf %17, %502 : vector<16x128xf32>
    %cst_108 = arith.constant dense<0.000000e+00> : vector<128xf32>
    %504 = vector.multi_reduction <add>, %503, %cst_108 [0] : vector<16x128xf32> to vector<128xf32>
    %505 = vector.shape_cast %504 : vector<128xf32> to vector<1x128xf32>
    %506 = arith.mulf %21, %492 : vector<1x64xf32>
    %507 = arith.addf %506, %366 : vector<1x64xf32>
    %508 = vector.extract_strided_slice %505 {offsets = [0, 0], sizes = [1, 64], strides = [1, 1]} : vector<1x128xf32> to vector<1x64xf32>
    %509 = arith.addf %507, %508 : vector<1x64xf32>
    %510 = vector.extract_strided_slice %505 {offsets = [0, 64], sizes = [1, 64], strides = [1, 1]} : vector<1x128xf32> to vector<1x64xf32>
    %511 = arith.addf %367, %510 : vector<1x64xf32>
    %512 = tpu.reciprocal %511 {approx = true} : vector<1x64xf32> -> vector<1x64xf32>
    %513 = arith.mulf %511, %512 : vector<1x64xf32>
    %cst_109 = arith.constant 2.000000e+00 : f32
    %514 = vector.broadcast %cst_109 : f32 to vector<1x64xf32>
    %515 = arith.subf %514, %513 : vector<1x64xf32>
    %516 = arith.mulf %512, %515 : vector<1x64xf32>
    %517 = arith.mulf %509, %516 : vector<1x64xf32>
    %518 = vector.extract_strided_slice %57 {offsets = [0, 384], sizes = [1, 128], strides = [1, 1]} : vector<1x1024xf32> to vector<1x128xf32>
    %519 = vector.extract_strided_slice %518 {offsets = [0, 0], sizes = [1, 64], strides = [1, 1]} : vector<1x128xf32> to vector<1x64xf32>
    %520 = vector.extract_strided_slice %518 {offsets = [0, 64], sizes = [1, 64], strides = [1, 1]} : vector<1x128xf32> to vector<1x64xf32>
    %521 = vector.broadcast %517 : vector<1x64xf32> to vector<16x64xf32>
    %522 = arith.mulf %521, %19 : vector<16x64xf32>
    %cst_110 = arith.constant dense<0.000000e+00> : vector<16x128xf32>
    %523 = tpu.matmul %522, %20, %cst_110 {dimension_numbers = #tpu.dot_dimension_numbers<[1], [0], [0], [1], [0, 0, 1, 1], [], []>} : vector<16x64xf32>, vector<64x128xf32>, vector<16x128xf32> -> vector<16x128xf32>
    %524 = arith.subf %523, %13 : vector<16x128xf32>
    %525 = arith.mulf %524, %15 : vector<16x128xf32>
    %526 = arith.negf %525 : vector<16x128xf32>
    %527 = math.exp %526 : vector<16x128xf32>
    %cst_111 = arith.constant 1.000000e+00 : f32
    %528 = vector.broadcast %cst_111 : f32 to vector<16x128xf32>
    %529 = arith.addf %528, %527 : vector<16x128xf32>
    %530 = arith.divf %528, %529 : vector<16x128xf32>
    %531 = arith.mulf %17, %530 : vector<16x128xf32>
    %cst_112 = arith.constant dense<0.000000e+00> : vector<128xf32>
    %532 = vector.multi_reduction <add>, %531, %cst_112 [0] : vector<16x128xf32> to vector<128xf32>
    %533 = vector.shape_cast %532 : vector<128xf32> to vector<1x128xf32>
    %534 = arith.mulf %21, %517 : vector<1x64xf32>
    %535 = arith.addf %534, %519 : vector<1x64xf32>
    %536 = vector.extract_strided_slice %533 {offsets = [0, 0], sizes = [1, 64], strides = [1, 1]} : vector<1x128xf32> to vector<1x64xf32>
    %537 = arith.addf %535, %536 : vector<1x64xf32>
    %538 = vector.extract_strided_slice %533 {offsets = [0, 64], sizes = [1, 64], strides = [1, 1]} : vector<1x128xf32> to vector<1x64xf32>
    %539 = arith.addf %520, %538 : vector<1x64xf32>
    %540 = tpu.reciprocal %539 {approx = true} : vector<1x64xf32> -> vector<1x64xf32>
    %541 = arith.mulf %539, %540 : vector<1x64xf32>
    %cst_113 = arith.constant 2.000000e+00 : f32
    %542 = vector.broadcast %cst_113 : f32 to vector<1x64xf32>
    %543 = arith.subf %542, %541 : vector<1x64xf32>
    %544 = arith.mulf %540, %543 : vector<1x64xf32>
    %545 = arith.mulf %537, %544 : vector<1x64xf32>
    %546 = vector.broadcast %545 : vector<1x64xf32> to vector<16x64xf32>
    %547 = arith.mulf %546, %19 : vector<16x64xf32>
    %cst_114 = arith.constant dense<0.000000e+00> : vector<16x128xf32>
    %548 = tpu.matmul %547, %20, %cst_114 {dimension_numbers = #tpu.dot_dimension_numbers<[1], [0], [0], [1], [0, 0, 1, 1], [], []>} : vector<16x64xf32>, vector<64x128xf32>, vector<16x128xf32> -> vector<16x128xf32>
    %549 = arith.subf %548, %13 : vector<16x128xf32>
    %550 = arith.mulf %549, %15 : vector<16x128xf32>
    %551 = arith.negf %550 : vector<16x128xf32>
    %552 = math.exp %551 : vector<16x128xf32>
    %cst_115 = arith.constant 1.000000e+00 : f32
    %553 = vector.broadcast %cst_115 : f32 to vector<16x128xf32>
    %554 = arith.addf %553, %552 : vector<16x128xf32>
    %555 = arith.divf %553, %554 : vector<16x128xf32>
    %556 = arith.mulf %17, %555 : vector<16x128xf32>
    %cst_116 = arith.constant dense<0.000000e+00> : vector<128xf32>
    %557 = vector.multi_reduction <add>, %556, %cst_116 [0] : vector<16x128xf32> to vector<128xf32>
    %558 = vector.shape_cast %557 : vector<128xf32> to vector<1x128xf32>
    %559 = arith.mulf %21, %545 : vector<1x64xf32>
    %560 = arith.addf %559, %519 : vector<1x64xf32>
    %561 = vector.extract_strided_slice %558 {offsets = [0, 0], sizes = [1, 64], strides = [1, 1]} : vector<1x128xf32> to vector<1x64xf32>
    %562 = arith.addf %560, %561 : vector<1x64xf32>
    %563 = vector.extract_strided_slice %558 {offsets = [0, 64], sizes = [1, 64], strides = [1, 1]} : vector<1x128xf32> to vector<1x64xf32>
    %564 = arith.addf %520, %563 : vector<1x64xf32>
    %565 = tpu.reciprocal %564 {approx = true} : vector<1x64xf32> -> vector<1x64xf32>
    %566 = arith.mulf %564, %565 : vector<1x64xf32>
    %cst_117 = arith.constant 2.000000e+00 : f32
    %567 = vector.broadcast %cst_117 : f32 to vector<1x64xf32>
    %568 = arith.subf %567, %566 : vector<1x64xf32>
    %569 = arith.mulf %565, %568 : vector<1x64xf32>
    %570 = arith.mulf %562, %569 : vector<1x64xf32>
    %571 = vector.broadcast %570 : vector<1x64xf32> to vector<16x64xf32>
    %572 = arith.mulf %571, %19 : vector<16x64xf32>
    %cst_118 = arith.constant dense<0.000000e+00> : vector<16x128xf32>
    %573 = tpu.matmul %572, %20, %cst_118 {dimension_numbers = #tpu.dot_dimension_numbers<[1], [0], [0], [1], [0, 0, 1, 1], [], []>} : vector<16x64xf32>, vector<64x128xf32>, vector<16x128xf32> -> vector<16x128xf32>
    %574 = arith.subf %573, %13 : vector<16x128xf32>
    %575 = arith.mulf %574, %15 : vector<16x128xf32>
    %576 = arith.negf %575 : vector<16x128xf32>
    %577 = math.exp %576 : vector<16x128xf32>
    %cst_119 = arith.constant 1.000000e+00 : f32
    %578 = vector.broadcast %cst_119 : f32 to vector<16x128xf32>
    %579 = arith.addf %578, %577 : vector<16x128xf32>
    %580 = arith.divf %578, %579 : vector<16x128xf32>
    %581 = arith.mulf %17, %580 : vector<16x128xf32>
    %cst_120 = arith.constant dense<0.000000e+00> : vector<128xf32>
    %582 = vector.multi_reduction <add>, %581, %cst_120 [0] : vector<16x128xf32> to vector<128xf32>
    %583 = vector.shape_cast %582 : vector<128xf32> to vector<1x128xf32>
    %584 = arith.mulf %21, %570 : vector<1x64xf32>
    %585 = arith.addf %584, %519 : vector<1x64xf32>
    %586 = vector.extract_strided_slice %583 {offsets = [0, 0], sizes = [1, 64], strides = [1, 1]} : vector<1x128xf32> to vector<1x64xf32>
    %587 = arith.addf %585, %586 : vector<1x64xf32>
    %588 = vector.extract_strided_slice %583 {offsets = [0, 64], sizes = [1, 64], strides = [1, 1]} : vector<1x128xf32> to vector<1x64xf32>
    %589 = arith.addf %520, %588 : vector<1x64xf32>
    %590 = tpu.reciprocal %589 {approx = true} : vector<1x64xf32> -> vector<1x64xf32>
    %591 = arith.mulf %589, %590 : vector<1x64xf32>
    %cst_121 = arith.constant 2.000000e+00 : f32
    %592 = vector.broadcast %cst_121 : f32 to vector<1x64xf32>
    %593 = arith.subf %592, %591 : vector<1x64xf32>
    %594 = arith.mulf %590, %593 : vector<1x64xf32>
    %595 = arith.mulf %587, %594 : vector<1x64xf32>
    %596 = vector.broadcast %595 : vector<1x64xf32> to vector<16x64xf32>
    %597 = arith.mulf %596, %19 : vector<16x64xf32>
    %cst_122 = arith.constant dense<0.000000e+00> : vector<16x128xf32>
    %598 = tpu.matmul %597, %20, %cst_122 {dimension_numbers = #tpu.dot_dimension_numbers<[1], [0], [0], [1], [0, 0, 1, 1], [], []>} : vector<16x64xf32>, vector<64x128xf32>, vector<16x128xf32> -> vector<16x128xf32>
    %599 = arith.subf %598, %13 : vector<16x128xf32>
    %600 = arith.mulf %599, %15 : vector<16x128xf32>
    %601 = arith.negf %600 : vector<16x128xf32>
    %602 = math.exp %601 : vector<16x128xf32>
    %cst_123 = arith.constant 1.000000e+00 : f32
    %603 = vector.broadcast %cst_123 : f32 to vector<16x128xf32>
    %604 = arith.addf %603, %602 : vector<16x128xf32>
    %605 = arith.divf %603, %604 : vector<16x128xf32>
    %606 = arith.mulf %17, %605 : vector<16x128xf32>
    %cst_124 = arith.constant dense<0.000000e+00> : vector<128xf32>
    %607 = vector.multi_reduction <add>, %606, %cst_124 [0] : vector<16x128xf32> to vector<128xf32>
    %608 = vector.shape_cast %607 : vector<128xf32> to vector<1x128xf32>
    %609 = arith.mulf %21, %595 : vector<1x64xf32>
    %610 = arith.addf %609, %519 : vector<1x64xf32>
    %611 = vector.extract_strided_slice %608 {offsets = [0, 0], sizes = [1, 64], strides = [1, 1]} : vector<1x128xf32> to vector<1x64xf32>
    %612 = arith.addf %610, %611 : vector<1x64xf32>
    %613 = vector.extract_strided_slice %608 {offsets = [0, 64], sizes = [1, 64], strides = [1, 1]} : vector<1x128xf32> to vector<1x64xf32>
    %614 = arith.addf %520, %613 : vector<1x64xf32>
    %615 = tpu.reciprocal %614 {approx = true} : vector<1x64xf32> -> vector<1x64xf32>
    %616 = arith.mulf %614, %615 : vector<1x64xf32>
    %cst_125 = arith.constant 2.000000e+00 : f32
    %617 = vector.broadcast %cst_125 : f32 to vector<1x64xf32>
    %618 = arith.subf %617, %616 : vector<1x64xf32>
    %619 = arith.mulf %615, %618 : vector<1x64xf32>
    %620 = arith.mulf %612, %619 : vector<1x64xf32>
    %621 = vector.broadcast %620 : vector<1x64xf32> to vector<16x64xf32>
    %622 = arith.mulf %621, %19 : vector<16x64xf32>
    %cst_126 = arith.constant dense<0.000000e+00> : vector<16x128xf32>
    %623 = tpu.matmul %622, %20, %cst_126 {dimension_numbers = #tpu.dot_dimension_numbers<[1], [0], [0], [1], [0, 0, 1, 1], [], []>} : vector<16x64xf32>, vector<64x128xf32>, vector<16x128xf32> -> vector<16x128xf32>
    %624 = arith.subf %623, %13 : vector<16x128xf32>
    %625 = arith.mulf %624, %15 : vector<16x128xf32>
    %626 = arith.negf %625 : vector<16x128xf32>
    %627 = math.exp %626 : vector<16x128xf32>
    %cst_127 = arith.constant 1.000000e+00 : f32
    %628 = vector.broadcast %cst_127 : f32 to vector<16x128xf32>
    %629 = arith.addf %628, %627 : vector<16x128xf32>
    %630 = arith.divf %628, %629 : vector<16x128xf32>
    %631 = arith.mulf %17, %630 : vector<16x128xf32>
    %cst_128 = arith.constant dense<0.000000e+00> : vector<128xf32>
    %632 = vector.multi_reduction <add>, %631, %cst_128 [0] : vector<16x128xf32> to vector<128xf32>
    %633 = vector.shape_cast %632 : vector<128xf32> to vector<1x128xf32>
    %634 = arith.mulf %21, %620 : vector<1x64xf32>
    %635 = arith.addf %634, %519 : vector<1x64xf32>
    %636 = vector.extract_strided_slice %633 {offsets = [0, 0], sizes = [1, 64], strides = [1, 1]} : vector<1x128xf32> to vector<1x64xf32>
    %637 = arith.addf %635, %636 : vector<1x64xf32>
    %638 = vector.extract_strided_slice %633 {offsets = [0, 64], sizes = [1, 64], strides = [1, 1]} : vector<1x128xf32> to vector<1x64xf32>
    %639 = arith.addf %520, %638 : vector<1x64xf32>
    %640 = tpu.reciprocal %639 {approx = true} : vector<1x64xf32> -> vector<1x64xf32>
    %641 = arith.mulf %639, %640 : vector<1x64xf32>
    %cst_129 = arith.constant 2.000000e+00 : f32
    %642 = vector.broadcast %cst_129 : f32 to vector<1x64xf32>
    %643 = arith.subf %642, %641 : vector<1x64xf32>
    %644 = arith.mulf %640, %643 : vector<1x64xf32>
    %645 = arith.mulf %637, %644 : vector<1x64xf32>
    %646 = vector.broadcast %645 : vector<1x64xf32> to vector<16x64xf32>
    %647 = arith.mulf %646, %19 : vector<16x64xf32>
    %cst_130 = arith.constant dense<0.000000e+00> : vector<16x128xf32>
    %648 = tpu.matmul %647, %20, %cst_130 {dimension_numbers = #tpu.dot_dimension_numbers<[1], [0], [0], [1], [0, 0, 1, 1], [], []>} : vector<16x64xf32>, vector<64x128xf32>, vector<16x128xf32> -> vector<16x128xf32>
    %649 = arith.subf %648, %13 : vector<16x128xf32>
    %650 = arith.mulf %649, %15 : vector<16x128xf32>
    %651 = arith.negf %650 : vector<16x128xf32>
    %652 = math.exp %651 : vector<16x128xf32>
    %cst_131 = arith.constant 1.000000e+00 : f32
    %653 = vector.broadcast %cst_131 : f32 to vector<16x128xf32>
    %654 = arith.addf %653, %652 : vector<16x128xf32>
    %655 = arith.divf %653, %654 : vector<16x128xf32>
    %656 = arith.mulf %17, %655 : vector<16x128xf32>
    %cst_132 = arith.constant dense<0.000000e+00> : vector<128xf32>
    %657 = vector.multi_reduction <add>, %656, %cst_132 [0] : vector<16x128xf32> to vector<128xf32>
    %658 = vector.shape_cast %657 : vector<128xf32> to vector<1x128xf32>
    %659 = arith.mulf %21, %645 : vector<1x64xf32>
    %660 = arith.addf %659, %519 : vector<1x64xf32>
    %661 = vector.extract_strided_slice %658 {offsets = [0, 0], sizes = [1, 64], strides = [1, 1]} : vector<1x128xf32> to vector<1x64xf32>
    %662 = arith.addf %660, %661 : vector<1x64xf32>
    %663 = vector.extract_strided_slice %658 {offsets = [0, 64], sizes = [1, 64], strides = [1, 1]} : vector<1x128xf32> to vector<1x64xf32>
    %664 = arith.addf %520, %663 : vector<1x64xf32>
    %665 = tpu.reciprocal %664 {approx = true} : vector<1x64xf32> -> vector<1x64xf32>
    %666 = arith.mulf %664, %665 : vector<1x64xf32>
    %cst_133 = arith.constant 2.000000e+00 : f32
    %667 = vector.broadcast %cst_133 : f32 to vector<1x64xf32>
    %668 = arith.subf %667, %666 : vector<1x64xf32>
    %669 = arith.mulf %665, %668 : vector<1x64xf32>
    %670 = arith.mulf %662, %669 : vector<1x64xf32>
    %671 = vector.extract_strided_slice %57 {offsets = [0, 512], sizes = [1, 128], strides = [1, 1]} : vector<1x1024xf32> to vector<1x128xf32>
    %672 = vector.extract_strided_slice %671 {offsets = [0, 0], sizes = [1, 64], strides = [1, 1]} : vector<1x128xf32> to vector<1x64xf32>
    %673 = vector.extract_strided_slice %671 {offsets = [0, 64], sizes = [1, 64], strides = [1, 1]} : vector<1x128xf32> to vector<1x64xf32>
    %674 = vector.broadcast %670 : vector<1x64xf32> to vector<16x64xf32>
    %675 = arith.mulf %674, %19 : vector<16x64xf32>
    %cst_134 = arith.constant dense<0.000000e+00> : vector<16x128xf32>
    %676 = tpu.matmul %675, %20, %cst_134 {dimension_numbers = #tpu.dot_dimension_numbers<[1], [0], [0], [1], [0, 0, 1, 1], [], []>} : vector<16x64xf32>, vector<64x128xf32>, vector<16x128xf32> -> vector<16x128xf32>
    %677 = arith.subf %676, %13 : vector<16x128xf32>
    %678 = arith.mulf %677, %15 : vector<16x128xf32>
    %679 = arith.negf %678 : vector<16x128xf32>
    %680 = math.exp %679 : vector<16x128xf32>
    %cst_135 = arith.constant 1.000000e+00 : f32
    %681 = vector.broadcast %cst_135 : f32 to vector<16x128xf32>
    %682 = arith.addf %681, %680 : vector<16x128xf32>
    %683 = arith.divf %681, %682 : vector<16x128xf32>
    %684 = arith.mulf %17, %683 : vector<16x128xf32>
    %cst_136 = arith.constant dense<0.000000e+00> : vector<128xf32>
    %685 = vector.multi_reduction <add>, %684, %cst_136 [0] : vector<16x128xf32> to vector<128xf32>
    %686 = vector.shape_cast %685 : vector<128xf32> to vector<1x128xf32>
    %687 = arith.mulf %21, %670 : vector<1x64xf32>
    %688 = arith.addf %687, %672 : vector<1x64xf32>
    %689 = vector.extract_strided_slice %686 {offsets = [0, 0], sizes = [1, 64], strides = [1, 1]} : vector<1x128xf32> to vector<1x64xf32>
    %690 = arith.addf %688, %689 : vector<1x64xf32>
    %691 = vector.extract_strided_slice %686 {offsets = [0, 64], sizes = [1, 64], strides = [1, 1]} : vector<1x128xf32> to vector<1x64xf32>
    %692 = arith.addf %673, %691 : vector<1x64xf32>
    %693 = tpu.reciprocal %692 {approx = true} : vector<1x64xf32> -> vector<1x64xf32>
    %694 = arith.mulf %692, %693 : vector<1x64xf32>
    %cst_137 = arith.constant 2.000000e+00 : f32
    %695 = vector.broadcast %cst_137 : f32 to vector<1x64xf32>
    %696 = arith.subf %695, %694 : vector<1x64xf32>
    %697 = arith.mulf %693, %696 : vector<1x64xf32>
    %698 = arith.mulf %690, %697 : vector<1x64xf32>
    %699 = vector.broadcast %698 : vector<1x64xf32> to vector<16x64xf32>
    %700 = arith.mulf %699, %19 : vector<16x64xf32>
    %cst_138 = arith.constant dense<0.000000e+00> : vector<16x128xf32>
    %701 = tpu.matmul %700, %20, %cst_138 {dimension_numbers = #tpu.dot_dimension_numbers<[1], [0], [0], [1], [0, 0, 1, 1], [], []>} : vector<16x64xf32>, vector<64x128xf32>, vector<16x128xf32> -> vector<16x128xf32>
    %702 = arith.subf %701, %13 : vector<16x128xf32>
    %703 = arith.mulf %702, %15 : vector<16x128xf32>
    %704 = arith.negf %703 : vector<16x128xf32>
    %705 = math.exp %704 : vector<16x128xf32>
    %cst_139 = arith.constant 1.000000e+00 : f32
    %706 = vector.broadcast %cst_139 : f32 to vector<16x128xf32>
    %707 = arith.addf %706, %705 : vector<16x128xf32>
    %708 = arith.divf %706, %707 : vector<16x128xf32>
    %709 = arith.mulf %17, %708 : vector<16x128xf32>
    %cst_140 = arith.constant dense<0.000000e+00> : vector<128xf32>
    %710 = vector.multi_reduction <add>, %709, %cst_140 [0] : vector<16x128xf32> to vector<128xf32>
    %711 = vector.shape_cast %710 : vector<128xf32> to vector<1x128xf32>
    %712 = arith.mulf %21, %698 : vector<1x64xf32>
    %713 = arith.addf %712, %672 : vector<1x64xf32>
    %714 = vector.extract_strided_slice %711 {offsets = [0, 0], sizes = [1, 64], strides = [1, 1]} : vector<1x128xf32> to vector<1x64xf32>
    %715 = arith.addf %713, %714 : vector<1x64xf32>
    %716 = vector.extract_strided_slice %711 {offsets = [0, 64], sizes = [1, 64], strides = [1, 1]} : vector<1x128xf32> to vector<1x64xf32>
    %717 = arith.addf %673, %716 : vector<1x64xf32>
    %718 = tpu.reciprocal %717 {approx = true} : vector<1x64xf32> -> vector<1x64xf32>
    %719 = arith.mulf %717, %718 : vector<1x64xf32>
    %cst_141 = arith.constant 2.000000e+00 : f32
    %720 = vector.broadcast %cst_141 : f32 to vector<1x64xf32>
    %721 = arith.subf %720, %719 : vector<1x64xf32>
    %722 = arith.mulf %718, %721 : vector<1x64xf32>
    %723 = arith.mulf %715, %722 : vector<1x64xf32>
    %724 = vector.broadcast %723 : vector<1x64xf32> to vector<16x64xf32>
    %725 = arith.mulf %724, %19 : vector<16x64xf32>
    %cst_142 = arith.constant dense<0.000000e+00> : vector<16x128xf32>
    %726 = tpu.matmul %725, %20, %cst_142 {dimension_numbers = #tpu.dot_dimension_numbers<[1], [0], [0], [1], [0, 0, 1, 1], [], []>} : vector<16x64xf32>, vector<64x128xf32>, vector<16x128xf32> -> vector<16x128xf32>
    %727 = arith.subf %726, %13 : vector<16x128xf32>
    %728 = arith.mulf %727, %15 : vector<16x128xf32>
    %729 = arith.negf %728 : vector<16x128xf32>
    %730 = math.exp %729 : vector<16x128xf32>
    %cst_143 = arith.constant 1.000000e+00 : f32
    %731 = vector.broadcast %cst_143 : f32 to vector<16x128xf32>
    %732 = arith.addf %731, %730 : vector<16x128xf32>
    %733 = arith.divf %731, %732 : vector<16x128xf32>
    %734 = arith.mulf %17, %733 : vector<16x128xf32>
    %cst_144 = arith.constant dense<0.000000e+00> : vector<128xf32>
    %735 = vector.multi_reduction <add>, %734, %cst_144 [0] : vector<16x128xf32> to vector<128xf32>
    %736 = vector.shape_cast %735 : vector<128xf32> to vector<1x128xf32>
    %737 = arith.mulf %21, %723 : vector<1x64xf32>
    %738 = arith.addf %737, %672 : vector<1x64xf32>
    %739 = vector.extract_strided_slice %736 {offsets = [0, 0], sizes = [1, 64], strides = [1, 1]} : vector<1x128xf32> to vector<1x64xf32>
    %740 = arith.addf %738, %739 : vector<1x64xf32>
    %741 = vector.extract_strided_slice %736 {offsets = [0, 64], sizes = [1, 64], strides = [1, 1]} : vector<1x128xf32> to vector<1x64xf32>
    %742 = arith.addf %673, %741 : vector<1x64xf32>
    %743 = tpu.reciprocal %742 {approx = true} : vector<1x64xf32> -> vector<1x64xf32>
    %744 = arith.mulf %742, %743 : vector<1x64xf32>
    %cst_145 = arith.constant 2.000000e+00 : f32
    %745 = vector.broadcast %cst_145 : f32 to vector<1x64xf32>
    %746 = arith.subf %745, %744 : vector<1x64xf32>
    %747 = arith.mulf %743, %746 : vector<1x64xf32>
    %748 = arith.mulf %740, %747 : vector<1x64xf32>
    %749 = vector.broadcast %748 : vector<1x64xf32> to vector<16x64xf32>
    %750 = arith.mulf %749, %19 : vector<16x64xf32>
    %cst_146 = arith.constant dense<0.000000e+00> : vector<16x128xf32>
    %751 = tpu.matmul %750, %20, %cst_146 {dimension_numbers = #tpu.dot_dimension_numbers<[1], [0], [0], [1], [0, 0, 1, 1], [], []>} : vector<16x64xf32>, vector<64x128xf32>, vector<16x128xf32> -> vector<16x128xf32>
    %752 = arith.subf %751, %13 : vector<16x128xf32>
    %753 = arith.mulf %752, %15 : vector<16x128xf32>
    %754 = arith.negf %753 : vector<16x128xf32>
    %755 = math.exp %754 : vector<16x128xf32>
    %cst_147 = arith.constant 1.000000e+00 : f32
    %756 = vector.broadcast %cst_147 : f32 to vector<16x128xf32>
    %757 = arith.addf %756, %755 : vector<16x128xf32>
    %758 = arith.divf %756, %757 : vector<16x128xf32>
    %759 = arith.mulf %17, %758 : vector<16x128xf32>
    %cst_148 = arith.constant dense<0.000000e+00> : vector<128xf32>
    %760 = vector.multi_reduction <add>, %759, %cst_148 [0] : vector<16x128xf32> to vector<128xf32>
    %761 = vector.shape_cast %760 : vector<128xf32> to vector<1x128xf32>
    %762 = arith.mulf %21, %748 : vector<1x64xf32>
    %763 = arith.addf %762, %672 : vector<1x64xf32>
    %764 = vector.extract_strided_slice %761 {offsets = [0, 0], sizes = [1, 64], strides = [1, 1]} : vector<1x128xf32> to vector<1x64xf32>
    %765 = arith.addf %763, %764 : vector<1x64xf32>
    %766 = vector.extract_strided_slice %761 {offsets = [0, 64], sizes = [1, 64], strides = [1, 1]} : vector<1x128xf32> to vector<1x64xf32>
    %767 = arith.addf %673, %766 : vector<1x64xf32>
    %768 = tpu.reciprocal %767 {approx = true} : vector<1x64xf32> -> vector<1x64xf32>
    %769 = arith.mulf %767, %768 : vector<1x64xf32>
    %cst_149 = arith.constant 2.000000e+00 : f32
    %770 = vector.broadcast %cst_149 : f32 to vector<1x64xf32>
    %771 = arith.subf %770, %769 : vector<1x64xf32>
    %772 = arith.mulf %768, %771 : vector<1x64xf32>
    %773 = arith.mulf %765, %772 : vector<1x64xf32>
    %774 = vector.broadcast %773 : vector<1x64xf32> to vector<16x64xf32>
    %775 = arith.mulf %774, %19 : vector<16x64xf32>
    %cst_150 = arith.constant dense<0.000000e+00> : vector<16x128xf32>
    %776 = tpu.matmul %775, %20, %cst_150 {dimension_numbers = #tpu.dot_dimension_numbers<[1], [0], [0], [1], [0, 0, 1, 1], [], []>} : vector<16x64xf32>, vector<64x128xf32>, vector<16x128xf32> -> vector<16x128xf32>
    %777 = arith.subf %776, %13 : vector<16x128xf32>
    %778 = arith.mulf %777, %15 : vector<16x128xf32>
    %779 = arith.negf %778 : vector<16x128xf32>
    %780 = math.exp %779 : vector<16x128xf32>
    %cst_151 = arith.constant 1.000000e+00 : f32
    %781 = vector.broadcast %cst_151 : f32 to vector<16x128xf32>
    %782 = arith.addf %781, %780 : vector<16x128xf32>
    %783 = arith.divf %781, %782 : vector<16x128xf32>
    %784 = arith.mulf %17, %783 : vector<16x128xf32>
    %cst_152 = arith.constant dense<0.000000e+00> : vector<128xf32>
    %785 = vector.multi_reduction <add>, %784, %cst_152 [0] : vector<16x128xf32> to vector<128xf32>
    %786 = vector.shape_cast %785 : vector<128xf32> to vector<1x128xf32>
    %787 = arith.mulf %21, %773 : vector<1x64xf32>
    %788 = arith.addf %787, %672 : vector<1x64xf32>
    %789 = vector.extract_strided_slice %786 {offsets = [0, 0], sizes = [1, 64], strides = [1, 1]} : vector<1x128xf32> to vector<1x64xf32>
    %790 = arith.addf %788, %789 : vector<1x64xf32>
    %791 = vector.extract_strided_slice %786 {offsets = [0, 64], sizes = [1, 64], strides = [1, 1]} : vector<1x128xf32> to vector<1x64xf32>
    %792 = arith.addf %673, %791 : vector<1x64xf32>
    %793 = tpu.reciprocal %792 {approx = true} : vector<1x64xf32> -> vector<1x64xf32>
    %794 = arith.mulf %792, %793 : vector<1x64xf32>
    %cst_153 = arith.constant 2.000000e+00 : f32
    %795 = vector.broadcast %cst_153 : f32 to vector<1x64xf32>
    %796 = arith.subf %795, %794 : vector<1x64xf32>
    %797 = arith.mulf %793, %796 : vector<1x64xf32>
    %798 = arith.mulf %790, %797 : vector<1x64xf32>
    %799 = vector.broadcast %798 : vector<1x64xf32> to vector<16x64xf32>
    %800 = arith.mulf %799, %19 : vector<16x64xf32>
    %cst_154 = arith.constant dense<0.000000e+00> : vector<16x128xf32>
    %801 = tpu.matmul %800, %20, %cst_154 {dimension_numbers = #tpu.dot_dimension_numbers<[1], [0], [0], [1], [0, 0, 1, 1], [], []>} : vector<16x64xf32>, vector<64x128xf32>, vector<16x128xf32> -> vector<16x128xf32>
    %802 = arith.subf %801, %13 : vector<16x128xf32>
    %803 = arith.mulf %802, %15 : vector<16x128xf32>
    %804 = arith.negf %803 : vector<16x128xf32>
    %805 = math.exp %804 : vector<16x128xf32>
    %cst_155 = arith.constant 1.000000e+00 : f32
    %806 = vector.broadcast %cst_155 : f32 to vector<16x128xf32>
    %807 = arith.addf %806, %805 : vector<16x128xf32>
    %808 = arith.divf %806, %807 : vector<16x128xf32>
    %809 = arith.mulf %17, %808 : vector<16x128xf32>
    %cst_156 = arith.constant dense<0.000000e+00> : vector<128xf32>
    %810 = vector.multi_reduction <add>, %809, %cst_156 [0] : vector<16x128xf32> to vector<128xf32>
    %811 = vector.shape_cast %810 : vector<128xf32> to vector<1x128xf32>
    %812 = arith.mulf %21, %798 : vector<1x64xf32>
    %813 = arith.addf %812, %672 : vector<1x64xf32>
    %814 = vector.extract_strided_slice %811 {offsets = [0, 0], sizes = [1, 64], strides = [1, 1]} : vector<1x128xf32> to vector<1x64xf32>
    %815 = arith.addf %813, %814 : vector<1x64xf32>
    %816 = vector.extract_strided_slice %811 {offsets = [0, 64], sizes = [1, 64], strides = [1, 1]} : vector<1x128xf32> to vector<1x64xf32>
    %817 = arith.addf %673, %816 : vector<1x64xf32>
    %818 = tpu.reciprocal %817 {approx = true} : vector<1x64xf32> -> vector<1x64xf32>
    %819 = arith.mulf %817, %818 : vector<1x64xf32>
    %cst_157 = arith.constant 2.000000e+00 : f32
    %820 = vector.broadcast %cst_157 : f32 to vector<1x64xf32>
    %821 = arith.subf %820, %819 : vector<1x64xf32>
    %822 = arith.mulf %818, %821 : vector<1x64xf32>
    %823 = arith.mulf %815, %822 : vector<1x64xf32>
    %824 = vector.extract_strided_slice %57 {offsets = [0, 640], sizes = [1, 128], strides = [1, 1]} : vector<1x1024xf32> to vector<1x128xf32>
    %825 = vector.extract_strided_slice %824 {offsets = [0, 0], sizes = [1, 64], strides = [1, 1]} : vector<1x128xf32> to vector<1x64xf32>
    %826 = vector.extract_strided_slice %824 {offsets = [0, 64], sizes = [1, 64], strides = [1, 1]} : vector<1x128xf32> to vector<1x64xf32>
    %827 = vector.broadcast %823 : vector<1x64xf32> to vector<16x64xf32>
    %828 = arith.mulf %827, %19 : vector<16x64xf32>
    %cst_158 = arith.constant dense<0.000000e+00> : vector<16x128xf32>
    %829 = tpu.matmul %828, %20, %cst_158 {dimension_numbers = #tpu.dot_dimension_numbers<[1], [0], [0], [1], [0, 0, 1, 1], [], []>} : vector<16x64xf32>, vector<64x128xf32>, vector<16x128xf32> -> vector<16x128xf32>
    %830 = arith.subf %829, %13 : vector<16x128xf32>
    %831 = arith.mulf %830, %15 : vector<16x128xf32>
    %832 = arith.negf %831 : vector<16x128xf32>
    %833 = math.exp %832 : vector<16x128xf32>
    %cst_159 = arith.constant 1.000000e+00 : f32
    %834 = vector.broadcast %cst_159 : f32 to vector<16x128xf32>
    %835 = arith.addf %834, %833 : vector<16x128xf32>
    %836 = arith.divf %834, %835 : vector<16x128xf32>
    %837 = arith.mulf %17, %836 : vector<16x128xf32>
    %cst_160 = arith.constant dense<0.000000e+00> : vector<128xf32>
    %838 = vector.multi_reduction <add>, %837, %cst_160 [0] : vector<16x128xf32> to vector<128xf32>
    %839 = vector.shape_cast %838 : vector<128xf32> to vector<1x128xf32>
    %840 = arith.mulf %21, %823 : vector<1x64xf32>
    %841 = arith.addf %840, %825 : vector<1x64xf32>
    %842 = vector.extract_strided_slice %839 {offsets = [0, 0], sizes = [1, 64], strides = [1, 1]} : vector<1x128xf32> to vector<1x64xf32>
    %843 = arith.addf %841, %842 : vector<1x64xf32>
    %844 = vector.extract_strided_slice %839 {offsets = [0, 64], sizes = [1, 64], strides = [1, 1]} : vector<1x128xf32> to vector<1x64xf32>
    %845 = arith.addf %826, %844 : vector<1x64xf32>
    %846 = tpu.reciprocal %845 {approx = true} : vector<1x64xf32> -> vector<1x64xf32>
    %847 = arith.mulf %845, %846 : vector<1x64xf32>
    %cst_161 = arith.constant 2.000000e+00 : f32
    %848 = vector.broadcast %cst_161 : f32 to vector<1x64xf32>
    %849 = arith.subf %848, %847 : vector<1x64xf32>
    %850 = arith.mulf %846, %849 : vector<1x64xf32>
    %851 = arith.mulf %843, %850 : vector<1x64xf32>
    %852 = vector.broadcast %851 : vector<1x64xf32> to vector<16x64xf32>
    %853 = arith.mulf %852, %19 : vector<16x64xf32>
    %cst_162 = arith.constant dense<0.000000e+00> : vector<16x128xf32>
    %854 = tpu.matmul %853, %20, %cst_162 {dimension_numbers = #tpu.dot_dimension_numbers<[1], [0], [0], [1], [0, 0, 1, 1], [], []>} : vector<16x64xf32>, vector<64x128xf32>, vector<16x128xf32> -> vector<16x128xf32>
    %855 = arith.subf %854, %13 : vector<16x128xf32>
    %856 = arith.mulf %855, %15 : vector<16x128xf32>
    %857 = arith.negf %856 : vector<16x128xf32>
    %858 = math.exp %857 : vector<16x128xf32>
    %cst_163 = arith.constant 1.000000e+00 : f32
    %859 = vector.broadcast %cst_163 : f32 to vector<16x128xf32>
    %860 = arith.addf %859, %858 : vector<16x128xf32>
    %861 = arith.divf %859, %860 : vector<16x128xf32>
    %862 = arith.mulf %17, %861 : vector<16x128xf32>
    %cst_164 = arith.constant dense<0.000000e+00> : vector<128xf32>
    %863 = vector.multi_reduction <add>, %862, %cst_164 [0] : vector<16x128xf32> to vector<128xf32>
    %864 = vector.shape_cast %863 : vector<128xf32> to vector<1x128xf32>
    %865 = arith.mulf %21, %851 : vector<1x64xf32>
    %866 = arith.addf %865, %825 : vector<1x64xf32>
    %867 = vector.extract_strided_slice %864 {offsets = [0, 0], sizes = [1, 64], strides = [1, 1]} : vector<1x128xf32> to vector<1x64xf32>
    %868 = arith.addf %866, %867 : vector<1x64xf32>
    %869 = vector.extract_strided_slice %864 {offsets = [0, 64], sizes = [1, 64], strides = [1, 1]} : vector<1x128xf32> to vector<1x64xf32>
    %870 = arith.addf %826, %869 : vector<1x64xf32>
    %871 = tpu.reciprocal %870 {approx = true} : vector<1x64xf32> -> vector<1x64xf32>
    %872 = arith.mulf %870, %871 : vector<1x64xf32>
    %cst_165 = arith.constant 2.000000e+00 : f32
    %873 = vector.broadcast %cst_165 : f32 to vector<1x64xf32>
    %874 = arith.subf %873, %872 : vector<1x64xf32>
    %875 = arith.mulf %871, %874 : vector<1x64xf32>
    %876 = arith.mulf %868, %875 : vector<1x64xf32>
    %877 = vector.broadcast %876 : vector<1x64xf32> to vector<16x64xf32>
    %878 = arith.mulf %877, %19 : vector<16x64xf32>
    %cst_166 = arith.constant dense<0.000000e+00> : vector<16x128xf32>
    %879 = tpu.matmul %878, %20, %cst_166 {dimension_numbers = #tpu.dot_dimension_numbers<[1], [0], [0], [1], [0, 0, 1, 1], [], []>} : vector<16x64xf32>, vector<64x128xf32>, vector<16x128xf32> -> vector<16x128xf32>
    %880 = arith.subf %879, %13 : vector<16x128xf32>
    %881 = arith.mulf %880, %15 : vector<16x128xf32>
    %882 = arith.negf %881 : vector<16x128xf32>
    %883 = math.exp %882 : vector<16x128xf32>
    %cst_167 = arith.constant 1.000000e+00 : f32
    %884 = vector.broadcast %cst_167 : f32 to vector<16x128xf32>
    %885 = arith.addf %884, %883 : vector<16x128xf32>
    %886 = arith.divf %884, %885 : vector<16x128xf32>
    %887 = arith.mulf %17, %886 : vector<16x128xf32>
    %cst_168 = arith.constant dense<0.000000e+00> : vector<128xf32>
    %888 = vector.multi_reduction <add>, %887, %cst_168 [0] : vector<16x128xf32> to vector<128xf32>
    %889 = vector.shape_cast %888 : vector<128xf32> to vector<1x128xf32>
    %890 = arith.mulf %21, %876 : vector<1x64xf32>
    %891 = arith.addf %890, %825 : vector<1x64xf32>
    %892 = vector.extract_strided_slice %889 {offsets = [0, 0], sizes = [1, 64], strides = [1, 1]} : vector<1x128xf32> to vector<1x64xf32>
    %893 = arith.addf %891, %892 : vector<1x64xf32>
    %894 = vector.extract_strided_slice %889 {offsets = [0, 64], sizes = [1, 64], strides = [1, 1]} : vector<1x128xf32> to vector<1x64xf32>
    %895 = arith.addf %826, %894 : vector<1x64xf32>
    %896 = tpu.reciprocal %895 {approx = true} : vector<1x64xf32> -> vector<1x64xf32>
    %897 = arith.mulf %895, %896 : vector<1x64xf32>
    %cst_169 = arith.constant 2.000000e+00 : f32
    %898 = vector.broadcast %cst_169 : f32 to vector<1x64xf32>
    %899 = arith.subf %898, %897 : vector<1x64xf32>
    %900 = arith.mulf %896, %899 : vector<1x64xf32>
    %901 = arith.mulf %893, %900 : vector<1x64xf32>
    %902 = vector.broadcast %901 : vector<1x64xf32> to vector<16x64xf32>
    %903 = arith.mulf %902, %19 : vector<16x64xf32>
    %cst_170 = arith.constant dense<0.000000e+00> : vector<16x128xf32>
    %904 = tpu.matmul %903, %20, %cst_170 {dimension_numbers = #tpu.dot_dimension_numbers<[1], [0], [0], [1], [0, 0, 1, 1], [], []>} : vector<16x64xf32>, vector<64x128xf32>, vector<16x128xf32> -> vector<16x128xf32>
    %905 = arith.subf %904, %13 : vector<16x128xf32>
    %906 = arith.mulf %905, %15 : vector<16x128xf32>
    %907 = arith.negf %906 : vector<16x128xf32>
    %908 = math.exp %907 : vector<16x128xf32>
    %cst_171 = arith.constant 1.000000e+00 : f32
    %909 = vector.broadcast %cst_171 : f32 to vector<16x128xf32>
    %910 = arith.addf %909, %908 : vector<16x128xf32>
    %911 = arith.divf %909, %910 : vector<16x128xf32>
    %912 = arith.mulf %17, %911 : vector<16x128xf32>
    %cst_172 = arith.constant dense<0.000000e+00> : vector<128xf32>
    %913 = vector.multi_reduction <add>, %912, %cst_172 [0] : vector<16x128xf32> to vector<128xf32>
    %914 = vector.shape_cast %913 : vector<128xf32> to vector<1x128xf32>
    %915 = arith.mulf %21, %901 : vector<1x64xf32>
    %916 = arith.addf %915, %825 : vector<1x64xf32>
    %917 = vector.extract_strided_slice %914 {offsets = [0, 0], sizes = [1, 64], strides = [1, 1]} : vector<1x128xf32> to vector<1x64xf32>
    %918 = arith.addf %916, %917 : vector<1x64xf32>
    %919 = vector.extract_strided_slice %914 {offsets = [0, 64], sizes = [1, 64], strides = [1, 1]} : vector<1x128xf32> to vector<1x64xf32>
    %920 = arith.addf %826, %919 : vector<1x64xf32>
    %921 = tpu.reciprocal %920 {approx = true} : vector<1x64xf32> -> vector<1x64xf32>
    %922 = arith.mulf %920, %921 : vector<1x64xf32>
    %cst_173 = arith.constant 2.000000e+00 : f32
    %923 = vector.broadcast %cst_173 : f32 to vector<1x64xf32>
    %924 = arith.subf %923, %922 : vector<1x64xf32>
    %925 = arith.mulf %921, %924 : vector<1x64xf32>
    %926 = arith.mulf %918, %925 : vector<1x64xf32>
    %927 = vector.broadcast %926 : vector<1x64xf32> to vector<16x64xf32>
    %928 = arith.mulf %927, %19 : vector<16x64xf32>
    %cst_174 = arith.constant dense<0.000000e+00> : vector<16x128xf32>
    %929 = tpu.matmul %928, %20, %cst_174 {dimension_numbers = #tpu.dot_dimension_numbers<[1], [0], [0], [1], [0, 0, 1, 1], [], []>} : vector<16x64xf32>, vector<64x128xf32>, vector<16x128xf32> -> vector<16x128xf32>
    %930 = arith.subf %929, %13 : vector<16x128xf32>
    %931 = arith.mulf %930, %15 : vector<16x128xf32>
    %932 = arith.negf %931 : vector<16x128xf32>
    %933 = math.exp %932 : vector<16x128xf32>
    %cst_175 = arith.constant 1.000000e+00 : f32
    %934 = vector.broadcast %cst_175 : f32 to vector<16x128xf32>
    %935 = arith.addf %934, %933 : vector<16x128xf32>
    %936 = arith.divf %934, %935 : vector<16x128xf32>
    %937 = arith.mulf %17, %936 : vector<16x128xf32>
    %cst_176 = arith.constant dense<0.000000e+00> : vector<128xf32>
    %938 = vector.multi_reduction <add>, %937, %cst_176 [0] : vector<16x128xf32> to vector<128xf32>
    %939 = vector.shape_cast %938 : vector<128xf32> to vector<1x128xf32>
    %940 = arith.mulf %21, %926 : vector<1x64xf32>
    %941 = arith.addf %940, %825 : vector<1x64xf32>
    %942 = vector.extract_strided_slice %939 {offsets = [0, 0], sizes = [1, 64], strides = [1, 1]} : vector<1x128xf32> to vector<1x64xf32>
    %943 = arith.addf %941, %942 : vector<1x64xf32>
    %944 = vector.extract_strided_slice %939 {offsets = [0, 64], sizes = [1, 64], strides = [1, 1]} : vector<1x128xf32> to vector<1x64xf32>
    %945 = arith.addf %826, %944 : vector<1x64xf32>
    %946 = tpu.reciprocal %945 {approx = true} : vector<1x64xf32> -> vector<1x64xf32>
    %947 = arith.mulf %945, %946 : vector<1x64xf32>
    %cst_177 = arith.constant 2.000000e+00 : f32
    %948 = vector.broadcast %cst_177 : f32 to vector<1x64xf32>
    %949 = arith.subf %948, %947 : vector<1x64xf32>
    %950 = arith.mulf %946, %949 : vector<1x64xf32>
    %951 = arith.mulf %943, %950 : vector<1x64xf32>
    %952 = vector.broadcast %951 : vector<1x64xf32> to vector<16x64xf32>
    %953 = arith.mulf %952, %19 : vector<16x64xf32>
    %cst_178 = arith.constant dense<0.000000e+00> : vector<16x128xf32>
    %954 = tpu.matmul %953, %20, %cst_178 {dimension_numbers = #tpu.dot_dimension_numbers<[1], [0], [0], [1], [0, 0, 1, 1], [], []>} : vector<16x64xf32>, vector<64x128xf32>, vector<16x128xf32> -> vector<16x128xf32>
    %955 = arith.subf %954, %13 : vector<16x128xf32>
    %956 = arith.mulf %955, %15 : vector<16x128xf32>
    %957 = arith.negf %956 : vector<16x128xf32>
    %958 = math.exp %957 : vector<16x128xf32>
    %cst_179 = arith.constant 1.000000e+00 : f32
    %959 = vector.broadcast %cst_179 : f32 to vector<16x128xf32>
    %960 = arith.addf %959, %958 : vector<16x128xf32>
    %961 = arith.divf %959, %960 : vector<16x128xf32>
    %962 = arith.mulf %17, %961 : vector<16x128xf32>
    %cst_180 = arith.constant dense<0.000000e+00> : vector<128xf32>
    %963 = vector.multi_reduction <add>, %962, %cst_180 [0] : vector<16x128xf32> to vector<128xf32>
    %964 = vector.shape_cast %963 : vector<128xf32> to vector<1x128xf32>
    %965 = arith.mulf %21, %951 : vector<1x64xf32>
    %966 = arith.addf %965, %825 : vector<1x64xf32>
    %967 = vector.extract_strided_slice %964 {offsets = [0, 0], sizes = [1, 64], strides = [1, 1]} : vector<1x128xf32> to vector<1x64xf32>
    %968 = arith.addf %966, %967 : vector<1x64xf32>
    %969 = vector.extract_strided_slice %964 {offsets = [0, 64], sizes = [1, 64], strides = [1, 1]} : vector<1x128xf32> to vector<1x64xf32>
    %970 = arith.addf %826, %969 : vector<1x64xf32>
    %971 = tpu.reciprocal %970 {approx = true} : vector<1x64xf32> -> vector<1x64xf32>
    %972 = arith.mulf %970, %971 : vector<1x64xf32>
    %cst_181 = arith.constant 2.000000e+00 : f32
    %973 = vector.broadcast %cst_181 : f32 to vector<1x64xf32>
    %974 = arith.subf %973, %972 : vector<1x64xf32>
    %975 = arith.mulf %971, %974 : vector<1x64xf32>
    %976 = arith.mulf %968, %975 : vector<1x64xf32>
    %977 = vector.extract_strided_slice %57 {offsets = [0, 768], sizes = [1, 128], strides = [1, 1]} : vector<1x1024xf32> to vector<1x128xf32>
    %978 = vector.extract_strided_slice %977 {offsets = [0, 0], sizes = [1, 64], strides = [1, 1]} : vector<1x128xf32> to vector<1x64xf32>
    %979 = vector.extract_strided_slice %977 {offsets = [0, 64], sizes = [1, 64], strides = [1, 1]} : vector<1x128xf32> to vector<1x64xf32>
    %980 = vector.broadcast %976 : vector<1x64xf32> to vector<16x64xf32>
    %981 = arith.mulf %980, %19 : vector<16x64xf32>
    %cst_182 = arith.constant dense<0.000000e+00> : vector<16x128xf32>
    %982 = tpu.matmul %981, %20, %cst_182 {dimension_numbers = #tpu.dot_dimension_numbers<[1], [0], [0], [1], [0, 0, 1, 1], [], []>} : vector<16x64xf32>, vector<64x128xf32>, vector<16x128xf32> -> vector<16x128xf32>
    %983 = arith.subf %982, %13 : vector<16x128xf32>
    %984 = arith.mulf %983, %15 : vector<16x128xf32>
    %985 = arith.negf %984 : vector<16x128xf32>
    %986 = math.exp %985 : vector<16x128xf32>
    %cst_183 = arith.constant 1.000000e+00 : f32
    %987 = vector.broadcast %cst_183 : f32 to vector<16x128xf32>
    %988 = arith.addf %987, %986 : vector<16x128xf32>
    %989 = arith.divf %987, %988 : vector<16x128xf32>
    %990 = arith.mulf %17, %989 : vector<16x128xf32>
    %cst_184 = arith.constant dense<0.000000e+00> : vector<128xf32>
    %991 = vector.multi_reduction <add>, %990, %cst_184 [0] : vector<16x128xf32> to vector<128xf32>
    %992 = vector.shape_cast %991 : vector<128xf32> to vector<1x128xf32>
    %993 = arith.mulf %21, %976 : vector<1x64xf32>
    %994 = arith.addf %993, %978 : vector<1x64xf32>
    %995 = vector.extract_strided_slice %992 {offsets = [0, 0], sizes = [1, 64], strides = [1, 1]} : vector<1x128xf32> to vector<1x64xf32>
    %996 = arith.addf %994, %995 : vector<1x64xf32>
    %997 = vector.extract_strided_slice %992 {offsets = [0, 64], sizes = [1, 64], strides = [1, 1]} : vector<1x128xf32> to vector<1x64xf32>
    %998 = arith.addf %979, %997 : vector<1x64xf32>
    %999 = tpu.reciprocal %998 {approx = true} : vector<1x64xf32> -> vector<1x64xf32>
    %1000 = arith.mulf %998, %999 : vector<1x64xf32>
    %cst_185 = arith.constant 2.000000e+00 : f32
    %1001 = vector.broadcast %cst_185 : f32 to vector<1x64xf32>
    %1002 = arith.subf %1001, %1000 : vector<1x64xf32>
    %1003 = arith.mulf %999, %1002 : vector<1x64xf32>
    %1004 = arith.mulf %996, %1003 : vector<1x64xf32>
    %1005 = vector.broadcast %1004 : vector<1x64xf32> to vector<16x64xf32>
    %1006 = arith.mulf %1005, %19 : vector<16x64xf32>
    %cst_186 = arith.constant dense<0.000000e+00> : vector<16x128xf32>
    %1007 = tpu.matmul %1006, %20, %cst_186 {dimension_numbers = #tpu.dot_dimension_numbers<[1], [0], [0], [1], [0, 0, 1, 1], [], []>} : vector<16x64xf32>, vector<64x128xf32>, vector<16x128xf32> -> vector<16x128xf32>
    %1008 = arith.subf %1007, %13 : vector<16x128xf32>
    %1009 = arith.mulf %1008, %15 : vector<16x128xf32>
    %1010 = arith.negf %1009 : vector<16x128xf32>
    %1011 = math.exp %1010 : vector<16x128xf32>
    %cst_187 = arith.constant 1.000000e+00 : f32
    %1012 = vector.broadcast %cst_187 : f32 to vector<16x128xf32>
    %1013 = arith.addf %1012, %1011 : vector<16x128xf32>
    %1014 = arith.divf %1012, %1013 : vector<16x128xf32>
    %1015 = arith.mulf %17, %1014 : vector<16x128xf32>
    %cst_188 = arith.constant dense<0.000000e+00> : vector<128xf32>
    %1016 = vector.multi_reduction <add>, %1015, %cst_188 [0] : vector<16x128xf32> to vector<128xf32>
    %1017 = vector.shape_cast %1016 : vector<128xf32> to vector<1x128xf32>
    %1018 = arith.mulf %21, %1004 : vector<1x64xf32>
    %1019 = arith.addf %1018, %978 : vector<1x64xf32>
    %1020 = vector.extract_strided_slice %1017 {offsets = [0, 0], sizes = [1, 64], strides = [1, 1]} : vector<1x128xf32> to vector<1x64xf32>
    %1021 = arith.addf %1019, %1020 : vector<1x64xf32>
    %1022 = vector.extract_strided_slice %1017 {offsets = [0, 64], sizes = [1, 64], strides = [1, 1]} : vector<1x128xf32> to vector<1x64xf32>
    %1023 = arith.addf %979, %1022 : vector<1x64xf32>
    %1024 = tpu.reciprocal %1023 {approx = true} : vector<1x64xf32> -> vector<1x64xf32>
    %1025 = arith.mulf %1023, %1024 : vector<1x64xf32>
    %cst_189 = arith.constant 2.000000e+00 : f32
    %1026 = vector.broadcast %cst_189 : f32 to vector<1x64xf32>
    %1027 = arith.subf %1026, %1025 : vector<1x64xf32>
    %1028 = arith.mulf %1024, %1027 : vector<1x64xf32>
    %1029 = arith.mulf %1021, %1028 : vector<1x64xf32>
    %1030 = vector.broadcast %1029 : vector<1x64xf32> to vector<16x64xf32>
    %1031 = arith.mulf %1030, %19 : vector<16x64xf32>
    %cst_190 = arith.constant dense<0.000000e+00> : vector<16x128xf32>
    %1032 = tpu.matmul %1031, %20, %cst_190 {dimension_numbers = #tpu.dot_dimension_numbers<[1], [0], [0], [1], [0, 0, 1, 1], [], []>} : vector<16x64xf32>, vector<64x128xf32>, vector<16x128xf32> -> vector<16x128xf32>
    %1033 = arith.subf %1032, %13 : vector<16x128xf32>
    %1034 = arith.mulf %1033, %15 : vector<16x128xf32>
    %1035 = arith.negf %1034 : vector<16x128xf32>
    %1036 = math.exp %1035 : vector<16x128xf32>
    %cst_191 = arith.constant 1.000000e+00 : f32
    %1037 = vector.broadcast %cst_191 : f32 to vector<16x128xf32>
    %1038 = arith.addf %1037, %1036 : vector<16x128xf32>
    %1039 = arith.divf %1037, %1038 : vector<16x128xf32>
    %1040 = arith.mulf %17, %1039 : vector<16x128xf32>
    %cst_192 = arith.constant dense<0.000000e+00> : vector<128xf32>
    %1041 = vector.multi_reduction <add>, %1040, %cst_192 [0] : vector<16x128xf32> to vector<128xf32>
    %1042 = vector.shape_cast %1041 : vector<128xf32> to vector<1x128xf32>
    %1043 = arith.mulf %21, %1029 : vector<1x64xf32>
    %1044 = arith.addf %1043, %978 : vector<1x64xf32>
    %1045 = vector.extract_strided_slice %1042 {offsets = [0, 0], sizes = [1, 64], strides = [1, 1]} : vector<1x128xf32> to vector<1x64xf32>
    %1046 = arith.addf %1044, %1045 : vector<1x64xf32>
    %1047 = vector.extract_strided_slice %1042 {offsets = [0, 64], sizes = [1, 64], strides = [1, 1]} : vector<1x128xf32> to vector<1x64xf32>
    %1048 = arith.addf %979, %1047 : vector<1x64xf32>
    %1049 = tpu.reciprocal %1048 {approx = true} : vector<1x64xf32> -> vector<1x64xf32>
    %1050 = arith.mulf %1048, %1049 : vector<1x64xf32>
    %cst_193 = arith.constant 2.000000e+00 : f32
    %1051 = vector.broadcast %cst_193 : f32 to vector<1x64xf32>
    %1052 = arith.subf %1051, %1050 : vector<1x64xf32>
    %1053 = arith.mulf %1049, %1052 : vector<1x64xf32>
    %1054 = arith.mulf %1046, %1053 : vector<1x64xf32>
    %1055 = vector.broadcast %1054 : vector<1x64xf32> to vector<16x64xf32>
    %1056 = arith.mulf %1055, %19 : vector<16x64xf32>
    %cst_194 = arith.constant dense<0.000000e+00> : vector<16x128xf32>
    %1057 = tpu.matmul %1056, %20, %cst_194 {dimension_numbers = #tpu.dot_dimension_numbers<[1], [0], [0], [1], [0, 0, 1, 1], [], []>} : vector<16x64xf32>, vector<64x128xf32>, vector<16x128xf32> -> vector<16x128xf32>
    %1058 = arith.subf %1057, %13 : vector<16x128xf32>
    %1059 = arith.mulf %1058, %15 : vector<16x128xf32>
    %1060 = arith.negf %1059 : vector<16x128xf32>
    %1061 = math.exp %1060 : vector<16x128xf32>
    %cst_195 = arith.constant 1.000000e+00 : f32
    %1062 = vector.broadcast %cst_195 : f32 to vector<16x128xf32>
    %1063 = arith.addf %1062, %1061 : vector<16x128xf32>
    %1064 = arith.divf %1062, %1063 : vector<16x128xf32>
    %1065 = arith.mulf %17, %1064 : vector<16x128xf32>
    %cst_196 = arith.constant dense<0.000000e+00> : vector<128xf32>
    %1066 = vector.multi_reduction <add>, %1065, %cst_196 [0] : vector<16x128xf32> to vector<128xf32>
    %1067 = vector.shape_cast %1066 : vector<128xf32> to vector<1x128xf32>
    %1068 = arith.mulf %21, %1054 : vector<1x64xf32>
    %1069 = arith.addf %1068, %978 : vector<1x64xf32>
    %1070 = vector.extract_strided_slice %1067 {offsets = [0, 0], sizes = [1, 64], strides = [1, 1]} : vector<1x128xf32> to vector<1x64xf32>
    %1071 = arith.addf %1069, %1070 : vector<1x64xf32>
    %1072 = vector.extract_strided_slice %1067 {offsets = [0, 64], sizes = [1, 64], strides = [1, 1]} : vector<1x128xf32> to vector<1x64xf32>
    %1073 = arith.addf %979, %1072 : vector<1x64xf32>
    %1074 = tpu.reciprocal %1073 {approx = true} : vector<1x64xf32> -> vector<1x64xf32>
    %1075 = arith.mulf %1073, %1074 : vector<1x64xf32>
    %cst_197 = arith.constant 2.000000e+00 : f32
    %1076 = vector.broadcast %cst_197 : f32 to vector<1x64xf32>
    %1077 = arith.subf %1076, %1075 : vector<1x64xf32>
    %1078 = arith.mulf %1074, %1077 : vector<1x64xf32>
    %1079 = arith.mulf %1071, %1078 : vector<1x64xf32>
    %1080 = vector.broadcast %1079 : vector<1x64xf32> to vector<16x64xf32>
    %1081 = arith.mulf %1080, %19 : vector<16x64xf32>
    %cst_198 = arith.constant dense<0.000000e+00> : vector<16x128xf32>
    %1082 = tpu.matmul %1081, %20, %cst_198 {dimension_numbers = #tpu.dot_dimension_numbers<[1], [0], [0], [1], [0, 0, 1, 1], [], []>} : vector<16x64xf32>, vector<64x128xf32>, vector<16x128xf32> -> vector<16x128xf32>
    %1083 = arith.subf %1082, %13 : vector<16x128xf32>
    %1084 = arith.mulf %1083, %15 : vector<16x128xf32>
    %1085 = arith.negf %1084 : vector<16x128xf32>
    %1086 = math.exp %1085 : vector<16x128xf32>
    %cst_199 = arith.constant 1.000000e+00 : f32
    %1087 = vector.broadcast %cst_199 : f32 to vector<16x128xf32>
    %1088 = arith.addf %1087, %1086 : vector<16x128xf32>
    %1089 = arith.divf %1087, %1088 : vector<16x128xf32>
    %1090 = arith.mulf %17, %1089 : vector<16x128xf32>
    %cst_200 = arith.constant dense<0.000000e+00> : vector<128xf32>
    %1091 = vector.multi_reduction <add>, %1090, %cst_200 [0] : vector<16x128xf32> to vector<128xf32>
    %1092 = vector.shape_cast %1091 : vector<128xf32> to vector<1x128xf32>
    %1093 = arith.mulf %21, %1079 : vector<1x64xf32>
    %1094 = arith.addf %1093, %978 : vector<1x64xf32>
    %1095 = vector.extract_strided_slice %1092 {offsets = [0, 0], sizes = [1, 64], strides = [1, 1]} : vector<1x128xf32> to vector<1x64xf32>
    %1096 = arith.addf %1094, %1095 : vector<1x64xf32>
    %1097 = vector.extract_strided_slice %1092 {offsets = [0, 64], sizes = [1, 64], strides = [1, 1]} : vector<1x128xf32> to vector<1x64xf32>
    %1098 = arith.addf %979, %1097 : vector<1x64xf32>
    %1099 = tpu.reciprocal %1098 {approx = true} : vector<1x64xf32> -> vector<1x64xf32>
    %1100 = arith.mulf %1098, %1099 : vector<1x64xf32>
    %cst_201 = arith.constant 2.000000e+00 : f32
    %1101 = vector.broadcast %cst_201 : f32 to vector<1x64xf32>
    %1102 = arith.subf %1101, %1100 : vector<1x64xf32>
    %1103 = arith.mulf %1099, %1102 : vector<1x64xf32>
    %1104 = arith.mulf %1096, %1103 : vector<1x64xf32>
    %1105 = vector.broadcast %1104 : vector<1x64xf32> to vector<16x64xf32>
    %1106 = arith.mulf %1105, %19 : vector<16x64xf32>
    %cst_202 = arith.constant dense<0.000000e+00> : vector<16x128xf32>
    %1107 = tpu.matmul %1106, %20, %cst_202 {dimension_numbers = #tpu.dot_dimension_numbers<[1], [0], [0], [1], [0, 0, 1, 1], [], []>} : vector<16x64xf32>, vector<64x128xf32>, vector<16x128xf32> -> vector<16x128xf32>
    %1108 = arith.subf %1107, %13 : vector<16x128xf32>
    %1109 = arith.mulf %1108, %15 : vector<16x128xf32>
    %1110 = arith.negf %1109 : vector<16x128xf32>
    %1111 = math.exp %1110 : vector<16x128xf32>
    %cst_203 = arith.constant 1.000000e+00 : f32
    %1112 = vector.broadcast %cst_203 : f32 to vector<16x128xf32>
    %1113 = arith.addf %1112, %1111 : vector<16x128xf32>
    %1114 = arith.divf %1112, %1113 : vector<16x128xf32>
    %1115 = arith.mulf %17, %1114 : vector<16x128xf32>
    %cst_204 = arith.constant dense<0.000000e+00> : vector<128xf32>
    %1116 = vector.multi_reduction <add>, %1115, %cst_204 [0] : vector<16x128xf32> to vector<128xf32>
    %1117 = vector.shape_cast %1116 : vector<128xf32> to vector<1x128xf32>
    %1118 = arith.mulf %21, %1104 : vector<1x64xf32>
    %1119 = arith.addf %1118, %978 : vector<1x64xf32>
    %1120 = vector.extract_strided_slice %1117 {offsets = [0, 0], sizes = [1, 64], strides = [1, 1]} : vector<1x128xf32> to vector<1x64xf32>
    %1121 = arith.addf %1119, %1120 : vector<1x64xf32>
    %1122 = vector.extract_strided_slice %1117 {offsets = [0, 64], sizes = [1, 64], strides = [1, 1]} : vector<1x128xf32> to vector<1x64xf32>
    %1123 = arith.addf %979, %1122 : vector<1x64xf32>
    %1124 = tpu.reciprocal %1123 {approx = true} : vector<1x64xf32> -> vector<1x64xf32>
    %1125 = arith.mulf %1123, %1124 : vector<1x64xf32>
    %cst_205 = arith.constant 2.000000e+00 : f32
    %1126 = vector.broadcast %cst_205 : f32 to vector<1x64xf32>
    %1127 = arith.subf %1126, %1125 : vector<1x64xf32>
    %1128 = arith.mulf %1124, %1127 : vector<1x64xf32>
    %1129 = arith.mulf %1121, %1128 : vector<1x64xf32>
    %1130 = vector.extract_strided_slice %57 {offsets = [0, 896], sizes = [1, 128], strides = [1, 1]} : vector<1x1024xf32> to vector<1x128xf32>
    %1131 = vector.extract_strided_slice %1130 {offsets = [0, 0], sizes = [1, 64], strides = [1, 1]} : vector<1x128xf32> to vector<1x64xf32>
    %1132 = vector.extract_strided_slice %1130 {offsets = [0, 64], sizes = [1, 64], strides = [1, 1]} : vector<1x128xf32> to vector<1x64xf32>
    %1133 = vector.broadcast %1129 : vector<1x64xf32> to vector<16x64xf32>
    %1134 = arith.mulf %1133, %19 : vector<16x64xf32>
    %cst_206 = arith.constant dense<0.000000e+00> : vector<16x128xf32>
    %1135 = tpu.matmul %1134, %20, %cst_206 {dimension_numbers = #tpu.dot_dimension_numbers<[1], [0], [0], [1], [0, 0, 1, 1], [], []>} : vector<16x64xf32>, vector<64x128xf32>, vector<16x128xf32> -> vector<16x128xf32>
    %1136 = arith.subf %1135, %13 : vector<16x128xf32>
    %1137 = arith.mulf %1136, %15 : vector<16x128xf32>
    %1138 = arith.negf %1137 : vector<16x128xf32>
    %1139 = math.exp %1138 : vector<16x128xf32>
    %cst_207 = arith.constant 1.000000e+00 : f32
    %1140 = vector.broadcast %cst_207 : f32 to vector<16x128xf32>
    %1141 = arith.addf %1140, %1139 : vector<16x128xf32>
    %1142 = arith.divf %1140, %1141 : vector<16x128xf32>
    %1143 = arith.mulf %17, %1142 : vector<16x128xf32>
    %cst_208 = arith.constant dense<0.000000e+00> : vector<128xf32>
    %1144 = vector.multi_reduction <add>, %1143, %cst_208 [0] : vector<16x128xf32> to vector<128xf32>
    %1145 = vector.shape_cast %1144 : vector<128xf32> to vector<1x128xf32>
    %1146 = arith.mulf %21, %1129 : vector<1x64xf32>
    %1147 = arith.addf %1146, %1131 : vector<1x64xf32>
    %1148 = vector.extract_strided_slice %1145 {offsets = [0, 0], sizes = [1, 64], strides = [1, 1]} : vector<1x128xf32> to vector<1x64xf32>
    %1149 = arith.addf %1147, %1148 : vector<1x64xf32>
    %1150 = vector.extract_strided_slice %1145 {offsets = [0, 64], sizes = [1, 64], strides = [1, 1]} : vector<1x128xf32> to vector<1x64xf32>
    %1151 = arith.addf %1132, %1150 : vector<1x64xf32>
    %1152 = tpu.reciprocal %1151 {approx = true} : vector<1x64xf32> -> vector<1x64xf32>
    %1153 = arith.mulf %1151, %1152 : vector<1x64xf32>
    %cst_209 = arith.constant 2.000000e+00 : f32
    %1154 = vector.broadcast %cst_209 : f32 to vector<1x64xf32>
    %1155 = arith.subf %1154, %1153 : vector<1x64xf32>
    %1156 = arith.mulf %1152, %1155 : vector<1x64xf32>
    %1157 = arith.mulf %1149, %1156 : vector<1x64xf32>
    %1158 = vector.broadcast %1157 : vector<1x64xf32> to vector<16x64xf32>
    %1159 = arith.mulf %1158, %19 : vector<16x64xf32>
    %cst_210 = arith.constant dense<0.000000e+00> : vector<16x128xf32>
    %1160 = tpu.matmul %1159, %20, %cst_210 {dimension_numbers = #tpu.dot_dimension_numbers<[1], [0], [0], [1], [0, 0, 1, 1], [], []>} : vector<16x64xf32>, vector<64x128xf32>, vector<16x128xf32> -> vector<16x128xf32>
    %1161 = arith.subf %1160, %13 : vector<16x128xf32>
    %1162 = arith.mulf %1161, %15 : vector<16x128xf32>
    %1163 = arith.negf %1162 : vector<16x128xf32>
    %1164 = math.exp %1163 : vector<16x128xf32>
    %cst_211 = arith.constant 1.000000e+00 : f32
    %1165 = vector.broadcast %cst_211 : f32 to vector<16x128xf32>
    %1166 = arith.addf %1165, %1164 : vector<16x128xf32>
    %1167 = arith.divf %1165, %1166 : vector<16x128xf32>
    %1168 = arith.mulf %17, %1167 : vector<16x128xf32>
    %cst_212 = arith.constant dense<0.000000e+00> : vector<128xf32>
    %1169 = vector.multi_reduction <add>, %1168, %cst_212 [0] : vector<16x128xf32> to vector<128xf32>
    %1170 = vector.shape_cast %1169 : vector<128xf32> to vector<1x128xf32>
    %1171 = arith.mulf %21, %1157 : vector<1x64xf32>
    %1172 = arith.addf %1171, %1131 : vector<1x64xf32>
    %1173 = vector.extract_strided_slice %1170 {offsets = [0, 0], sizes = [1, 64], strides = [1, 1]} : vector<1x128xf32> to vector<1x64xf32>
    %1174 = arith.addf %1172, %1173 : vector<1x64xf32>
    %1175 = vector.extract_strided_slice %1170 {offsets = [0, 64], sizes = [1, 64], strides = [1, 1]} : vector<1x128xf32> to vector<1x64xf32>
    %1176 = arith.addf %1132, %1175 : vector<1x64xf32>
    %1177 = tpu.reciprocal %1176 {approx = true} : vector<1x64xf32> -> vector<1x64xf32>
    %1178 = arith.mulf %1176, %1177 : vector<1x64xf32>
    %cst_213 = arith.constant 2.000000e+00 : f32
    %1179 = vector.broadcast %cst_213 : f32 to vector<1x64xf32>
    %1180 = arith.subf %1179, %1178 : vector<1x64xf32>
    %1181 = arith.mulf %1177, %1180 : vector<1x64xf32>
    %1182 = arith.mulf %1174, %1181 : vector<1x64xf32>
    %1183 = vector.broadcast %1182 : vector<1x64xf32> to vector<16x64xf32>
    %1184 = arith.mulf %1183, %19 : vector<16x64xf32>
    %cst_214 = arith.constant dense<0.000000e+00> : vector<16x128xf32>
    %1185 = tpu.matmul %1184, %20, %cst_214 {dimension_numbers = #tpu.dot_dimension_numbers<[1], [0], [0], [1], [0, 0, 1, 1], [], []>} : vector<16x64xf32>, vector<64x128xf32>, vector<16x128xf32> -> vector<16x128xf32>
    %1186 = arith.subf %1185, %13 : vector<16x128xf32>
    %1187 = arith.mulf %1186, %15 : vector<16x128xf32>
    %1188 = arith.negf %1187 : vector<16x128xf32>
    %1189 = math.exp %1188 : vector<16x128xf32>
    %cst_215 = arith.constant 1.000000e+00 : f32
    %1190 = vector.broadcast %cst_215 : f32 to vector<16x128xf32>
    %1191 = arith.addf %1190, %1189 : vector<16x128xf32>
    %1192 = arith.divf %1190, %1191 : vector<16x128xf32>
    %1193 = arith.mulf %17, %1192 : vector<16x128xf32>
    %cst_216 = arith.constant dense<0.000000e+00> : vector<128xf32>
    %1194 = vector.multi_reduction <add>, %1193, %cst_216 [0] : vector<16x128xf32> to vector<128xf32>
    %1195 = vector.shape_cast %1194 : vector<128xf32> to vector<1x128xf32>
    %1196 = arith.mulf %21, %1182 : vector<1x64xf32>
    %1197 = arith.addf %1196, %1131 : vector<1x64xf32>
    %1198 = vector.extract_strided_slice %1195 {offsets = [0, 0], sizes = [1, 64], strides = [1, 1]} : vector<1x128xf32> to vector<1x64xf32>
    %1199 = arith.addf %1197, %1198 : vector<1x64xf32>
    %1200 = vector.extract_strided_slice %1195 {offsets = [0, 64], sizes = [1, 64], strides = [1, 1]} : vector<1x128xf32> to vector<1x64xf32>
    %1201 = arith.addf %1132, %1200 : vector<1x64xf32>
    %1202 = tpu.reciprocal %1201 {approx = true} : vector<1x64xf32> -> vector<1x64xf32>
    %1203 = arith.mulf %1201, %1202 : vector<1x64xf32>
    %cst_217 = arith.constant 2.000000e+00 : f32
    %1204 = vector.broadcast %cst_217 : f32 to vector<1x64xf32>
    %1205 = arith.subf %1204, %1203 : vector<1x64xf32>
    %1206 = arith.mulf %1202, %1205 : vector<1x64xf32>
    %1207 = arith.mulf %1199, %1206 : vector<1x64xf32>
    %1208 = vector.broadcast %1207 : vector<1x64xf32> to vector<16x64xf32>
    %1209 = arith.mulf %1208, %19 : vector<16x64xf32>
    %cst_218 = arith.constant dense<0.000000e+00> : vector<16x128xf32>
    %1210 = tpu.matmul %1209, %20, %cst_218 {dimension_numbers = #tpu.dot_dimension_numbers<[1], [0], [0], [1], [0, 0, 1, 1], [], []>} : vector<16x64xf32>, vector<64x128xf32>, vector<16x128xf32> -> vector<16x128xf32>
    %1211 = arith.subf %1210, %13 : vector<16x128xf32>
    %1212 = arith.mulf %1211, %15 : vector<16x128xf32>
    %1213 = arith.negf %1212 : vector<16x128xf32>
    %1214 = math.exp %1213 : vector<16x128xf32>
    %cst_219 = arith.constant 1.000000e+00 : f32
    %1215 = vector.broadcast %cst_219 : f32 to vector<16x128xf32>
    %1216 = arith.addf %1215, %1214 : vector<16x128xf32>
    %1217 = arith.divf %1215, %1216 : vector<16x128xf32>
    %1218 = arith.mulf %17, %1217 : vector<16x128xf32>
    %cst_220 = arith.constant dense<0.000000e+00> : vector<128xf32>
    %1219 = vector.multi_reduction <add>, %1218, %cst_220 [0] : vector<16x128xf32> to vector<128xf32>
    %1220 = vector.shape_cast %1219 : vector<128xf32> to vector<1x128xf32>
    %1221 = arith.mulf %21, %1207 : vector<1x64xf32>
    %1222 = arith.addf %1221, %1131 : vector<1x64xf32>
    %1223 = vector.extract_strided_slice %1220 {offsets = [0, 0], sizes = [1, 64], strides = [1, 1]} : vector<1x128xf32> to vector<1x64xf32>
    %1224 = arith.addf %1222, %1223 : vector<1x64xf32>
    %1225 = vector.extract_strided_slice %1220 {offsets = [0, 64], sizes = [1, 64], strides = [1, 1]} : vector<1x128xf32> to vector<1x64xf32>
    %1226 = arith.addf %1132, %1225 : vector<1x64xf32>
    %1227 = tpu.reciprocal %1226 {approx = true} : vector<1x64xf32> -> vector<1x64xf32>
    %1228 = arith.mulf %1226, %1227 : vector<1x64xf32>
    %cst_221 = arith.constant 2.000000e+00 : f32
    %1229 = vector.broadcast %cst_221 : f32 to vector<1x64xf32>
    %1230 = arith.subf %1229, %1228 : vector<1x64xf32>
    %1231 = arith.mulf %1227, %1230 : vector<1x64xf32>
    %1232 = arith.mulf %1224, %1231 : vector<1x64xf32>
    %1233 = vector.broadcast %1232 : vector<1x64xf32> to vector<16x64xf32>
    %1234 = arith.mulf %1233, %19 : vector<16x64xf32>
    %cst_222 = arith.constant dense<0.000000e+00> : vector<16x128xf32>
    %1235 = tpu.matmul %1234, %20, %cst_222 {dimension_numbers = #tpu.dot_dimension_numbers<[1], [0], [0], [1], [0, 0, 1, 1], [], []>} : vector<16x64xf32>, vector<64x128xf32>, vector<16x128xf32> -> vector<16x128xf32>
    %1236 = arith.subf %1235, %13 : vector<16x128xf32>
    %1237 = arith.mulf %1236, %15 : vector<16x128xf32>
    %1238 = arith.negf %1237 : vector<16x128xf32>
    %1239 = math.exp %1238 : vector<16x128xf32>
    %cst_223 = arith.constant 1.000000e+00 : f32
    %1240 = vector.broadcast %cst_223 : f32 to vector<16x128xf32>
    %1241 = arith.addf %1240, %1239 : vector<16x128xf32>
    %1242 = arith.divf %1240, %1241 : vector<16x128xf32>
    %1243 = arith.mulf %17, %1242 : vector<16x128xf32>
    %cst_224 = arith.constant dense<0.000000e+00> : vector<128xf32>
    %1244 = vector.multi_reduction <add>, %1243, %cst_224 [0] : vector<16x128xf32> to vector<128xf32>
    %1245 = vector.shape_cast %1244 : vector<128xf32> to vector<1x128xf32>
    %1246 = arith.mulf %21, %1232 : vector<1x64xf32>
    %1247 = arith.addf %1246, %1131 : vector<1x64xf32>
    %1248 = vector.extract_strided_slice %1245 {offsets = [0, 0], sizes = [1, 64], strides = [1, 1]} : vector<1x128xf32> to vector<1x64xf32>
    %1249 = arith.addf %1247, %1248 : vector<1x64xf32>
    %1250 = vector.extract_strided_slice %1245 {offsets = [0, 64], sizes = [1, 64], strides = [1, 1]} : vector<1x128xf32> to vector<1x64xf32>
    %1251 = arith.addf %1132, %1250 : vector<1x64xf32>
    %1252 = tpu.reciprocal %1251 {approx = true} : vector<1x64xf32> -> vector<1x64xf32>
    %1253 = arith.mulf %1251, %1252 : vector<1x64xf32>
    %cst_225 = arith.constant 2.000000e+00 : f32
    %1254 = vector.broadcast %cst_225 : f32 to vector<1x64xf32>
    %1255 = arith.subf %1254, %1253 : vector<1x64xf32>
    %1256 = arith.mulf %1252, %1255 : vector<1x64xf32>
    %1257 = arith.mulf %1249, %1256 : vector<1x64xf32>
    %1258 = vector.broadcast %1257 : vector<1x64xf32> to vector<16x64xf32>
    %1259 = arith.mulf %1258, %19 : vector<16x64xf32>
    %cst_226 = arith.constant dense<0.000000e+00> : vector<16x128xf32>
    %1260 = tpu.matmul %1259, %20, %cst_226 {dimension_numbers = #tpu.dot_dimension_numbers<[1], [0], [0], [1], [0, 0, 1, 1], [], []>} : vector<16x64xf32>, vector<64x128xf32>, vector<16x128xf32> -> vector<16x128xf32>
    %1261 = arith.subf %1260, %13 : vector<16x128xf32>
    %1262 = arith.mulf %1261, %15 : vector<16x128xf32>
    %1263 = arith.negf %1262 : vector<16x128xf32>
    %1264 = math.exp %1263 : vector<16x128xf32>
    %cst_227 = arith.constant 1.000000e+00 : f32
    %1265 = vector.broadcast %cst_227 : f32 to vector<16x128xf32>
    %1266 = arith.addf %1265, %1264 : vector<16x128xf32>
    %1267 = arith.divf %1265, %1266 : vector<16x128xf32>
    %1268 = arith.mulf %17, %1267 : vector<16x128xf32>
    %cst_228 = arith.constant dense<0.000000e+00> : vector<128xf32>
    %1269 = vector.multi_reduction <add>, %1268, %cst_228 [0] : vector<16x128xf32> to vector<128xf32>
    %1270 = vector.shape_cast %1269 : vector<128xf32> to vector<1x128xf32>
    %1271 = arith.mulf %21, %1257 : vector<1x64xf32>
    %1272 = arith.addf %1271, %1131 : vector<1x64xf32>
    %1273 = vector.extract_strided_slice %1270 {offsets = [0, 0], sizes = [1, 64], strides = [1, 1]} : vector<1x128xf32> to vector<1x64xf32>
    %1274 = arith.addf %1272, %1273 : vector<1x64xf32>
    %1275 = vector.extract_strided_slice %1270 {offsets = [0, 64], sizes = [1, 64], strides = [1, 1]} : vector<1x128xf32> to vector<1x64xf32>
    %1276 = arith.addf %1132, %1275 : vector<1x64xf32>
    %1277 = tpu.reciprocal %1276 {approx = true} : vector<1x64xf32> -> vector<1x64xf32>
    %1278 = arith.mulf %1276, %1277 : vector<1x64xf32>
    %cst_229 = arith.constant 2.000000e+00 : f32
    %1279 = vector.broadcast %cst_229 : f32 to vector<1x64xf32>
    %1280 = arith.subf %1279, %1278 : vector<1x64xf32>
    %1281 = arith.mulf %1277, %1280 : vector<1x64xf32>
    %1282 = arith.mulf %1274, %1281 : vector<1x64xf32>
    %1283 = tpu.concatenate %211, %364, %517, %670, %823, %976, %1129, %1282 in 0 : vector<1x64xf32>, vector<1x64xf32>, vector<1x64xf32>, vector<1x64xf32>, vector<1x64xf32>, vector<1x64xf32>, vector<1x64xf32>, vector<1x64xf32> -> vector<8x64xf32>
    %1284 = vector.broadcast %22 : vector<1x64xf32> to vector<8x64xf32>
    %1285 = arith.mulf %1283, %1284 : vector<8x64xf32>
    %1286 = vector.broadcast %23 : vector<1x64xf32> to vector<8x64xf32>
    %1287 = arith.addf %1285, %1286 : vector<8x64xf32>
    %c0_230 = arith.constant 0 : index
    %c0_231 = arith.constant 0 : index
    %1288 = vector.load %arg12[%c0_230, %c0_231] : memref<8x64xf32, #tpu.memory_space<vmem>>, vector<8x64xf32>
    tpu.vector_store %arg12[%c0_230, %c0_231], %1287 {strides = array<i32>} : memref<8x64xf32, #tpu.memory_space<vmem>>, vector<8x64xf32>,
    return
  }
  func.func @transform_0(%arg0: i32) -> (i32, i32) {
    %c0_i32 = arith.constant 0 : i32
    %c0_i32_0 = arith.constant 0 : i32
    %c0_i32_1 = arith.constant 0 : i32
    return %c0_i32, %c0_i32_0 : i32, i32
  }
  func.func @transform_1(%arg0: i32) -> (i32, i32) {
    %c0_i32 = arith.constant 0 : i32
    %c0_i32_0 = arith.constant 0 : i32
    %c0_i32_1 = arith.constant 0 : i32
    return %c0_i32, %c0_i32_0 : i32, i32
  }
  func.func @transform_2(%arg0: i32) -> (i32, i32) {
    %c0_i32 = arith.constant 0 : i32
    %c0_i32_0 = arith.constant 0 : i32
    %c0_i32_1 = arith.constant 0 : i32
    return %c0_i32, %c0_i32_0 : i32, i32
  }
  func.func @transform_3(%arg0: i32) -> (i32, i32) {
    %c0_i32 = arith.constant 0 : i32
    %c0_i32_0 = arith.constant 0 : i32
    %c0_i32_1 = arith.constant 0 : i32
    return %c0_i32, %c0_i32_0 : i32, i32
  }
  func.func @transform_4(%arg0: i32) -> (i32, i32) {
    %c0_i32 = arith.constant 0 : i32
    %c0_i32_0 = arith.constant 0 : i32
    %c0_i32_1 = arith.constant 0 : i32
    return %c0_i32, %c0_i32_0 : i32, i32
  }
  func.func @transform_5(%arg0: i32) -> (i32, i32, i32) {
    %c0_i32 = arith.constant 0 : i32
    %c0_i32_0 = arith.constant 0 : i32
    %c0_i32_1 = arith.constant 0 : i32
    %c0_i32_2 = arith.constant 0 : i32
    return %c0_i32, %c0_i32_0, %c0_i32_1 : i32, i32, i32
  }
  func.func @transform_6(%arg0: i32) -> (i32, i32) {
    %c0_i32 = arith.constant 0 : i32
    %c0_i32_0 = arith.constant 0 : i32
    %c0_i32_1 = arith.constant 0 : i32
    return %c0_i32, %c0_i32_0 : i32, i32
  }
  func.func @transform_7(%arg0: i32) -> (i32, i32, i32) {
    %c0_i32 = arith.constant 0 : i32
    %c0_i32_0 = arith.constant 0 : i32
    %c0_i32_1 = arith.constant 0 : i32
    %c0_i32_2 = arith.constant 0 : i32
    return %c0_i32, %c0_i32_0, %c0_i32_1 : i32, i32, i32
  }
  func.func @transform_8(%arg0: i32) -> (i32, i32) {
    %c0_i32 = arith.constant 0 : i32
    %c0_i32_0 = arith.constant 0 : i32
    %c0_i32_1 = arith.constant 0 : i32
    return %c0_i32, %c0_i32_0 : i32, i32
  }
  func.func @transform_9(%arg0: i32) -> (i32, i32) {
    %c0_i32 = arith.constant 0 : i32
    %c0_i32_0 = arith.constant 0 : i32
    %c0_i32_1 = arith.constant 0 : i32
    return %c0_i32, %c0_i32_0 : i32, i32
  }
  func.func @transform_10(%arg0: i32) -> (i32, i32) {
    %c0_i32 = arith.constant 0 : i32
    %c0_i32_0 = arith.constant 0 : i32
    %c0_i32_1 = arith.constant 0 : i32
    return %c0_i32, %c0_i32_0 : i32, i32
  }
  func.func @transform_11(%arg0: i32) -> (i32, i32) {
    %c0_i32 = arith.constant 0 : i32
    %c0_i32_0 = arith.constant 0 : i32
    %c0_i32_1 = arith.constant 0 : i32
    return %c0_i32, %c0_i32_0 : i32, i32
  }
}

</mosaic_0001>

<llo_original>
// kernel: tpu_custom_call.1
$region0: #{tpu_custom_call.1}
  #allocation0 [shape = 'u32[]', space=smem, size = 0x4, offset = 0x4, fixed_abs, tag = 'smem constant byte address 0x4 - core index']
  #allocation1 [shape = 'u32[144,128]{1,0:T(1,128)}', space=vmem, size = 0x12000, scoped, tag = 'internal scratch']
  %s0 = inlined_call_operand.hbm [shape: f32[6,32], index: 0, kind: input, shape index: {}]
  %s1 = inlined_call_operand.vmem [shape: f32[16,6], index: 1, kind: input, shape index: {}]
  %s2 = inlined_call_operand.hbm [shape: f32[8,16], index: 2, kind: input, shape index: {}]
  %s3 = inlined_call_operand.vmem [shape: f32[16,8], index: 3, kind: input, shape index: {}]
  %s4 = inlined_call_operand.hbm [shape: f32[32,1024], index: 4, kind: input, shape index: {}]
  %s5 = inlined_call_operand.hbm [shape: f32[3,8,1024], index: 5, kind: input, shape index: {}]
  %s6 = inlined_call_operand.hbm [shape: f32[1,1024], index: 6, kind: input, shape index: {}]
  %s7 = inlined_call_operand.hbm [shape: f32[3,16,128], index: 7, kind: input, shape index: {}]
  %s8 = inlined_call_operand.vmem [shape: f32[2,128], index: 8, kind: input, shape index: {}]
  %s9 = inlined_call_operand.vmem [shape: f32[16,64], index: 9, kind: input, shape index: {}]
  %s10 = inlined_call_operand.vmem [shape: f32[64,128], index: 10, kind: input, shape index: {}]
  %s11 = inlined_call_operand.hbm [shape: f32[8,64], index: 11, kind: output, shape index: {}]
  %s12 = sld [smem:[#allocation0]]
  $region78: #{tpu_custom_call.1} parent=0
    _
  %s14 = ssub.s32 1, %s12
  %s15 = scalar_select 0, %s14, %s12
  $region1: #{tpu_custom_call.1} parent=0
    #allocation2 [shape = 'u8[4096]{0}', space=vmem, size = 0x1000, scoped, tag = 'input window, operand 0, single buffered']
    #allocation3 [shape = 's32[1]{0}', space=sflag, size = 0x4, scoped, tag = 'scoped memory for tpu_custom_call.1']
    #allocation4 [shape = 's32[1]{0}', space=sflag, size = 0x4, scoped, tag = 'scoped memory for tpu_custom_call.1']
    #allocation5 [shape = 'u8[4096]{0}', space=vmem, size = 0x1000, scoped, tag = 'input window, operand 2, single buffered']
    #allocation6 [shape = 's32[1]{0}', space=sflag, size = 0x4, scoped, tag = 'scoped memory for tpu_custom_call.1']
    #allocation7 [shape = 'u8[131072]{0}', space=vmem, size = 0x20000, scoped, tag = 'input window, operand 4, single buffered']
    #allocation8 [shape = 'u8[98304]{0}', space=vmem, size = 0x18000, scoped, tag = 'input window, operand 5, single buffered']
    #allocation9 [shape = 's32[1]{0}', space=sflag, size = 0x4, scoped, tag = 'scoped memory for tpu_custom_call.1']
    #allocation10 [shape = 'u8[4096]{0}', space=vmem, size = 0x1000, scoped, tag = 'input window, operand 6, single buffered']
    #allocation11 [shape = 'u8[24576]{0}', space=vmem, size = 0x6000, scoped, tag = 'input window, operand 7, single buffered']
    #allocation12 [shape = 's32[1]{0}', space=sflag, size = 0x4, scoped, tag = 'scoped memory for tpu_custom_call.1']
    #allocation13 [shape = 'u8[4096]{0}', space=vmem, size = 0x1000, scoped, tag = 'output window, operand 0, single buffered']
    %16 = vsyncpa [#allocation3], 0
    %17 = vsyncpa [#allocation6], 0
    %18 = vsyncpa [#allocation9], 0
    %19 = vsyncpa [#allocation12], 0
    %20 = vsyncpa [#allocation4], 0
    // Predicated region
    $region2: #{tpu_custom_call.1} parent=1 // pred_check
      _
    $region3: #{tpu_custom_call.1} parent=1 // pred_check_branch
      %22 = sbr.rel (0) target = $region5
    $region4: #{tpu_custom_call.1} parent=1 // pred_region
      %s24 = ssub.s32 128, 128
      %25 = vsyncadd [#allocation3], %s24
      %s27 = sshll.u32 [#allocation2], 4
      %s28 = int_to_ptr.vmem [resolvable:$true] %s27
      %30 = dma.hbm_to_vmem [thread:$0]  %s0, 128, %s28, [#allocation3]
    $region5: #{tpu_custom_call.1} parent=1 // pred_fallthru
      _
    // Predicated region
    $region6: #{tpu_custom_call.1} parent=1 // pred_check
      _
    $region7: #{tpu_custom_call.1} parent=1 // pred_check_branch
      %32 = sbr.rel (0) target = $region9
    $region8: #{tpu_custom_call.1} parent=1 // pred_region
      _
    $region9: #{tpu_custom_call.1} parent=1 // pred_fallthru
      _
    // Predicated region
    $region10: #{tpu_custom_call.1} parent=1 // pred_check
      _
    $region11: #{tpu_custom_call.1} parent=1 // pred_check_branch
      %34 = sbr.rel (0) target = $region13
    $region12: #{tpu_custom_call.1} parent=1 // pred_region
      %s36 = ssub.s32 128, 128
      %37 = vsyncadd [#allocation6], %s36
      %s39 = sshll.u32 [#allocation5], 4
      %s40 = int_to_ptr.vmem [resolvable:$true] %s39
      %42 = dma.hbm_to_vmem [thread:$0]  %s2, 128, %s40, [#allocation6]
    $region13: #{tpu_custom_call.1} parent=1 // pred_fallthru
      _
    // Predicated region
    $region14: #{tpu_custom_call.1} parent=1 // pred_check
      _
    $region15: #{tpu_custom_call.1} parent=1 // pred_check_branch
      %44 = sbr.rel (0) target = $region17
    $region16: #{tpu_custom_call.1} parent=1 // pred_region
      _
    $region17: #{tpu_custom_call.1} parent=1 // pred_fallthru
      _
    // Predicated region
    $region18: #{tpu_custom_call.1} parent=1 // pred_check
      _
    $region19: #{tpu_custom_call.1} parent=1 // pred_check_branch
      %46 = sbr.rel (0) target = $region21
    $region20: #{tpu_custom_call.1} parent=1 // pred_region
      %s48 = ssub.s32 4096, 4096
      %49 = vsyncadd [#allocation6], %s48
      %s50 = sshll.u32 [#allocation7], 4
      %s51 = int_to_ptr.vmem [resolvable:$true] %s50
      %56 = dma.hbm_to_vmem [thread:$0]  %s4, 4096, %s51, [#allocation6], 1024, 1024, 64
    $region21: #{tpu_custom_call.1} parent=1 // pred_fallthru
      _
    // Predicated region
    $region22: #{tpu_custom_call.1} parent=1 // pred_check
      _
    $region23: #{tpu_custom_call.1} parent=1 // pred_check_branch
      %58 = sbr.rel (0) target = $region25
    $region24: #{tpu_custom_call.1} parent=1 // pred_region
      %s60 = ssub.s32 3072, 3072
      %61 = vsyncadd [#allocation9], %s60
      %s62 = sshll.u32 [#allocation8], 4
      %s63 = int_to_ptr.vmem [resolvable:$true] %s62
      %68 = dma.hbm_to_vmem [thread:$0]  %s5, 3072, %s63, [#allocation9], 1024, 1024, 64
    $region25: #{tpu_custom_call.1} parent=1 // pred_fallthru
      _
    // Predicated region
    $region26: #{tpu_custom_call.1} parent=1 // pred_check
      _
    $region27: #{tpu_custom_call.1} parent=1 // pred_check_branch
      %70 = sbr.rel (0) target = $region29
    $region28: #{tpu_custom_call.1} parent=1 // pred_region
      %s72 = ssub.s32 128, 128
      %73 = vsyncadd [#allocation9], %s72
      %s75 = sshll.u32 [#allocation10], 4
      %s76 = int_to_ptr.vmem [resolvable:$true] %s75
      %78 = dma.hbm_to_vmem [thread:$0]  %s6, 128, %s76, [#allocation9]
    $region29: #{tpu_custom_call.1} parent=1 // pred_fallthru
      _
    // Predicated region
    $region30: #{tpu_custom_call.1} parent=1 // pred_check
      _
    $region31: #{tpu_custom_call.1} parent=1 // pred_check_branch
      %80 = sbr.rel (0) target = $region33
    $region32: #{tpu_custom_call.1} parent=1 // pred_region
      %s82 = ssub.s32 768, 768
      %83 = vsyncadd [#allocation12], %s82
      %s84 = sshll.u32 [#allocation11], 4
      %s85 = int_to_ptr.vmem [resolvable:$true] %s84
      %90 = dma.hbm_to_vmem [thread:$0]  %s7, 768, %s85, [#allocation12], 128, 128, 8
    $region33: #{tpu_custom_call.1} parent=1 // pred_fallthru
      _
    // Predicated region
    $region34: #{tpu_custom_call.1} parent=1 // pred_check
      _
    $region35: #{tpu_custom_call.1} parent=1 // pred_check_branch
      %92 = sbr.rel (0) target = $region37
    $region36: #{tpu_custom_call.1} parent=1 // pred_region
      _
    $region37: #{tpu_custom_call.1} parent=1 // pred_fallthru
      _
    // Predicated region
    $region38: #{tpu_custom_call.1} parent=1 // pred_check
      _
    $region39: #{tpu_custom_call.1} parent=1 // pred_check_branch
      %94 = sbr.rel (0) target = $region41
    $region40: #{tpu_custom_call.1} parent=1 // pred_region
      _
    $region41: #{tpu_custom_call.1} parent=1 // pred_fallthru
      _
    // Predicated region
    $region42: #{tpu_custom_call.1} parent=1 // pred_check
      _
    $region43: #{tpu_custom_call.1} parent=1 // pred_check_branch
      %96 = sbr.rel (0) target = $region45
    $region44: #{tpu_custom_call.1} parent=1 // pred_region
      _
    $region45: #{tpu_custom_call.1} parent=1 // pred_fallthru
      _
    // Predicated region
    $region46: #{tpu_custom_call.1} parent=1 // pred_check
      _
    $region47: #{tpu_custom_call.1} parent=1 // pred_check_branch
      %98 = sbr.rel (0) target = $region49
    $region48: #{tpu_custom_call.1} parent=1 // pred_region
      %99 = dma.done [#allocation3], 128
    $region49: #{tpu_custom_call.1} parent=1 // pred_fallthru
      _
    // Predicated region
    $region50: #{tpu_custom_call.1} parent=1 // pred_check
      _
    $region51: #{tpu_custom_call.1} parent=1 // pred_check_branch
      %101 = sbr.rel (0) target = $region53
    $region52: #{tpu_custom_call.1} parent=1 // pred_region
      %102 = dma.done [#allocation6], 128
    $region53: #{tpu_custom_call.1} parent=1 // pred_fallthru
      _
    // Predicated region
    $region54: #{tpu_custom_call.1} parent=1 // pred_check
      _
    $region55: #{tpu_custom_call.1} parent=1 // pred_check_branch
      %104 = sbr.rel (0) target = $region57
    $region56: #{tpu_custom_call.1} parent=1 // pred_region
      %105 = dma.done [#allocation6], 4096
    $region57: #{tpu_custom_call.1} parent=1 // pred_fallthru
      _
    // Predicated region
    $region58: #{tpu_custom_call.1} parent=1 // pred_check
      _
    $region59: #{tpu_custom_call.1} parent=1 // pred_check_branch
      %107 = sbr.rel (0) target = $region61
    $region60: #{tpu_custom_call.1} parent=1 // pred_region
      %108 = dma.done [#allocation9], 3072
    $region61: #{tpu_custom_call.1} parent=1 // pred_fallthru
      _
    // Predicated region
    $region62: #{tpu_custom_call.1} parent=1 // pred_check
      _
    $region63: #{tpu_custom_call.1} parent=1 // pred_check_branch
      %110 = sbr.rel (0) target = $region65
    $region64: #{tpu_custom_call.1} parent=1 // pred_region
      %111 = dma.done [#allocation9], 128
    $region65: #{tpu_custom_call.1} parent=1 // pred_fallthru
      _
    // Predicated region
    $region66: #{tpu_custom_call.1} parent=1 // pred_check
      _
    $region67: #{tpu_custom_call.1} parent=1 // pred_check_branch
      %113 = sbr.rel (0) target = $region69
    $region68: #{tpu_custom_call.1} parent=1 // pred_region
      %114 = dma.done [#allocation12], 768
    $region69: #{tpu_custom_call.1} parent=1 // pred_fallthru
      _
    %v115 = vld [vmem:[#allocation2] sm:$0x3f]
    %v116 = vld [vmem:[%s1] sm:$0xff]
    %v117 = vld [vmem:[%s1 + $0x8] sm:$0xff]
    %v118 = vld [vmem:[#allocation5] sm:$0xff]
    %v119 = vld [vmem:[%s3] sm:$0xff]
    %v120 = vld [vmem:[%s3 + $0x8] sm:$0xff]
    %v121 = vld [vmem:[#allocation7] sm:$0xff]
    %v122 = vld [vmem:[#allocation7 + $0x8] sm:$0xff]
    %v123 = vld [vmem:[#allocation7 + $0x10] sm:$0xff]
    %v124 = vld [vmem:[#allocation7 + $0x18] sm:$0xff]
    %v125 = vld [vmem:[#allocation7 + $0x20] sm:$0xff]
    %v126 = vld [vmem:[#allocation7 + $0x28] sm:$0xff]
    %v127 = vld [vmem:[#allocation7 + $0x30] sm:$0xff]
    %v128 = vld [vmem:[#allocation7 + $0x38] sm:$0xff]
    %v129 = vld [vmem:[#allocation7 + $0x40] sm:$0xff]
    %v130 = vld [vmem:[#allocation7 + $0x48] sm:$0xff]
    %v131 = vld [vmem:[#allocation7 + $0x50] sm:$0xff]
    %v132 = vld [vmem:[#allocation7 + $0x58] sm:$0xff]
    %v133 = vld [vmem:[#allocation7 + $0x60] sm:$0xff]
    %v134 = vld [vmem:[#allocation7 + $0x68] sm:$0xff]
    %v135 = vld [vmem:[#allocation7 + $0x70] sm:$0xff]
    %v136 = vld [vmem:[#allocation7 + $0x78] sm:$0xff]
    %v137 = vld [vmem:[#allocation7 + $0x80] sm:$0xff]
    %v138 = vld [vmem:[#allocation7 + $0x88] sm:$0xff]
    %v139 = vld [vmem:[#allocation7 + $0x90] sm:$0xff]
    %v140 = vld [vmem:[#allocation7 + $0x98] sm:$0xff]
    %v141 = vld [vmem:[#allocation7 + $0xa0] sm:$0xff]
    %v142 = vld [vmem:[#allocation7 + $0xa8] sm:$0xff]
    %v143 = vld [vmem:[#allocation7 + $0xb0] sm:$0xff]
    %v144 = vld [vmem:[#allocation7 + $0xb8] sm:$0xff]
    %v145 = vld [vmem:[#allocation7 + $0xc0] sm:$0xff]
    %v146 = vld [vmem:[#allocation7 + $0xc8] sm:$0xff]
    %v147 = vld [vmem:[#allocation7 + $0xd0] sm:$0xff]
    %v148 = vld [vmem:[#allocation7 + $0xd8] sm:$0xff]
    %v149 = vld [vmem:[#allocation7 + $0xe0] sm:$0xff]
    %v150 = vld [vmem:[#allocation7 + $0xe8] sm:$0xff]
    %v151 = vld [vmem:[#allocation7 + $0xf0] sm:$0xff]
    %v152 = vld [vmem:[#allocation7 + $0xf8] sm:$0xff]
    %v153 = vld [vmem:[#allocation8] sm:$0xff]
    %v154 = vld [vmem:[#allocation8 + $0x8] sm:$0xff]
    %v155 = vld [vmem:[#allocation8 + $0x10] sm:$0xff]
    %v156 = vld [vmem:[#allocation8 + $0x18] sm:$0xff]
    %v157 = vld [vmem:[#allocation8 + $0x20] sm:$0xff]
    %v158 = vld [vmem:[#allocation8 + $0x28] sm:$0xff]
    %v159 = vld [vmem:[#allocation8 + $0x30] sm:$0xff]
    %v160 = vld [vmem:[#allocation8 + $0x38] sm:$0xff]
    %s161 = scalar_lea.vmem [#allocation8], 64
    %v162 = vld [vmem:[%s161] sm:$0xff]
    %v163 = vld [vmem:[%s161 + $0x8] sm:$0xff]
    %v164 = vld [vmem:[%s161 + $0x10] sm:$0xff]
    %v165 = vld [vmem:[%s161 + $0x18] sm:$0xff]
    %v166 = vld [vmem:[%s161 + $0x20] sm:$0xff]
    %v167 = vld [vmem:[%s161 + $0x28] sm:$0xff]
    %v168 = vld [vmem:[%s161 + $0x30] sm:$0xff]
    %v169 = vld [vmem:[%s161 + $0x38] sm:$0xff]
    %s170 = scalar_lea.vmem [#allocation8], 128
    %v171 = vld [vmem:[%s170] sm:$0xff]
    %v172 = vld [vmem:[%s170 + $0x8] sm:$0xff]
    %v173 = vld [vmem:[%s170 + $0x10] sm:$0xff]
    %v174 = vld [vmem:[%s170 + $0x18] sm:$0xff]
    %v175 = vld [vmem:[%s170 + $0x20] sm:$0xff]
    %v176 = vld [vmem:[%s170 + $0x28] sm:$0xff]
    %v177 = vld [vmem:[%s170 + $0x30] sm:$0xff]
    %v178 = vld [vmem:[%s170 + $0x38] sm:$0xff]
    %v179 = vld [vmem:[#allocation10] sm:$0xff]
    %v180 = vld [vmem:[#allocation11] sm:$0xff]
    %v181 = vld [vmem:[#allocation11 + $0x8] sm:$0xff]
    %s182 = scalar_lea.vmem [#allocation11], 16
    %v183 = vld [vmem:[%s182] sm:$0xff]
    %v184 = vld [vmem:[%s182 + $0x8] sm:$0xff]
    %s185 = scalar_lea.vmem [#allocation11], 32
    %v186 = vld [vmem:[%s185] sm:$0xff]
    %v187 = vld [vmem:[%s185 + $0x8] sm:$0xff]
    %v188 = vld [vmem:[%s8] sm:$0x3]
    %v189 = vld [vmem:[%s9] sm:$0xff]
    %v190 = vld [vmem:[%s9 + $0x8] sm:$0xff]
    %v191 = vld [vmem:[%s10] sm:$0xff]
    %v192 = vld [vmem:[%s10 + $0x8] sm:$0xff]
    %v193 = vld [vmem:[%s10 + $0x10] sm:$0xff]
    %v194 = vld [vmem:[%s10 + $0x18] sm:$0xff]
    %v195 = vld [vmem:[%s10 + $0x20] sm:$0xff]
    %v196 = vld [vmem:[%s10 + $0x28] sm:$0xff]
    %v197 = vld [vmem:[%s10 + $0x30] sm:$0xff]
    %v198 = vld [vmem:[%s10 + $0x38] sm:$0xff]
    %200 = vset.pattern.permute.xlu0 0
    %201 = vperm.xlu0 %200, %v119
    %v202 = vpop.permute.xlu0 %201
    %v204 = vsub.f32 %v115, %v202
    %205 = vset.pattern.permute.xlu0 1
    %206 = vperm.xlu0 %205, %v119
    %v207 = vpop.permute.xlu0 %206
    %v209 = vmul.f32 %v204, %v207
    %210 = vset.pattern.permute.xlu0 2
    %211 = vperm.xlu0 %210, %v119
    %v212 = vpop.permute.xlu0 %211
    %215 = vset.pattern.permute.xlu0 2
    %216 = vperm.xlu0 %215, %v120
    %v217 = vpop.permute.xlu0 %216
    %vm219 = vcmask 48128
    %v221 = vsel %vm219, %v116, 0
    %v224 = vsel %vm219, %v117, 0
    %vm226 = vcmask 1045504
    %v228 = vsel %vm226, %v209, 0
    %230 = vmatprep.subr.mxu0 0.0
    %231 = vmatpush1.msra.mxu0 %v228
    %232 = vmatprep.subr.mxu0 0.0
    %233 = vmatpush1.msra.mxu0 0.0
    %234 = vmatprep.subr.mxu0 0.0
    %235 = vmatpush1.msra.mxu0 0.0
    %236 = vmatprep.subr.mxu0 0.0
    %237 = vmatpush1.msra.mxu0 0.0
    %238 = vmatprep.subr.mxu0 0.0
    %239 = vmatpush1.msra.mxu0 0.0
    %240 = vmatprep.subr.mxu0 0.0
    %241 = vmatpush1.msra.mxu0 0.0
    %242 = vmatprep.subr.mxu0 0.0
    %243 = vmatpush1.msra.mxu0 0.0
    %244 = vmatprep.subr.mxu0 0.0
    %245 = vmatpush1.msra.mxu0 0.0
    %246 = vmatprep.subr.mxu0 0.0
    %247 = vmatpush1.msra.mxu0 0.0
    %248 = vmatprep.subr.mxu0 0.0
    %249 = vmatpush1.msra.mxu0 0.0
    %250 = vmatprep.subr.mxu0 0.0
    %251 = vmatpush1.msra.mxu0 0.0
    %252 = vmatprep.subr.mxu0 0.0
    %253 = vmatpush1.msra.mxu0 0.0
    %254 = vmatprep.subr.mxu0 0.0
    %255 = vmatpush1.msra.mxu0 0.0
    %256 = vmatprep.subr.mxu0 0.0
    %257 = vmatpush1.msra.mxu0 0.0
    %258 = vmatprep.subr.mxu0 0.0
    %259 = vmatpush1.msra.mxu0 0.0
    %260 = vmatprep.subr.mxu0 0.0
    %261 = vmatpush1.msra.mxu0 0.0
    %262 = vmatprep.subr.mxu0 0.0
    %263 = vmatpush1.msra.mxu0 0.0
    %264 = vmatprep.subr.mxu0 0.0
    %265 = vmatpush1.msra.mxu0 0.0
    %266 = vmatprep.subr.mxu0 0.0
    %267 = vmatpush1.msra.mxu0 0.0
    %268 = vmatprep.subr.mxu0 0.0
    %269 = vmatpush1.msra.mxu0 0.0
    %270 = vmatprep.subr.mxu0 0.0
    %271 = vmatpush1.msra.mxu0 0.0
    %272 = vmatprep.subr.mxu0 0.0
    %273 = vmatpush1.msra.mxu0 0.0
    %274 = vmatprep.subr.mxu0 0.0
    %275 = vmatpush1.msra.mxu0 0.0
    %276 = vmatprep.subr.mxu0 0.0
    %277 = vmatpush1.msra.mxu0 0.0
    %278 = vmatprep.subr.mxu0 0.0
    %279 = vmatpush1.msra.mxu0 0.0
    %280 = vmatprep.subr.mxu0 0.0
    %281 = vmatpush1.msra.mxu0 0.0
    %282 = vmatprep.subr.mxu0 0.0
    %283 = vmatpush1.msra.mxu0 0.0
    %284 = vmatprep.subr.mxu0 0.0
    %285 = vmatpush1.msra.mxu0 0.0
    %286 = vmatprep.subr.mxu0 0.0
    %287 = vmatpush1.msra.mxu0 0.0
    %288 = vmatprep.subr.mxu0 0.0
    %289 = vmatpush1.msra.mxu0 0.0
    %290 = vmatprep.subr.mxu0 0.0
    %291 = vmatpush1.msra.mxu0 0.0
    %292 = vmatprep.subr.mxu0 0.0
    %293 = vmatpush1.msra.mxu0 0.0
    %294 = vmatprep.mubr.f32.mxu0 0.0
    %295 = vmatmul.mubr.f32.gmra.mrb[0].mxu0 %v221
    %v296 = vpop.f32.mrb[0].mxu0
    %v297 = vadd.f32 %v212, %v296
    %v298 = vpop.f32.mrb[0].mxu0
    %299 = vmatprep.mubr.f32.mxu0 0.0
    %300 = vmatmul.mubr.f32.gmra.mrb[0].mxu0 %v224
    %v301 = vpop.f32.mrb[0].mxu0
    %v302 = vadd.f32 %v217, %v301
    %v303 = vpop.f32.mrb[0].mxu0
    %304 = vdwg.mxu0
    %v305 = vtanh.pop %v297
    %v306 = vtanh.pop %v302
    %307 = vset.pattern.permute.xlu0 3
    %308 = vperm.xlu0 %307, %v119
    %v309 = vpop.permute.xlu0 %308
    %vm311 = vcmask 130048
    %v313 = vsel %vm311, %v118, 0
    %315 = vmatprep.subr.mxu0 0.0
    %316 = vmatpush1.msra.mxu0 %v305
    %317 = vmatprep.subr.mxu0 0.0
    %318 = vmatpush1.msra.mxu0 %v306
    %319 = vmatprep.subr.mxu0 0.0
    %320 = vmatpush1.msra.mxu0 0.0
    %321 = vmatprep.subr.mxu0 0.0
    %322 = vmatpush1.msra.mxu0 0.0
    %323 = vmatprep.subr.mxu0 0.0
    %324 = vmatpush1.msra.mxu0 0.0
    %325 = vmatprep.subr.mxu0 0.0
    %326 = vmatpush1.msra.mxu0 0.0
    %327 = vmatprep.subr.mxu0 0.0
    %328 = vmatpush1.msra.mxu0 0.0
    %329 = vmatprep.subr.mxu0 0.0
    %330 = vmatpush1.msra.mxu0 0.0
    %331 = vmatprep.subr.mxu0 0.0
    %332 = vmatpush1.msra.mxu0 0.0
    %333 = vmatprep.subr.mxu0 0.0
    %334 = vmatpush1.msra.mxu0 0.0
    %335 = vmatprep.subr.mxu0 0.0
    %336 = vmatpush1.msra.mxu0 0.0
    %337 = vmatprep.subr.mxu0 0.0
    %338 = vmatpush1.msra.mxu0 0.0
    %339 = vmatprep.subr.mxu0 0.0
    %340 = vmatpush1.msra.mxu0 0.0
    %341 = vmatprep.subr.mxu0 0.0
    %342 = vmatpush1.msra.mxu0 0.0
    %343 = vmatprep.subr.mxu0 0.0
    %344 = vmatpush1.msra.mxu0 0.0
    %345 = vmatprep.subr.mxu0 0.0
    %346 = vmatpush1.msra.mxu0 0.0
    %347 = vmatprep.subr.mxu0 0.0
    %348 = vmatpush1.msra.mxu0 0.0
    %349 = vmatprep.subr.mxu0 0.0
    %350 = vmatpush1.msra.mxu0 0.0
    %351 = vmatprep.subr.mxu0 0.0
    %352 = vmatpush1.msra.mxu0 0.0
    %353 = vmatprep.subr.mxu0 0.0
    %354 = vmatpush1.msra.mxu0 0.0
    %355 = vmatprep.subr.mxu0 0.0
    %356 = vmatpush1.msra.mxu0 0.0
    %357 = vmatprep.subr.mxu0 0.0
    %358 = vmatpush1.msra.mxu0 0.0
    %359 = vmatprep.subr.mxu0 0.0
    %360 = vmatpush1.msra.mxu0 0.0
    %361 = vmatprep.subr.mxu0 0.0
    %362 = vmatpush1.msra.mxu0 0.0
    %363 = vmatprep.subr.mxu0 0.0
    %364 = vmatpush1.msra.mxu0 0.0
    %365 = vmatprep.subr.mxu0 0.0
    %366 = vmatpush1.msra.mxu0 0.0
    %367 = vmatprep.subr.mxu0 0.0
    %368 = vmatpush1.msra.mxu0 0.0
    %369 = vmatprep.subr.mxu0 0.0
    %370 = vmatpush1.msra.mxu0 0.0
    %371 = vmatprep.subr.mxu0 0.0
    %372 = vmatpush1.msra.mxu0 0.0
    %373 = vmatprep.subr.mxu0 0.0
    %374 = vmatpush1.msra.mxu0 0.0
    %375 = vmatprep.subr.mxu0 0.0
    %376 = vmatpush1.msra.mxu0 0.0
    %377 = vmatprep.subr.mxu0 0.0
    %378 = vmatpush1.msra.mxu0 0.0
    %379 = vmatprep.mubr.f32.mxu0 0.0
    %380 = vmatmul.mubr.f32.gmra.mrb[0].mxu0 %v313
    %v381 = vpop.f32.mrb[0].mxu0
    %v382 = vadd.f32 %v309, %v381
    %v383 = vpop.f32.mrb[0].mxu0
    %384 = vdwg.mxu0
    %v385 = vtanh.pop %v382
    %386 = vset.pattern.permute.xlu0 4
    %387 = vperm.xlu0 %386, %v119
    %v388 = vpop.permute.xlu0 %387
    %v390 = vmul.f32 %v385, %v388
    %391 = vset.pattern.permute.xlu0 5
    %392 = vperm.xlu0 %391, %v119
    %v393 = vpop.permute.xlu0 %392
    %v395 = vadd.f32 %v390, %v393
    %vm396 = vcmask 261120
    %v398 = vsel %vm396, %v395, 0
    %400 = vmatprep.subr.mxu0 %v122
    %401 = vmatpush1.msra.mxu0 %v121
    %402 = vmatprep.subr.mxu0 %v130
    %403 = vmatpush1.msra.mxu0 %v129
    %404 = vmatprep.subr.mxu0 %v138
    %405 = vmatpush1.msra.mxu0 %v137
    %406 = vmatprep.subr.mxu0 %v146
    %407 = vmatpush1.msra.mxu0 %v145
    %408 = vmatprep.subr.mxu0 0.0
    %409 = vmatpush1.msra.mxu0 0.0
    %410 = vmatprep.subr.mxu0 0.0
    %411 = vmatpush1.msra.mxu0 0.0
    %412 = vmatprep.subr.mxu0 0.0
    %413 = vmatpush1.msra.mxu0 0.0
    %414 = vmatprep.subr.mxu0 0.0
    %415 = vmatpush1.msra.mxu0 0.0
    %416 = vmatprep.subr.mxu0 0.0
    %417 = vmatpush1.msra.mxu0 0.0
    %418 = vmatprep.subr.mxu0 0.0
    %419 = vmatpush1.msra.mxu0 0.0
    %420 = vmatprep.subr.mxu0 0.0
    %421 = vmatpush1.msra.mxu0 0.0
    %422 = vmatprep.subr.mxu0 0.0
    %423 = vmatpush1.msra.mxu0 0.0
    %424 = vmatprep.subr.mxu0 0.0
    %425 = vmatpush1.msra.mxu0 0.0
    %426 = vmatprep.subr.mxu0 0.0
    %427 = vmatpush1.msra.mxu0 0.0
    %428 = vmatprep.subr.mxu0 0.0
    %429 = vmatpush1.msra.mxu0 0.0
    %430 = vmatprep.subr.mxu0 0.0
    %431 = vmatpush1.msra.mxu0 0.0
    %432 = vmatprep.subr.mxu0 0.0
    %433 = vmatpush1.msra.mxu0 0.0
    %434 = vmatprep.subr.mxu0 0.0
    %435 = vmatpush1.msra.mxu0 0.0
    %436 = vmatprep.subr.mxu0 0.0
    %437 = vmatpush1.msra.mxu0 0.0
    %438 = vmatprep.subr.mxu0 0.0
    %439 = vmatpush1.msra.mxu0 0.0
    %440 = vmatprep.subr.mxu0 0.0
    %441 = vmatpush1.msra.mxu0 0.0
    %442 = vmatprep.subr.mxu0 0.0
    %443 = vmatpush1.msra.mxu0 0.0
    %444 = vmatprep.subr.mxu0 0.0
    %445 = vmatpush1.msra.mxu0 0.0
    %446 = vmatprep.subr.mxu0 0.0
    %447 = vmatpush1.msra.mxu0 0.0
    %448 = vmatprep.subr.mxu0 0.0
    %449 = vmatpush1.msra.mxu0 0.0
    %450 = vmatprep.subr.mxu0 0.0
    %451 = vmatpush1.msra.mxu0 0.0
    %452 = vmatprep.subr.mxu0 0.0
    %453 = vmatpush1.msra.mxu0 0.0
    %454 = vmatprep.subr.mxu0 0.0
    %455 = vmatpush1.msra.mxu0 0.0
    %456 = vmatprep.subr.mxu0 0.0
    %457 = vmatpush1.msra.mxu0 0.0
    %458 = vmatprep.subr.mxu0 0.0
    %459 = vmatpush1.msra.mxu0 0.0
    %460 = vmatprep.subr.mxu0 0.0
    %461 = vmatpush1.msra.mxu0 0.0
    %462 = vmatprep.subr.mxu0 0.0
    %463 = vmatpush1.msra.mxu0 0.0
    %464 = vmatprep.mubr.f32.mxu0 0.0
    %465 = vmatmul.mubr.f32.gmra.mrb[0].mxu0 %v398
    %v466 = vpop.f32.mrb[0].mxu0
    %v467 = vadd.f32 0.0, %v466
    %v468 = vpop.f32.mrb[0].mxu0
    %v469 = vadd.f32 0.0, %v468
    %470 = vdwg.mxu0
    %471 = vmatprep.subr.mxu0 %v124
    %472 = vmatpush1.msra.mxu0 %v123
    %473 = vmatprep.subr.mxu0 %v132
    %474 = vmatpush1.msra.mxu0 %v131
    %475 = vmatprep.subr.mxu0 %v140
    %476 = vmatpush1.msra.mxu0 %v139
    %477 = vmatprep.subr.mxu0 %v148
    %478 = vmatpush1.msra.mxu0 %v147
    %479 = vmatprep.subr.mxu0 0.0
    %480 = vmatpush1.msra.mxu0 0.0
    %481 = vmatprep.subr.mxu0 0.0
    %482 = vmatpush1.msra.mxu0 0.0
    %483 = vmatprep.subr.mxu0 0.0
    %484 = vmatpush1.msra.mxu0 0.0
    %485 = vmatprep.subr.mxu0 0.0
    %486 = vmatpush1.msra.mxu0 0.0
    %487 = vmatprep.subr.mxu0 0.0
    %488 = vmatpush1.msra.mxu0 0.0
    %489 = vmatprep.subr.mxu0 0.0
    %490 = vmatpush1.msra.mxu0 0.0
    %491 = vmatprep.subr.mxu0 0.0
    %492 = vmatpush1.msra.mxu0 0.0
    %493 = vmatprep.subr.mxu0 0.0
    %494 = vmatpush1.msra.mxu0 0.0
    %495 = vmatprep.subr.mxu0 0.0
    %496 = vmatpush1.msra.mxu0 0.0
    %497 = vmatprep.subr.mxu0 0.0
    %498 = vmatpush1.msra.mxu0 0.0
    %499 = vmatprep.subr.mxu0 0.0
    %500 = vmatpush1.msra.mxu0 0.0
    %501 = vmatprep.subr.mxu0 0.0
    %502 = vmatpush1.msra.mxu0 0.0
    %503 = vmatprep.subr.mxu0 0.0
    %504 = vmatpush1.msra.mxu0 0.0
    %505 = vmatprep.subr.mxu0 0.0
    %506 = vmatpush1.msra.mxu0 0.0
    %507 = vmatprep.subr.mxu0 0.0
    %508 = vmatpush1.msra.mxu0 0.0
    %509 = vmatprep.subr.mxu0 0.0
    %510 = vmatpush1.msra.mxu0 0.0
    %511 = vmatprep.subr.mxu0 0.0
    %512 = vmatpush1.msra.mxu0 0.0
    %513 = vmatprep.subr.mxu0 0.0
    %514 = vmatpush1.msra.mxu0 0.0
    %515 = vmatprep.subr.mxu0 0.0
    %516 = vmatpush1.msra.mxu0 0.0
    %517 = vmatprep.subr.mxu0 0.0
    %518 = vmatpush1.msra.mxu0 0.0
    %519 = vmatprep.subr.mxu0 0.0
    %520 = vmatpush1.msra.mxu0 0.0
    %521 = vmatprep.subr.mxu0 0.0
    %522 = vmatpush1.msra.mxu0 0.0
    %523 = vmatprep.subr.mxu0 0.0
    %524 = vmatpush1.msra.mxu0 0.0
    %525 = vmatprep.subr.mxu0 0.0
    %526 = vmatpush1.msra.mxu0 0.0
    %527 = vmatprep.subr.mxu0 0.0
    %528 = vmatpush1.msra.mxu0 0.0
    %529 = vmatprep.subr.mxu0 0.0
    %530 = vmatpush1.msra.mxu0 0.0
    %531 = vmatprep.subr.mxu0 0.0
    %532 = vmatpush1.msra.mxu0 0.0
    %533 = vmatprep.subr.mxu0 0.0
    %534 = vmatpush1.msra.mxu0 0.0
    %535 = vmatprep.mubr.f32.mxu0 0.0
    %536 = vmatmul.mubr.f32.gmra.mrb[0].mxu0 %v398
    %v537 = vpop.f32.mrb[0].mxu0
    %v538 = vadd.f32 0.0, %v537
    %v539 = vpop.f32.mrb[0].mxu0
    %v540 = vadd.f32 0.0, %v539
    %541 = vdwg.mxu0
    %542 = vmatprep.subr.mxu0 %v126
    %543 = vmatpush1.msra.mxu0 %v125
    %544 = vmatprep.subr.mxu0 %v134
    %545 = vmatpush1.msra.mxu0 %v133
    %546 = vmatprep.subr.mxu0 %v142
    %547 = vmatpush1.msra.mxu0 %v141
    %548 = vmatprep.subr.mxu0 %v150
    %549 = vmatpush1.msra.mxu0 %v149
    %550 = vmatprep.subr.mxu0 0.0
    %551 = vmatpush1.msra.mxu0 0.0
    %552 = vmatprep.subr.mxu0 0.0
    %553 = vmatpush1.msra.mxu0 0.0
    %554 = vmatprep.subr.mxu0 0.0
    %555 = vmatpush1.msra.mxu0 0.0
    %556 = vmatprep.subr.mxu0 0.0
    %557 = vmatpush1.msra.mxu0 0.0
    %558 = vmatprep.subr.mxu0 0.0
    %559 = vmatpush1.msra.mxu0 0.0
    %560 = vmatprep.subr.mxu0 0.0
    %561 = vmatpush1.msra.mxu0 0.0
    %562 = vmatprep.subr.mxu0 0.0
    %563 = vmatpush1.msra.mxu0 0.0
    %564 = vmatprep.subr.mxu0 0.0
    %565 = vmatpush1.msra.mxu0 0.0
    %566 = vmatprep.subr.mxu0 0.0
    %567 = vmatpush1.msra.mxu0 0.0
    %568 = vmatprep.subr.mxu0 0.0
    %569 = vmatpush1.msra.mxu0 0.0
    %570 = vmatprep.subr.mxu0 0.0
    %571 = vmatpush1.msra.mxu0 0.0
    %572 = vmatprep.subr.mxu0 0.0
    %573 = vmatpush1.msra.mxu0 0.0
    %574 = vmatprep.subr.mxu0 0.0
    %575 = vmatpush1.msra.mxu0 0.0
    %576 = vmatprep.subr.mxu0 0.0
    %577 = vmatpush1.msra.mxu0 0.0
    %578 = vmatprep.subr.mxu0 0.0
    %579 = vmatpush1.msra.mxu0 0.0
    %580 = vmatprep.subr.mxu0 0.0
    %581 = vmatpush1.msra.mxu0 0.0
    %582 = vmatprep.subr.mxu0 0.0
    %583 = vmatpush1.msra.mxu0 0.0
    %584 = vmatprep.subr.mxu0 0.0
    %585 = vmatpush1.msra.mxu0 0.0
    %586 = vmatprep.subr.mxu0 0.0
    %587 = vmatpush1.msra.mxu0 0.0
    %588 = vmatprep.subr.mxu0 0.0
    %589 = vmatpush1.msra.mxu0 0.0
    %590 = vmatprep.subr.mxu0 0.0
    %591 = vmatpush1.msra.mxu0 0.0
    %592 = vmatprep.subr.mxu0 0.0
    %593 = vmatpush1.msra.mxu0 0.0
    %594 = vmatprep.subr.mxu0 0.0
    %595 = vmatpush1.msra.mxu0 0.0
    %596 = vmatprep.subr.mxu0 0.0
    %597 = vmatpush1.msra.mxu0 0.0
    %598 = vmatprep.subr.mxu0 0.0
    %599 = vmatpush1.msra.mxu0 0.0
    %600 = vmatprep.subr.mxu0 0.0
    %601 = vmatpush1.msra.mxu0 0.0
    %602 = vmatprep.subr.mxu0 0.0
    %603 = vmatpush1.msra.mxu0 0.0
    %604 = vmatprep.subr.mxu0 0.0
    %605 = vmatpush1.msra.mxu0 0.0
    %606 = vmatprep.mubr.f32.mxu0 0.0
    %607 = vmatmul.mubr.f32.gmra.mrb[0].mxu0 %v398
    %v608 = vpop.f32.mrb[0].mxu0
    %v609 = vadd.f32 0.0, %v608
    %v610 = vpop.f32.mrb[0].mxu0
    %v611 = vadd.f32 0.0, %v610
    %612 = vdwg.mxu0
    %613 = vmatprep.subr.mxu0 %v128
    %614 = vmatpush1.msra.mxu0 %v127
    %615 = vmatprep.subr.mxu0 %v136
    %616 = vmatpush1.msra.mxu0 %v135
    %617 = vmatprep.subr.mxu0 %v144
    %618 = vmatpush1.msra.mxu0 %v143
    %619 = vmatprep.subr.mxu0 %v152
    %620 = vmatpush1.msra.mxu0 %v151
    %621 = vmatprep.subr.mxu0 0.0
    %622 = vmatpush1.msra.mxu0 0.0
    %623 = vmatprep.subr.mxu0 0.0
    %624 = vmatpush1.msra.mxu0 0.0
    %625 = vmatprep.subr.mxu0 0.0
    %626 = vmatpush1.msra.mxu0 0.0
    %627 = vmatprep.subr.mxu0 0.0
    %628 = vmatpush1.msra.mxu0 0.0
    %629 = vmatprep.subr.mxu0 0.0
    %630 = vmatpush1.msra.mxu0 0.0
    %631 = vmatprep.subr.mxu0 0.0
    %632 = vmatpush1.msra.mxu0 0.0
    %633 = vmatprep.subr.mxu0 0.0
    %634 = vmatpush1.msra.mxu0 0.0
    %635 = vmatprep.subr.mxu0 0.0
    %636 = vmatpush1.msra.mxu0 0.0
    %637 = vmatprep.subr.mxu0 0.0
    %638 = vmatpush1.msra.mxu0 0.0
    %639 = vmatprep.subr.mxu0 0.0
    %640 = vmatpush1.msra.mxu0 0.0
    %641 = vmatprep.subr.mxu0 0.0
    %642 = vmatpush1.msra.mxu0 0.0
    %643 = vmatprep.subr.mxu0 0.0
    %644 = vmatpush1.msra.mxu0 0.0
    %645 = vmatprep.subr.mxu0 0.0
    %646 = vmatpush1.msra.mxu0 0.0
    %647 = vmatprep.subr.mxu0 0.0
    %648 = vmatpush1.msra.mxu0 0.0
    %649 = vmatprep.subr.mxu0 0.0
    %650 = vmatpush1.msra.mxu0 0.0
    %651 = vmatprep.subr.mxu0 0.0
    %652 = vmatpush1.msra.mxu0 0.0
    %653 = vmatprep.subr.mxu0 0.0
    %654 = vmatpush1.msra.mxu0 0.0
    %655 = vmatprep.subr.mxu0 0.0
    %656 = vmatpush1.msra.mxu0 0.0
    %657 = vmatprep.subr.mxu0 0.0
    %658 = vmatpush1.msra.mxu0 0.0
    %659 = vmatprep.subr.mxu0 0.0
    %660 = vmatpush1.msra.mxu0 0.0
    %661 = vmatprep.subr.mxu0 0.0
    %662 = vmatpush1.msra.mxu0 0.0
    %663 = vmatprep.subr.mxu0 0.0
    %664 = vmatpush1.msra.mxu0 0.0
    %665 = vmatprep.subr.mxu0 0.0
    %666 = vmatpush1.msra.mxu0 0.0
    %667 = vmatprep.subr.mxu0 0.0
    %668 = vmatpush1.msra.mxu0 0.0
    %669 = vmatprep.subr.mxu0 0.0
    %670 = vmatpush1.msra.mxu0 0.0
    %671 = vmatprep.subr.mxu0 0.0
    %672 = vmatpush1.msra.mxu0 0.0
    %673 = vmatprep.subr.mxu0 0.0
    %674 = vmatpush1.msra.mxu0 0.0
    %675 = vmatprep.subr.mxu0 0.0
    %676 = vmatpush1.msra.mxu0 0.0
    %677 = vmatprep.mubr.f32.mxu0 0.0
    %678 = vmatmul.mubr.f32.gmra.mrb[0].mxu0 %v398
    %v679 = vpop.f32.mrb[0].mxu0
    %v680 = vadd.f32 0.0, %v679
    %v681 = vpop.f32.mrb[0].mxu0
    %v682 = vadd.f32 0.0, %v681
    %683 = vdwg.mxu0
    %v684 = vsub.f32 %v467, %v153
    %v685 = vsub.f32 %v469, %v154
    %v686 = vsub.f32 %v538, %v155
    %v687 = vsub.f32 %v540, %v156
    %v688 = vsub.f32 %v609, %v157
    %v689 = vsub.f32 %v611, %v158
    %v690 = vsub.f32 %v680, %v159
    %v691 = vsub.f32 %v682, %v160
    %v692 = vmul.f32 %v684, %v162
    %v693 = vmul.f32 %v685, %v163
    %v694 = vmul.f32 %v686, %v164
    %v695 = vmul.f32 %v687, %v165
    %v696 = vmul.f32 %v688, %v166
    %v697 = vmul.f32 %v689, %v167
    %v698 = vmul.f32 %v690, %v168
    %v699 = vmul.f32 %v691, %v169
    %v700 = vxor.u32 %v692, 2147483648
    %v701 = vxor.u32 %v693, 2147483648
    %v702 = vxor.u32 %v694, 2147483648
    %v703 = vxor.u32 %v695, 2147483648
    %v704 = vxor.u32 %v696, 2147483648
    %v705 = vxor.u32 %v697, 2147483648
    %v706 = vxor.u32 %v698, 2147483648
    %v707 = vxor.u32 %v699, 2147483648
    %v708 = vmul.f32 %v700, 1.442695
    %v709 = vpow.pop %v708
    %v710 = vmul.f32 %v701, 1.442695
    %v711 = vpow.pop %v710
    %v712 = vmul.f32 %v702, 1.442695
    %v713 = vpow.pop %v712
    %v714 = vmul.f32 %v703, 1.442695
    %v715 = vpow.pop %v714
    %v716 = vmul.f32 %v704, 1.442695
    %v717 = vpow.pop %v716
    %v718 = vmul.f32 %v705, 1.442695
    %v719 = vpow.pop %v718
    %v720 = vmul.f32 %v706, 1.442695
    %v721 = vpow.pop %v720
    %v722 = vmul.f32 %v707, 1.442695
    %v723 = vpow.pop %v722
    %v724 = vadd.f32 %v709, 1.0
    %v725 = vadd.f32 %v711, 1.0
    %v726 = vadd.f32 %v713, 1.0
    %v727 = vadd.f32 %v715, 1.0
    %v728 = vadd.f32 %v717, 1.0
    %v729 = vadd.f32 %v719, 1.0
    %v730 = vadd.f32 %v721, 1.0
    %v731 = vadd.f32 %v723, 1.0
    %v732 = vrcp.pop %v724
    %v733 = vmul.f32 1.0, %v732
    %v734 = vrcp.pop %v725
    %v735 = vmul.f32 1.0, %v734
    %v736 = vrcp.pop %v726
    %v737 = vmul.f32 1.0, %v736
    %v738 = vrcp.pop %v727
    %v739 = vmul.f32 1.0, %v738
    %v740 = vrcp.pop %v728
    %v741 = vmul.f32 1.0, %v740
    %v742 = vrcp.pop %v729
    %v743 = vmul.f32 1.0, %v742
    %v744 = vrcp.pop %v730
    %v745 = vmul.f32 1.0, %v744
    %v746 = vrcp.pop %v731
    %v747 = vmul.f32 1.0, %v746
    %v748 = vmul.f32 %v171, %v733
    %v749 = vmul.f32 %v172, %v735
    %v750 = vmul.f32 %v173, %v737
    %v751 = vmul.f32 %v174, %v739
    %v752 = vmul.f32 %v175, %v741
    %v753 = vmul.f32 %v176, %v743
    %v754 = vmul.f32 %v177, %v745
    %v755 = vmul.f32 %v178, %v747
    %v756 = vrot.slane %v748, 4
    %v757 = vadd.f32 %v748, %v756
    %v758 = vrot.slane %v757, 2
    %v759 = vadd.f32 %v757, %v758
    %v760 = vrot.slane %v759, 1
    %v761 = vadd.f32 %v759, %v760
    %v762 = vrot.slane %v749, 4
    %v763 = vadd.f32 %v749, %v762
    %v764 = vrot.slane %v763, 2
    %v765 = vadd.f32 %v763, %v764
    %v766 = vrot.slane %v765, 1
    %v767 = vadd.f32 %v765, %v766
    %v768 = vrot.slane %v750, 4
    %v769 = vadd.f32 %v750, %v768
    %v770 = vrot.slane %v769, 2
    %v771 = vadd.f32 %v769, %v770
    %v772 = vrot.slane %v771, 1
    %v773 = vadd.f32 %v771, %v772
    %v774 = vrot.slane %v751, 4
    %v775 = vadd.f32 %v751, %v774
    %v776 = vrot.slane %v775, 2
    %v777 = vadd.f32 %v775, %v776
    %v778 = vrot.slane %v777, 1
    %v779 = vadd.f32 %v777, %v778
    %v780 = vrot.slane %v752, 4
    %v781 = vadd.f32 %v752, %v780
    %v782 = vrot.slane %v781, 2
    %v783 = vadd.f32 %v781, %v782
    %v784 = vrot.slane %v783, 1
    %v785 = vadd.f32 %v783, %v784
    %v786 = vrot.slane %v753, 4
    %v787 = vadd.f32 %v753, %v786
    %v788 = vrot.slane %v787, 2
    %v789 = vadd.f32 %v787, %v788
    %v790 = vrot.slane %v789, 1
    %v791 = vadd.f32 %v789, %v790
    %v792 = vrot.slane %v754, 4
    %v793 = vadd.f32 %v754, %v792
    %v794 = vrot.slane %v793, 2
    %v795 = vadd.f32 %v793, %v794
    %v796 = vrot.slane %v795, 1
    %v797 = vadd.f32 %v795, %v796
    %v798 = vrot.slane %v755, 4
    %v799 = vadd.f32 %v755, %v798
    %v800 = vrot.slane %v799, 2
    %v801 = vadd.f32 %v799, %v800
    %v802 = vrot.slane %v801, 1
    %v803 = vadd.f32 %v801, %v802
    %v805 = vlaneseq
    %v806 = vshrl.u32 %v805, 7
    %v807 = vsub.s32 0, %v806
    %v808 = vrot.slane %v179, %v807
    %v809 = vlaneseq
    %v810 = vshrl.u32 %v809, 7
    %v811 = vsub.s32 1, %v810
    %v812 = vrot.slane %v179, %v811
    %v813 = vlaneseq
    %v814 = vshrl.u32 %v813, 7
    %v815 = vsub.s32 2, %v814
    %v816 = vrot.slane %v179, %v815
    %v817 = vlaneseq
    %v818 = vshrl.u32 %v817, 7
    %v819 = vsub.s32 3, %v818
    %v820 = vrot.slane %v179, %v819
    %v821 = vlaneseq
    %v822 = vshrl.u32 %v821, 7
    %v823 = vsub.s32 4, %v822
    %v824 = vrot.slane %v179, %v823
    %v825 = vlaneseq
    %v826 = vshrl.u32 %v825, 7
    %v827 = vsub.s32 5, %v826
    %v828 = vrot.slane %v179, %v827
    %v829 = vlaneseq
    %v830 = vshrl.u32 %v829, 7
    %v831 = vsub.s32 6, %v830
    %v832 = vrot.slane %v179, %v831
    %v833 = vlaneseq
    %v834 = vshrl.u32 %v833, 7
    %v835 = vsub.s32 7, %v834
    %v836 = vrot.slane %v179, %v835
    %v845 = vadd.f32 %v761, %v808
    %v846 = vadd.f32 %v767, %v812
    %v847 = vadd.f32 %v773, %v816
    %v848 = vadd.f32 %v779, %v820
    %v849 = vadd.f32 %v785, %v824
    %v850 = vadd.f32 %v791, %v828
    %v851 = vadd.f32 %v797, %v832
    %v852 = vadd.f32 %v803, %v836
    %v853 = vmul.f32 %v189, 0.0
    %v854 = vmul.f32 %v190, 0.0
    %vm855 = vcmask 523264
    %v857 = vsel %vm855, %v853, 0
    %v860 = vsel %vm855, %v854, 0
    %862 = vmatprep.subr.mxu0 0.0
    %863 = vmatpush1.msra.mxu0 %v191
    %864 = vmatprep.subr.mxu0 0.0
    %865 = vmatpush1.msra.mxu0 %v192
    %866 = vmatprep.subr.mxu0 0.0
    %867 = vmatpush1.msra.mxu0 %v193
    %868 = vmatprep.subr.mxu0 0.0
    %869 = vmatpush1.msra.mxu0 %v194
    %870 = vmatprep.subr.mxu0 0.0
    %871 = vmatpush1.msra.mxu0 %v195
    %872 = vmatprep.subr.mxu0 0.0
    %873 = vmatpush1.msra.mxu0 %v196
    %874 = vmatprep.subr.mxu0 0.0
    %875 = vmatpush1.msra.mxu0 %v197
    %876 = vmatprep.subr.mxu0 0.0
    %877 = vmatpush1.msra.mxu0 %v198
    %878 = vmatprep.subr.mxu0 0.0
    %879 = vmatpush1.msra.mxu0 0.0
    %880 = vmatprep.subr.mxu0 0.0
    %881 = vmatpush1.msra.mxu0 0.0
    %882 = vmatprep.subr.mxu0 0.0
    %883 = vmatpush1.msra.mxu0 0.0
    %884 = vmatprep.subr.mxu0 0.0
    %885 = vmatpush1.msra.mxu0 0.0
    %886 = vmatprep.subr.mxu0 0.0
    %887 = vmatpush1.msra.mxu0 0.0
    %888 = vmatprep.subr.mxu0 0.0
    %889 = vmatpush1.msra.mxu0 0.0
    %890 = vmatprep.subr.mxu0 0.0
    %891 = vmatpush1.msra.mxu0 0.0
    %892 = vmatprep.subr.mxu0 0.0
    %893 = vmatpush1.msra.mxu0 0.0
    %894 = vmatprep.subr.mxu0 0.0
    %895 = vmatpush1.msra.mxu0 0.0
    %896 = vmatprep.subr.mxu0 0.0
    %897 = vmatpush1.msra.mxu0 0.0
    %898 = vmatprep.subr.mxu0 0.0
    %899 = vmatpush1.msra.mxu0 0.0
    %900 = vmatprep.subr.mxu0 0.0
    %901 = vmatpush1.msra.mxu0 0.0
    %902 = vmatprep.subr.mxu0 0.0
    %903 = vmatpush1.msra.mxu0 0.0
    %904 = vmatprep.subr.mxu0 0.0
    %905 = vmatpush1.msra.mxu0 0.0
    %906 = vmatprep.subr.mxu0 0.0
    %907 = vmatpush1.msra.mxu0 0.0
    %908 = vmatprep.subr.mxu0 0.0
    %909 = vmatpush1.msra.mxu0 0.0
    %910 = vmatprep.subr.mxu0 0.0
    %911 = vmatpush1.msra.mxu0 0.0
    %912 = vmatprep.subr.mxu0 0.0
    %913 = vmatpush1.msra.mxu0 0.0
    %914 = vmatprep.subr.mxu0 0.0
    %915 = vmatpush1.msra.mxu0 0.0
    %916 = vmatprep.subr.mxu0 0.0
    %917 = vmatpush1.msra.mxu0 0.0
    %918 = vmatprep.subr.mxu0 0.0
    %919 = vmatpush1.msra.mxu0 0.0
    %920 = vmatprep.subr.mxu0 0.0
    %921 = vmatpush1.msra.mxu0 0.0
    %922 = vmatprep.subr.mxu0 0.0
    %923 = vmatpush1.msra.mxu0 0.0
    %924 = vmatprep.subr.mxu0 0.0
    %925 = vmatpush1.msra.mxu0 0.0
    %926 = vmatprep.mubr.f32.mxu0 0.0
    %927 = vmatmul.mubr.f32.gmra.mrb[0].mxu0 %v857
    %v928 = vpop.f32.mrb[0].mxu0
    %v929 = vadd.f32 0.0, %v928
    %v930 = vpop.f32.mrb[0].mxu0
    %931 = vmatprep.mubr.f32.mxu0 0.0
    %932 = vmatmul.mubr.f32.gmra.mrb[0].mxu0 %v860
    %v933 = vpop.f32.mrb[0].mxu0
    %v934 = vadd.f32 0.0, %v933
    %v935 = vpop.f32.mrb[0].mxu0
    %936 = vdwg.mxu0
    %v937 = vsub.f32 %v929, %v180
    %v938 = vsub.f32 %v934, %v181
    %v939 = vmul.f32 %v937, %v183
    %v940 = vmul.f32 %v938, %v184
    %v941 = vxor.u32 %v939, 2147483648
    %v942 = vxor.u32 %v940, 2147483648
    %v943 = vmul.f32 %v941, 1.442695
    %v944 = vpow.pop %v943
    %v945 = vmul.f32 %v942, 1.442695
    %v946 = vpow.pop %v945
    %v947 = vadd.f32 %v944, 1.0
    %v948 = vadd.f32 %v946, 1.0
    %v949 = vrcp.pop %v947
    %v950 = vmul.f32 1.0, %v949
    %v951 = vrcp.pop %v948
    %v952 = vmul.f32 1.0, %v951
    %v953 = vmul.f32 %v186, %v950
    %v954 = vmul.f32 %v187, %v952
    %v955 = vadd.f32 %v953, %v954
    %v956 = vrot.slane %v955, 4
    %v957 = vadd.f32 %v955, %v956
    %v958 = vrot.slane %v957, 2
    %v959 = vadd.f32 %v957, %v958
    %v960 = vrot.slane %v959, 1
    %v961 = vadd.f32 %v959, %v960
    %v962 = vmul.f32 %v188, 0.0
    %v963 = vadd.f32 %v962, %v845
    %v964 = vadd.f32 %v963, %v961
    %v965 = vadd.f32 %v845, %v961
    %v966 = vrcp.pop %v965
    %v967 = vmul.f32 %v965, %v966
    %v968 = vsub.f32 2.0, %v967
    %v969 = vmul.f32 %v966, %v968
    %971 = vrot.lane.b32.xlu0 %v969, 64
    %v972 = vpop.permute.xlu0 %971
    %v974 = vmul.f32 %v964, %v972
    %v975 = vlaneseq
    %v976 = vshrl.u32 %v975, 7
    %v977 = vsub.s32 0, %v976
    %v978 = vrot.slane %v974, %v977
    %v979 = vmul.f32 %v978, %v189
    %v980 = vmul.f32 %v978, %v190
    %v982 = vsel %vm855, %v979, 0
    %v985 = vsel %vm855, %v980, 0
    %987 = vmatprep.subr.mxu0 0.0
    %988 = vmatpush1.msra.mxu0 %v191
    %989 = vmatprep.subr.mxu0 0.0
    %990 = vmatpush1.msra.mxu0 %v192
    %991 = vmatprep.subr.mxu0 0.0
    %992 = vmatpush1.msra.mxu0 %v193
    %993 = vmatprep.subr.mxu0 0.0
    %994 = vmatpush1.msra.mxu0 %v194
    %995 = vmatprep.subr.mxu0 0.0
    %996 = vmatpush1.msra.mxu0 %v195
    %997 = vmatprep.subr.mxu0 0.0
    %998 = vmatpush1.msra.mxu0 %v196
    %999 = vmatprep.subr.mxu0 0.0
    %1000 = vmatpush1.msra.mxu0 %v197
    %1001 = vmatprep.subr.mxu0 0.0
    %1002 = vmatpush1.msra.mxu0 %v198
    %1003 = vmatprep.subr.mxu0 0.0
    %1004 = vmatpush1.msra.mxu0 0.0
    %1005 = vmatprep.subr.mxu0 0.0
    %1006 = vmatpush1.msra.mxu0 0.0
    %1007 = vmatprep.subr.mxu0 0.0
    %1008 = vmatpush1.msra.mxu0 0.0
    %1009 = vmatprep.subr.mxu0 0.0
    %1010 = vmatpush1.msra.mxu0 0.0
    %1011 = vmatprep.subr.mxu0 0.0
    %1012 = vmatpush1.msra.mxu0 0.0
    %1013 = vmatprep.subr.mxu0 0.0
    %1014 = vmatpush1.msra.mxu0 0.0
    %1015 = vmatprep.subr.mxu0 0.0
    %1016 = vmatpush1.msra.mxu0 0.0
    %1017 = vmatprep.subr.mxu0 0.0
    %1018 = vmatpush1.msra.mxu0 0.0
    %1019 = vmatprep.subr.mxu0 0.0
    %1020 = vmatpush1.msra.mxu0 0.0
    %1021 = vmatprep.subr.mxu0 0.0
    %1022 = vmatpush1.msra.mxu0 0.0
    %1023 = vmatprep.subr.mxu0 0.0
    %1024 = vmatpush1.msra.mxu0 0.0
    %1025 = vmatprep.subr.mxu0 0.0
    %1026 = vmatpush1.msra.mxu0 0.0
    %1027 = vmatprep.subr.mxu0 0.0
    %1028 = vmatpush1.msra.mxu0 0.0
    %1029 = vmatprep.subr.mxu0 0.0
    %1030 = vmatpush1.msra.mxu0 0.0
    %1031 = vmatprep.subr.mxu0 0.0
    %1032 = vmatpush1.msra.mxu0 0.0
    %1033 = vmatprep.subr.mxu0 0.0
    %1034 = vmatpush1.msra.mxu0 0.0
    %1035 = vmatprep.subr.mxu0 0.0
    %1036 = vmatpush1.msra.mxu0 0.0
    %1037 = vmatprep.subr.mxu0 0.0
    %1038 = vmatpush1.msra.mxu0 0.0
    %1039 = vmatprep.subr.mxu0 0.0
    %1040 = vmatpush1.msra.mxu0 0.0
    %1041 = vmatprep.subr.mxu0 0.0
    %1042 = vmatpush1.msra.mxu0 0.0
    %1043 = vmatprep.subr.mxu0 0.0
    %1044 = vmatpush1.msra.mxu0 0.0
    %1045 = vmatprep.subr.mxu0 0.0
    %1046 = vmatpush1.msra.mxu0 0.0
    %1047 = vmatprep.subr.mxu0 0.0
    %1048 = vmatpush1.msra.mxu0 0.0
    %1049 = vmatprep.subr.mxu0 0.0
    %1050 = vmatpush1.msra.mxu0 0.0
    %1051 = vmatprep.mubr.f32.mxu0 0.0
    %1052 = vmatmul.mubr.f32.gmra.mrb[0].mxu0 %v982
    %v1053 = vpop.f32.mrb[0].mxu0
    %v1054 = vadd.f32 0.0, %v1053
    %v1055 = vpop.f32.mrb[0].mxu0
    %1056 = vmatprep.mubr.f32.mxu0 0.0
    %1057 = vmatmul.mubr.f32.gmra.mrb[0].mxu0 %v985
    %v1058 = vpop.f32.mrb[0].mxu0
    %v1059 = vadd.f32 0.0, %v1058
    %v1060 = vpop.f32.mrb[0].mxu0
    %1061 = vdwg.mxu0
    %v1062 = vsub.f32 %v1054, %v180
    %v1063 = vsub.f32 %v1059, %v181
    %v1064 = vmul.f32 %v1062, %v183
    %v1065 = vmul.f32 %v1063, %v184
    %v1066 = vxor.u32 %v1064, 2147483648
    %v1067 = vxor.u32 %v1065, 2147483648
    %v1068 = vmul.f32 %v1066, 1.442695
    %v1069 = vpow.pop %v1068
    %v1070 = vmul.f32 %v1067, 1.442695
    %v1071 = vpow.pop %v1070
    %v1072 = vadd.f32 %v1069, 1.0
    %v1073 = vadd.f32 %v1071, 1.0
    %v1074 = vrcp.pop %v1072
    %v1075 = vmul.f32 1.0, %v1074
    %v1076 = vrcp.pop %v1073
    %v1077 = vmul.f32 1.0, %v1076
    %v1078 = vmul.f32 %v186, %v1075
    %v1079 = vmul.f32 %v187, %v1077
    %v1080 = vadd.f32 %v1078, %v1079
    %v1081 = vrot.slane %v1080, 4
    %v1082 = vadd.f32 %v1080, %v1081
    %v1083 = vrot.slane %v1082, 2
    %v1084 = vadd.f32 %v1082, %v1083
    %v1085 = vrot.slane %v1084, 1
    %v1086 = vadd.f32 %v1084, %v1085
    %v1087 = vmul.f32 %v188, %v974
    %v1088 = vadd.f32 %v1087, %v845
    %v1089 = vadd.f32 %v1088, %v1086
    %v1090 = vadd.f32 %v845, %v1086
    %v1091 = vrcp.pop %v1090
    %v1092 = vmul.f32 %v1090, %v1091
    %v1093 = vsub.f32 2.0, %v1092
    %v1094 = vmul.f32 %v1091, %v1093
    %1096 = vrot.lane.b32.xlu0 %v1094, 64
    %v1097 = vpop.permute.xlu0 %1096
    %v1099 = vmul.f32 %v1089, %v1097
    %v1100 = vlaneseq
    %v1101 = vshrl.u32 %v1100, 7
    %v1102 = vsub.s32 0, %v1101
    %v1103 = vrot.slane %v1099, %v1102
    %v1104 = vmul.f32 %v1103, %v189
    %v1105 = vmul.f32 %v1103, %v190
    %v1107 = vsel %vm855, %v1104, 0
    %v1110 = vsel %vm855, %v1105, 0
    %1112 = vmatprep.subr.mxu0 0.0
    %1113 = vmatpush1.msra.mxu0 %v191
    %1114 = vmatprep.subr.mxu0 0.0
    %1115 = vmatpush1.msra.mxu0 %v192
    %1116 = vmatprep.subr.mxu0 0.0
    %1117 = vmatpush1.msra.mxu0 %v193
    %1118 = vmatprep.subr.mxu0 0.0
    %1119 = vmatpush1.msra.mxu0 %v194
    %1120 = vmatprep.subr.mxu0 0.0
    %1121 = vmatpush1.msra.mxu0 %v195
    %1122 = vmatprep.subr.mxu0 0.0
    %1123 = vmatpush1.msra.mxu0 %v196
    %1124 = vmatprep.subr.mxu0 0.0
    %1125 = vmatpush1.msra.mxu0 %v197
    %1126 = vmatprep.subr.mxu0 0.0
    %1127 = vmatpush1.msra.mxu0 %v198
    %1128 = vmatprep.subr.mxu0 0.0
    %1129 = vmatpush1.msra.mxu0 0.0
    %1130 = vmatprep.subr.mxu0 0.0
    %1131 = vmatpush1.msra.mxu0 0.0
    %1132 = vmatprep.subr.mxu0 0.0
    %1133 = vmatpush1.msra.mxu0 0.0
    %1134 = vmatprep.subr.mxu0 0.0
    %1135 = vmatpush1.msra.mxu0 0.0
    %1136 = vmatprep.subr.mxu0 0.0
    %1137 = vmatpush1.msra.mxu0 0.0
    %1138 = vmatprep.subr.mxu0 0.0
    %1139 = vmatpush1.msra.mxu0 0.0
    %1140 = vmatprep.subr.mxu0 0.0
    %1141 = vmatpush1.msra.mxu0 0.0
    %1142 = vmatprep.subr.mxu0 0.0
    %1143 = vmatpush1.msra.mxu0 0.0
    %1144 = vmatprep.subr.mxu0 0.0
    %1145 = vmatpush1.msra.mxu0 0.0
    %1146 = vmatprep.subr.mxu0 0.0
    %1147 = vmatpush1.msra.mxu0 0.0
    %1148 = vmatprep.subr.mxu0 0.0
    %1149 = vmatpush1.msra.mxu0 0.0
    %1150 = vmatprep.subr.mxu0 0.0
    %1151 = vmatpush1.msra.mxu0 0.0
    %1152 = vmatprep.subr.mxu0 0.0
    %1153 = vmatpush1.msra.mxu0 0.0
    %1154 = vmatprep.subr.mxu0 0.0
    %1155 = vmatpush1.msra.mxu0 0.0
    %1156 = vmatprep.subr.mxu0 0.0
    %1157 = vmatpush1.msra.mxu0 0.0
    %1158 = vmatprep.subr.mxu0 0.0
    %1159 = vmatpush1.msra.mxu0 0.0
    %1160 = vmatprep.subr.mxu0 0.0
    %1161 = vmatpush1.msra.mxu0 0.0
    %1162 = vmatprep.subr.mxu0 0.0
    %1163 = vmatpush1.msra.mxu0 0.0
    %1164 = vmatprep.subr.mxu0 0.0
    %1165 = vmatpush1.msra.mxu0 0.0
    %1166 = vmatprep.subr.mxu0 0.0
    %1167 = vmatpush1.msra.mxu0 0.0
    %1168 = vmatprep.subr.mxu0 0.0
    %1169 = vmatpush1.msra.mxu0 0.0
    %1170 = vmatprep.subr.mxu0 0.0
    %1171 = vmatpush1.msra.mxu0 0.0
    %1172 = vmatprep.subr.mxu0 0.0
    %1173 = vmatpush1.msra.mxu0 0.0
    %1174 = vmatprep.subr.mxu0 0.0
    %1175 = vmatpush1.msra.mxu0 0.0
    %1176 = vmatprep.mubr.f32.mxu0 0.0
    %1177 = vmatmul.mubr.f32.gmra.mrb[0].mxu0 %v1107
    %v1178 = vpop.f32.mrb[0].mxu0
    %v1179 = vadd.f32 0.0, %v1178
    %v1180 = vpop.f32.mrb[0].mxu0
    %1181 = vmatprep.mubr.f32.mxu0 0.0
    %1182 = vmatmul.mubr.f32.gmra.mrb[0].mxu0 %v1110
    %v1183 = vpop.f32.mrb[0].mxu0
    %v1184 = vadd.f32 0.0, %v1183
    %v1185 = vpop.f32.mrb[0].mxu0
    %1186 = vdwg.mxu0
    %v1187 = vsub.f32 %v1179, %v180
    %v1188 = vsub.f32 %v1184, %v181
    %v1189 = vmul.f32 %v1187, %v183
    %v1190 = vmul.f32 %v1188, %v184
    %v1191 = vxor.u32 %v1189, 2147483648
    %v1192 = vxor.u32 %v1190, 2147483648
    %v1193 = vmul.f32 %v1191, 1.442695
    %v1194 = vpow.pop %v1193
    %v1195 = vmul.f32 %v1192, 1.442695
    %v1196 = vpow.pop %v1195
    %v1197 = vadd.f32 %v1194, 1.0
    %v1198 = vadd.f32 %v1196, 1.0
    %v1199 = vrcp.pop %v1197
    %v1200 = vmul.f32 1.0, %v1199
    %v1201 = vrcp.pop %v1198
    %v1202 = vmul.f32 1.0, %v1201
    %v1203 = vmul.f32 %v186, %v1200
    %v1204 = vmul.f32 %v187, %v1202
    %v1205 = vadd.f32 %v1203, %v1204
    %v1206 = vrot.slane %v1205, 4
    %v1207 = vadd.f32 %v1205, %v1206
    %v1208 = vrot.slane %v1207, 2
    %v1209 = vadd.f32 %v1207, %v1208
    %v1210 = vrot.slane %v1209, 1
    %v1211 = vadd.f32 %v1209, %v1210
    %v1212 = vmul.f32 %v188, %v1099
    %v1213 = vadd.f32 %v1212, %v845
    %v1214 = vadd.f32 %v1213, %v1211
    %v1215 = vadd.f32 %v845, %v1211
    %v1216 = vrcp.pop %v1215
    %v1217 = vmul.f32 %v1215, %v1216
    %v1218 = vsub.f32 2.0, %v1217
    %v1219 = vmul.f32 %v1216, %v1218
    %1221 = vrot.lane.b32.xlu0 %v1219, 64
    %v1222 = vpop.permute.xlu0 %1221
    %v1224 = vmul.f32 %v1214, %v1222
    %v1225 = vlaneseq
    %v1226 = vshrl.u32 %v1225, 7
    %v1227 = vsub.s32 0, %v1226
    %v1228 = vrot.slane %v1224, %v1227
    %v1229 = vmul.f32 %v1228, %v189
    %v1230 = vmul.f32 %v1228, %v190
    %v1232 = vsel %vm855, %v1229, 0
    %v1235 = vsel %vm855, %v1230, 0
    %1237 = vmatprep.subr.mxu0 0.0
    %1238 = vmatpush1.msra.mxu0 %v191
    %1239 = vmatprep.subr.mxu0 0.0
    %1240 = vmatpush1.msra.mxu0 %v192
    %1241 = vmatprep.subr.mxu0 0.0
    %1242 = vmatpush1.msra.mxu0 %v193
    %1243 = vmatprep.subr.mxu0 0.0
    %1244 = vmatpush1.msra.mxu0 %v194
    %1245 = vmatprep.subr.mxu0 0.0
    %1246 = vmatpush1.msra.mxu0 %v195
    %1247 = vmatprep.subr.mxu0 0.0
    %1248 = vmatpush1.msra.mxu0 %v196
    %1249 = vmatprep.subr.mxu0 0.0
    %1250 = vmatpush1.msra.mxu0 %v197
    %1251 = vmatprep.subr.mxu0 0.0
    %1252 = vmatpush1.msra.mxu0 %v198
    %1253 = vmatprep.subr.mxu0 0.0
    %1254 = vmatpush1.msra.mxu0 0.0
    %1255 = vmatprep.subr.mxu0 0.0
    %1256 = vmatpush1.msra.mxu0 0.0
    %1257 = vmatprep.subr.mxu0 0.0
    %1258 = vmatpush1.msra.mxu0 0.0
    %1259 = vmatprep.subr.mxu0 0.0
    %1260 = vmatpush1.msra.mxu0 0.0
    %1261 = vmatprep.subr.mxu0 0.0
    %1262 = vmatpush1.msra.mxu0 0.0
    %1263 = vmatprep.subr.mxu0 0.0
    %1264 = vmatpush1.msra.mxu0 0.0
    %1265 = vmatprep.subr.mxu0 0.0
    %1266 = vmatpush1.msra.mxu0 0.0
    %1267 = vmatprep.subr.mxu0 0.0
    %1268 = vmatpush1.msra.mxu0 0.0
    %1269 = vmatprep.subr.mxu0 0.0
    %1270 = vmatpush1.msra.mxu0 0.0
    %1271 = vmatprep.subr.mxu0 0.0
    %1272 = vmatpush1.msra.mxu0 0.0
    %1273 = vmatprep.subr.mxu0 0.0
    %1274 = vmatpush1.msra.mxu0 0.0
    %1275 = vmatprep.subr.mxu0 0.0
    %1276 = vmatpush1.msra.mxu0 0.0
    %1277 = vmatprep.subr.mxu0 0.0
    %1278 = vmatpush1.msra.mxu0 0.0
    %1279 = vmatprep.subr.mxu0 0.0
    %1280 = vmatpush1.msra.mxu0 0.0
    %1281 = vmatprep.subr.mxu0 0.0
    %1282 = vmatpush1.msra.mxu0 0.0
    %1283 = vmatprep.subr.mxu0 0.0
    %1284 = vmatpush1.msra.mxu0 0.0
    %1285 = vmatprep.subr.mxu0 0.0
    %1286 = vmatpush1.msra.mxu0 0.0
    %1287 = vmatprep.subr.mxu0 0.0
    %1288 = vmatpush1.msra.mxu0 0.0
    %1289 = vmatprep.subr.mxu0 0.0
    %1290 = vmatpush1.msra.mxu0 0.0
    %1291 = vmatprep.subr.mxu0 0.0
    %1292 = vmatpush1.msra.mxu0 0.0
    %1293 = vmatprep.subr.mxu0 0.0
    %1294 = vmatpush1.msra.mxu0 0.0
    %1295 = vmatprep.subr.mxu0 0.0
    %1296 = vmatpush1.msra.mxu0 0.0
    %1297 = vmatprep.subr.mxu0 0.0
    %1298 = vmatpush1.msra.mxu0 0.0
    %1299 = vmatprep.subr.mxu0 0.0
    %1300 = vmatpush1.msra.mxu0 0.0
    %1301 = vmatprep.mubr.f32.mxu0 0.0
    %1302 = vmatmul.mubr.f32.gmra.mrb[0].mxu0 %v1232
    %v1303 = vpop.f32.mrb[0].mxu0
    %v1304 = vadd.f32 0.0, %v1303
    %v1305 = vpop.f32.mrb[0].mxu0
    %1306 = vmatprep.mubr.f32.mxu0 0.0
    %1307 = vmatmul.mubr.f32.gmra.mrb[0].mxu0 %v1235
    %v1308 = vpop.f32.mrb[0].mxu0
    %v1309 = vadd.f32 0.0, %v1308
    %v1310 = vpop.f32.mrb[0].mxu0
    %1311 = vdwg.mxu0
    %v1312 = vsub.f32 %v1304, %v180
    %v1313 = vsub.f32 %v1309, %v181
    %v1314 = vmul.f32 %v1312, %v183
    %v1315 = vmul.f32 %v1313, %v184
    %v1316 = vxor.u32 %v1314, 2147483648
    %v1317 = vxor.u32 %v1315, 2147483648
    %v1318 = vmul.f32 %v1316, 1.442695
    %v1319 = vpow.pop %v1318
    %v1320 = vmul.f32 %v1317, 1.442695
    %v1321 = vpow.pop %v1320
    %v1322 = vadd.f32 %v1319, 1.0
    %v1323 = vadd.f32 %v1321, 1.0
    %v1324 = vrcp.pop %v1322
    %v1325 = vmul.f32 1.0, %v1324
    %v1326 = vrcp.pop %v1323
    %v1327 = vmul.f32 1.0, %v1326
    %v1328 = vmul.f32 %v186, %v1325
    %v1329 = vmul.f32 %v187, %v1327
    %v1330 = vadd.f32 %v1328, %v1329
    %v1331 = vrot.slane %v1330, 4
    %v1332 = vadd.f32 %v1330, %v1331
    %v1333 = vrot.slane %v1332, 2
    %v1334 = vadd.f32 %v1332, %v1333
    %v1335 = vrot.slane %v1334, 1
    %v1336 = vadd.f32 %v1334, %v1335
    %v1337 = vmul.f32 %v188, %v1224
    %v1338 = vadd.f32 %v1337, %v845
    %v1339 = vadd.f32 %v1338, %v1336
    %v1340 = vadd.f32 %v845, %v1336
    %v1341 = vrcp.pop %v1340
    %v1342 = vmul.f32 %v1340, %v1341
    %v1343 = vsub.f32 2.0, %v1342
    %v1344 = vmul.f32 %v1341, %v1343
    %1346 = vrot.lane.b32.xlu0 %v1344, 64
    %v1347 = vpop.permute.xlu0 %1346
    %v1349 = vmul.f32 %v1339, %v1347
    %v1350 = vlaneseq
    %v1351 = vshrl.u32 %v1350, 7
    %v1352 = vsub.s32 0, %v1351
    %v1353 = vrot.slane %v1349, %v1352
    %v1354 = vmul.f32 %v1353, %v189
    %v1355 = vmul.f32 %v1353, %v190
    %v1357 = vsel %vm855, %v1354, 0
    %v1360 = vsel %vm855, %v1355, 0
    %1362 = vmatprep.subr.mxu0 0.0
    %1363 = vmatpush1.msra.mxu0 %v191
    %1364 = vmatprep.subr.mxu0 0.0
    %1365 = vmatpush1.msra.mxu0 %v192
    %1366 = vmatprep.subr.mxu0 0.0
    %1367 = vmatpush1.msra.mxu0 %v193
    %1368 = vmatprep.subr.mxu0 0.0
    %1369 = vmatpush1.msra.mxu0 %v194
    %1370 = vmatprep.subr.mxu0 0.0
    %1371 = vmatpush1.msra.mxu0 %v195
    %1372 = vmatprep.subr.mxu0 0.0
    %1373 = vmatpush1.msra.mxu0 %v196
    %1374 = vmatprep.subr.mxu0 0.0
    %1375 = vmatpush1.msra.mxu0 %v197
    %1376 = vmatprep.subr.mxu0 0.0
    %1377 = vmatpush1.msra.mxu0 %v198
    %1378 = vmatprep.subr.mxu0 0.0
    %1379 = vmatpush1.msra.mxu0 0.0
    %1380 = vmatprep.subr.mxu0 0.0
    %1381 = vmatpush1.msra.mxu0 0.0
    %1382 = vmatprep.subr.mxu0 0.0
    %1383 = vmatpush1.msra.mxu0 0.0
    %1384 = vmatprep.subr.mxu0 0.0
    %1385 = vmatpush1.msra.mxu0 0.0
    %1386 = vmatprep.subr.mxu0 0.0
    %1387 = vmatpush1.msra.mxu0 0.0
    %1388 = vmatprep.subr.mxu0 0.0
    %1389 = vmatpush1.msra.mxu0 0.0
    %1390 = vmatprep.subr.mxu0 0.0
    %1391 = vmatpush1.msra.mxu0 0.0
    %1392 = vmatprep.subr.mxu0 0.0
    %1393 = vmatpush1.msra.mxu0 0.0
    %1394 = vmatprep.subr.mxu0 0.0
    %1395 = vmatpush1.msra.mxu0 0.0
    %1396 = vmatprep.subr.mxu0 0.0
    %1397 = vmatpush1.msra.mxu0 0.0
    %1398 = vmatprep.subr.mxu0 0.0
    %1399 = vmatpush1.msra.mxu0 0.0
    %1400 = vmatprep.subr.mxu0 0.0
    %1401 = vmatpush1.msra.mxu0 0.0
    %1402 = vmatprep.subr.mxu0 0.0
    %1403 = vmatpush1.msra.mxu0 0.0
    %1404 = vmatprep.subr.mxu0 0.0
    %1405 = vmatpush1.msra.mxu0 0.0
    %1406 = vmatprep.subr.mxu0 0.0
    %1407 = vmatpush1.msra.mxu0 0.0
    %1408 = vmatprep.subr.mxu0 0.0
    %1409 = vmatpush1.msra.mxu0 0.0
    %1410 = vmatprep.subr.mxu0 0.0
    %1411 = vmatpush1.msra.mxu0 0.0
    %1412 = vmatprep.subr.mxu0 0.0
    %1413 = vmatpush1.msra.mxu0 0.0
    %1414 = vmatprep.subr.mxu0 0.0
    %1415 = vmatpush1.msra.mxu0 0.0
    %1416 = vmatprep.subr.mxu0 0.0
    %1417 = vmatpush1.msra.mxu0 0.0
    %1418 = vmatprep.subr.mxu0 0.0
    %1419 = vmatpush1.msra.mxu0 0.0
    %1420 = vmatprep.subr.mxu0 0.0
    %1421 = vmatpush1.msra.mxu0 0.0
    %1422 = vmatprep.subr.mxu0 0.0
    %1423 = vmatpush1.msra.mxu0 0.0
    %1424 = vmatprep.subr.mxu0 0.0
    %1425 = vmatpush1.msra.mxu0 0.0
    %1426 = vmatprep.mubr.f32.mxu0 0.0
    %1427 = vmatmul.mubr.f32.gmra.mrb[0].mxu0 %v1357
    %v1428 = vpop.f32.mrb[0].mxu0
    %v1429 = vadd.f32 0.0, %v1428
    %v1430 = vpop.f32.mrb[0].mxu0
    %1431 = vmatprep.mubr.f32.mxu0 0.0
    %1432 = vmatmul.mubr.f32.gmra.mrb[0].mxu0 %v1360
    %v1433 = vpop.f32.mrb[0].mxu0
    %v1434 = vadd.f32 0.0, %v1433
    %v1435 = vpop.f32.mrb[0].mxu0
    %1436 = vdwg.mxu0
    %v1437 = vsub.f32 %v1429, %v180
    %v1438 = vsub.f32 %v1434, %v181
    %v1439 = vmul.f32 %v1437, %v183
    %v1440 = vmul.f32 %v1438, %v184
    %v1441 = vxor.u32 %v1439, 2147483648
    %v1442 = vxor.u32 %v1440, 2147483648
    %v1443 = vmul.f32 %v1441, 1.442695
    %v1444 = vpow.pop %v1443
    %v1445 = vmul.f32 %v1442, 1.442695
    %v1446 = vpow.pop %v1445
    %v1447 = vadd.f32 %v1444, 1.0
    %v1448 = vadd.f32 %v1446, 1.0
    %v1449 = vrcp.pop %v1447
    %v1450 = vmul.f32 1.0, %v1449
    %v1451 = vrcp.pop %v1448
    %v1452 = vmul.f32 1.0, %v1451
    %v1453 = vmul.f32 %v186, %v1450
    %v1454 = vmul.f32 %v187, %v1452
    %v1455 = vadd.f32 %v1453, %v1454
    %v1456 = vrot.slane %v1455, 4
    %v1457 = vadd.f32 %v1455, %v1456
    %v1458 = vrot.slane %v1457, 2
    %v1459 = vadd.f32 %v1457, %v1458
    %v1460 = vrot.slane %v1459, 1
    %v1461 = vadd.f32 %v1459, %v1460
    %v1462 = vmul.f32 %v188, %v1349
    %v1463 = vadd.f32 %v1462, %v845
    %v1464 = vadd.f32 %v1463, %v1461
    %v1465 = vadd.f32 %v845, %v1461
    %v1466 = vrcp.pop %v1465
    %v1467 = vmul.f32 %v1465, %v1466
    %v1468 = vsub.f32 2.0, %v1467
    %v1469 = vmul.f32 %v1466, %v1468
    %1471 = vrot.lane.b32.xlu0 %v1469, 64
    %v1472 = vpop.permute.xlu0 %1471
    %v1474 = vmul.f32 %v1464, %v1472
    %v1475 = vlaneseq
    %v1476 = vshrl.u32 %v1475, 7
    %v1477 = vsub.s32 0, %v1476
    %v1478 = vrot.slane %v1474, %v1477
    %v1479 = vmul.f32 %v1478, %v189
    %v1480 = vmul.f32 %v1478, %v190
    %v1482 = vsel %vm855, %v1479, 0
    %v1485 = vsel %vm855, %v1480, 0
    %1487 = vmatprep.subr.mxu0 0.0
    %1488 = vmatpush1.msra.mxu0 %v191
    %1489 = vmatprep.subr.mxu0 0.0
    %1490 = vmatpush1.msra.mxu0 %v192
    %1491 = vmatprep.subr.mxu0 0.0
    %1492 = vmatpush1.msra.mxu0 %v193
    %1493 = vmatprep.subr.mxu0 0.0
    %1494 = vmatpush1.msra.mxu0 %v194
    %1495 = vmatprep.subr.mxu0 0.0
    %1496 = vmatpush1.msra.mxu0 %v195
    %1497 = vmatprep.subr.mxu0 0.0
    %1498 = vmatpush1.msra.mxu0 %v196
    %1499 = vmatprep.subr.mxu0 0.0
    %1500 = vmatpush1.msra.mxu0 %v197
    %1501 = vmatprep.subr.mxu0 0.0
    %1502 = vmatpush1.msra.mxu0 %v198
    %1503 = vmatprep.subr.mxu0 0.0
    %1504 = vmatpush1.msra.mxu0 0.0
    %1505 = vmatprep.subr.mxu0 0.0
    %1506 = vmatpush1.msra.mxu0 0.0
    %1507 = vmatprep.subr.mxu0 0.0
    %1508 = vmatpush1.msra.mxu0 0.0
    %1509 = vmatprep.subr.mxu0 0.0
    %1510 = vmatpush1.msra.mxu0 0.0
    %1511 = vmatprep.subr.mxu0 0.0
    %1512 = vmatpush1.msra.mxu0 0.0
    %1513 = vmatprep.subr.mxu0 0.0
    %1514 = vmatpush1.msra.mxu0 0.0
    %1515 = vmatprep.subr.mxu0 0.0
    %1516 = vmatpush1.msra.mxu0 0.0
    %1517 = vmatprep.subr.mxu0 0.0
    %1518 = vmatpush1.msra.mxu0 0.0
    %1519 = vmatprep.subr.mxu0 0.0
    %1520 = vmatpush1.msra.mxu0 0.0
    %1521 = vmatprep.subr.mxu0 0.0
    %1522 = vmatpush1.msra.mxu0 0.0
    %1523 = vmatprep.subr.mxu0 0.0
    %1524 = vmatpush1.msra.mxu0 0.0
    %1525 = vmatprep.subr.mxu0 0.0
    %1526 = vmatpush1.msra.mxu0 0.0
    %1527 = vmatprep.subr.mxu0 0.0
    %1528 = vmatpush1.msra.mxu0 0.0
    %1529 = vmatprep.subr.mxu0 0.0
    %1530 = vmatpush1.msra.mxu0 0.0
    %1531 = vmatprep.subr.mxu0 0.0
    %1532 = vmatpush1.msra.mxu0 0.0
    %1533 = vmatprep.subr.mxu0 0.0
    %1534 = vmatpush1.msra.mxu0 0.0
    %1535 = vmatprep.subr.mxu0 0.0
    %1536 = vmatpush1.msra.mxu0 0.0
    %1537 = vmatprep.subr.mxu0 0.0
    %1538 = vmatpush1.msra.mxu0 0.0
    %1539 = vmatprep.subr.mxu0 0.0
    %1540 = vmatpush1.msra.mxu0 0.0
    %1541 = vmatprep.subr.mxu0 0.0
    %1542 = vmatpush1.msra.mxu0 0.0
    %1543 = vmatprep.subr.mxu0 0.0
    %1544 = vmatpush1.msra.mxu0 0.0
    %1545 = vmatprep.subr.mxu0 0.0
    %1546 = vmatpush1.msra.mxu0 0.0
    %1547 = vmatprep.subr.mxu0 0.0
    %1548 = vmatpush1.msra.mxu0 0.0
    %1549 = vmatprep.subr.mxu0 0.0
    %1550 = vmatpush1.msra.mxu0 0.0
    %1551 = vmatprep.mubr.f32.mxu0 0.0
    %1552 = vmatmul.mubr.f32.gmra.mrb[0].mxu0 %v1482
    %v1553 = vpop.f32.mrb[0].mxu0
    %v1554 = vadd.f32 0.0, %v1553
    %v1555 = vpop.f32.mrb[0].mxu0
    %1556 = vmatprep.mubr.f32.mxu0 0.0
    %1557 = vmatmul.mubr.f32.gmra.mrb[0].mxu0 %v1485
    %v1558 = vpop.f32.mrb[0].mxu0
    %v1559 = vadd.f32 0.0, %v1558
    %v1560 = vpop.f32.mrb[0].mxu0
    %1561 = vdwg.mxu0
    %v1562 = vsub.f32 %v1554, %v180
    %v1563 = vsub.f32 %v1559, %v181
    %v1564 = vmul.f32 %v1562, %v183
    %v1565 = vmul.f32 %v1563, %v184
    %v1566 = vxor.u32 %v1564, 2147483648
    %v1567 = vxor.u32 %v1565, 2147483648
    %v1568 = vmul.f32 %v1566, 1.442695
    %v1569 = vpow.pop %v1568
    %v1570 = vmul.f32 %v1567, 1.442695
    %v1571 = vpow.pop %v1570
    %v1572 = vadd.f32 %v1569, 1.0
    %v1573 = vadd.f32 %v1571, 1.0
    %v1574 = vrcp.pop %v1572
    %v1575 = vmul.f32 1.0, %v1574
    %v1576 = vrcp.pop %v1573
    %v1577 = vmul.f32 1.0, %v1576
    %v1578 = vmul.f32 %v186, %v1575
    %v1579 = vmul.f32 %v187, %v1577
    %v1580 = vadd.f32 %v1578, %v1579
    %v1581 = vrot.slane %v1580, 4
    %v1582 = vadd.f32 %v1580, %v1581
    %v1583 = vrot.slane %v1582, 2
    %v1584 = vadd.f32 %v1582, %v1583
    %v1585 = vrot.slane %v1584, 1
    %v1586 = vadd.f32 %v1584, %v1585
    %v1587 = vmul.f32 %v188, %v1474
    %v1588 = vadd.f32 %v1587, %v845
    %v1589 = vadd.f32 %v1588, %v1586
    %v1590 = vadd.f32 %v845, %v1586
    %v1591 = vrcp.pop %v1590
    %v1592 = vmul.f32 %v1590, %v1591
    %v1593 = vsub.f32 2.0, %v1592
    %v1594 = vmul.f32 %v1591, %v1593
    %1596 = vrot.lane.b32.xlu0 %v1594, 64
    %v1597 = vpop.permute.xlu0 %1596
    %v1599 = vmul.f32 %v1589, %v1597
    %v1600 = vlaneseq
    %v1601 = vshrl.u32 %v1600, 7
    %v1602 = vsub.s32 0, %v1601
    %v1603 = vrot.slane %v1599, %v1602
    %v1604 = vmul.f32 %v1603, %v189
    %v1605 = vmul.f32 %v1603, %v190
    %v1607 = vsel %vm855, %v1604, 0
    %v1610 = vsel %vm855, %v1605, 0
    %1612 = vmatprep.subr.mxu0 0.0
    %1613 = vmatpush1.msra.mxu0 %v191
    %1614 = vmatprep.subr.mxu0 0.0
    %1615 = vmatpush1.msra.mxu0 %v192
    %1616 = vmatprep.subr.mxu0 0.0
    %1617 = vmatpush1.msra.mxu0 %v193
    %1618 = vmatprep.subr.mxu0 0.0
    %1619 = vmatpush1.msra.mxu0 %v194
    %1620 = vmatprep.subr.mxu0 0.0
    %1621 = vmatpush1.msra.mxu0 %v195
    %1622 = vmatprep.subr.mxu0 0.0
    %1623 = vmatpush1.msra.mxu0 %v196
    %1624 = vmatprep.subr.mxu0 0.0
    %1625 = vmatpush1.msra.mxu0 %v197
    %1626 = vmatprep.subr.mxu0 0.0
    %1627 = vmatpush1.msra.mxu0 %v198
    %1628 = vmatprep.subr.mxu0 0.0
    %1629 = vmatpush1.msra.mxu0 0.0
    %1630 = vmatprep.subr.mxu0 0.0
    %1631 = vmatpush1.msra.mxu0 0.0
    %1632 = vmatprep.subr.mxu0 0.0
    %1633 = vmatpush1.msra.mxu0 0.0
    %1634 = vmatprep.subr.mxu0 0.0
    %1635 = vmatpush1.msra.mxu0 0.0
    %1636 = vmatprep.subr.mxu0 0.0
    %1637 = vmatpush1.msra.mxu0 0.0
    %1638 = vmatprep.subr.mxu0 0.0
    %1639 = vmatpush1.msra.mxu0 0.0
    %1640 = vmatprep.subr.mxu0 0.0
    %1641 = vmatpush1.msra.mxu0 0.0
    %1642 = vmatprep.subr.mxu0 0.0
    %1643 = vmatpush1.msra.mxu0 0.0
    %1644 = vmatprep.subr.mxu0 0.0
    %1645 = vmatpush1.msra.mxu0 0.0
    %1646 = vmatprep.subr.mxu0 0.0
    %1647 = vmatpush1.msra.mxu0 0.0
    %1648 = vmatprep.subr.mxu0 0.0
    %1649 = vmatpush1.msra.mxu0 0.0
    %1650 = vmatprep.subr.mxu0 0.0
    %1651 = vmatpush1.msra.mxu0 0.0
    %1652 = vmatprep.subr.mxu0 0.0
    %1653 = vmatpush1.msra.mxu0 0.0
    %1654 = vmatprep.subr.mxu0 0.0
    %1655 = vmatpush1.msra.mxu0 0.0
    %1656 = vmatprep.subr.mxu0 0.0
    %1657 = vmatpush1.msra.mxu0 0.0
    %1658 = vmatprep.subr.mxu0 0.0
    %1659 = vmatpush1.msra.mxu0 0.0
    %1660 = vmatprep.subr.mxu0 0.0
    %1661 = vmatpush1.msra.mxu0 0.0
    %1662 = vmatprep.subr.mxu0 0.0
    %1663 = vmatpush1.msra.mxu0 0.0
    %1664 = vmatprep.subr.mxu0 0.0
    %1665 = vmatpush1.msra.mxu0 0.0
    %1666 = vmatprep.subr.mxu0 0.0
    %1667 = vmatpush1.msra.mxu0 0.0
    %1668 = vmatprep.subr.mxu0 0.0
    %1669 = vmatpush1.msra.mxu0 0.0
    %1670 = vmatprep.subr.mxu0 0.0
    %1671 = vmatpush1.msra.mxu0 0.0
    %1672 = vmatprep.subr.mxu0 0.0
    %1673 = vmatpush1.msra.mxu0 0.0
    %1674 = vmatprep.subr.mxu0 0.0
    %1675 = vmatpush1.msra.mxu0 0.0
    %1676 = vmatprep.mubr.f32.mxu0 0.0
    %1677 = vmatmul.mubr.f32.gmra.mrb[0].mxu0 %v1607
    %v1678 = vpop.f32.mrb[0].mxu0
    %v1679 = vadd.f32 0.0, %v1678
    %v1680 = vpop.f32.mrb[0].mxu0
    %1681 = vmatprep.mubr.f32.mxu0 0.0
    %1682 = vmatmul.mubr.f32.gmra.mrb[0].mxu0 %v1610
    %v1683 = vpop.f32.mrb[0].mxu0
    %v1684 = vadd.f32 0.0, %v1683
    %v1685 = vpop.f32.mrb[0].mxu0
    %1686 = vdwg.mxu0
    %v1687 = vsub.f32 %v1679, %v180
    %v1688 = vsub.f32 %v1684, %v181
    %v1689 = vmul.f32 %v1687, %v183
    %v1690 = vmul.f32 %v1688, %v184
    %v1691 = vxor.u32 %v1689, 2147483648
    %v1692 = vxor.u32 %v1690, 2147483648
    %v1693 = vmul.f32 %v1691, 1.442695
    %v1694 = vpow.pop %v1693
    %v1695 = vmul.f32 %v1692, 1.442695
    %v1696 = vpow.pop %v1695
    %v1697 = vadd.f32 %v1694, 1.0
    %v1698 = vadd.f32 %v1696, 1.0
    %v1699 = vrcp.pop %v1697
    %v1700 = vmul.f32 1.0, %v1699
    %v1701 = vrcp.pop %v1698
    %v1702 = vmul.f32 1.0, %v1701
    %v1703 = vmul.f32 %v186, %v1700
    %v1704 = vmul.f32 %v187, %v1702
    %v1705 = vadd.f32 %v1703, %v1704
    %v1706 = vrot.slane %v1705, 4
    %v1707 = vadd.f32 %v1705, %v1706
    %v1708 = vrot.slane %v1707, 2
    %v1709 = vadd.f32 %v1707, %v1708
    %v1710 = vrot.slane %v1709, 1
    %v1711 = vadd.f32 %v1709, %v1710
    %v1712 = vmul.f32 %v188, %v1599
    %v1713 = vadd.f32 %v1712, %v846
    %v1714 = vadd.f32 %v1713, %v1711
    %v1715 = vadd.f32 %v846, %v1711
    %v1716 = vrcp.pop %v1715
    %v1717 = vmul.f32 %v1715, %v1716
    %v1718 = vsub.f32 2.0, %v1717
    %v1719 = vmul.f32 %v1716, %v1718
    %1721 = vrot.lane.b32.xlu0 %v1719, 64
    %v1722 = vpop.permute.xlu0 %1721
    %v1724 = vmul.f32 %v1714, %v1722
    %v1725 = vlaneseq
    %v1726 = vshrl.u32 %v1725, 7
    %v1727 = vsub.s32 0, %v1726
    %v1728 = vrot.slane %v1724, %v1727
    %v1729 = vmul.f32 %v1728, %v189
    %v1730 = vmul.f32 %v1728, %v190
    %v1732 = vsel %vm855, %v1729, 0
    %v1735 = vsel %vm855, %v1730, 0
    %1737 = vmatprep.subr.mxu0 0.0
    %1738 = vmatpush1.msra.mxu0 %v191
    %1739 = vmatprep.subr.mxu0 0.0
    %1740 = vmatpush1.msra.mxu0 %v192
    %1741 = vmatprep.subr.mxu0 0.0
    %1742 = vmatpush1.msra.mxu0 %v193
    %1743 = vmatprep.subr.mxu0 0.0
    %1744 = vmatpush1.msra.mxu0 %v194
    %1745 = vmatprep.subr.mxu0 0.0
    %1746 = vmatpush1.msra.mxu0 %v195
    %1747 = vmatprep.subr.mxu0 0.0
    %1748 = vmatpush1.msra.mxu0 %v196
    %1749 = vmatprep.subr.mxu0 0.0
    %1750 = vmatpush1.msra.mxu0 %v197
    %1751 = vmatprep.subr.mxu0 0.0
    %1752 = vmatpush1.msra.mxu0 %v198
    %1753 = vmatprep.subr.mxu0 0.0
    %1754 = vmatpush1.msra.mxu0 0.0
    %1755 = vmatprep.subr.mxu0 0.0
    %1756 = vmatpush1.msra.mxu0 0.0
    %1757 = vmatprep.subr.mxu0 0.0
    %1758 = vmatpush1.msra.mxu0 0.0
    %1759 = vmatprep.subr.mxu0 0.0
    %1760 = vmatpush1.msra.mxu0 0.0
    %1761 = vmatprep.subr.mxu0 0.0
    %1762 = vmatpush1.msra.mxu0 0.0
    %1763 = vmatprep.subr.mxu0 0.0
    %1764 = vmatpush1.msra.mxu0 0.0
    %1765 = vmatprep.subr.mxu0 0.0
    %1766 = vmatpush1.msra.mxu0 0.0
    %1767 = vmatprep.subr.mxu0 0.0
    %1768 = vmatpush1.msra.mxu0 0.0
    %1769 = vmatprep.subr.mxu0 0.0
    %1770 = vmatpush1.msra.mxu0 0.0
    %1771 = vmatprep.subr.mxu0 0.0
    %1772 = vmatpush1.msra.mxu0 0.0
    %1773 = vmatprep.subr.mxu0 0.0
    %1774 = vmatpush1.msra.mxu0 0.0
    %1775 = vmatprep.subr.mxu0 0.0
    %1776 = vmatpush1.msra.mxu0 0.0
    %1777 = vmatprep.subr.mxu0 0.0
    %1778 = vmatpush1.msra.mxu0 0.0
    %1779 = vmatprep.subr.mxu0 0.0
    %1780 = vmatpush1.msra.mxu0 0.0
    %1781 = vmatprep.subr.mxu0 0.0
    %1782 = vmatpush1.msra.mxu0 0.0
    %1783 = vmatprep.subr.mxu0 0.0
    %1784 = vmatpush1.msra.mxu0 0.0
    %1785 = vmatprep.subr.mxu0 0.0
    %1786 = vmatpush1.msra.mxu0 0.0
    %1787 = vmatprep.subr.mxu0 0.0
    %1788 = vmatpush1.msra.mxu0 0.0
    %1789 = vmatprep.subr.mxu0 0.0
    %1790 = vmatpush1.msra.mxu0 0.0
    %1791 = vmatprep.subr.mxu0 0.0
    %1792 = vmatpush1.msra.mxu0 0.0
    %1793 = vmatprep.subr.mxu0 0.0
    %1794 = vmatpush1.msra.mxu0 0.0
    %1795 = vmatprep.subr.mxu0 0.0
    %1796 = vmatpush1.msra.mxu0 0.0
    %1797 = vmatprep.subr.mxu0 0.0
    %1798 = vmatpush1.msra.mxu0 0.0
    %1799 = vmatprep.subr.mxu0 0.0
    %1800 = vmatpush1.msra.mxu0 0.0
    %1801 = vmatprep.mubr.f32.mxu0 0.0
    %1802 = vmatmul.mubr.f32.gmra.mrb[0].mxu0 %v1732
    %v1803 = vpop.f32.mrb[0].mxu0
    %v1804 = vadd.f32 0.0, %v1803
    %v1805 = vpop.f32.mrb[0].mxu0
    %1806 = vmatprep.mubr.f32.mxu0 0.0
    %1807 = vmatmul.mubr.f32.gmra.mrb[0].mxu0 %v1735
    %v1808 = vpop.f32.mrb[0].mxu0
    %v1809 = vadd.f32 0.0, %v1808
    %v1810 = vpop.f32.mrb[0].mxu0
    %1811 = vdwg.mxu0
    %v1812 = vsub.f32 %v1804, %v180
    %v1813 = vsub.f32 %v1809, %v181
    %v1814 = vmul.f32 %v1812, %v183
    %v1815 = vmul.f32 %v1813, %v184
    %v1816 = vxor.u32 %v1814, 2147483648
    %v1817 = vxor.u32 %v1815, 2147483648
    %v1818 = vmul.f32 %v1816, 1.442695
    %v1819 = vpow.pop %v1818
    %v1820 = vmul.f32 %v1817, 1.442695
    %v1821 = vpow.pop %v1820
    %v1822 = vadd.f32 %v1819, 1.0
    %v1823 = vadd.f32 %v1821, 1.0
    %v1824 = vrcp.pop %v1822
    %v1825 = vmul.f32 1.0, %v1824
    %v1826 = vrcp.pop %v1823
    %v1827 = vmul.f32 1.0, %v1826
    %v1828 = vmul.f32 %v186, %v1825
    %v1829 = vmul.f32 %v187, %v1827
    %v1830 = vadd.f32 %v1828, %v1829
    %v1831 = vrot.slane %v1830, 4
    %v1832 = vadd.f32 %v1830, %v1831
    %v1833 = vrot.slane %v1832, 2
    %v1834 = vadd.f32 %v1832, %v1833
    %v1835 = vrot.slane %v1834, 1
    %v1836 = vadd.f32 %v1834, %v1835
    %v1837 = vmul.f32 %v188, %v1724
    %v1838 = vadd.f32 %v1837, %v846
    %v1839 = vadd.f32 %v1838, %v1836
    %v1840 = vadd.f32 %v846, %v1836
    %v1841 = vrcp.pop %v1840
    %v1842 = vmul.f32 %v1840, %v1841
    %v1843 = vsub.f32 2.0, %v1842
    %v1844 = vmul.f32 %v1841, %v1843
    %1846 = vrot.lane.b32.xlu0 %v1844, 64
    %v1847 = vpop.permute.xlu0 %1846
    %v1849 = vmul.f32 %v1839, %v1847
    %v1850 = vlaneseq
    %v1851 = vshrl.u32 %v1850, 7
    %v1852 = vsub.s32 0, %v1851
    %v1853 = vrot.slane %v1849, %v1852
    %v1854 = vmul.f32 %v1853, %v189
    %v1855 = vmul.f32 %v1853, %v190
    %v1857 = vsel %vm855, %v1854, 0
    %v1860 = vsel %vm855, %v1855, 0
    %1862 = vmatprep.subr.mxu0 0.0
    %1863 = vmatpush1.msra.mxu0 %v191
    %1864 = vmatprep.subr.mxu0 0.0
    %1865 = vmatpush1.msra.mxu0 %v192
    %1866 = vmatprep.subr.mxu0 0.0
    %1867 = vmatpush1.msra.mxu0 %v193
    %1868 = vmatprep.subr.mxu0 0.0
    %1869 = vmatpush1.msra.mxu0 %v194
    %1870 = vmatprep.subr.mxu0 0.0
    %1871 = vmatpush1.msra.mxu0 %v195
    %1872 = vmatprep.subr.mxu0 0.0
    %1873 = vmatpush1.msra.mxu0 %v196
    %1874 = vmatprep.subr.mxu0 0.0
    %1875 = vmatpush1.msra.mxu0 %v197
    %1876 = vmatprep.subr.mxu0 0.0
    %1877 = vmatpush1.msra.mxu0 %v198
    %1878 = vmatprep.subr.mxu0 0.0
    %1879 = vmatpush1.msra.mxu0 0.0
    %1880 = vmatprep.subr.mxu0 0.0
    %1881 = vmatpush1.msra.mxu0 0.0
    %1882 = vmatprep.subr.mxu0 0.0
    %1883 = vmatpush1.msra.mxu0 0.0
    %1884 = vmatprep.subr.mxu0 0.0
    %1885 = vmatpush1.msra.mxu0 0.0
    %1886 = vmatprep.subr.mxu0 0.0
    %1887 = vmatpush1.msra.mxu0 0.0
    %1888 = vmatprep.subr.mxu0 0.0
    %1889 = vmatpush1.msra.mxu0 0.0
    %1890 = vmatprep.subr.mxu0 0.0
    %1891 = vmatpush1.msra.mxu0 0.0
    %1892 = vmatprep.subr.mxu0 0.0
    %1893 = vmatpush1.msra.mxu0 0.0
    %1894 = vmatprep.subr.mxu0 0.0
    %1895 = vmatpush1.msra.mxu0 0.0
    %1896 = vmatprep.subr.mxu0 0.0
    %1897 = vmatpush1.msra.mxu0 0.0
    %1898 = vmatprep.subr.mxu0 0.0
    %1899 = vmatpush1.msra.mxu0 0.0
    %1900 = vmatprep.subr.mxu0 0.0
    %1901 = vmatpush1.msra.mxu0 0.0
    %1902 = vmatprep.subr.mxu0 0.0
    %1903 = vmatpush1.msra.mxu0 0.0
    %1904 = vmatprep.subr.mxu0 0.0
    %1905 = vmatpush1.msra.mxu0 0.0
    %1906 = vmatprep.subr.mxu0 0.0
    %1907 = vmatpush1.msra.mxu0 0.0
    %1908 = vmatprep.subr.mxu0 0.0
    %1909 = vmatpush1.msra.mxu0 0.0
    %1910 = vmatprep.subr.mxu0 0.0
    %1911 = vmatpush1.msra.mxu0 0.0
    %1912 = vmatprep.subr.mxu0 0.0
    %1913 = vmatpush1.msra.mxu0 0.0
    %1914 = vmatprep.subr.mxu0 0.0
    %1915 = vmatpush1.msra.mxu0 0.0
    %1916 = vmatprep.subr.mxu0 0.0
    %1917 = vmatpush1.msra.mxu0 0.0
    %1918 = vmatprep.subr.mxu0 0.0
    %1919 = vmatpush1.msra.mxu0 0.0
    %1920 = vmatprep.subr.mxu0 0.0
    %1921 = vmatpush1.msra.mxu0 0.0
    %1922 = vmatprep.subr.mxu0 0.0
    %1923 = vmatpush1.msra.mxu0 0.0
    %1924 = vmatprep.subr.mxu0 0.0
    %1925 = vmatpush1.msra.mxu0 0.0
    %1926 = vmatprep.mubr.f32.mxu0 0.0
    %1927 = vmatmul.mubr.f32.gmra.mrb[0].mxu0 %v1857
    %v1928 = vpop.f32.mrb[0].mxu0
    %v1929 = vadd.f32 0.0, %v1928
    %v1930 = vpop.f32.mrb[0].mxu0
    %1931 = vmatprep.mubr.f32.mxu0 0.0
    %1932 = vmatmul.mubr.f32.gmra.mrb[0].mxu0 %v1860
    %v1933 = vpop.f32.mrb[0].mxu0
    %v1934 = vadd.f32 0.0, %v1933
    %v1935 = vpop.f32.mrb[0].mxu0
    %1936 = vdwg.mxu0
    %v1937 = vsub.f32 %v1929, %v180
    %v1938 = vsub.f32 %v1934, %v181
    %v1939 = vmul.f32 %v1937, %v183
    %v1940 = vmul.f32 %v1938, %v184
    %v1941 = vxor.u32 %v1939, 2147483648
    %v1942 = vxor.u32 %v1940, 2147483648
    %v1943 = vmul.f32 %v1941, 1.442695
    %v1944 = vpow.pop %v1943
    %v1945 = vmul.f32 %v1942, 1.442695
    %v1946 = vpow.pop %v1945
    %v1947 = vadd.f32 %v1944, 1.0
    %v1948 = vadd.f32 %v1946, 1.0
    %v1949 = vrcp.pop %v1947
    %v1950 = vmul.f32 1.0, %v1949
    %v1951 = vrcp.pop %v1948
    %v1952 = vmul.f32 1.0, %v1951
    %v1953 = vmul.f32 %v186, %v1950
    %v1954 = vmul.f32 %v187, %v1952
    %v1955 = vadd.f32 %v1953, %v1954
    %v1956 = vrot.slane %v1955, 4
    %v1957 = vadd.f32 %v1955, %v1956
    %v1958 = vrot.slane %v1957, 2
    %v1959 = vadd.f32 %v1957, %v1958
    %v1960 = vrot.slane %v1959, 1
    %v1961 = vadd.f32 %v1959, %v1960
    %v1962 = vmul.f32 %v188, %v1849
    %v1963 = vadd.f32 %v1962, %v846
    %v1964 = vadd.f32 %v1963, %v1961
    %v1965 = vadd.f32 %v846, %v1961
    %v1966 = vrcp.pop %v1965
    %v1967 = vmul.f32 %v1965, %v1966
    %v1968 = vsub.f32 2.0, %v1967
    %v1969 = vmul.f32 %v1966, %v1968
    %1971 = vrot.lane.b32.xlu0 %v1969, 64
    %v1972 = vpop.permute.xlu0 %1971
    %v1974 = vmul.f32 %v1964, %v1972
    %v1975 = vlaneseq
    %v1976 = vshrl.u32 %v1975, 7
    %v1977 = vsub.s32 0, %v1976
    %v1978 = vrot.slane %v1974, %v1977
    %v1979 = vmul.f32 %v1978, %v189
    %v1980 = vmul.f32 %v1978, %v190
    %v1982 = vsel %vm855, %v1979, 0
    %v1985 = vsel %vm855, %v1980, 0
    %1987 = vmatprep.subr.mxu0 0.0
    %1988 = vmatpush1.msra.mxu0 %v191
    %1989 = vmatprep.subr.mxu0 0.0
    %1990 = vmatpush1.msra.mxu0 %v192
    %1991 = vmatprep.subr.mxu0 0.0
    %1992 = vmatpush1.msra.mxu0 %v193
    %1993 = vmatprep.subr.mxu0 0.0
    %1994 = vmatpush1.msra.mxu0 %v194
    %1995 = vmatprep.subr.mxu0 0.0
    %1996 = vmatpush1.msra.mxu0 %v195
    %1997 = vmatprep.subr.mxu0 0.0
    %1998 = vmatpush1.msra.mxu0 %v196
    %1999 = vmatprep.subr.mxu0 0.0
    %2000 = vmatpush1.msra.mxu0 %v197
    %2001 = vmatprep.subr.mxu0 0.0
    %2002 = vmatpush1.msra.mxu0 %v198
    %2003 = vmatprep.subr.mxu0 0.0
    %2004 = vmatpush1.msra.mxu0 0.0
    %2005 = vmatprep.subr.mxu0 0.0
    %2006 = vmatpush1.msra.mxu0 0.0
    %2007 = vmatprep.subr.mxu0 0.0
    %2008 = vmatpush1.msra.mxu0 0.0
    %2009 = vmatprep.subr.mxu0 0.0
    %2010 = vmatpush1.msra.mxu0 0.0
    %2011 = vmatprep.subr.mxu0 0.0
    %2012 = vmatpush1.msra.mxu0 0.0
    %2013 = vmatprep.subr.mxu0 0.0
    %2014 = vmatpush1.msra.mxu0 0.0
    %2015 = vmatprep.subr.mxu0 0.0
    %2016 = vmatpush1.msra.mxu0 0.0
    %2017 = vmatprep.subr.mxu0 0.0
    %2018 = vmatpush1.msra.mxu0 0.0
    %2019 = vmatprep.subr.mxu0 0.0
    %2020 = vmatpush1.msra.mxu0 0.0
    %2021 = vmatprep.subr.mxu0 0.0
    %2022 = vmatpush1.msra.mxu0 0.0
    %2023 = vmatprep.subr.mxu0 0.0
    %2024 = vmatpush1.msra.mxu0 0.0
    %2025 = vmatprep.subr.mxu0 0.0
    %2026 = vmatpush1.msra.mxu0 0.0
    %2027 = vmatprep.subr.mxu0 0.0
    %2028 = vmatpush1.msra.mxu0 0.0
    %2029 = vmatprep.subr.mxu0 0.0
    %2030 = vmatpush1.msra.mxu0 0.0
    %2031 = vmatprep.subr.mxu0 0.0
    %2032 = vmatpush1.msra.mxu0 0.0
    %2033 = vmatprep.subr.mxu0 0.0
    %2034 = vmatpush1.msra.mxu0 0.0
    %2035 = vmatprep.subr.mxu0 0.0
    %2036 = vmatpush1.msra.mxu0 0.0
    %2037 = vmatprep.subr.mxu0 0.0
    %2038 = vmatpush1.msra.mxu0 0.0
    %2039 = vmatprep.subr.mxu0 0.0
    %2040 = vmatpush1.msra.mxu0 0.0
    %2041 = vmatprep.subr.mxu0 0.0
    %2042 = vmatpush1.msra.mxu0 0.0
    %2043 = vmatprep.subr.mxu0 0.0
    %2044 = vmatpush1.msra.mxu0 0.0
    %2045 = vmatprep.subr.mxu0 0.0
    %2046 = vmatpush1.msra.mxu0 0.0
    %2047 = vmatprep.subr.mxu0 0.0
    %2048 = vmatpush1.msra.mxu0 0.0
    %2049 = vmatprep.subr.mxu0 0.0
    %2050 = vmatpush1.msra.mxu0 0.0
    %2051 = vmatprep.mubr.f32.mxu0 0.0
    %2052 = vmatmul.mubr.f32.gmra.mrb[0].mxu0 %v1982
    %v2053 = vpop.f32.mrb[0].mxu0
    %v2054 = vadd.f32 0.0, %v2053
    %v2055 = vpop.f32.mrb[0].mxu0
    %2056 = vmatprep.mubr.f32.mxu0 0.0
    %2057 = vmatmul.mubr.f32.gmra.mrb[0].mxu0 %v1985
    %v2058 = vpop.f32.mrb[0].mxu0
    %v2059 = vadd.f32 0.0, %v2058
    %v2060 = vpop.f32.mrb[0].mxu0
    %2061 = vdwg.mxu0
    %v2062 = vsub.f32 %v2054, %v180
    %v2063 = vsub.f32 %v2059, %v181
    %v2064 = vmul.f32 %v2062, %v183
    %v2065 = vmul.f32 %v2063, %v184
    %v2066 = vxor.u32 %v2064, 2147483648
    %v2067 = vxor.u32 %v2065, 2147483648
    %v2068 = vmul.f32 %v2066, 1.442695
    %v2069 = vpow.pop %v2068
    %v2070 = vmul.f32 %v2067, 1.442695
    %v2071 = vpow.pop %v2070
    %v2072 = vadd.f32 %v2069, 1.0
    %v2073 = vadd.f32 %v2071, 1.0
    %v2074 = vrcp.pop %v2072
    %v2075 = vmul.f32 1.0, %v2074
    %v2076 = vrcp.pop %v2073
    %v2077 = vmul.f32 1.0, %v2076
    %v2078 = vmul.f32 %v186, %v2075
    %v2079 = vmul.f32 %v187, %v2077
    %v2080 = vadd.f32 %v2078, %v2079
    %v2081 = vrot.slane %v2080, 4
    %v2082 = vadd.f32 %v2080, %v2081
    %v2083 = vrot.slane %v2082, 2
    %v2084 = vadd.f32 %v2082, %v2083
    %v2085 = vrot.slane %v2084, 1
    %v2086 = vadd.f32 %v2084, %v2085
    %v2087 = vmul.f32 %v188, %v1974
    %v2088 = vadd.f32 %v2087, %v846
    %v2089 = vadd.f32 %v2088, %v2086
    %v2090 = vadd.f32 %v846, %v2086
    %v2091 = vrcp.pop %v2090
    %v2092 = vmul.f32 %v2090, %v2091
    %v2093 = vsub.f32 2.0, %v2092
    %v2094 = vmul.f32 %v2091, %v2093
    %2096 = vrot.lane.b32.xlu0 %v2094, 64
    %v2097 = vpop.permute.xlu0 %2096
    %v2099 = vmul.f32 %v2089, %v2097
    %v2100 = vlaneseq
    %v2101 = vshrl.u32 %v2100, 7
    %v2102 = vsub.s32 0, %v2101
    %v2103 = vrot.slane %v2099, %v2102
    %v2104 = vmul.f32 %v2103, %v189
    %v2105 = vmul.f32 %v2103, %v190
    %v2107 = vsel %vm855, %v2104, 0
    %v2110 = vsel %vm855, %v2105, 0
    %2112 = vmatprep.subr.mxu0 0.0
    %2113 = vmatpush1.msra.mxu0 %v191
    %2114 = vmatprep.subr.mxu0 0.0
    %2115 = vmatpush1.msra.mxu0 %v192
    %2116 = vmatprep.subr.mxu0 0.0
    %2117 = vmatpush1.msra.mxu0 %v193
    %2118 = vmatprep.subr.mxu0 0.0
    %2119 = vmatpush1.msra.mxu0 %v194
    %2120 = vmatprep.subr.mxu0 0.0
    %2121 = vmatpush1.msra.mxu0 %v195
    %2122 = vmatprep.subr.mxu0 0.0
    %2123 = vmatpush1.msra.mxu0 %v196
    %2124 = vmatprep.subr.mxu0 0.0
    %2125 = vmatpush1.msra.mxu0 %v197
    %2126 = vmatprep.subr.mxu0 0.0
    %2127 = vmatpush1.msra.mxu0 %v198
    %2128 = vmatprep.subr.mxu0 0.0
    %2129 = vmatpush1.msra.mxu0 0.0
    %2130 = vmatprep.subr.mxu0 0.0
    %2131 = vmatpush1.msra.mxu0 0.0
    %2132 = vmatprep.subr.mxu0 0.0
    %2133 = vmatpush1.msra.mxu0 0.0
    %2134 = vmatprep.subr.mxu0 0.0
    %2135 = vmatpush1.msra.mxu0 0.0
    %2136 = vmatprep.subr.mxu0 0.0
    %2137 = vmatpush1.msra.mxu0 0.0
    %2138 = vmatprep.subr.mxu0 0.0
    %2139 = vmatpush1.msra.mxu0 0.0
    %2140 = vmatprep.subr.mxu0 0.0
    %2141 = vmatpush1.msra.mxu0 0.0
    %2142 = vmatprep.subr.mxu0 0.0
    %2143 = vmatpush1.msra.mxu0 0.0
    %2144 = vmatprep.subr.mxu0 0.0
    %2145 = vmatpush1.msra.mxu0 0.0
    %2146 = vmatprep.subr.mxu0 0.0
    %2147 = vmatpush1.msra.mxu0 0.0
    %2148 = vmatprep.subr.mxu0 0.0
    %2149 = vmatpush1.msra.mxu0 0.0
    %2150 = vmatprep.subr.mxu0 0.0
    %2151 = vmatpush1.msra.mxu0 0.0
    %2152 = vmatprep.subr.mxu0 0.0
    %2153 = vmatpush1.msra.mxu0 0.0
    %2154 = vmatprep.subr.mxu0 0.0
    %2155 = vmatpush1.msra.mxu0 0.0
    %2156 = vmatprep.subr.mxu0 0.0
    %2157 = vmatpush1.msra.mxu0 0.0
    %2158 = vmatprep.subr.mxu0 0.0
    %2159 = vmatpush1.msra.mxu0 0.0
    %2160 = vmatprep.subr.mxu0 0.0
    %2161 = vmatpush1.msra.mxu0 0.0
    %2162 = vmatprep.subr.mxu0 0.0
    %2163 = vmatpush1.msra.mxu0 0.0
    %2164 = vmatprep.subr.mxu0 0.0
    %2165 = vmatpush1.msra.mxu0 0.0
    %2166 = vmatprep.subr.mxu0 0.0
    %2167 = vmatpush1.msra.mxu0 0.0
    %2168 = vmatprep.subr.mxu0 0.0
    %2169 = vmatpush1.msra.mxu0 0.0
    %2170 = vmatprep.subr.mxu0 0.0
    %2171 = vmatpush1.msra.mxu0 0.0
    %2172 = vmatprep.subr.mxu0 0.0
    %2173 = vmatpush1.msra.mxu0 0.0
    %2174 = vmatprep.subr.mxu0 0.0
    %2175 = vmatpush1.msra.mxu0 0.0
    %2176 = vmatprep.mubr.f32.mxu0 0.0
    %2177 = vmatmul.mubr.f32.gmra.mrb[0].mxu0 %v2107
    %v2178 = vpop.f32.mrb[0].mxu0
    %v2179 = vadd.f32 0.0, %v2178
    %v2180 = vpop.f32.mrb[0].mxu0
    %2181 = vmatprep.mubr.f32.mxu0 0.0
    %2182 = vmatmul.mubr.f32.gmra.mrb[0].mxu0 %v2110
    %v2183 = vpop.f32.mrb[0].mxu0
    %v2184 = vadd.f32 0.0, %v2183
    %v2185 = vpop.f32.mrb[0].mxu0
    %2186 = vdwg.mxu0
    %v2187 = vsub.f32 %v2179, %v180
    %v2188 = vsub.f32 %v2184, %v181
    %v2189 = vmul.f32 %v2187, %v183
    %v2190 = vmul.f32 %v2188, %v184
    %v2191 = vxor.u32 %v2189, 2147483648
    %v2192 = vxor.u32 %v2190, 2147483648
    %v2193 = vmul.f32 %v2191, 1.442695
    %v2194 = vpow.pop %v2193
    %v2195 = vmul.f32 %v2192, 1.442695
    %v2196 = vpow.pop %v2195
    %v2197 = vadd.f32 %v2194, 1.0
    %v2198 = vadd.f32 %v2196, 1.0
    %v2199 = vrcp.pop %v2197
    %v2200 = vmul.f32 1.0, %v2199
    %v2201 = vrcp.pop %v2198
    %v2202 = vmul.f32 1.0, %v2201
    %v2203 = vmul.f32 %v186, %v2200
    %v2204 = vmul.f32 %v187, %v2202
    %v2205 = vadd.f32 %v2203, %v2204
    %v2206 = vrot.slane %v2205, 4
    %v2207 = vadd.f32 %v2205, %v2206
    %v2208 = vrot.slane %v2207, 2
    %v2209 = vadd.f32 %v2207, %v2208
    %v2210 = vrot.slane %v2209, 1
    %v2211 = vadd.f32 %v2209, %v2210
    %v2212 = vmul.f32 %v188, %v2099
    %v2213 = vadd.f32 %v2212, %v846
    %v2214 = vadd.f32 %v2213, %v2211
    %v2215 = vadd.f32 %v846, %v2211
    %v2216 = vrcp.pop %v2215
    %v2217 = vmul.f32 %v2215, %v2216
    %v2218 = vsub.f32 2.0, %v2217
    %v2219 = vmul.f32 %v2216, %v2218
    %2221 = vrot.lane.b32.xlu0 %v2219, 64
    %v2222 = vpop.permute.xlu0 %2221
    %v2224 = vmul.f32 %v2214, %v2222
    %v2225 = vlaneseq
    %v2226 = vshrl.u32 %v2225, 7
    %v2227 = vsub.s32 0, %v2226
    %v2228 = vrot.slane %v2224, %v2227
    %v2229 = vmul.f32 %v2228, %v189
    %v2230 = vmul.f32 %v2228, %v190
    %v2232 = vsel %vm855, %v2229, 0
    %v2235 = vsel %vm855, %v2230, 0
    %2237 = vmatprep.subr.mxu0 0.0
    %2238 = vmatpush1.msra.mxu0 %v191
    %2239 = vmatprep.subr.mxu0 0.0
    %2240 = vmatpush1.msra.mxu0 %v192
    %2241 = vmatprep.subr.mxu0 0.0
    %2242 = vmatpush1.msra.mxu0 %v193
    %2243 = vmatprep.subr.mxu0 0.0
    %2244 = vmatpush1.msra.mxu0 %v194
    %2245 = vmatprep.subr.mxu0 0.0
    %2246 = vmatpush1.msra.mxu0 %v195
    %2247 = vmatprep.subr.mxu0 0.0
    %2248 = vmatpush1.msra.mxu0 %v196
    %2249 = vmatprep.subr.mxu0 0.0
    %2250 = vmatpush1.msra.mxu0 %v197
    %2251 = vmatprep.subr.mxu0 0.0
    %2252 = vmatpush1.msra.mxu0 %v198
    %2253 = vmatprep.subr.mxu0 0.0
    %2254 = vmatpush1.msra.mxu0 0.0
    %2255 = vmatprep.subr.mxu0 0.0
    %2256 = vmatpush1.msra.mxu0 0.0
    %2257 = vmatprep.subr.mxu0 0.0
    %2258 = vmatpush1.msra.mxu0 0.0
    %2259 = vmatprep.subr.mxu0 0.0
    %2260 = vmatpush1.msra.mxu0 0.0
    %2261 = vmatprep.subr.mxu0 0.0
    %2262 = vmatpush1.msra.mxu0 0.0
    %2263 = vmatprep.subr.mxu0 0.0
    %2264 = vmatpush1.msra.mxu0 0.0
    %2265 = vmatprep.subr.mxu0 0.0
    %2266 = vmatpush1.msra.mxu0 0.0
    %2267 = vmatprep.subr.mxu0 0.0
    %2268 = vmatpush1.msra.mxu0 0.0
    %2269 = vmatprep.subr.mxu0 0.0
    %2270 = vmatpush1.msra.mxu0 0.0
    %2271 = vmatprep.subr.mxu0 0.0
    %2272 = vmatpush1.msra.mxu0 0.0
    %2273 = vmatprep.subr.mxu0 0.0
    %2274 = vmatpush1.msra.mxu0 0.0
    %2275 = vmatprep.subr.mxu0 0.0
    %2276 = vmatpush1.msra.mxu0 0.0
    %2277 = vmatprep.subr.mxu0 0.0
    %2278 = vmatpush1.msra.mxu0 0.0
    %2279 = vmatprep.subr.mxu0 0.0
    %2280 = vmatpush1.msra.mxu0 0.0
    %2281 = vmatprep.subr.mxu0 0.0
    %2282 = vmatpush1.msra.mxu0 0.0
    %2283 = vmatprep.subr.mxu0 0.0
    %2284 = vmatpush1.msra.mxu0 0.0
    %2285 = vmatprep.subr.mxu0 0.0
    %2286 = vmatpush1.msra.mxu0 0.0
    %2287 = vmatprep.subr.mxu0 0.0
    %2288 = vmatpush1.msra.mxu0 0.0
    %2289 = vmatprep.subr.mxu0 0.0
    %2290 = vmatpush1.msra.mxu0 0.0
    %2291 = vmatprep.subr.mxu0 0.0
    %2292 = vmatpush1.msra.mxu0 0.0
    %2293 = vmatprep.subr.mxu0 0.0
    %2294 = vmatpush1.msra.mxu0 0.0
    %2295 = vmatprep.subr.mxu0 0.0
    %2296 = vmatpush1.msra.mxu0 0.0
    %2297 = vmatprep.subr.mxu0 0.0
    %2298 = vmatpush1.msra.mxu0 0.0
    %2299 = vmatprep.subr.mxu0 0.0
    %2300 = vmatpush1.msra.mxu0 0.0
    %2301 = vmatprep.mubr.f32.mxu0 0.0
    %2302 = vmatmul.mubr.f32.gmra.mrb[0].mxu0 %v2232
    %v2303 = vpop.f32.mrb[0].mxu0
    %v2304 = vadd.f32 0.0, %v2303
    %v2305 = vpop.f32.mrb[0].mxu0
    %2306 = vmatprep.mubr.f32.mxu0 0.0
    %2307 = vmatmul.mubr.f32.gmra.mrb[0].mxu0 %v2235
    %v2308 = vpop.f32.mrb[0].mxu0
    %v2309 = vadd.f32 0.0, %v2308
    %v2310 = vpop.f32.mrb[0].mxu0
    %2311 = vdwg.mxu0
    %v2312 = vsub.f32 %v2304, %v180
    %v2313 = vsub.f32 %v2309, %v181
    %v2314 = vmul.f32 %v2312, %v183
    %v2315 = vmul.f32 %v2313, %v184
    %v2316 = vxor.u32 %v2314, 2147483648
    %v2317 = vxor.u32 %v2315, 2147483648
    %v2318 = vmul.f32 %v2316, 1.442695
    %v2319 = vpow.pop %v2318
    %v2320 = vmul.f32 %v2317, 1.442695
    %v2321 = vpow.pop %v2320
    %v2322 = vadd.f32 %v2319, 1.0
    %v2323 = vadd.f32 %v2321, 1.0
    %v2324 = vrcp.pop %v2322
    %v2325 = vmul.f32 1.0, %v2324
    %v2326 = vrcp.pop %v2323
    %v2327 = vmul.f32 1.0, %v2326
    %v2328 = vmul.f32 %v186, %v2325
    %v2329 = vmul.f32 %v187, %v2327
    %v2330 = vadd.f32 %v2328, %v2329
    %v2331 = vrot.slane %v2330, 4
    %v2332 = vadd.f32 %v2330, %v2331
    %v2333 = vrot.slane %v2332, 2
    %v2334 = vadd.f32 %v2332, %v2333
    %v2335 = vrot.slane %v2334, 1
    %v2336 = vadd.f32 %v2334, %v2335
    %v2337 = vmul.f32 %v188, %v2224
    %v2338 = vadd.f32 %v2337, %v846
    %v2339 = vadd.f32 %v2338, %v2336
    %v2340 = vadd.f32 %v846, %v2336
    %v2341 = vrcp.pop %v2340
    %v2342 = vmul.f32 %v2340, %v2341
    %v2343 = vsub.f32 2.0, %v2342
    %v2344 = vmul.f32 %v2341, %v2343
    %2346 = vrot.lane.b32.xlu0 %v2344, 64
    %v2347 = vpop.permute.xlu0 %2346
    %v2349 = vmul.f32 %v2339, %v2347
    %v2350 = vlaneseq
    %v2351 = vshrl.u32 %v2350, 7
    %v2352 = vsub.s32 0, %v2351
    %v2353 = vrot.slane %v2349, %v2352
    %v2354 = vmul.f32 %v2353, %v189
    %v2355 = vmul.f32 %v2353, %v190
    %v2357 = vsel %vm855, %v2354, 0
    %v2360 = vsel %vm855, %v2355, 0
    %2362 = vmatprep.subr.mxu0 0.0
    %2363 = vmatpush1.msra.mxu0 %v191
    %2364 = vmatprep.subr.mxu0 0.0
    %2365 = vmatpush1.msra.mxu0 %v192
    %2366 = vmatprep.subr.mxu0 0.0
    %2367 = vmatpush1.msra.mxu0 %v193
    %2368 = vmatprep.subr.mxu0 0.0
    %2369 = vmatpush1.msra.mxu0 %v194
    %2370 = vmatprep.subr.mxu0 0.0
    %2371 = vmatpush1.msra.mxu0 %v195
    %2372 = vmatprep.subr.mxu0 0.0
    %2373 = vmatpush1.msra.mxu0 %v196
    %2374 = vmatprep.subr.mxu0 0.0
    %2375 = vmatpush1.msra.mxu0 %v197
    %2376 = vmatprep.subr.mxu0 0.0
    %2377 = vmatpush1.msra.mxu0 %v198
    %2378 = vmatprep.subr.mxu0 0.0
    %2379 = vmatpush1.msra.mxu0 0.0
    %2380 = vmatprep.subr.mxu0 0.0
    %2381 = vmatpush1.msra.mxu0 0.0
    %2382 = vmatprep.subr.mxu0 0.0
    %2383 = vmatpush1.msra.mxu0 0.0
    %2384 = vmatprep.subr.mxu0 0.0
    %2385 = vmatpush1.msra.mxu0 0.0
    %2386 = vmatprep.subr.mxu0 0.0
    %2387 = vmatpush1.msra.mxu0 0.0
    %2388 = vmatprep.subr.mxu0 0.0
    %2389 = vmatpush1.msra.mxu0 0.0
    %2390 = vmatprep.subr.mxu0 0.0
    %2391 = vmatpush1.msra.mxu0 0.0
    %2392 = vmatprep.subr.mxu0 0.0
    %2393 = vmatpush1.msra.mxu0 0.0
    %2394 = vmatprep.subr.mxu0 0.0
    %2395 = vmatpush1.msra.mxu0 0.0
    %2396 = vmatprep.subr.mxu0 0.0
    %2397 = vmatpush1.msra.mxu0 0.0
    %2398 = vmatprep.subr.mxu0 0.0
    %2399 = vmatpush1.msra.mxu0 0.0
    %2400 = vmatprep.subr.mxu0 0.0
    %2401 = vmatpush1.msra.mxu0 0.0
    %2402 = vmatprep.subr.mxu0 0.0
    %2403 = vmatpush1.msra.mxu0 0.0
    %2404 = vmatprep.subr.mxu0 0.0
    %2405 = vmatpush1.msra.mxu0 0.0
    %2406 = vmatprep.subr.mxu0 0.0
    %2407 = vmatpush1.msra.mxu0 0.0
    %2408 = vmatprep.subr.mxu0 0.0
    %2409 = vmatpush1.msra.mxu0 0.0
    %2410 = vmatprep.subr.mxu0 0.0
    %2411 = vmatpush1.msra.mxu0 0.0
    %2412 = vmatprep.subr.mxu0 0.0
    %2413 = vmatpush1.msra.mxu0 0.0
    %2414 = vmatprep.subr.mxu0 0.0
    %2415 = vmatpush1.msra.mxu0 0.0
    %2416 = vmatprep.subr.mxu0 0.0
    %2417 = vmatpush1.msra.mxu0 0.0
    %2418 = vmatprep.subr.mxu0 0.0
    %2419 = vmatpush1.msra.mxu0 0.0
    %2420 = vmatprep.subr.mxu0 0.0
    %2421 = vmatpush1.msra.mxu0 0.0
    %2422 = vmatprep.subr.mxu0 0.0
    %2423 = vmatpush1.msra.mxu0 0.0
    %2424 = vmatprep.subr.mxu0 0.0
    %2425 = vmatpush1.msra.mxu0 0.0
    %2426 = vmatprep.mubr.f32.mxu0 0.0
    %2427 = vmatmul.mubr.f32.gmra.mrb[0].mxu0 %v2357
    %v2428 = vpop.f32.mrb[0].mxu0
    %v2429 = vadd.f32 0.0, %v2428
    %v2430 = vpop.f32.mrb[0].mxu0
    %2431 = vmatprep.mubr.f32.mxu0 0.0
    %2432 = vmatmul.mubr.f32.gmra.mrb[0].mxu0 %v2360
    %v2433 = vpop.f32.mrb[0].mxu0
    %v2434 = vadd.f32 0.0, %v2433
    %v2435 = vpop.f32.mrb[0].mxu0
    %2436 = vdwg.mxu0
    %v2437 = vsub.f32 %v2429, %v180
    %v2438 = vsub.f32 %v2434, %v181
    %v2439 = vmul.f32 %v2437, %v183
    %v2440 = vmul.f32 %v2438, %v184
    %v2441 = vxor.u32 %v2439, 2147483648
    %v2442 = vxor.u32 %v2440, 2147483648
    %v2443 = vmul.f32 %v2441, 1.442695
    %v2444 = vpow.pop %v2443
    %v2445 = vmul.f32 %v2442, 1.442695
    %v2446 = vpow.pop %v2445
    %v2447 = vadd.f32 %v2444, 1.0
    %v2448 = vadd.f32 %v2446, 1.0
    %v2449 = vrcp.pop %v2447
    %v2450 = vmul.f32 1.0, %v2449
    %v2451 = vrcp.pop %v2448
    %v2452 = vmul.f32 1.0, %v2451
    %v2453 = vmul.f32 %v186, %v2450
    %v2454 = vmul.f32 %v187, %v2452
    %v2455 = vadd.f32 %v2453, %v2454
    %v2456 = vrot.slane %v2455, 4
    %v2457 = vadd.f32 %v2455, %v2456
    %v2458 = vrot.slane %v2457, 2
    %v2459 = vadd.f32 %v2457, %v2458
    %v2460 = vrot.slane %v2459, 1
    %v2461 = vadd.f32 %v2459, %v2460
    %v2462 = vmul.f32 %v188, %v2349
    %v2463 = vadd.f32 %v2462, %v847
    %v2464 = vadd.f32 %v2463, %v2461
    %v2465 = vadd.f32 %v847, %v2461
    %v2466 = vrcp.pop %v2465
    %v2467 = vmul.f32 %v2465, %v2466
    %v2468 = vsub.f32 2.0, %v2467
    %v2469 = vmul.f32 %v2466, %v2468
    %2471 = vrot.lane.b32.xlu0 %v2469, 64
    %v2472 = vpop.permute.xlu0 %2471
    %v2474 = vmul.f32 %v2464, %v2472
    %v2475 = vlaneseq
    %v2476 = vshrl.u32 %v2475, 7
    %v2477 = vsub.s32 0, %v2476
    %v2478 = vrot.slane %v2474, %v2477
    %v2479 = vmul.f32 %v2478, %v189
    %v2480 = vmul.f32 %v2478, %v190
    %v2482 = vsel %vm855, %v2479, 0
    %v2485 = vsel %vm855, %v2480, 0
    %2487 = vmatprep.subr.mxu0 0.0
    %2488 = vmatpush1.msra.mxu0 %v191
    %2489 = vmatprep.subr.mxu0 0.0
    %2490 = vmatpush1.msra.mxu0 %v192
    %2491 = vmatprep.subr.mxu0 0.0
    %2492 = vmatpush1.msra.mxu0 %v193
    %2493 = vmatprep.subr.mxu0 0.0
    %2494 = vmatpush1.msra.mxu0 %v194
    %2495 = vmatprep.subr.mxu0 0.0
    %2496 = vmatpush1.msra.mxu0 %v195
    %2497 = vmatprep.subr.mxu0 0.0
    %2498 = vmatpush1.msra.mxu0 %v196
    %2499 = vmatprep.subr.mxu0 0.0
    %2500 = vmatpush1.msra.mxu0 %v197
    %2501 = vmatprep.subr.mxu0 0.0
    %2502 = vmatpush1.msra.mxu0 %v198
    %2503 = vmatprep.subr.mxu0 0.0
    %2504 = vmatpush1.msra.mxu0 0.0
    %2505 = vmatprep.subr.mxu0 0.0
    %2506 = vmatpush1.msra.mxu0 0.0
    %2507 = vmatprep.subr.mxu0 0.0
    %2508 = vmatpush1.msra.mxu0 0.0
    %2509 = vmatprep.subr.mxu0 0.0
    %2510 = vmatpush1.msra.mxu0 0.0
    %2511 = vmatprep.subr.mxu0 0.0
    %2512 = vmatpush1.msra.mxu0 0.0
    %2513 = vmatprep.subr.mxu0 0.0
    %2514 = vmatpush1.msra.mxu0 0.0
    %2515 = vmatprep.subr.mxu0 0.0
    %2516 = vmatpush1.msra.mxu0 0.0
    %2517 = vmatprep.subr.mxu0 0.0
    %2518 = vmatpush1.msra.mxu0 0.0
    %2519 = vmatprep.subr.mxu0 0.0
    %2520 = vmatpush1.msra.mxu0 0.0
    %2521 = vmatprep.subr.mxu0 0.0
    %2522 = vmatpush1.msra.mxu0 0.0
    %2523 = vmatprep.subr.mxu0 0.0
    %2524 = vmatpush1.msra.mxu0 0.0
    %2525 = vmatprep.subr.mxu0 0.0
    %2526 = vmatpush1.msra.mxu0 0.0
    %2527 = vmatprep.subr.mxu0 0.0
    %2528 = vmatpush1.msra.mxu0 0.0
    %2529 = vmatprep.subr.mxu0 0.0
    %2530 = vmatpush1.msra.mxu0 0.0
    %2531 = vmatprep.subr.mxu0 0.0
    %2532 = vmatpush1.msra.mxu0 0.0
    %2533 = vmatprep.subr.mxu0 0.0
    %2534 = vmatpush1.msra.mxu0 0.0
    %2535 = vmatprep.subr.mxu0 0.0
    %2536 = vmatpush1.msra.mxu0 0.0
    %2537 = vmatprep.subr.mxu0 0.0
    %2538 = vmatpush1.msra.mxu0 0.0
    %2539 = vmatprep.subr.mxu0 0.0
    %2540 = vmatpush1.msra.mxu0 0.0
    %2541 = vmatprep.subr.mxu0 0.0
    %2542 = vmatpush1.msra.mxu0 0.0
    %2543 = vmatprep.subr.mxu0 0.0
    %2544 = vmatpush1.msra.mxu0 0.0
    %2545 = vmatprep.subr.mxu0 0.0
    %2546 = vmatpush1.msra.mxu0 0.0
    %2547 = vmatprep.subr.mxu0 0.0
    %2548 = vmatpush1.msra.mxu0 0.0
    %2549 = vmatprep.subr.mxu0 0.0
    %2550 = vmatpush1.msra.mxu0 0.0
    %2551 = vmatprep.mubr.f32.mxu0 0.0
    %2552 = vmatmul.mubr.f32.gmra.mrb[0].mxu0 %v2482
    %v2553 = vpop.f32.mrb[0].mxu0
    %v2554 = vadd.f32 0.0, %v2553
    %v2555 = vpop.f32.mrb[0].mxu0
    %2556 = vmatprep.mubr.f32.mxu0 0.0
    %2557 = vmatmul.mubr.f32.gmra.mrb[0].mxu0 %v2485
    %v2558 = vpop.f32.mrb[0].mxu0
    %v2559 = vadd.f32 0.0, %v2558
    %v2560 = vpop.f32.mrb[0].mxu0
    %2561 = vdwg.mxu0
    %v2562 = vsub.f32 %v2554, %v180
    %v2563 = vsub.f32 %v2559, %v181
    %v2564 = vmul.f32 %v2562, %v183
    %v2565 = vmul.f32 %v2563, %v184
    %v2566 = vxor.u32 %v2564, 2147483648
    %v2567 = vxor.u32 %v2565, 2147483648
    %v2568 = vmul.f32 %v2566, 1.442695
    %v2569 = vpow.pop %v2568
    %v2570 = vmul.f32 %v2567, 1.442695
    %v2571 = vpow.pop %v2570
    %v2572 = vadd.f32 %v2569, 1.0
    %v2573 = vadd.f32 %v2571, 1.0
    %v2574 = vrcp.pop %v2572
    %v2575 = vmul.f32 1.0, %v2574
    %v2576 = vrcp.pop %v2573
    %v2577 = vmul.f32 1.0, %v2576
    %v2578 = vmul.f32 %v186, %v2575
    %v2579 = vmul.f32 %v187, %v2577
    %v2580 = vadd.f32 %v2578, %v2579
    %v2581 = vrot.slane %v2580, 4
    %v2582 = vadd.f32 %v2580, %v2581
    %v2583 = vrot.slane %v2582, 2
    %v2584 = vadd.f32 %v2582, %v2583
    %v2585 = vrot.slane %v2584, 1
    %v2586 = vadd.f32 %v2584, %v2585
    %v2587 = vmul.f32 %v188, %v2474
    %v2588 = vadd.f32 %v2587, %v847
    %v2589 = vadd.f32 %v2588, %v2586
    %v2590 = vadd.f32 %v847, %v2586
    %v2591 = vrcp.pop %v2590
    %v2592 = vmul.f32 %v2590, %v2591
    %v2593 = vsub.f32 2.0, %v2592
    %v2594 = vmul.f32 %v2591, %v2593
    %2596 = vrot.lane.b32.xlu0 %v2594, 64
    %v2597 = vpop.permute.xlu0 %2596
    %v2599 = vmul.f32 %v2589, %v2597
    %v2600 = vlaneseq
    %v2601 = vshrl.u32 %v2600, 7
    %v2602 = vsub.s32 0, %v2601
    %v2603 = vrot.slane %v2599, %v2602
    %v2604 = vmul.f32 %v2603, %v189
    %v2605 = vmul.f32 %v2603, %v190
    %v2607 = vsel %vm855, %v2604, 0
    %v2610 = vsel %vm855, %v2605, 0
    %2612 = vmatprep.subr.mxu0 0.0
    %2613 = vmatpush1.msra.mxu0 %v191
    %2614 = vmatprep.subr.mxu0 0.0
    %2615 = vmatpush1.msra.mxu0 %v192
    %2616 = vmatprep.subr.mxu0 0.0
    %2617 = vmatpush1.msra.mxu0 %v193
    %2618 = vmatprep.subr.mxu0 0.0
    %2619 = vmatpush1.msra.mxu0 %v194
    %2620 = vmatprep.subr.mxu0 0.0
    %2621 = vmatpush1.msra.mxu0 %v195
    %2622 = vmatprep.subr.mxu0 0.0
    %2623 = vmatpush1.msra.mxu0 %v196
    %2624 = vmatprep.subr.mxu0 0.0
    %2625 = vmatpush1.msra.mxu0 %v197
    %2626 = vmatprep.subr.mxu0 0.0
    %2627 = vmatpush1.msra.mxu0 %v198
    %2628 = vmatprep.subr.mxu0 0.0
    %2629 = vmatpush1.msra.mxu0 0.0
    %2630 = vmatprep.subr.mxu0 0.0
    %2631 = vmatpush1.msra.mxu0 0.0
    %2632 = vmatprep.subr.mxu0 0.0
    %2633 = vmatpush1.msra.mxu0 0.0
    %2634 = vmatprep.subr.mxu0 0.0
    %2635 = vmatpush1.msra.mxu0 0.0
    %2636 = vmatprep.subr.mxu0 0.0
    %2637 = vmatpush1.msra.mxu0 0.0
    %2638 = vmatprep.subr.mxu0 0.0
    %2639 = vmatpush1.msra.mxu0 0.0
    %2640 = vmatprep.subr.mxu0 0.0
    %2641 = vmatpush1.msra.mxu0 0.0
    %2642 = vmatprep.subr.mxu0 0.0
    %2643 = vmatpush1.msra.mxu0 0.0
    %2644 = vmatprep.subr.mxu0 0.0
    %2645 = vmatpush1.msra.mxu0 0.0
    %2646 = vmatprep.subr.mxu0 0.0
    %2647 = vmatpush1.msra.mxu0 0.0
    %2648 = vmatprep.subr.mxu0 0.0
    %2649 = vmatpush1.msra.mxu0 0.0
    %2650 = vmatprep.subr.mxu0 0.0
    %2651 = vmatpush1.msra.mxu0 0.0
    %2652 = vmatprep.subr.mxu0 0.0
    %2653 = vmatpush1.msra.mxu0 0.0
    %2654 = vmatprep.subr.mxu0 0.0
    %2655 = vmatpush1.msra.mxu0 0.0
    %2656 = vmatprep.subr.mxu0 0.0
    %2657 = vmatpush1.msra.mxu0 0.0
    %2658 = vmatprep.subr.mxu0 0.0
    %2659 = vmatpush1.msra.mxu0 0.0
    %2660 = vmatprep.subr.mxu0 0.0
    %2661 = vmatpush1.msra.mxu0 0.0
    %2662 = vmatprep.subr.mxu0 0.0
    %2663 = vmatpush1.msra.mxu0 0.0
    %2664 = vmatprep.subr.mxu0 0.0
    %2665 = vmatpush1.msra.mxu0 0.0
    %2666 = vmatprep.subr.mxu0 0.0
    %2667 = vmatpush1.msra.mxu0 0.0
    %2668 = vmatprep.subr.mxu0 0.0
    %2669 = vmatpush1.msra.mxu0 0.0
    %2670 = vmatprep.subr.mxu0 0.0
    %2671 = vmatpush1.msra.mxu0 0.0
    %2672 = vmatprep.subr.mxu0 0.0
    %2673 = vmatpush1.msra.mxu0 0.0
    %2674 = vmatprep.subr.mxu0 0.0
    %2675 = vmatpush1.msra.mxu0 0.0
    %2676 = vmatprep.mubr.f32.mxu0 0.0
    %2677 = vmatmul.mubr.f32.gmra.mrb[0].mxu0 %v2607
    %v2678 = vpop.f32.mrb[0].mxu0
    %v2679 = vadd.f32 0.0, %v2678
    %v2680 = vpop.f32.mrb[0].mxu0
    %2681 = vmatprep.mubr.f32.mxu0 0.0
    %2682 = vmatmul.mubr.f32.gmra.mrb[0].mxu0 %v2610
    %v2683 = vpop.f32.mrb[0].mxu0
    %v2684 = vadd.f32 0.0, %v2683
    %v2685 = vpop.f32.mrb[0].mxu0
    %2686 = vdwg.mxu0
    %v2687 = vsub.f32 %v2679, %v180
    %v2688 = vsub.f32 %v2684, %v181
    %v2689 = vmul.f32 %v2687, %v183
    %v2690 = vmul.f32 %v2688, %v184
    %v2691 = vxor.u32 %v2689, 2147483648
    %v2692 = vxor.u32 %v2690, 2147483648
    %v2693 = vmul.f32 %v2691, 1.442695
    %v2694 = vpow.pop %v2693
    %v2695 = vmul.f32 %v2692, 1.442695
    %v2696 = vpow.pop %v2695
    %v2697 = vadd.f32 %v2694, 1.0
    %v2698 = vadd.f32 %v2696, 1.0
    %v2699 = vrcp.pop %v2697
    %v2700 = vmul.f32 1.0, %v2699
    %v2701 = vrcp.pop %v2698
    %v2702 = vmul.f32 1.0, %v2701
    %v2703 = vmul.f32 %v186, %v2700
    %v2704 = vmul.f32 %v187, %v2702
    %v2705 = vadd.f32 %v2703, %v2704
    %v2706 = vrot.slane %v2705, 4
    %v2707 = vadd.f32 %v2705, %v2706
    %v2708 = vrot.slane %v2707, 2
    %v2709 = vadd.f32 %v2707, %v2708
    %v2710 = vrot.slane %v2709, 1
    %v2711 = vadd.f32 %v2709, %v2710
    %v2712 = vmul.f32 %v188, %v2599
    %v2713 = vadd.f32 %v2712, %v847
    %v2714 = vadd.f32 %v2713, %v2711
    %v2715 = vadd.f32 %v847, %v2711
    %v2716 = vrcp.pop %v2715
    %v2717 = vmul.f32 %v2715, %v2716
    %v2718 = vsub.f32 2.0, %v2717
    %v2719 = vmul.f32 %v2716, %v2718
    %2721 = vrot.lane.b32.xlu0 %v2719, 64
    %v2722 = vpop.permute.xlu0 %2721
    %v2724 = vmul.f32 %v2714, %v2722
    %v2725 = vlaneseq
    %v2726 = vshrl.u32 %v2725, 7
    %v2727 = vsub.s32 0, %v2726
    %v2728 = vrot.slane %v2724, %v2727
    %v2729 = vmul.f32 %v2728, %v189
    %v2730 = vmul.f32 %v2728, %v190
    %v2732 = vsel %vm855, %v2729, 0
    %v2735 = vsel %vm855, %v2730, 0
    %2737 = vmatprep.subr.mxu0 0.0
    %2738 = vmatpush1.msra.mxu0 %v191
    %2739 = vmatprep.subr.mxu0 0.0
    %2740 = vmatpush1.msra.mxu0 %v192
    %2741 = vmatprep.subr.mxu0 0.0
    %2742 = vmatpush1.msra.mxu0 %v193
    %2743 = vmatprep.subr.mxu0 0.0
    %2744 = vmatpush1.msra.mxu0 %v194
    %2745 = vmatprep.subr.mxu0 0.0
    %2746 = vmatpush1.msra.mxu0 %v195
    %2747 = vmatprep.subr.mxu0 0.0
    %2748 = vmatpush1.msra.mxu0 %v196
    %2749 = vmatprep.subr.mxu0 0.0
    %2750 = vmatpush1.msra.mxu0 %v197
    %2751 = vmatprep.subr.mxu0 0.0
    %2752 = vmatpush1.msra.mxu0 %v198
    %2753 = vmatprep.subr.mxu0 0.0
    %2754 = vmatpush1.msra.mxu0 0.0
    %2755 = vmatprep.subr.mxu0 0.0
    %2756 = vmatpush1.msra.mxu0 0.0
    %2757 = vmatprep.subr.mxu0 0.0
    %2758 = vmatpush1.msra.mxu0 0.0
    %2759 = vmatprep.subr.mxu0 0.0
    %2760 = vmatpush1.msra.mxu0 0.0
    %2761 = vmatprep.subr.mxu0 0.0
    %2762 = vmatpush1.msra.mxu0 0.0
    %2763 = vmatprep.subr.mxu0 0.0
    %2764 = vmatpush1.msra.mxu0 0.0
    %2765 = vmatprep.subr.mxu0 0.0
    %2766 = vmatpush1.msra.mxu0 0.0
    %2767 = vmatprep.subr.mxu0 0.0
    %2768 = vmatpush1.msra.mxu0 0.0
    %2769 = vmatprep.subr.mxu0 0.0
    %2770 = vmatpush1.msra.mxu0 0.0
    %2771 = vmatprep.subr.mxu0 0.0
    %2772 = vmatpush1.msra.mxu0 0.0
    %2773 = vmatprep.subr.mxu0 0.0
    %2774 = vmatpush1.msra.mxu0 0.0
    %2775 = vmatprep.subr.mxu0 0.0
    %2776 = vmatpush1.msra.mxu0 0.0
    %2777 = vmatprep.subr.mxu0 0.0
    %2778 = vmatpush1.msra.mxu0 0.0
    %2779 = vmatprep.subr.mxu0 0.0
    %2780 = vmatpush1.msra.mxu0 0.0
    %2781 = vmatprep.subr.mxu0 0.0
    %2782 = vmatpush1.msra.mxu0 0.0
    %2783 = vmatprep.subr.mxu0 0.0
    %2784 = vmatpush1.msra.mxu0 0.0
    %2785 = vmatprep.subr.mxu0 0.0
    %2786 = vmatpush1.msra.mxu0 0.0
    %2787 = vmatprep.subr.mxu0 0.0
    %2788 = vmatpush1.msra.mxu0 0.0
    %2789 = vmatprep.subr.mxu0 0.0
    %2790 = vmatpush1.msra.mxu0 0.0
    %2791 = vmatprep.subr.mxu0 0.0
    %2792 = vmatpush1.msra.mxu0 0.0
    %2793 = vmatprep.subr.mxu0 0.0
    %2794 = vmatpush1.msra.mxu0 0.0
    %2795 = vmatprep.subr.mxu0 0.0
    %2796 = vmatpush1.msra.mxu0 0.0
    %2797 = vmatprep.subr.mxu0 0.0
    %2798 = vmatpush1.msra.mxu0 0.0
    %2799 = vmatprep.subr.mxu0 0.0
    %2800 = vmatpush1.msra.mxu0 0.0
    %2801 = vmatprep.mubr.f32.mxu0 0.0
    %2802 = vmatmul.mubr.f32.gmra.mrb[0].mxu0 %v2732
    %v2803 = vpop.f32.mrb[0].mxu0
    %v2804 = vadd.f32 0.0, %v2803
    %v2805 = vpop.f32.mrb[0].mxu0
    %2806 = vmatprep.mubr.f32.mxu0 0.0
    %2807 = vmatmul.mubr.f32.gmra.mrb[0].mxu0 %v2735
    %v2808 = vpop.f32.mrb[0].mxu0
    %v2809 = vadd.f32 0.0, %v2808
    %v2810 = vpop.f32.mrb[0].mxu0
    %2811 = vdwg.mxu0
    %v2812 = vsub.f32 %v2804, %v180
    %v2813 = vsub.f32 %v2809, %v181
    %v2814 = vmul.f32 %v2812, %v183
    %v2815 = vmul.f32 %v2813, %v184
    %v2816 = vxor.u32 %v2814, 2147483648
    %v2817 = vxor.u32 %v2815, 2147483648
    %v2818 = vmul.f32 %v2816, 1.442695
    %v2819 = vpow.pop %v2818
    %v2820 = vmul.f32 %v2817, 1.442695
    %v2821 = vpow.pop %v2820
    %v2822 = vadd.f32 %v2819, 1.0
    %v2823 = vadd.f32 %v2821, 1.0
    %v2824 = vrcp.pop %v2822
    %v2825 = vmul.f32 1.0, %v2824
    %v2826 = vrcp.pop %v2823
    %v2827 = vmul.f32 1.0, %v2826
    %v2828 = vmul.f32 %v186, %v2825
    %v2829 = vmul.f32 %v187, %v2827
    %v2830 = vadd.f32 %v2828, %v2829
    %v2831 = vrot.slane %v2830, 4
    %v2832 = vadd.f32 %v2830, %v2831
    %v2833 = vrot.slane %v2832, 2
    %v2834 = vadd.f32 %v2832, %v2833
    %v2835 = vrot.slane %v2834, 1
    %v2836 = vadd.f32 %v2834, %v2835
    %v2837 = vmul.f32 %v188, %v2724
    %v2838 = vadd.f32 %v2837, %v847
    %v2839 = vadd.f32 %v2838, %v2836
    %v2840 = vadd.f32 %v847, %v2836
    %v2841 = vrcp.pop %v2840
    %v2842 = vmul.f32 %v2840, %v2841
    %v2843 = vsub.f32 2.0, %v2842
    %v2844 = vmul.f32 %v2841, %v2843
    %2846 = vrot.lane.b32.xlu0 %v2844, 64
    %v2847 = vpop.permute.xlu0 %2846
    %v2849 = vmul.f32 %v2839, %v2847
    %v2850 = vlaneseq
    %v2851 = vshrl.u32 %v2850, 7
    %v2852 = vsub.s32 0, %v2851
    %v2853 = vrot.slane %v2849, %v2852
    %v2854 = vmul.f32 %v2853, %v189
    %v2855 = vmul.f32 %v2853, %v190
    %v2857 = vsel %vm855, %v2854, 0
    %v2860 = vsel %vm855, %v2855, 0
    %2862 = vmatprep.subr.mxu0 0.0
    %2863 = vmatpush1.msra.mxu0 %v191
    %2864 = vmatprep.subr.mxu0 0.0
    %2865 = vmatpush1.msra.mxu0 %v192
    %2866 = vmatprep.subr.mxu0 0.0
    %2867 = vmatpush1.msra.mxu0 %v193
    %2868 = vmatprep.subr.mxu0 0.0
    %2869 = vmatpush1.msra.mxu0 %v194
    %2870 = vmatprep.subr.mxu0 0.0
    %2871 = vmatpush1.msra.mxu0 %v195
    %2872 = vmatprep.subr.mxu0 0.0
    %2873 = vmatpush1.msra.mxu0 %v196
    %2874 = vmatprep.subr.mxu0 0.0
    %2875 = vmatpush1.msra.mxu0 %v197
    %2876 = vmatprep.subr.mxu0 0.0
    %2877 = vmatpush1.msra.mxu0 %v198
    %2878 = vmatprep.subr.mxu0 0.0
    %2879 = vmatpush1.msra.mxu0 0.0
    %2880 = vmatprep.subr.mxu0 0.0
    %2881 = vmatpush1.msra.mxu0 0.0
    %2882 = vmatprep.subr.mxu0 0.0
    %2883 = vmatpush1.msra.mxu0 0.0
    %2884 = vmatprep.subr.mxu0 0.0
    %2885 = vmatpush1.msra.mxu0 0.0
    %2886 = vmatprep.subr.mxu0 0.0
    %2887 = vmatpush1.msra.mxu0 0.0
    %2888 = vmatprep.subr.mxu0 0.0
    %2889 = vmatpush1.msra.mxu0 0.0
    %2890 = vmatprep.subr.mxu0 0.0
    %2891 = vmatpush1.msra.mxu0 0.0
    %2892 = vmatprep.subr.mxu0 0.0
    %2893 = vmatpush1.msra.mxu0 0.0
    %2894 = vmatprep.subr.mxu0 0.0
    %2895 = vmatpush1.msra.mxu0 0.0
    %2896 = vmatprep.subr.mxu0 0.0
    %2897 = vmatpush1.msra.mxu0 0.0
    %2898 = vmatprep.subr.mxu0 0.0
    %2899 = vmatpush1.msra.mxu0 0.0
    %2900 = vmatprep.subr.mxu0 0.0
    %2901 = vmatpush1.msra.mxu0 0.0
    %2902 = vmatprep.subr.mxu0 0.0
    %2903 = vmatpush1.msra.mxu0 0.0
    %2904 = vmatprep.subr.mxu0 0.0
    %2905 = vmatpush1.msra.mxu0 0.0
    %2906 = vmatprep.subr.mxu0 0.0
    %2907 = vmatpush1.msra.mxu0 0.0
    %2908 = vmatprep.subr.mxu0 0.0
    %2909 = vmatpush1.msra.mxu0 0.0
    %2910 = vmatprep.subr.mxu0 0.0
    %2911 = vmatpush1.msra.mxu0 0.0
    %2912 = vmatprep.subr.mxu0 0.0
    %2913 = vmatpush1.msra.mxu0 0.0
    %2914 = vmatprep.subr.mxu0 0.0
    %2915 = vmatpush1.msra.mxu0 0.0
    %2916 = vmatprep.subr.mxu0 0.0
    %2917 = vmatpush1.msra.mxu0 0.0
    %2918 = vmatprep.subr.mxu0 0.0
    %2919 = vmatpush1.msra.mxu0 0.0
    %2920 = vmatprep.subr.mxu0 0.0
    %2921 = vmatpush1.msra.mxu0 0.0
    %2922 = vmatprep.subr.mxu0 0.0
    %2923 = vmatpush1.msra.mxu0 0.0
    %2924 = vmatprep.subr.mxu0 0.0
    %2925 = vmatpush1.msra.mxu0 0.0
    %2926 = vmatprep.mubr.f32.mxu0 0.0
    %2927 = vmatmul.mubr.f32.gmra.mrb[0].mxu0 %v2857
    %v2928 = vpop.f32.mrb[0].mxu0
    %v2929 = vadd.f32 0.0, %v2928
    %v2930 = vpop.f32.mrb[0].mxu0
    %2931 = vmatprep.mubr.f32.mxu0 0.0
    %2932 = vmatmul.mubr.f32.gmra.mrb[0].mxu0 %v2860
    %v2933 = vpop.f32.mrb[0].mxu0
    %v2934 = vadd.f32 0.0, %v2933
    %v2935 = vpop.f32.mrb[0].mxu0
    %2936 = vdwg.mxu0
    %v2937 = vsub.f32 %v2929, %v180
    %v2938 = vsub.f32 %v2934, %v181
    %v2939 = vmul.f32 %v2937, %v183
    %v2940 = vmul.f32 %v2938, %v184
    %v2941 = vxor.u32 %v2939, 2147483648
    %v2942 = vxor.u32 %v2940, 2147483648
    %v2943 = vmul.f32 %v2941, 1.442695
    %v2944 = vpow.pop %v2943
    %v2945 = vmul.f32 %v2942, 1.442695
    %v2946 = vpow.pop %v2945
    %v2947 = vadd.f32 %v2944, 1.0
    %v2948 = vadd.f32 %v2946, 1.0
    %v2949 = vrcp.pop %v2947
    %v2950 = vmul.f32 1.0, %v2949
    %v2951 = vrcp.pop %v2948
    %v2952 = vmul.f32 1.0, %v2951
    %v2953 = vmul.f32 %v186, %v2950
    %v2954 = vmul.f32 %v187, %v2952
    %v2955 = vadd.f32 %v2953, %v2954
    %v2956 = vrot.slane %v2955, 4
    %v2957 = vadd.f32 %v2955, %v2956
    %v2958 = vrot.slane %v2957, 2
    %v2959 = vadd.f32 %v2957, %v2958
    %v2960 = vrot.slane %v2959, 1
    %v2961 = vadd.f32 %v2959, %v2960
    %v2962 = vmul.f32 %v188, %v2849
    %v2963 = vadd.f32 %v2962, %v847
    %v2964 = vadd.f32 %v2963, %v2961
    %v2965 = vadd.f32 %v847, %v2961
    %v2966 = vrcp.pop %v2965
    %v2967 = vmul.f32 %v2965, %v2966
    %v2968 = vsub.f32 2.0, %v2967
    %v2969 = vmul.f32 %v2966, %v2968
    %2971 = vrot.lane.b32.xlu0 %v2969, 64
    %v2972 = vpop.permute.xlu0 %2971
    %v2974 = vmul.f32 %v2964, %v2972
    %v2975 = vlaneseq
    %v2976 = vshrl.u32 %v2975, 7
    %v2977 = vsub.s32 0, %v2976
    %v2978 = vrot.slane %v2974, %v2977
    %v2979 = vmul.f32 %v2978, %v189
    %v2980 = vmul.f32 %v2978, %v190
    %v2982 = vsel %vm855, %v2979, 0
    %v2985 = vsel %vm855, %v2980, 0
    %2987 = vmatprep.subr.mxu0 0.0
    %2988 = vmatpush1.msra.mxu0 %v191
    %2989 = vmatprep.subr.mxu0 0.0
    %2990 = vmatpush1.msra.mxu0 %v192
    %2991 = vmatprep.subr.mxu0 0.0
    %2992 = vmatpush1.msra.mxu0 %v193
    %2993 = vmatprep.subr.mxu0 0.0
    %2994 = vmatpush1.msra.mxu0 %v194
    %2995 = vmatprep.subr.mxu0 0.0
    %2996 = vmatpush1.msra.mxu0 %v195
    %2997 = vmatprep.subr.mxu0 0.0
    %2998 = vmatpush1.msra.mxu0 %v196
    %2999 = vmatprep.subr.mxu0 0.0
    %3000 = vmatpush1.msra.mxu0 %v197
    %3001 = vmatprep.subr.mxu0 0.0
    %3002 = vmatpush1.msra.mxu0 %v198
    %3003 = vmatprep.subr.mxu0 0.0
    %3004 = vmatpush1.msra.mxu0 0.0
    %3005 = vmatprep.subr.mxu0 0.0
    %3006 = vmatpush1.msra.mxu0 0.0
    %3007 = vmatprep.subr.mxu0 0.0
    %3008 = vmatpush1.msra.mxu0 0.0
    %3009 = vmatprep.subr.mxu0 0.0
    %3010 = vmatpush1.msra.mxu0 0.0
    %3011 = vmatprep.subr.mxu0 0.0
    %3012 = vmatpush1.msra.mxu0 0.0
    %3013 = vmatprep.subr.mxu0 0.0
    %3014 = vmatpush1.msra.mxu0 0.0
    %3015 = vmatprep.subr.mxu0 0.0
    %3016 = vmatpush1.msra.mxu0 0.0
    %3017 = vmatprep.subr.mxu0 0.0
    %3018 = vmatpush1.msra.mxu0 0.0
    %3019 = vmatprep.subr.mxu0 0.0
    %3020 = vmatpush1.msra.mxu0 0.0
    %3021 = vmatprep.subr.mxu0 0.0
    %3022 = vmatpush1.msra.mxu0 0.0
    %3023 = vmatprep.subr.mxu0 0.0
    %3024 = vmatpush1.msra.mxu0 0.0
    %3025 = vmatprep.subr.mxu0 0.0
    %3026 = vmatpush1.msra.mxu0 0.0
    %3027 = vmatprep.subr.mxu0 0.0
    %3028 = vmatpush1.msra.mxu0 0.0
    %3029 = vmatprep.subr.mxu0 0.0
    %3030 = vmatpush1.msra.mxu0 0.0
    %3031 = vmatprep.subr.mxu0 0.0
    %3032 = vmatpush1.msra.mxu0 0.0
    %3033 = vmatprep.subr.mxu0 0.0
    %3034 = vmatpush1.msra.mxu0 0.0
    %3035 = vmatprep.subr.mxu0 0.0
    %3036 = vmatpush1.msra.mxu0 0.0
    %3037 = vmatprep.subr.mxu0 0.0
    %3038 = vmatpush1.msra.mxu0 0.0
    %3039 = vmatprep.subr.mxu0 0.0
    %3040 = vmatpush1.msra.mxu0 0.0
    %3041 = vmatprep.subr.mxu0 0.0
    %3042 = vmatpush1.msra.mxu0 0.0
    %3043 = vmatprep.subr.mxu0 0.0
    %3044 = vmatpush1.msra.mxu0 0.0
    %3045 = vmatprep.subr.mxu0 0.0
    %3046 = vmatpush1.msra.mxu0 0.0
    %3047 = vmatprep.subr.mxu0 0.0
    %3048 = vmatpush1.msra.mxu0 0.0
    %3049 = vmatprep.subr.mxu0 0.0
    %3050 = vmatpush1.msra.mxu0 0.0
    %3051 = vmatprep.mubr.f32.mxu0 0.0
    %3052 = vmatmul.mubr.f32.gmra.mrb[0].mxu0 %v2982
    %v3053 = vpop.f32.mrb[0].mxu0
    %v3054 = vadd.f32 0.0, %v3053
    %v3055 = vpop.f32.mrb[0].mxu0
    %3056 = vmatprep.mubr.f32.mxu0 0.0
    %3057 = vmatmul.mubr.f32.gmra.mrb[0].mxu0 %v2985
    %v3058 = vpop.f32.mrb[0].mxu0
    %v3059 = vadd.f32 0.0, %v3058
    %v3060 = vpop.f32.mrb[0].mxu0
    %3061 = vdwg.mxu0
    %v3062 = vsub.f32 %v3054, %v180
    %v3063 = vsub.f32 %v3059, %v181
    %v3064 = vmul.f32 %v3062, %v183
    %v3065 = vmul.f32 %v3063, %v184
    %v3066 = vxor.u32 %v3064, 2147483648
    %v3067 = vxor.u32 %v3065, 2147483648
    %v3068 = vmul.f32 %v3066, 1.442695
    %v3069 = vpow.pop %v3068
    %v3070 = vmul.f32 %v3067, 1.442695
    %v3071 = vpow.pop %v3070
    %v3072 = vadd.f32 %v3069, 1.0
    %v3073 = vadd.f32 %v3071, 1.0
    %v3074 = vrcp.pop %v3072
    %v3075 = vmul.f32 1.0, %v3074
    %v3076 = vrcp.pop %v3073
    %v3077 = vmul.f32 1.0, %v3076
    %v3078 = vmul.f32 %v186, %v3075
    %v3079 = vmul.f32 %v187, %v3077
    %v3080 = vadd.f32 %v3078, %v3079
    %v3081 = vrot.slane %v3080, 4
    %v3082 = vadd.f32 %v3080, %v3081
    %v3083 = vrot.slane %v3082, 2
    %v3084 = vadd.f32 %v3082, %v3083
    %v3085 = vrot.slane %v3084, 1
    %v3086 = vadd.f32 %v3084, %v3085
    %v3087 = vmul.f32 %v188, %v2974
    %v3088 = vadd.f32 %v3087, %v847
    %v3089 = vadd.f32 %v3088, %v3086
    %v3090 = vadd.f32 %v847, %v3086
    %v3091 = vrcp.pop %v3090
    %v3092 = vmul.f32 %v3090, %v3091
    %v3093 = vsub.f32 2.0, %v3092
    %v3094 = vmul.f32 %v3091, %v3093
    %3096 = vrot.lane.b32.xlu0 %v3094, 64
    %v3097 = vpop.permute.xlu0 %3096
    %v3099 = vmul.f32 %v3089, %v3097
    %v3100 = vlaneseq
    %v3101 = vshrl.u32 %v3100, 7
    %v3102 = vsub.s32 0, %v3101
    %v3103 = vrot.slane %v3099, %v3102
    %v3104 = vmul.f32 %v3103, %v189
    %v3105 = vmul.f32 %v3103, %v190
    %v3107 = vsel %vm855, %v3104, 0
    %v3110 = vsel %vm855, %v3105, 0
    %3112 = vmatprep.subr.mxu0 0.0
    %3113 = vmatpush1.msra.mxu0 %v191
    %3114 = vmatprep.subr.mxu0 0.0
    %3115 = vmatpush1.msra.mxu0 %v192
    %3116 = vmatprep.subr.mxu0 0.0
    %3117 = vmatpush1.msra.mxu0 %v193
    %3118 = vmatprep.subr.mxu0 0.0
    %3119 = vmatpush1.msra.mxu0 %v194
    %3120 = vmatprep.subr.mxu0 0.0
    %3121 = vmatpush1.msra.mxu0 %v195
    %3122 = vmatprep.subr.mxu0 0.0
    %3123 = vmatpush1.msra.mxu0 %v196
    %3124 = vmatprep.subr.mxu0 0.0
    %3125 = vmatpush1.msra.mxu0 %v197
    %3126 = vmatprep.subr.mxu0 0.0
    %3127 = vmatpush1.msra.mxu0 %v198
    %3128 = vmatprep.subr.mxu0 0.0
    %3129 = vmatpush1.msra.mxu0 0.0
    %3130 = vmatprep.subr.mxu0 0.0
    %3131 = vmatpush1.msra.mxu0 0.0
    %3132 = vmatprep.subr.mxu0 0.0
    %3133 = vmatpush1.msra.mxu0 0.0
    %3134 = vmatprep.subr.mxu0 0.0
    %3135 = vmatpush1.msra.mxu0 0.0
    %3136 = vmatprep.subr.mxu0 0.0
    %3137 = vmatpush1.msra.mxu0 0.0
    %3138 = vmatprep.subr.mxu0 0.0
    %3139 = vmatpush1.msra.mxu0 0.0
    %3140 = vmatprep.subr.mxu0 0.0
    %3141 = vmatpush1.msra.mxu0 0.0
    %3142 = vmatprep.subr.mxu0 0.0
    %3143 = vmatpush1.msra.mxu0 0.0
    %3144 = vmatprep.subr.mxu0 0.0
    %3145 = vmatpush1.msra.mxu0 0.0
    %3146 = vmatprep.subr.mxu0 0.0
    %3147 = vmatpush1.msra.mxu0 0.0
    %3148 = vmatprep.subr.mxu0 0.0
    %3149 = vmatpush1.msra.mxu0 0.0
    %3150 = vmatprep.subr.mxu0 0.0
    %3151 = vmatpush1.msra.mxu0 0.0
    %3152 = vmatprep.subr.mxu0 0.0
    %3153 = vmatpush1.msra.mxu0 0.0
    %3154 = vmatprep.subr.mxu0 0.0
    %3155 = vmatpush1.msra.mxu0 0.0
    %3156 = vmatprep.subr.mxu0 0.0
    %3157 = vmatpush1.msra.mxu0 0.0
    %3158 = vmatprep.subr.mxu0 0.0
    %3159 = vmatpush1.msra.mxu0 0.0
    %3160 = vmatprep.subr.mxu0 0.0
    %3161 = vmatpush1.msra.mxu0 0.0
    %3162 = vmatprep.subr.mxu0 0.0
    %3163 = vmatpush1.msra.mxu0 0.0
    %3164 = vmatprep.subr.mxu0 0.0
    %3165 = vmatpush1.msra.mxu0 0.0
    %3166 = vmatprep.subr.mxu0 0.0
    %3167 = vmatpush1.msra.mxu0 0.0
    %3168 = vmatprep.subr.mxu0 0.0
    %3169 = vmatpush1.msra.mxu0 0.0
    %3170 = vmatprep.subr.mxu0 0.0
    %3171 = vmatpush1.msra.mxu0 0.0
    %3172 = vmatprep.subr.mxu0 0.0
    %3173 = vmatpush1.msra.mxu0 0.0
    %3174 = vmatprep.subr.mxu0 0.0
    %3175 = vmatpush1.msra.mxu0 0.0
    %3176 = vmatprep.mubr.f32.mxu0 0.0
    %3177 = vmatmul.mubr.f32.gmra.mrb[0].mxu0 %v3107
    %v3178 = vpop.f32.mrb[0].mxu0
    %v3179 = vadd.f32 0.0, %v3178
    %v3180 = vpop.f32.mrb[0].mxu0
    %3181 = vmatprep.mubr.f32.mxu0 0.0
    %3182 = vmatmul.mubr.f32.gmra.mrb[0].mxu0 %v3110
    %v3183 = vpop.f32.mrb[0].mxu0
    %v3184 = vadd.f32 0.0, %v3183
    %v3185 = vpop.f32.mrb[0].mxu0
    %3186 = vdwg.mxu0
    %v3187 = vsub.f32 %v3179, %v180
    %v3188 = vsub.f32 %v3184, %v181
    %v3189 = vmul.f32 %v3187, %v183
    %v3190 = vmul.f32 %v3188, %v184
    %v3191 = vxor.u32 %v3189, 2147483648
    %v3192 = vxor.u32 %v3190, 2147483648
    %v3193 = vmul.f32 %v3191, 1.442695
    %v3194 = vpow.pop %v3193
    %v3195 = vmul.f32 %v3192, 1.442695
    %v3196 = vpow.pop %v3195
    %v3197 = vadd.f32 %v3194, 1.0
    %v3198 = vadd.f32 %v3196, 1.0
    %v3199 = vrcp.pop %v3197
    %v3200 = vmul.f32 1.0, %v3199
    %v3201 = vrcp.pop %v3198
    %v3202 = vmul.f32 1.0, %v3201
    %v3203 = vmul.f32 %v186, %v3200
    %v3204 = vmul.f32 %v187, %v3202
    %v3205 = vadd.f32 %v3203, %v3204
    %v3206 = vrot.slane %v3205, 4
    %v3207 = vadd.f32 %v3205, %v3206
    %v3208 = vrot.slane %v3207, 2
    %v3209 = vadd.f32 %v3207, %v3208
    %v3210 = vrot.slane %v3209, 1
    %v3211 = vadd.f32 %v3209, %v3210
    %v3212 = vmul.f32 %v188, %v3099
    %v3213 = vadd.f32 %v3212, %v848
    %v3214 = vadd.f32 %v3213, %v3211
    %v3215 = vadd.f32 %v848, %v3211
    %v3216 = vrcp.pop %v3215
    %v3217 = vmul.f32 %v3215, %v3216
    %v3218 = vsub.f32 2.0, %v3217
    %v3219 = vmul.f32 %v3216, %v3218
    %3221 = vrot.lane.b32.xlu0 %v3219, 64
    %v3222 = vpop.permute.xlu0 %3221
    %v3224 = vmul.f32 %v3214, %v3222
    %v3225 = vlaneseq
    %v3226 = vshrl.u32 %v3225, 7
    %v3227 = vsub.s32 0, %v3226
    %v3228 = vrot.slane %v3224, %v3227
    %v3229 = vmul.f32 %v3228, %v189
    %v3230 = vmul.f32 %v3228, %v190
    %v3232 = vsel %vm855, %v3229, 0
    %v3235 = vsel %vm855, %v3230, 0
    %3237 = vmatprep.subr.mxu0 0.0
    %3238 = vmatpush1.msra.mxu0 %v191
    %3239 = vmatprep.subr.mxu0 0.0
    %3240 = vmatpush1.msra.mxu0 %v192
    %3241 = vmatprep.subr.mxu0 0.0
    %3242 = vmatpush1.msra.mxu0 %v193
    %3243 = vmatprep.subr.mxu0 0.0
    %3244 = vmatpush1.msra.mxu0 %v194
    %3245 = vmatprep.subr.mxu0 0.0
    %3246 = vmatpush1.msra.mxu0 %v195
    %3247 = vmatprep.subr.mxu0 0.0
    %3248 = vmatpush1.msra.mxu0 %v196
    %3249 = vmatprep.subr.mxu0 0.0
    %3250 = vmatpush1.msra.mxu0 %v197
    %3251 = vmatprep.subr.mxu0 0.0
    %3252 = vmatpush1.msra.mxu0 %v198
    %3253 = vmatprep.subr.mxu0 0.0
    %3254 = vmatpush1.msra.mxu0 0.0
    %3255 = vmatprep.subr.mxu0 0.0
    %3256 = vmatpush1.msra.mxu0 0.0
    %3257 = vmatprep.subr.mxu0 0.0
    %3258 = vmatpush1.msra.mxu0 0.0
    %3259 = vmatprep.subr.mxu0 0.0
    %3260 = vmatpush1.msra.mxu0 0.0
    %3261 = vmatprep.subr.mxu0 0.0
    %3262 = vmatpush1.msra.mxu0 0.0
    %3263 = vmatprep.subr.mxu0 0.0
    %3264 = vmatpush1.msra.mxu0 0.0
    %3265 = vmatprep.subr.mxu0 0.0
    %3266 = vmatpush1.msra.mxu0 0.0
    %3267 = vmatprep.subr.mxu0 0.0
    %3268 = vmatpush1.msra.mxu0 0.0
    %3269 = vmatprep.subr.mxu0 0.0
    %3270 = vmatpush1.msra.mxu0 0.0
    %3271 = vmatprep.subr.mxu0 0.0
    %3272 = vmatpush1.msra.mxu0 0.0
    %3273 = vmatprep.subr.mxu0 0.0
    %3274 = vmatpush1.msra.mxu0 0.0
    %3275 = vmatprep.subr.mxu0 0.0
    %3276 = vmatpush1.msra.mxu0 0.0
    %3277 = vmatprep.subr.mxu0 0.0
    %3278 = vmatpush1.msra.mxu0 0.0
    %3279 = vmatprep.subr.mxu0 0.0
    %3280 = vmatpush1.msra.mxu0 0.0
    %3281 = vmatprep.subr.mxu0 0.0
    %3282 = vmatpush1.msra.mxu0 0.0
    %3283 = vmatprep.subr.mxu0 0.0
    %3284 = vmatpush1.msra.mxu0 0.0
    %3285 = vmatprep.subr.mxu0 0.0
    %3286 = vmatpush1.msra.mxu0 0.0
    %3287 = vmatprep.subr.mxu0 0.0
    %3288 = vmatpush1.msra.mxu0 0.0
    %3289 = vmatprep.subr.mxu0 0.0
    %3290 = vmatpush1.msra.mxu0 0.0
    %3291 = vmatprep.subr.mxu0 0.0
    %3292 = vmatpush1.msra.mxu0 0.0
    %3293 = vmatprep.subr.mxu0 0.0
    %3294 = vmatpush1.msra.mxu0 0.0
    %3295 = vmatprep.subr.mxu0 0.0
    %3296 = vmatpush1.msra.mxu0 0.0
    %3297 = vmatprep.subr.mxu0 0.0
    %3298 = vmatpush1.msra.mxu0 0.0
    %3299 = vmatprep.subr.mxu0 0.0
    %3300 = vmatpush1.msra.mxu0 0.0
    %3301 = vmatprep.mubr.f32.mxu0 0.0
    %3302 = vmatmul.mubr.f32.gmra.mrb[0].mxu0 %v3232
    %v3303 = vpop.f32.mrb[0].mxu0
    %v3304 = vadd.f32 0.0, %v3303
    %v3305 = vpop.f32.mrb[0].mxu0
    %3306 = vmatprep.mubr.f32.mxu0 0.0
    %3307 = vmatmul.mubr.f32.gmra.mrb[0].mxu0 %v3235
    %v3308 = vpop.f32.mrb[0].mxu0
    %v3309 = vadd.f32 0.0, %v3308
    %v3310 = vpop.f32.mrb[0].mxu0
    %3311 = vdwg.mxu0
    %v3312 = vsub.f32 %v3304, %v180
    %v3313 = vsub.f32 %v3309, %v181
    %v3314 = vmul.f32 %v3312, %v183
    %v3315 = vmul.f32 %v3313, %v184
    %v3316 = vxor.u32 %v3314, 2147483648
    %v3317 = vxor.u32 %v3315, 2147483648
    %v3318 = vmul.f32 %v3316, 1.442695
    %v3319 = vpow.pop %v3318
    %v3320 = vmul.f32 %v3317, 1.442695
    %v3321 = vpow.pop %v3320
    %v3322 = vadd.f32 %v3319, 1.0
    %v3323 = vadd.f32 %v3321, 1.0
    %v3324 = vrcp.pop %v3322
    %v3325 = vmul.f32 1.0, %v3324
    %v3326 = vrcp.pop %v3323
    %v3327 = vmul.f32 1.0, %v3326
    %v3328 = vmul.f32 %v186, %v3325
    %v3329 = vmul.f32 %v187, %v3327
    %v3330 = vadd.f32 %v3328, %v3329
    %v3331 = vrot.slane %v3330, 4
    %v3332 = vadd.f32 %v3330, %v3331
    %v3333 = vrot.slane %v3332, 2
    %v3334 = vadd.f32 %v3332, %v3333
    %v3335 = vrot.slane %v3334, 1
    %v3336 = vadd.f32 %v3334, %v3335
    %v3337 = vmul.f32 %v188, %v3224
    %v3338 = vadd.f32 %v3337, %v848
    %v3339 = vadd.f32 %v3338, %v3336
    %v3340 = vadd.f32 %v848, %v3336
    %v3341 = vrcp.pop %v3340
    %v3342 = vmul.f32 %v3340, %v3341
    %v3343 = vsub.f32 2.0, %v3342
    %v3344 = vmul.f32 %v3341, %v3343
    %3346 = vrot.lane.b32.xlu0 %v3344, 64
    %v3347 = vpop.permute.xlu0 %3346
    %v3349 = vmul.f32 %v3339, %v3347
    %v3350 = vlaneseq
    %v3351 = vshrl.u32 %v3350, 7
    %v3352 = vsub.s32 0, %v3351
    %v3353 = vrot.slane %v3349, %v3352
    %v3354 = vmul.f32 %v3353, %v189
    %v3355 = vmul.f32 %v3353, %v190
    %v3357 = vsel %vm855, %v3354, 0
    %v3360 = vsel %vm855, %v3355, 0
    %3362 = vmatprep.subr.mxu0 0.0
    %3363 = vmatpush1.msra.mxu0 %v191
    %3364 = vmatprep.subr.mxu0 0.0
    %3365 = vmatpush1.msra.mxu0 %v192
    %3366 = vmatprep.subr.mxu0 0.0
    %3367 = vmatpush1.msra.mxu0 %v193
    %3368 = vmatprep.subr.mxu0 0.0
    %3369 = vmatpush1.msra.mxu0 %v194
    %3370 = vmatprep.subr.mxu0 0.0
    %3371 = vmatpush1.msra.mxu0 %v195
    %3372 = vmatprep.subr.mxu0 0.0
    %3373 = vmatpush1.msra.mxu0 %v196
    %3374 = vmatprep.subr.mxu0 0.0
    %3375 = vmatpush1.msra.mxu0 %v197
    %3376 = vmatprep.subr.mxu0 0.0
    %3377 = vmatpush1.msra.mxu0 %v198
    %3378 = vmatprep.subr.mxu0 0.0
    %3379 = vmatpush1.msra.mxu0 0.0
    %3380 = vmatprep.subr.mxu0 0.0
    %3381 = vmatpush1.msra.mxu0 0.0
    %3382 = vmatprep.subr.mxu0 0.0
    %3383 = vmatpush1.msra.mxu0 0.0
    %3384 = vmatprep.subr.mxu0 0.0
    %3385 = vmatpush1.msra.mxu0 0.0
    %3386 = vmatprep.subr.mxu0 0.0
    %3387 = vmatpush1.msra.mxu0 0.0
    %3388 = vmatprep.subr.mxu0 0.0
    %3389 = vmatpush1.msra.mxu0 0.0
    %3390 = vmatprep.subr.mxu0 0.0
    %3391 = vmatpush1.msra.mxu0 0.0
    %3392 = vmatprep.subr.mxu0 0.0
    %3393 = vmatpush1.msra.mxu0 0.0
    %3394 = vmatprep.subr.mxu0 0.0
    %3395 = vmatpush1.msra.mxu0 0.0
    %3396 = vmatprep.subr.mxu0 0.0
    %3397 = vmatpush1.msra.mxu0 0.0
    %3398 = vmatprep.subr.mxu0 0.0
    %3399 = vmatpush1.msra.mxu0 0.0
    %3400 = vmatprep.subr.mxu0 0.0
    %3401 = vmatpush1.msra.mxu0 0.0
    %3402 = vmatprep.subr.mxu0 0.0
    %3403 = vmatpush1.msra.mxu0 0.0
    %3404 = vmatprep.subr.mxu0 0.0
    %3405 = vmatpush1.msra.mxu0 0.0
    %3406 = vmatprep.subr.mxu0 0.0
    %3407 = vmatpush1.msra.mxu0 0.0
    %3408 = vmatprep.subr.mxu0 0.0
    %3409 = vmatpush1.msra.mxu0 0.0
    %3410 = vmatprep.subr.mxu0 0.0
    %3411 = vmatpush1.msra.mxu0 0.0
    %3412 = vmatprep.subr.mxu0 0.0
    %3413 = vmatpush1.msra.mxu0 0.0
    %3414 = vmatprep.subr.mxu0 0.0
    %3415 = vmatpush1.msra.mxu0 0.0
    %3416 = vmatprep.subr.mxu0 0.0
    %3417 = vmatpush1.msra.mxu0 0.0
    %3418 = vmatprep.subr.mxu0 0.0
    %3419 = vmatpush1.msra.mxu0 0.0
    %3420 = vmatprep.subr.mxu0 0.0
    %3421 = vmatpush1.msra.mxu0 0.0
    %3422 = vmatprep.subr.mxu0 0.0
    %3423 = vmatpush1.msra.mxu0 0.0
    %3424 = vmatprep.subr.mxu0 0.0
    %3425 = vmatpush1.msra.mxu0 0.0
    %3426 = vmatprep.mubr.f32.mxu0 0.0
    %3427 = vmatmul.mubr.f32.gmra.mrb[0].mxu0 %v3357
    %v3428 = vpop.f32.mrb[0].mxu0
    %v3429 = vadd.f32 0.0, %v3428
    %v3430 = vpop.f32.mrb[0].mxu0
    %3431 = vmatprep.mubr.f32.mxu0 0.0
    %3432 = vmatmul.mubr.f32.gmra.mrb[0].mxu0 %v3360
    %v3433 = vpop.f32.mrb[0].mxu0
    %v3434 = vadd.f32 0.0, %v3433
    %v3435 = vpop.f32.mrb[0].mxu0
    %3436 = vdwg.mxu0
    %v3437 = vsub.f32 %v3429, %v180
    %v3438 = vsub.f32 %v3434, %v181
    %v3439 = vmul.f32 %v3437, %v183
    %v3440 = vmul.f32 %v3438, %v184
    %v3441 = vxor.u32 %v3439, 2147483648
    %v3442 = vxor.u32 %v3440, 2147483648
    %v3443 = vmul.f32 %v3441, 1.442695
    %v3444 = vpow.pop %v3443
    %v3445 = vmul.f32 %v3442, 1.442695
    %v3446 = vpow.pop %v3445
    %v3447 = vadd.f32 %v3444, 1.0
    %v3448 = vadd.f32 %v3446, 1.0
    %v3449 = vrcp.pop %v3447
    %v3450 = vmul.f32 1.0, %v3449
    %v3451 = vrcp.pop %v3448
    %v3452 = vmul.f32 1.0, %v3451
    %v3453 = vmul.f32 %v186, %v3450
    %v3454 = vmul.f32 %v187, %v3452
    %v3455 = vadd.f32 %v3453, %v3454
    %v3456 = vrot.slane %v3455, 4
    %v3457 = vadd.f32 %v3455, %v3456
    %v3458 = vrot.slane %v3457, 2
    %v3459 = vadd.f32 %v3457, %v3458
    %v3460 = vrot.slane %v3459, 1
    %v3461 = vadd.f32 %v3459, %v3460
    %v3462 = vmul.f32 %v188, %v3349
    %v3463 = vadd.f32 %v3462, %v848
    %v3464 = vadd.f32 %v3463, %v3461
    %v3465 = vadd.f32 %v848, %v3461
    %v3466 = vrcp.pop %v3465
    %v3467 = vmul.f32 %v3465, %v3466
    %v3468 = vsub.f32 2.0, %v3467
    %v3469 = vmul.f32 %v3466, %v3468
    %3471 = vrot.lane.b32.xlu0 %v3469, 64
    %v3472 = vpop.permute.xlu0 %3471
    %v3474 = vmul.f32 %v3464, %v3472
    %v3475 = vlaneseq
    %v3476 = vshrl.u32 %v3475, 7
    %v3477 = vsub.s32 0, %v3476
    %v3478 = vrot.slane %v3474, %v3477
    %v3479 = vmul.f32 %v3478, %v189
    %v3480 = vmul.f32 %v3478, %v190
    %v3482 = vsel %vm855, %v3479, 0
    %v3485 = vsel %vm855, %v3480, 0
    %3487 = vmatprep.subr.mxu0 0.0
    %3488 = vmatpush1.msra.mxu0 %v191
    %3489 = vmatprep.subr.mxu0 0.0
    %3490 = vmatpush1.msra.mxu0 %v192
    %3491 = vmatprep.subr.mxu0 0.0
    %3492 = vmatpush1.msra.mxu0 %v193
    %3493 = vmatprep.subr.mxu0 0.0
    %3494 = vmatpush1.msra.mxu0 %v194
    %3495 = vmatprep.subr.mxu0 0.0
    %3496 = vmatpush1.msra.mxu0 %v195
    %3497 = vmatprep.subr.mxu0 0.0
    %3498 = vmatpush1.msra.mxu0 %v196
    %3499 = vmatprep.subr.mxu0 0.0
    %3500 = vmatpush1.msra.mxu0 %v197
    %3501 = vmatprep.subr.mxu0 0.0
    %3502 = vmatpush1.msra.mxu0 %v198
    %3503 = vmatprep.subr.mxu0 0.0
    %3504 = vmatpush1.msra.mxu0 0.0
    %3505 = vmatprep.subr.mxu0 0.0
    %3506 = vmatpush1.msra.mxu0 0.0
    %3507 = vmatprep.subr.mxu0 0.0
    %3508 = vmatpush1.msra.mxu0 0.0
    %3509 = vmatprep.subr.mxu0 0.0
    %3510 = vmatpush1.msra.mxu0 0.0
    %3511 = vmatprep.subr.mxu0 0.0
    %3512 = vmatpush1.msra.mxu0 0.0
    %3513 = vmatprep.subr.mxu0 0.0
    %3514 = vmatpush1.msra.mxu0 0.0
    %3515 = vmatprep.subr.mxu0 0.0
    %3516 = vmatpush1.msra.mxu0 0.0
    %3517 = vmatprep.subr.mxu0 0.0
    %3518 = vmatpush1.msra.mxu0 0.0
    %3519 = vmatprep.subr.mxu0 0.0
    %3520 = vmatpush1.msra.mxu0 0.0
    %3521 = vmatprep.subr.mxu0 0.0
    %3522 = vmatpush1.msra.mxu0 0.0
    %3523 = vmatprep.subr.mxu0 0.0
    %3524 = vmatpush1.msra.mxu0 0.0
    %3525 = vmatprep.subr.mxu0 0.0
    %3526 = vmatpush1.msra.mxu0 0.0
    %3527 = vmatprep.subr.mxu0 0.0
    %3528 = vmatpush1.msra.mxu0 0.0
    %3529 = vmatprep.subr.mxu0 0.0
    %3530 = vmatpush1.msra.mxu0 0.0
    %3531 = vmatprep.subr.mxu0 0.0
    %3532 = vmatpush1.msra.mxu0 0.0
    %3533 = vmatprep.subr.mxu0 0.0
    %3534 = vmatpush1.msra.mxu0 0.0
    %3535 = vmatprep.subr.mxu0 0.0
    %3536 = vmatpush1.msra.mxu0 0.0
    %3537 = vmatprep.subr.mxu0 0.0
    %3538 = vmatpush1.msra.mxu0 0.0
    %3539 = vmatprep.subr.mxu0 0.0
    %3540 = vmatpush1.msra.mxu0 0.0
    %3541 = vmatprep.subr.mxu0 0.0
    %3542 = vmatpush1.msra.mxu0 0.0
    %3543 = vmatprep.subr.mxu0 0.0
    %3544 = vmatpush1.msra.mxu0 0.0
    %3545 = vmatprep.subr.mxu0 0.0
    %3546 = vmatpush1.msra.mxu0 0.0
    %3547 = vmatprep.subr.mxu0 0.0
    %3548 = vmatpush1.msra.mxu0 0.0
    %3549 = vmatprep.subr.mxu0 0.0
    %3550 = vmatpush1.msra.mxu0 0.0
    %3551 = vmatprep.mubr.f32.mxu0 0.0
    %3552 = vmatmul.mubr.f32.gmra.mrb[0].mxu0 %v3482
    %v3553 = vpop.f32.mrb[0].mxu0
    %v3554 = vadd.f32 0.0, %v3553
    %v3555 = vpop.f32.mrb[0].mxu0
    %3556 = vmatprep.mubr.f32.mxu0 0.0
    %3557 = vmatmul.mubr.f32.gmra.mrb[0].mxu0 %v3485
    %v3558 = vpop.f32.mrb[0].mxu0
    %v3559 = vadd.f32 0.0, %v3558
    %v3560 = vpop.f32.mrb[0].mxu0
    %3561 = vdwg.mxu0
    %v3562 = vsub.f32 %v3554, %v180
    %v3563 = vsub.f32 %v3559, %v181
    %v3564 = vmul.f32 %v3562, %v183
    %v3565 = vmul.f32 %v3563, %v184
    %v3566 = vxor.u32 %v3564, 2147483648
    %v3567 = vxor.u32 %v3565, 2147483648
    %v3568 = vmul.f32 %v3566, 1.442695
    %v3569 = vpow.pop %v3568
    %v3570 = vmul.f32 %v3567, 1.442695
    %v3571 = vpow.pop %v3570
    %v3572 = vadd.f32 %v3569, 1.0
    %v3573 = vadd.f32 %v3571, 1.0
    %v3574 = vrcp.pop %v3572
    %v3575 = vmul.f32 1.0, %v3574
    %v3576 = vrcp.pop %v3573
    %v3577 = vmul.f32 1.0, %v3576
    %v3578 = vmul.f32 %v186, %v3575
    %v3579 = vmul.f32 %v187, %v3577
    %v3580 = vadd.f32 %v3578, %v3579
    %v3581 = vrot.slane %v3580, 4
    %v3582 = vadd.f32 %v3580, %v3581
    %v3583 = vrot.slane %v3582, 2
    %v3584 = vadd.f32 %v3582, %v3583
    %v3585 = vrot.slane %v3584, 1
    %v3586 = vadd.f32 %v3584, %v3585
    %v3587 = vmul.f32 %v188, %v3474
    %v3588 = vadd.f32 %v3587, %v848
    %v3589 = vadd.f32 %v3588, %v3586
    %v3590 = vadd.f32 %v848, %v3586
    %v3591 = vrcp.pop %v3590
    %v3592 = vmul.f32 %v3590, %v3591
    %v3593 = vsub.f32 2.0, %v3592
    %v3594 = vmul.f32 %v3591, %v3593
    %3596 = vrot.lane.b32.xlu0 %v3594, 64
    %v3597 = vpop.permute.xlu0 %3596
    %v3599 = vmul.f32 %v3589, %v3597
    %v3600 = vlaneseq
    %v3601 = vshrl.u32 %v3600, 7
    %v3602 = vsub.s32 0, %v3601
    %v3603 = vrot.slane %v3599, %v3602
    %v3604 = vmul.f32 %v3603, %v189
    %v3605 = vmul.f32 %v3603, %v190
    %v3607 = vsel %vm855, %v3604, 0
    %v3610 = vsel %vm855, %v3605, 0
    %3612 = vmatprep.subr.mxu0 0.0
    %3613 = vmatpush1.msra.mxu0 %v191
    %3614 = vmatprep.subr.mxu0 0.0
    %3615 = vmatpush1.msra.mxu0 %v192
    %3616 = vmatprep.subr.mxu0 0.0
    %3617 = vmatpush1.msra.mxu0 %v193
    %3618 = vmatprep.subr.mxu0 0.0
    %3619 = vmatpush1.msra.mxu0 %v194
    %3620 = vmatprep.subr.mxu0 0.0
    %3621 = vmatpush1.msra.mxu0 %v195
    %3622 = vmatprep.subr.mxu0 0.0
    %3623 = vmatpush1.msra.mxu0 %v196
    %3624 = vmatprep.subr.mxu0 0.0
    %3625 = vmatpush1.msra.mxu0 %v197
    %3626 = vmatprep.subr.mxu0 0.0
    %3627 = vmatpush1.msra.mxu0 %v198
    %3628 = vmatprep.subr.mxu0 0.0
    %3629 = vmatpush1.msra.mxu0 0.0
    %3630 = vmatprep.subr.mxu0 0.0
    %3631 = vmatpush1.msra.mxu0 0.0
    %3632 = vmatprep.subr.mxu0 0.0
    %3633 = vmatpush1.msra.mxu0 0.0
    %3634 = vmatprep.subr.mxu0 0.0
    %3635 = vmatpush1.msra.mxu0 0.0
    %3636 = vmatprep.subr.mxu0 0.0
    %3637 = vmatpush1.msra.mxu0 0.0
    %3638 = vmatprep.subr.mxu0 0.0
    %3639 = vmatpush1.msra.mxu0 0.0
    %3640 = vmatprep.subr.mxu0 0.0
    %3641 = vmatpush1.msra.mxu0 0.0
    %3642 = vmatprep.subr.mxu0 0.0
    %3643 = vmatpush1.msra.mxu0 0.0
    %3644 = vmatprep.subr.mxu0 0.0
    %3645 = vmatpush1.msra.mxu0 0.0
    %3646 = vmatprep.subr.mxu0 0.0
    %3647 = vmatpush1.msra.mxu0 0.0
    %3648 = vmatprep.subr.mxu0 0.0
    %3649 = vmatpush1.msra.mxu0 0.0
    %3650 = vmatprep.subr.mxu0 0.0
    %3651 = vmatpush1.msra.mxu0 0.0
    %3652 = vmatprep.subr.mxu0 0.0
    %3653 = vmatpush1.msra.mxu0 0.0
    %3654 = vmatprep.subr.mxu0 0.0
    %3655 = vmatpush1.msra.mxu0 0.0
    %3656 = vmatprep.subr.mxu0 0.0
    %3657 = vmatpush1.msra.mxu0 0.0
    %3658 = vmatprep.subr.mxu0 0.0
    %3659 = vmatpush1.msra.mxu0 0.0
    %3660 = vmatprep.subr.mxu0 0.0
    %3661 = vmatpush1.msra.mxu0 0.0
    %3662 = vmatprep.subr.mxu0 0.0
    %3663 = vmatpush1.msra.mxu0 0.0
    %3664 = vmatprep.subr.mxu0 0.0
    %3665 = vmatpush1.msra.mxu0 0.0
    %3666 = vmatprep.subr.mxu0 0.0
    %3667 = vmatpush1.msra.mxu0 0.0
    %3668 = vmatprep.subr.mxu0 0.0
    %3669 = vmatpush1.msra.mxu0 0.0
    %3670 = vmatprep.subr.mxu0 0.0
    %3671 = vmatpush1.msra.mxu0 0.0
    %3672 = vmatprep.subr.mxu0 0.0
    %3673 = vmatpush1.msra.mxu0 0.0
    %3674 = vmatprep.subr.mxu0 0.0
    %3675 = vmatpush1.msra.mxu0 0.0
    %3676 = vmatprep.mubr.f32.mxu0 0.0
    %3677 = vmatmul.mubr.f32.gmra.mrb[0].mxu0 %v3607
    %v3678 = vpop.f32.mrb[0].mxu0
    %v3679 = vadd.f32 0.0, %v3678
    %v3680 = vpop.f32.mrb[0].mxu0
    %3681 = vmatprep.mubr.f32.mxu0 0.0
    %3682 = vmatmul.mubr.f32.gmra.mrb[0].mxu0 %v3610
    %v3683 = vpop.f32.mrb[0].mxu0
    %v3684 = vadd.f32 0.0, %v3683
    %v3685 = vpop.f32.mrb[0].mxu0
    %3686 = vdwg.mxu0
    %v3687 = vsub.f32 %v3679, %v180
    %v3688 = vsub.f32 %v3684, %v181
    %v3689 = vmul.f32 %v3687, %v183
    %v3690 = vmul.f32 %v3688, %v184
    %v3691 = vxor.u32 %v3689, 2147483648
    %v3692 = vxor.u32 %v3690, 2147483648
    %v3693 = vmul.f32 %v3691, 1.442695
    %v3694 = vpow.pop %v3693
    %v3695 = vmul.f32 %v3692, 1.442695
    %v3696 = vpow.pop %v3695
    %v3697 = vadd.f32 %v3694, 1.0
    %v3698 = vadd.f32 %v3696, 1.0
    %v3699 = vrcp.pop %v3697
    %v3700 = vmul.f32 1.0, %v3699
    %v3701 = vrcp.pop %v3698
    %v3702 = vmul.f32 1.0, %v3701
    %v3703 = vmul.f32 %v186, %v3700
    %v3704 = vmul.f32 %v187, %v3702
    %v3705 = vadd.f32 %v3703, %v3704
    %v3706 = vrot.slane %v3705, 4
    %v3707 = vadd.f32 %v3705, %v3706
    %v3708 = vrot.slane %v3707, 2
    %v3709 = vadd.f32 %v3707, %v3708
    %v3710 = vrot.slane %v3709, 1
    %v3711 = vadd.f32 %v3709, %v3710
    %v3712 = vmul.f32 %v188, %v3599
    %v3713 = vadd.f32 %v3712, %v848
    %v3714 = vadd.f32 %v3713, %v3711
    %v3715 = vadd.f32 %v848, %v3711
    %v3716 = vrcp.pop %v3715
    %v3717 = vmul.f32 %v3715, %v3716
    %v3718 = vsub.f32 2.0, %v3717
    %v3719 = vmul.f32 %v3716, %v3718
    %3721 = vrot.lane.b32.xlu0 %v3719, 64
    %v3722 = vpop.permute.xlu0 %3721
    %v3724 = vmul.f32 %v3714, %v3722
    %v3725 = vlaneseq
    %v3726 = vshrl.u32 %v3725, 7
    %v3727 = vsub.s32 0, %v3726
    %v3728 = vrot.slane %v3724, %v3727
    %v3729 = vmul.f32 %v3728, %v189
    %v3730 = vmul.f32 %v3728, %v190
    %v3732 = vsel %vm855, %v3729, 0
    %v3735 = vsel %vm855, %v3730, 0
    %3737 = vmatprep.subr.mxu0 0.0
    %3738 = vmatpush1.msra.mxu0 %v191
    %3739 = vmatprep.subr.mxu0 0.0
    %3740 = vmatpush1.msra.mxu0 %v192
    %3741 = vmatprep.subr.mxu0 0.0
    %3742 = vmatpush1.msra.mxu0 %v193
    %3743 = vmatprep.subr.mxu0 0.0
    %3744 = vmatpush1.msra.mxu0 %v194
    %3745 = vmatprep.subr.mxu0 0.0
    %3746 = vmatpush1.msra.mxu0 %v195
    %3747 = vmatprep.subr.mxu0 0.0
    %3748 = vmatpush1.msra.mxu0 %v196
    %3749 = vmatprep.subr.mxu0 0.0
    %3750 = vmatpush1.msra.mxu0 %v197
    %3751 = vmatprep.subr.mxu0 0.0
    %3752 = vmatpush1.msra.mxu0 %v198
    %3753 = vmatprep.subr.mxu0 0.0
    %3754 = vmatpush1.msra.mxu0 0.0
    %3755 = vmatprep.subr.mxu0 0.0
    %3756 = vmatpush1.msra.mxu0 0.0
    %3757 = vmatprep.subr.mxu0 0.0
    %3758 = vmatpush1.msra.mxu0 0.0
    %3759 = vmatprep.subr.mxu0 0.0
    %3760 = vmatpush1.msra.mxu0 0.0
    %3761 = vmatprep.subr.mxu0 0.0
    %3762 = vmatpush1.msra.mxu0 0.0
    %3763 = vmatprep.subr.mxu0 0.0
    %3764 = vmatpush1.msra.mxu0 0.0
    %3765 = vmatprep.subr.mxu0 0.0
    %3766 = vmatpush1.msra.mxu0 0.0
    %3767 = vmatprep.subr.mxu0 0.0
    %3768 = vmatpush1.msra.mxu0 0.0
    %3769 = vmatprep.subr.mxu0 0.0
    %3770 = vmatpush1.msra.mxu0 0.0
    %3771 = vmatprep.subr.mxu0 0.0
    %3772 = vmatpush1.msra.mxu0 0.0
    %3773 = vmatprep.subr.mxu0 0.0
    %3774 = vmatpush1.msra.mxu0 0.0
    %3775 = vmatprep.subr.mxu0 0.0
    %3776 = vmatpush1.msra.mxu0 0.0
    %3777 = vmatprep.subr.mxu0 0.0
    %3778 = vmatpush1.msra.mxu0 0.0
    %3779 = vmatprep.subr.mxu0 0.0
    %3780 = vmatpush1.msra.mxu0 0.0
    %3781 = vmatprep.subr.mxu0 0.0
    %3782 = vmatpush1.msra.mxu0 0.0
    %3783 = vmatprep.subr.mxu0 0.0
    %3784 = vmatpush1.msra.mxu0 0.0
    %3785 = vmatprep.subr.mxu0 0.0
    %3786 = vmatpush1.msra.mxu0 0.0
    %3787 = vmatprep.subr.mxu0 0.0
    %3788 = vmatpush1.msra.mxu0 0.0
    %3789 = vmatprep.subr.mxu0 0.0
    %3790 = vmatpush1.msra.mxu0 0.0
    %3791 = vmatprep.subr.mxu0 0.0
    %3792 = vmatpush1.msra.mxu0 0.0
    %3793 = vmatprep.subr.mxu0 0.0
    %3794 = vmatpush1.msra.mxu0 0.0
    %3795 = vmatprep.subr.mxu0 0.0
    %3796 = vmatpush1.msra.mxu0 0.0
    %3797 = vmatprep.subr.mxu0 0.0
    %3798 = vmatpush1.msra.mxu0 0.0
    %3799 = vmatprep.subr.mxu0 0.0
    %3800 = vmatpush1.msra.mxu0 0.0
    %3801 = vmatprep.mubr.f32.mxu0 0.0
    %3802 = vmatmul.mubr.f32.gmra.mrb[0].mxu0 %v3732
    %v3803 = vpop.f32.mrb[0].mxu0
    %v3804 = vadd.f32 0.0, %v3803
    %v3805 = vpop.f32.mrb[0].mxu0
    %3806 = vmatprep.mubr.f32.mxu0 0.0
    %3807 = vmatmul.mubr.f32.gmra.mrb[0].mxu0 %v3735
    %v3808 = vpop.f32.mrb[0].mxu0
    %v3809 = vadd.f32 0.0, %v3808
    %v3810 = vpop.f32.mrb[0].mxu0
    %3811 = vdwg.mxu0
    %v3812 = vsub.f32 %v3804, %v180
    %v3813 = vsub.f32 %v3809, %v181
    %v3814 = vmul.f32 %v3812, %v183
    %v3815 = vmul.f32 %v3813, %v184
    %v3816 = vxor.u32 %v3814, 2147483648
    %v3817 = vxor.u32 %v3815, 2147483648
    %v3818 = vmul.f32 %v3816, 1.442695
    %v3819 = vpow.pop %v3818
    %v3820 = vmul.f32 %v3817, 1.442695
    %v3821 = vpow.pop %v3820
    %v3822 = vadd.f32 %v3819, 1.0
    %v3823 = vadd.f32 %v3821, 1.0
    %v3824 = vrcp.pop %v3822
    %v3825 = vmul.f32 1.0, %v3824
    %v3826 = vrcp.pop %v3823
    %v3827 = vmul.f32 1.0, %v3826
    %v3828 = vmul.f32 %v186, %v3825
    %v3829 = vmul.f32 %v187, %v3827
    %v3830 = vadd.f32 %v3828, %v3829
    %v3831 = vrot.slane %v3830, 4
    %v3832 = vadd.f32 %v3830, %v3831
    %v3833 = vrot.slane %v3832, 2
    %v3834 = vadd.f32 %v3832, %v3833
    %v3835 = vrot.slane %v3834, 1
    %v3836 = vadd.f32 %v3834, %v3835
    %v3837 = vmul.f32 %v188, %v3724
    %v3838 = vadd.f32 %v3837, %v848
    %v3839 = vadd.f32 %v3838, %v3836
    %v3840 = vadd.f32 %v848, %v3836
    %v3841 = vrcp.pop %v3840
    %v3842 = vmul.f32 %v3840, %v3841
    %v3843 = vsub.f32 2.0, %v3842
    %v3844 = vmul.f32 %v3841, %v3843
    %3846 = vrot.lane.b32.xlu0 %v3844, 64
    %v3847 = vpop.permute.xlu0 %3846
    %v3849 = vmul.f32 %v3839, %v3847
    %v3850 = vlaneseq
    %v3851 = vshrl.u32 %v3850, 7
    %v3852 = vsub.s32 0, %v3851
    %v3853 = vrot.slane %v3849, %v3852
    %v3854 = vmul.f32 %v3853, %v189
    %v3855 = vmul.f32 %v3853, %v190
    %v3857 = vsel %vm855, %v3854, 0
    %v3860 = vsel %vm855, %v3855, 0
    %3862 = vmatprep.subr.mxu0 0.0
    %3863 = vmatpush1.msra.mxu0 %v191
    %3864 = vmatprep.subr.mxu0 0.0
    %3865 = vmatpush1.msra.mxu0 %v192
    %3866 = vmatprep.subr.mxu0 0.0
    %3867 = vmatpush1.msra.mxu0 %v193
    %3868 = vmatprep.subr.mxu0 0.0
    %3869 = vmatpush1.msra.mxu0 %v194
    %3870 = vmatprep.subr.mxu0 0.0
    %3871 = vmatpush1.msra.mxu0 %v195
    %3872 = vmatprep.subr.mxu0 0.0
    %3873 = vmatpush1.msra.mxu0 %v196
    %3874 = vmatprep.subr.mxu0 0.0
    %3875 = vmatpush1.msra.mxu0 %v197
    %3876 = vmatprep.subr.mxu0 0.0
    %3877 = vmatpush1.msra.mxu0 %v198
    %3878 = vmatprep.subr.mxu0 0.0
    %3879 = vmatpush1.msra.mxu0 0.0
    %3880 = vmatprep.subr.mxu0 0.0
    %3881 = vmatpush1.msra.mxu0 0.0
    %3882 = vmatprep.subr.mxu0 0.0
    %3883 = vmatpush1.msra.mxu0 0.0
    %3884 = vmatprep.subr.mxu0 0.0
    %3885 = vmatpush1.msra.mxu0 0.0
    %3886 = vmatprep.subr.mxu0 0.0
    %3887 = vmatpush1.msra.mxu0 0.0
    %3888 = vmatprep.subr.mxu0 0.0
    %3889 = vmatpush1.msra.mxu0 0.0
    %3890 = vmatprep.subr.mxu0 0.0
    %3891 = vmatpush1.msra.mxu0 0.0
    %3892 = vmatprep.subr.mxu0 0.0
    %3893 = vmatpush1.msra.mxu0 0.0
    %3894 = vmatprep.subr.mxu0 0.0
    %3895 = vmatpush1.msra.mxu0 0.0
    %3896 = vmatprep.subr.mxu0 0.0
    %3897 = vmatpush1.msra.mxu0 0.0
    %3898 = vmatprep.subr.mxu0 0.0
    %3899 = vmatpush1.msra.mxu0 0.0
    %3900 = vmatprep.subr.mxu0 0.0
    %3901 = vmatpush1.msra.mxu0 0.0
    %3902 = vmatprep.subr.mxu0 0.0
    %3903 = vmatpush1.msra.mxu0 0.0
    %3904 = vmatprep.subr.mxu0 0.0
    %3905 = vmatpush1.msra.mxu0 0.0
    %3906 = vmatprep.subr.mxu0 0.0
    %3907 = vmatpush1.msra.mxu0 0.0
    %3908 = vmatprep.subr.mxu0 0.0
    %3909 = vmatpush1.msra.mxu0 0.0
    %3910 = vmatprep.subr.mxu0 0.0
    %3911 = vmatpush1.msra.mxu0 0.0
    %3912 = vmatprep.subr.mxu0 0.0
    %3913 = vmatpush1.msra.mxu0 0.0
    %3914 = vmatprep.subr.mxu0 0.0
    %3915 = vmatpush1.msra.mxu0 0.0
    %3916 = vmatprep.subr.mxu0 0.0
    %3917 = vmatpush1.msra.mxu0 0.0
    %3918 = vmatprep.subr.mxu0 0.0
    %3919 = vmatpush1.msra.mxu0 0.0
    %3920 = vmatprep.subr.mxu0 0.0
    %3921 = vmatpush1.msra.mxu0 0.0
    %3922 = vmatprep.subr.mxu0 0.0
    %3923 = vmatpush1.msra.mxu0 0.0
    %3924 = vmatprep.subr.mxu0 0.0
    %3925 = vmatpush1.msra.mxu0 0.0
    %3926 = vmatprep.mubr.f32.mxu0 0.0
    %3927 = vmatmul.mubr.f32.gmra.mrb[0].mxu0 %v3857
    %v3928 = vpop.f32.mrb[0].mxu0
    %v3929 = vadd.f32 0.0, %v3928
    %v3930 = vpop.f32.mrb[0].mxu0
    %3931 = vmatprep.mubr.f32.mxu0 0.0
    %3932 = vmatmul.mubr.f32.gmra.mrb[0].mxu0 %v3860
    %v3933 = vpop.f32.mrb[0].mxu0
    %v3934 = vadd.f32 0.0, %v3933
    %v3935 = vpop.f32.mrb[0].mxu0
    %3936 = vdwg.mxu0
    %v3937 = vsub.f32 %v3929, %v180
    %v3938 = vsub.f32 %v3934, %v181
    %v3939 = vmul.f32 %v3937, %v183
    %v3940 = vmul.f32 %v3938, %v184
    %v3941 = vxor.u32 %v3939, 2147483648
    %v3942 = vxor.u32 %v3940, 2147483648
    %v3943 = vmul.f32 %v3941, 1.442695
    %v3944 = vpow.pop %v3943
    %v3945 = vmul.f32 %v3942, 1.442695
    %v3946 = vpow.pop %v3945
    %v3947 = vadd.f32 %v3944, 1.0
    %v3948 = vadd.f32 %v3946, 1.0
    %v3949 = vrcp.pop %v3947
    %v3950 = vmul.f32 1.0, %v3949
    %v3951 = vrcp.pop %v3948
    %v3952 = vmul.f32 1.0, %v3951
    %v3953 = vmul.f32 %v186, %v3950
    %v3954 = vmul.f32 %v187, %v3952
    %v3955 = vadd.f32 %v3953, %v3954
    %v3956 = vrot.slane %v3955, 4
    %v3957 = vadd.f32 %v3955, %v3956
    %v3958 = vrot.slane %v3957, 2
    %v3959 = vadd.f32 %v3957, %v3958
    %v3960 = vrot.slane %v3959, 1
    %v3961 = vadd.f32 %v3959, %v3960
    %v3962 = vmul.f32 %v188, %v3849
    %v3963 = vadd.f32 %v3962, %v849
    %v3964 = vadd.f32 %v3963, %v3961
    %v3965 = vadd.f32 %v849, %v3961
    %v3966 = vrcp.pop %v3965
    %v3967 = vmul.f32 %v3965, %v3966
    %v3968 = vsub.f32 2.0, %v3967
    %v3969 = vmul.f32 %v3966, %v3968
    %3971 = vrot.lane.b32.xlu0 %v3969, 64
    %v3972 = vpop.permute.xlu0 %3971
    %v3974 = vmul.f32 %v3964, %v3972
    %v3975 = vlaneseq
    %v3976 = vshrl.u32 %v3975, 7
    %v3977 = vsub.s32 0, %v3976
    %v3978 = vrot.slane %v3974, %v3977
    %v3979 = vmul.f32 %v3978, %v189
    %v3980 = vmul.f32 %v3978, %v190
    %v3982 = vsel %vm855, %v3979, 0
    %v3985 = vsel %vm855, %v3980, 0
    %3987 = vmatprep.subr.mxu0 0.0
    %3988 = vmatpush1.msra.mxu0 %v191
    %3989 = vmatprep.subr.mxu0 0.0
    %3990 = vmatpush1.msra.mxu0 %v192
    %3991 = vmatprep.subr.mxu0 0.0
    %3992 = vmatpush1.msra.mxu0 %v193
    %3993 = vmatprep.subr.mxu0 0.0
    %3994 = vmatpush1.msra.mxu0 %v194
    %3995 = vmatprep.subr.mxu0 0.0
    %3996 = vmatpush1.msra.mxu0 %v195
    %3997 = vmatprep.subr.mxu0 0.0
    %3998 = vmatpush1.msra.mxu0 %v196
    %3999 = vmatprep.subr.mxu0 0.0
    %4000 = vmatpush1.msra.mxu0 %v197
    %4001 = vmatprep.subr.mxu0 0.0
    %4002 = vmatpush1.msra.mxu0 %v198
    %4003 = vmatprep.subr.mxu0 0.0
    %4004 = vmatpush1.msra.mxu0 0.0
    %4005 = vmatprep.subr.mxu0 0.0
    %4006 = vmatpush1.msra.mxu0 0.0
    %4007 = vmatprep.subr.mxu0 0.0
    %4008 = vmatpush1.msra.mxu0 0.0
    %4009 = vmatprep.subr.mxu0 0.0
    %4010 = vmatpush1.msra.mxu0 0.0
    %4011 = vmatprep.subr.mxu0 0.0
    %4012 = vmatpush1.msra.mxu0 0.0
    %4013 = vmatprep.subr.mxu0 0.0
    %4014 = vmatpush1.msra.mxu0 0.0
    %4015 = vmatprep.subr.mxu0 0.0
    %4016 = vmatpush1.msra.mxu0 0.0
    %4017 = vmatprep.subr.mxu0 0.0
    %4018 = vmatpush1.msra.mxu0 0.0
    %4019 = vmatprep.subr.mxu0 0.0
    %4020 = vmatpush1.msra.mxu0 0.0
    %4021 = vmatprep.subr.mxu0 0.0
    %4022 = vmatpush1.msra.mxu0 0.0
    %4023 = vmatprep.subr.mxu0 0.0
    %4024 = vmatpush1.msra.mxu0 0.0
    %4025 = vmatprep.subr.mxu0 0.0
    %4026 = vmatpush1.msra.mxu0 0.0
    %4027 = vmatprep.subr.mxu0 0.0
    %4028 = vmatpush1.msra.mxu0 0.0
    %4029 = vmatprep.subr.mxu0 0.0
    %4030 = vmatpush1.msra.mxu0 0.0
    %4031 = vmatprep.subr.mxu0 0.0
    %4032 = vmatpush1.msra.mxu0 0.0
    %4033 = vmatprep.subr.mxu0 0.0
    %4034 = vmatpush1.msra.mxu0 0.0
    %4035 = vmatprep.subr.mxu0 0.0
    %4036 = vmatpush1.msra.mxu0 0.0
    %4037 = vmatprep.subr.mxu0 0.0
    %4038 = vmatpush1.msra.mxu0 0.0
    %4039 = vmatprep.subr.mxu0 0.0
    %4040 = vmatpush1.msra.mxu0 0.0
    %4041 = vmatprep.subr.mxu0 0.0
    %4042 = vmatpush1.msra.mxu0 0.0
    %4043 = vmatprep.subr.mxu0 0.0
    %4044 = vmatpush1.msra.mxu0 0.0
    %4045 = vmatprep.subr.mxu0 0.0
    %4046 = vmatpush1.msra.mxu0 0.0
    %4047 = vmatprep.subr.mxu0 0.0
    %4048 = vmatpush1.msra.mxu0 0.0
    %4049 = vmatprep.subr.mxu0 0.0
    %4050 = vmatpush1.msra.mxu0 0.0
    %4051 = vmatprep.mubr.f32.mxu0 0.0
    %4052 = vmatmul.mubr.f32.gmra.mrb[0].mxu0 %v3982
    %v4053 = vpop.f32.mrb[0].mxu0
    %v4054 = vadd.f32 0.0, %v4053
    %v4055 = vpop.f32.mrb[0].mxu0
    %4056 = vmatprep.mubr.f32.mxu0 0.0
    %4057 = vmatmul.mubr.f32.gmra.mrb[0].mxu0 %v3985
    %v4058 = vpop.f32.mrb[0].mxu0
    %v4059 = vadd.f32 0.0, %v4058
    %v4060 = vpop.f32.mrb[0].mxu0
    %4061 = vdwg.mxu0
    %v4062 = vsub.f32 %v4054, %v180
    %v4063 = vsub.f32 %v4059, %v181
    %v4064 = vmul.f32 %v4062, %v183
    %v4065 = vmul.f32 %v4063, %v184
    %v4066 = vxor.u32 %v4064, 2147483648
    %v4067 = vxor.u32 %v4065, 2147483648
    %v4068 = vmul.f32 %v4066, 1.442695
    %v4069 = vpow.pop %v4068
    %v4070 = vmul.f32 %v4067, 1.442695
    %v4071 = vpow.pop %v4070
    %v4072 = vadd.f32 %v4069, 1.0
    %v4073 = vadd.f32 %v4071, 1.0
    %v4074 = vrcp.pop %v4072
    %v4075 = vmul.f32 1.0, %v4074
    %v4076 = vrcp.pop %v4073
    %v4077 = vmul.f32 1.0, %v4076
    %v4078 = vmul.f32 %v186, %v4075
    %v4079 = vmul.f32 %v187, %v4077
    %v4080 = vadd.f32 %v4078, %v4079
    %v4081 = vrot.slane %v4080, 4
    %v4082 = vadd.f32 %v4080, %v4081
    %v4083 = vrot.slane %v4082, 2
    %v4084 = vadd.f32 %v4082, %v4083
    %v4085 = vrot.slane %v4084, 1
    %v4086 = vadd.f32 %v4084, %v4085
    %v4087 = vmul.f32 %v188, %v3974
    %v4088 = vadd.f32 %v4087, %v849
    %v4089 = vadd.f32 %v4088, %v4086
    %v4090 = vadd.f32 %v849, %v4086
    %v4091 = vrcp.pop %v4090
    %v4092 = vmul.f32 %v4090, %v4091
    %v4093 = vsub.f32 2.0, %v4092
    %v4094 = vmul.f32 %v4091, %v4093
    %4096 = vrot.lane.b32.xlu0 %v4094, 64
    %v4097 = vpop.permute.xlu0 %4096
    %v4099 = vmul.f32 %v4089, %v4097
    %v4100 = vlaneseq
    %v4101 = vshrl.u32 %v4100, 7
    %v4102 = vsub.s32 0, %v4101
    %v4103 = vrot.slane %v4099, %v4102
    %v4104 = vmul.f32 %v4103, %v189
    %v4105 = vmul.f32 %v4103, %v190
    %v4107 = vsel %vm855, %v4104, 0
    %v4110 = vsel %vm855, %v4105, 0
    %4112 = vmatprep.subr.mxu0 0.0
    %4113 = vmatpush1.msra.mxu0 %v191
    %4114 = vmatprep.subr.mxu0 0.0
    %4115 = vmatpush1.msra.mxu0 %v192
    %4116 = vmatprep.subr.mxu0 0.0
    %4117 = vmatpush1.msra.mxu0 %v193
    %4118 = vmatprep.subr.mxu0 0.0
    %4119 = vmatpush1.msra.mxu0 %v194
    %4120 = vmatprep.subr.mxu0 0.0
    %4121 = vmatpush1.msra.mxu0 %v195
    %4122 = vmatprep.subr.mxu0 0.0
    %4123 = vmatpush1.msra.mxu0 %v196
    %4124 = vmatprep.subr.mxu0 0.0
    %4125 = vmatpush1.msra.mxu0 %v197
    %4126 = vmatprep.subr.mxu0 0.0
    %4127 = vmatpush1.msra.mxu0 %v198
    %4128 = vmatprep.subr.mxu0 0.0
    %4129 = vmatpush1.msra.mxu0 0.0
    %4130 = vmatprep.subr.mxu0 0.0
    %4131 = vmatpush1.msra.mxu0 0.0
    %4132 = vmatprep.subr.mxu0 0.0
    %4133 = vmatpush1.msra.mxu0 0.0
    %4134 = vmatprep.subr.mxu0 0.0
    %4135 = vmatpush1.msra.mxu0 0.0
    %4136 = vmatprep.subr.mxu0 0.0
    %4137 = vmatpush1.msra.mxu0 0.0
    %4138 = vmatprep.subr.mxu0 0.0
    %4139 = vmatpush1.msra.mxu0 0.0
    %4140 = vmatprep.subr.mxu0 0.0
    %4141 = vmatpush1.msra.mxu0 0.0
    %4142 = vmatprep.subr.mxu0 0.0
    %4143 = vmatpush1.msra.mxu0 0.0
    %4144 = vmatprep.subr.mxu0 0.0
    %4145 = vmatpush1.msra.mxu0 0.0
    %4146 = vmatprep.subr.mxu0 0.0
    %4147 = vmatpush1.msra.mxu0 0.0
    %4148 = vmatprep.subr.mxu0 0.0
    %4149 = vmatpush1.msra.mxu0 0.0
    %4150 = vmatprep.subr.mxu0 0.0
    %4151 = vmatpush1.msra.mxu0 0.0
    %4152 = vmatprep.subr.mxu0 0.0
    %4153 = vmatpush1.msra.mxu0 0.0
    %4154 = vmatprep.subr.mxu0 0.0
    %4155 = vmatpush1.msra.mxu0 0.0
    %4156 = vmatprep.subr.mxu0 0.0
    %4157 = vmatpush1.msra.mxu0 0.0
    %4158 = vmatprep.subr.mxu0 0.0
    %4159 = vmatpush1.msra.mxu0 0.0
    %4160 = vmatprep.subr.mxu0 0.0
    %4161 = vmatpush1.msra.mxu0 0.0
    %4162 = vmatprep.subr.mxu0 0.0
    %4163 = vmatpush1.msra.mxu0 0.0
    %4164 = vmatprep.subr.mxu0 0.0
    %4165 = vmatpush1.msra.mxu0 0.0
    %4166 = vmatprep.subr.mxu0 0.0
    %4167 = vmatpush1.msra.mxu0 0.0
    %4168 = vmatprep.subr.mxu0 0.0
    %4169 = vmatpush1.msra.mxu0 0.0
    %4170 = vmatprep.subr.mxu0 0.0
    %4171 = vmatpush1.msra.mxu0 0.0
    %4172 = vmatprep.subr.mxu0 0.0
    %4173 = vmatpush1.msra.mxu0 0.0
    %4174 = vmatprep.subr.mxu0 0.0
    %4175 = vmatpush1.msra.mxu0 0.0
    %4176 = vmatprep.mubr.f32.mxu0 0.0
    %4177 = vmatmul.mubr.f32.gmra.mrb[0].mxu0 %v4107
    %v4178 = vpop.f32.mrb[0].mxu0
    %v4179 = vadd.f32 0.0, %v4178
    %v4180 = vpop.f32.mrb[0].mxu0
    %4181 = vmatprep.mubr.f32.mxu0 0.0
    %4182 = vmatmul.mubr.f32.gmra.mrb[0].mxu0 %v4110
    %v4183 = vpop.f32.mrb[0].mxu0
    %v4184 = vadd.f32 0.0, %v4183
    %v4185 = vpop.f32.mrb[0].mxu0
    %4186 = vdwg.mxu0
    %v4187 = vsub.f32 %v4179, %v180
    %v4188 = vsub.f32 %v4184, %v181
    %v4189 = vmul.f32 %v4187, %v183
    %v4190 = vmul.f32 %v4188, %v184
    %v4191 = vxor.u32 %v4189, 2147483648
    %v4192 = vxor.u32 %v4190, 2147483648
    %v4193 = vmul.f32 %v4191, 1.442695
    %v4194 = vpow.pop %v4193
    %v4195 = vmul.f32 %v4192, 1.442695
    %v4196 = vpow.pop %v4195
    %v4197 = vadd.f32 %v4194, 1.0
    %v4198 = vadd.f32 %v4196, 1.0
    %v4199 = vrcp.pop %v4197
    %v4200 = vmul.f32 1.0, %v4199
    %v4201 = vrcp.pop %v4198
    %v4202 = vmul.f32 1.0, %v4201
    %v4203 = vmul.f32 %v186, %v4200
    %v4204 = vmul.f32 %v187, %v4202
    %v4205 = vadd.f32 %v4203, %v4204
    %v4206 = vrot.slane %v4205, 4
    %v4207 = vadd.f32 %v4205, %v4206
    %v4208 = vrot.slane %v4207, 2
    %v4209 = vadd.f32 %v4207, %v4208
    %v4210 = vrot.slane %v4209, 1
    %v4211 = vadd.f32 %v4209, %v4210
    %v4212 = vmul.f32 %v188, %v4099
    %v4213 = vadd.f32 %v4212, %v849
    %v4214 = vadd.f32 %v4213, %v4211
    %v4215 = vadd.f32 %v849, %v4211
    %v4216 = vrcp.pop %v4215
    %v4217 = vmul.f32 %v4215, %v4216
    %v4218 = vsub.f32 2.0, %v4217
    %v4219 = vmul.f32 %v4216, %v4218
    %4221 = vrot.lane.b32.xlu0 %v4219, 64
    %v4222 = vpop.permute.xlu0 %4221
    %v4224 = vmul.f32 %v4214, %v4222
    %v4225 = vlaneseq
    %v4226 = vshrl.u32 %v4225, 7
    %v4227 = vsub.s32 0, %v4226
    %v4228 = vrot.slane %v4224, %v4227
    %v4229 = vmul.f32 %v4228, %v189
    %v4230 = vmul.f32 %v4228, %v190
    %v4232 = vsel %vm855, %v4229, 0
    %v4235 = vsel %vm855, %v4230, 0
    %4237 = vmatprep.subr.mxu0 0.0
    %4238 = vmatpush1.msra.mxu0 %v191
    %4239 = vmatprep.subr.mxu0 0.0
    %4240 = vmatpush1.msra.mxu0 %v192
    %4241 = vmatprep.subr.mxu0 0.0
    %4242 = vmatpush1.msra.mxu0 %v193
    %4243 = vmatprep.subr.mxu0 0.0
    %4244 = vmatpush1.msra.mxu0 %v194
    %4245 = vmatprep.subr.mxu0 0.0
    %4246 = vmatpush1.msra.mxu0 %v195
    %4247 = vmatprep.subr.mxu0 0.0
    %4248 = vmatpush1.msra.mxu0 %v196
    %4249 = vmatprep.subr.mxu0 0.0
    %4250 = vmatpush1.msra.mxu0 %v197
    %4251 = vmatprep.subr.mxu0 0.0
    %4252 = vmatpush1.msra.mxu0 %v198
    %4253 = vmatprep.subr.mxu0 0.0
    %4254 = vmatpush1.msra.mxu0 0.0
    %4255 = vmatprep.subr.mxu0 0.0
    %4256 = vmatpush1.msra.mxu0 0.0
    %4257 = vmatprep.subr.mxu0 0.0
    %4258 = vmatpush1.msra.mxu0 0.0
    %4259 = vmatprep.subr.mxu0 0.0
    %4260 = vmatpush1.msra.mxu0 0.0
    %4261 = vmatprep.subr.mxu0 0.0
    %4262 = vmatpush1.msra.mxu0 0.0
    %4263 = vmatprep.subr.mxu0 0.0
    %4264 = vmatpush1.msra.mxu0 0.0
    %4265 = vmatprep.subr.mxu0 0.0
    %4266 = vmatpush1.msra.mxu0 0.0
    %4267 = vmatprep.subr.mxu0 0.0
    %4268 = vmatpush1.msra.mxu0 0.0
    %4269 = vmatprep.subr.mxu0 0.0
    %4270 = vmatpush1.msra.mxu0 0.0
    %4271 = vmatprep.subr.mxu0 0.0
    %4272 = vmatpush1.msra.mxu0 0.0
    %4273 = vmatprep.subr.mxu0 0.0
    %4274 = vmatpush1.msra.mxu0 0.0
    %4275 = vmatprep.subr.mxu0 0.0
    %4276 = vmatpush1.msra.mxu0 0.0
    %4277 = vmatprep.subr.mxu0 0.0
    %4278 = vmatpush1.msra.mxu0 0.0
    %4279 = vmatprep.subr.mxu0 0.0
    %4280 = vmatpush1.msra.mxu0 0.0
    %4281 = vmatprep.subr.mxu0 0.0
    %4282 = vmatpush1.msra.mxu0 0.0
    %4283 = vmatprep.subr.mxu0 0.0
    %4284 = vmatpush1.msra.mxu0 0.0
    %4285 = vmatprep.subr.mxu0 0.0
    %4286 = vmatpush1.msra.mxu0 0.0
    %4287 = vmatprep.subr.mxu0 0.0
    %4288 = vmatpush1.msra.mxu0 0.0
    %4289 = vmatprep.subr.mxu0 0.0
    %4290 = vmatpush1.msra.mxu0 0.0
    %4291 = vmatprep.subr.mxu0 0.0
    %4292 = vmatpush1.msra.mxu0 0.0
    %4293 = vmatprep.subr.mxu0 0.0
    %4294 = vmatpush1.msra.mxu0 0.0
    %4295 = vmatprep.subr.mxu0 0.0
    %4296 = vmatpush1.msra.mxu0 0.0
    %4297 = vmatprep.subr.mxu0 0.0
    %4298 = vmatpush1.msra.mxu0 0.0
    %4299 = vmatprep.subr.mxu0 0.0
    %4300 = vmatpush1.msra.mxu0 0.0
    %4301 = vmatprep.mubr.f32.mxu0 0.0
    %4302 = vmatmul.mubr.f32.gmra.mrb[0].mxu0 %v4232
    %v4303 = vpop.f32.mrb[0].mxu0
    %v4304 = vadd.f32 0.0, %v4303
    %v4305 = vpop.f32.mrb[0].mxu0
    %4306 = vmatprep.mubr.f32.mxu0 0.0
    %4307 = vmatmul.mubr.f32.gmra.mrb[0].mxu0 %v4235
    %v4308 = vpop.f32.mrb[0].mxu0
    %v4309 = vadd.f32 0.0, %v4308
    %v4310 = vpop.f32.mrb[0].mxu0
    %4311 = vdwg.mxu0
    %v4312 = vsub.f32 %v4304, %v180
    %v4313 = vsub.f32 %v4309, %v181
    %v4314 = vmul.f32 %v4312, %v183
    %v4315 = vmul.f32 %v4313, %v184
    %v4316 = vxor.u32 %v4314, 2147483648
    %v4317 = vxor.u32 %v4315, 2147483648
    %v4318 = vmul.f32 %v4316, 1.442695
    %v4319 = vpow.pop %v4318
    %v4320 = vmul.f32 %v4317, 1.442695
    %v4321 = vpow.pop %v4320
    %v4322 = vadd.f32 %v4319, 1.0
    %v4323 = vadd.f32 %v4321, 1.0
    %v4324 = vrcp.pop %v4322
    %v4325 = vmul.f32 1.0, %v4324
    %v4326 = vrcp.pop %v4323
    %v4327 = vmul.f32 1.0, %v4326
    %v4328 = vmul.f32 %v186, %v4325
    %v4329 = vmul.f32 %v187, %v4327
    %v4330 = vadd.f32 %v4328, %v4329
    %v4331 = vrot.slane %v4330, 4
    %v4332 = vadd.f32 %v4330, %v4331
    %v4333 = vrot.slane %v4332, 2
    %v4334 = vadd.f32 %v4332, %v4333
    %v4335 = vrot.slane %v4334, 1
    %v4336 = vadd.f32 %v4334, %v4335
    %v4337 = vmul.f32 %v188, %v4224
    %v4338 = vadd.f32 %v4337, %v849
    %v4339 = vadd.f32 %v4338, %v4336
    %v4340 = vadd.f32 %v849, %v4336
    %v4341 = vrcp.pop %v4340
    %v4342 = vmul.f32 %v4340, %v4341
    %v4343 = vsub.f32 2.0, %v4342
    %v4344 = vmul.f32 %v4341, %v4343
    %4346 = vrot.lane.b32.xlu0 %v4344, 64
    %v4347 = vpop.permute.xlu0 %4346
    %v4349 = vmul.f32 %v4339, %v4347
    %v4350 = vlaneseq
    %v4351 = vshrl.u32 %v4350, 7
    %v4352 = vsub.s32 0, %v4351
    %v4353 = vrot.slane %v4349, %v4352
    %v4354 = vmul.f32 %v4353, %v189
    %v4355 = vmul.f32 %v4353, %v190
    %v4357 = vsel %vm855, %v4354, 0
    %v4360 = vsel %vm855, %v4355, 0
    %4362 = vmatprep.subr.mxu0 0.0
    %4363 = vmatpush1.msra.mxu0 %v191
    %4364 = vmatprep.subr.mxu0 0.0
    %4365 = vmatpush1.msra.mxu0 %v192
    %4366 = vmatprep.subr.mxu0 0.0
    %4367 = vmatpush1.msra.mxu0 %v193
    %4368 = vmatprep.subr.mxu0 0.0
    %4369 = vmatpush1.msra.mxu0 %v194
    %4370 = vmatprep.subr.mxu0 0.0
    %4371 = vmatpush1.msra.mxu0 %v195
    %4372 = vmatprep.subr.mxu0 0.0
    %4373 = vmatpush1.msra.mxu0 %v196
    %4374 = vmatprep.subr.mxu0 0.0
    %4375 = vmatpush1.msra.mxu0 %v197
    %4376 = vmatprep.subr.mxu0 0.0
    %4377 = vmatpush1.msra.mxu0 %v198
    %4378 = vmatprep.subr.mxu0 0.0
    %4379 = vmatpush1.msra.mxu0 0.0
    %4380 = vmatprep.subr.mxu0 0.0
    %4381 = vmatpush1.msra.mxu0 0.0
    %4382 = vmatprep.subr.mxu0 0.0
    %4383 = vmatpush1.msra.mxu0 0.0
    %4384 = vmatprep.subr.mxu0 0.0
    %4385 = vmatpush1.msra.mxu0 0.0
    %4386 = vmatprep.subr.mxu0 0.0
    %4387 = vmatpush1.msra.mxu0 0.0
    %4388 = vmatprep.subr.mxu0 0.0
    %4389 = vmatpush1.msra.mxu0 0.0
    %4390 = vmatprep.subr.mxu0 0.0
    %4391 = vmatpush1.msra.mxu0 0.0
    %4392 = vmatprep.subr.mxu0 0.0
    %4393 = vmatpush1.msra.mxu0 0.0
    %4394 = vmatprep.subr.mxu0 0.0
    %4395 = vmatpush1.msra.mxu0 0.0
    %4396 = vmatprep.subr.mxu0 0.0
    %4397 = vmatpush1.msra.mxu0 0.0
    %4398 = vmatprep.subr.mxu0 0.0
    %4399 = vmatpush1.msra.mxu0 0.0
    %4400 = vmatprep.subr.mxu0 0.0
    %4401 = vmatpush1.msra.mxu0 0.0
    %4402 = vmatprep.subr.mxu0 0.0
    %4403 = vmatpush1.msra.mxu0 0.0
    %4404 = vmatprep.subr.mxu0 0.0
    %4405 = vmatpush1.msra.mxu0 0.0
    %4406 = vmatprep.subr.mxu0 0.0
    %4407 = vmatpush1.msra.mxu0 0.0
    %4408 = vmatprep.subr.mxu0 0.0
    %4409 = vmatpush1.msra.mxu0 0.0
    %4410 = vmatprep.subr.mxu0 0.0
    %4411 = vmatpush1.msra.mxu0 0.0
    %4412 = vmatprep.subr.mxu0 0.0
    %4413 = vmatpush1.msra.mxu0 0.0
    %4414 = vmatprep.subr.mxu0 0.0
    %4415 = vmatpush1.msra.mxu0 0.0
    %4416 = vmatprep.subr.mxu0 0.0
    %4417 = vmatpush1.msra.mxu0 0.0
    %4418 = vmatprep.subr.mxu0 0.0
    %4419 = vmatpush1.msra.mxu0 0.0
    %4420 = vmatprep.subr.mxu0 0.0
    %4421 = vmatpush1.msra.mxu0 0.0
    %4422 = vmatprep.subr.mxu0 0.0
    %4423 = vmatpush1.msra.mxu0 0.0
    %4424 = vmatprep.subr.mxu0 0.0
    %4425 = vmatpush1.msra.mxu0 0.0
    %4426 = vmatprep.mubr.f32.mxu0 0.0
    %4427 = vmatmul.mubr.f32.gmra.mrb[0].mxu0 %v4357
    %v4428 = vpop.f32.mrb[0].mxu0
    %v4429 = vadd.f32 0.0, %v4428
    %v4430 = vpop.f32.mrb[0].mxu0
    %4431 = vmatprep.mubr.f32.mxu0 0.0
    %4432 = vmatmul.mubr.f32.gmra.mrb[0].mxu0 %v4360
    %v4433 = vpop.f32.mrb[0].mxu0
    %v4434 = vadd.f32 0.0, %v4433
    %v4435 = vpop.f32.mrb[0].mxu0
    %4436 = vdwg.mxu0
    %v4437 = vsub.f32 %v4429, %v180
    %v4438 = vsub.f32 %v4434, %v181
    %v4439 = vmul.f32 %v4437, %v183
    %v4440 = vmul.f32 %v4438, %v184
    %v4441 = vxor.u32 %v4439, 2147483648
    %v4442 = vxor.u32 %v4440, 2147483648
    %v4443 = vmul.f32 %v4441, 1.442695
    %v4444 = vpow.pop %v4443
    %v4445 = vmul.f32 %v4442, 1.442695
    %v4446 = vpow.pop %v4445
    %v4447 = vadd.f32 %v4444, 1.0
    %v4448 = vadd.f32 %v4446, 1.0
    %v4449 = vrcp.pop %v4447
    %v4450 = vmul.f32 1.0, %v4449
    %v4451 = vrcp.pop %v4448
    %v4452 = vmul.f32 1.0, %v4451
    %v4453 = vmul.f32 %v186, %v4450
    %v4454 = vmul.f32 %v187, %v4452
    %v4455 = vadd.f32 %v4453, %v4454
    %v4456 = vrot.slane %v4455, 4
    %v4457 = vadd.f32 %v4455, %v4456
    %v4458 = vrot.slane %v4457, 2
    %v4459 = vadd.f32 %v4457, %v4458
    %v4460 = vrot.slane %v4459, 1
    %v4461 = vadd.f32 %v4459, %v4460
    %v4462 = vmul.f32 %v188, %v4349
    %v4463 = vadd.f32 %v4462, %v849
    %v4464 = vadd.f32 %v4463, %v4461
    %v4465 = vadd.f32 %v849, %v4461
    %v4466 = vrcp.pop %v4465
    %v4467 = vmul.f32 %v4465, %v4466
    %v4468 = vsub.f32 2.0, %v4467
    %v4469 = vmul.f32 %v4466, %v4468
    %4471 = vrot.lane.b32.xlu0 %v4469, 64
    %v4472 = vpop.permute.xlu0 %4471
    %v4474 = vmul.f32 %v4464, %v4472
    %v4475 = vlaneseq
    %v4476 = vshrl.u32 %v4475, 7
    %v4477 = vsub.s32 0, %v4476
    %v4478 = vrot.slane %v4474, %v4477
    %v4479 = vmul.f32 %v4478, %v189
    %v4480 = vmul.f32 %v4478, %v190
    %v4482 = vsel %vm855, %v4479, 0
    %v4485 = vsel %vm855, %v4480, 0
    %4487 = vmatprep.subr.mxu0 0.0
    %4488 = vmatpush1.msra.mxu0 %v191
    %4489 = vmatprep.subr.mxu0 0.0
    %4490 = vmatpush1.msra.mxu0 %v192
    %4491 = vmatprep.subr.mxu0 0.0
    %4492 = vmatpush1.msra.mxu0 %v193
    %4493 = vmatprep.subr.mxu0 0.0
    %4494 = vmatpush1.msra.mxu0 %v194
    %4495 = vmatprep.subr.mxu0 0.0
    %4496 = vmatpush1.msra.mxu0 %v195
    %4497 = vmatprep.subr.mxu0 0.0
    %4498 = vmatpush1.msra.mxu0 %v196
    %4499 = vmatprep.subr.mxu0 0.0
    %4500 = vmatpush1.msra.mxu0 %v197
    %4501 = vmatprep.subr.mxu0 0.0
    %4502 = vmatpush1.msra.mxu0 %v198
    %4503 = vmatprep.subr.mxu0 0.0
    %4504 = vmatpush1.msra.mxu0 0.0
    %4505 = vmatprep.subr.mxu0 0.0
    %4506 = vmatpush1.msra.mxu0 0.0
    %4507 = vmatprep.subr.mxu0 0.0
    %4508 = vmatpush1.msra.mxu0 0.0
    %4509 = vmatprep.subr.mxu0 0.0
    %4510 = vmatpush1.msra.mxu0 0.0
    %4511 = vmatprep.subr.mxu0 0.0
    %4512 = vmatpush1.msra.mxu0 0.0
    %4513 = vmatprep.subr.mxu0 0.0
    %4514 = vmatpush1.msra.mxu0 0.0
    %4515 = vmatprep.subr.mxu0 0.0
    %4516 = vmatpush1.msra.mxu0 0.0
    %4517 = vmatprep.subr.mxu0 0.0
    %4518 = vmatpush1.msra.mxu0 0.0
    %4519 = vmatprep.subr.mxu0 0.0
    %4520 = vmatpush1.msra.mxu0 0.0
    %4521 = vmatprep.subr.mxu0 0.0
    %4522 = vmatpush1.msra.mxu0 0.0
    %4523 = vmatprep.subr.mxu0 0.0
    %4524 = vmatpush1.msra.mxu0 0.0
    %4525 = vmatprep.subr.mxu0 0.0
    %4526 = vmatpush1.msra.mxu0 0.0
    %4527 = vmatprep.subr.mxu0 0.0
    %4528 = vmatpush1.msra.mxu0 0.0
    %4529 = vmatprep.subr.mxu0 0.0
    %4530 = vmatpush1.msra.mxu0 0.0
    %4531 = vmatprep.subr.mxu0 0.0
    %4532 = vmatpush1.msra.mxu0 0.0
    %4533 = vmatprep.subr.mxu0 0.0
    %4534 = vmatpush1.msra.mxu0 0.0
    %4535 = vmatprep.subr.mxu0 0.0
    %4536 = vmatpush1.msra.mxu0 0.0
    %4537 = vmatprep.subr.mxu0 0.0
    %4538 = vmatpush1.msra.mxu0 0.0
    %4539 = vmatprep.subr.mxu0 0.0
    %4540 = vmatpush1.msra.mxu0 0.0
    %4541 = vmatprep.subr.mxu0 0.0
    %4542 = vmatpush1.msra.mxu0 0.0
    %4543 = vmatprep.subr.mxu0 0.0
    %4544 = vmatpush1.msra.mxu0 0.0
    %4545 = vmatprep.subr.mxu0 0.0
    %4546 = vmatpush1.msra.mxu0 0.0
    %4547 = vmatprep.subr.mxu0 0.0
    %4548 = vmatpush1.msra.mxu0 0.0
    %4549 = vmatprep.subr.mxu0 0.0
    %4550 = vmatpush1.msra.mxu0 0.0
    %4551 = vmatprep.mubr.f32.mxu0 0.0
    %4552 = vmatmul.mubr.f32.gmra.mrb[0].mxu0 %v4482
    %v4553 = vpop.f32.mrb[0].mxu0
    %v4554 = vadd.f32 0.0, %v4553
    %v4555 = vpop.f32.mrb[0].mxu0
    %4556 = vmatprep.mubr.f32.mxu0 0.0
    %4557 = vmatmul.mubr.f32.gmra.mrb[0].mxu0 %v4485
    %v4558 = vpop.f32.mrb[0].mxu0
    %v4559 = vadd.f32 0.0, %v4558
    %v4560 = vpop.f32.mrb[0].mxu0
    %4561 = vdwg.mxu0
    %v4562 = vsub.f32 %v4554, %v180
    %v4563 = vsub.f32 %v4559, %v181
    %v4564 = vmul.f32 %v4562, %v183
    %v4565 = vmul.f32 %v4563, %v184
    %v4566 = vxor.u32 %v4564, 2147483648
    %v4567 = vxor.u32 %v4565, 2147483648
    %v4568 = vmul.f32 %v4566, 1.442695
    %v4569 = vpow.pop %v4568
    %v4570 = vmul.f32 %v4567, 1.442695
    %v4571 = vpow.pop %v4570
    %v4572 = vadd.f32 %v4569, 1.0
    %v4573 = vadd.f32 %v4571, 1.0
    %v4574 = vrcp.pop %v4572
    %v4575 = vmul.f32 1.0, %v4574
    %v4576 = vrcp.pop %v4573
    %v4577 = vmul.f32 1.0, %v4576
    %v4578 = vmul.f32 %v186, %v4575
    %v4579 = vmul.f32 %v187, %v4577
    %v4580 = vadd.f32 %v4578, %v4579
    %v4581 = vrot.slane %v4580, 4
    %v4582 = vadd.f32 %v4580, %v4581
    %v4583 = vrot.slane %v4582, 2
    %v4584 = vadd.f32 %v4582, %v4583
    %v4585 = vrot.slane %v4584, 1
    %v4586 = vadd.f32 %v4584, %v4585
    %v4587 = vmul.f32 %v188, %v4474
    %v4588 = vadd.f32 %v4587, %v849
    %v4589 = vadd.f32 %v4588, %v4586
    %v4590 = vadd.f32 %v849, %v4586
    %v4591 = vrcp.pop %v4590
    %v4592 = vmul.f32 %v4590, %v4591
    %v4593 = vsub.f32 2.0, %v4592
    %v4594 = vmul.f32 %v4591, %v4593
    %4596 = vrot.lane.b32.xlu0 %v4594, 64
    %v4597 = vpop.permute.xlu0 %4596
    %v4599 = vmul.f32 %v4589, %v4597
    %v4600 = vlaneseq
    %v4601 = vshrl.u32 %v4600, 7
    %v4602 = vsub.s32 0, %v4601
    %v4603 = vrot.slane %v4599, %v4602
    %v4604 = vmul.f32 %v4603, %v189
    %v4605 = vmul.f32 %v4603, %v190
    %v4607 = vsel %vm855, %v4604, 0
    %v4610 = vsel %vm855, %v4605, 0
    %4612 = vmatprep.subr.mxu0 0.0
    %4613 = vmatpush1.msra.mxu0 %v191
    %4614 = vmatprep.subr.mxu0 0.0
    %4615 = vmatpush1.msra.mxu0 %v192
    %4616 = vmatprep.subr.mxu0 0.0
    %4617 = vmatpush1.msra.mxu0 %v193
    %4618 = vmatprep.subr.mxu0 0.0
    %4619 = vmatpush1.msra.mxu0 %v194
    %4620 = vmatprep.subr.mxu0 0.0
    %4621 = vmatpush1.msra.mxu0 %v195
    %4622 = vmatprep.subr.mxu0 0.0
    %4623 = vmatpush1.msra.mxu0 %v196
    %4624 = vmatprep.subr.mxu0 0.0
    %4625 = vmatpush1.msra.mxu0 %v197
    %4626 = vmatprep.subr.mxu0 0.0
    %4627 = vmatpush1.msra.mxu0 %v198
    %4628 = vmatprep.subr.mxu0 0.0
    %4629 = vmatpush1.msra.mxu0 0.0
    %4630 = vmatprep.subr.mxu0 0.0
    %4631 = vmatpush1.msra.mxu0 0.0
    %4632 = vmatprep.subr.mxu0 0.0
    %4633 = vmatpush1.msra.mxu0 0.0
    %4634 = vmatprep.subr.mxu0 0.0
    %4635 = vmatpush1.msra.mxu0 0.0
    %4636 = vmatprep.subr.mxu0 0.0
    %4637 = vmatpush1.msra.mxu0 0.0
    %4638 = vmatprep.subr.mxu0 0.0
    %4639 = vmatpush1.msra.mxu0 0.0
    %4640 = vmatprep.subr.mxu0 0.0
    %4641 = vmatpush1.msra.mxu0 0.0
    %4642 = vmatprep.subr.mxu0 0.0
    %4643 = vmatpush1.msra.mxu0 0.0
    %4644 = vmatprep.subr.mxu0 0.0
    %4645 = vmatpush1.msra.mxu0 0.0
    %4646 = vmatprep.subr.mxu0 0.0
    %4647 = vmatpush1.msra.mxu0 0.0
    %4648 = vmatprep.subr.mxu0 0.0
    %4649 = vmatpush1.msra.mxu0 0.0
    %4650 = vmatprep.subr.mxu0 0.0
    %4651 = vmatpush1.msra.mxu0 0.0
    %4652 = vmatprep.subr.mxu0 0.0
    %4653 = vmatpush1.msra.mxu0 0.0
    %4654 = vmatprep.subr.mxu0 0.0
    %4655 = vmatpush1.msra.mxu0 0.0
    %4656 = vmatprep.subr.mxu0 0.0
    %4657 = vmatpush1.msra.mxu0 0.0
    %4658 = vmatprep.subr.mxu0 0.0
    %4659 = vmatpush1.msra.mxu0 0.0
    %4660 = vmatprep.subr.mxu0 0.0
    %4661 = vmatpush1.msra.mxu0 0.0
    %4662 = vmatprep.subr.mxu0 0.0
    %4663 = vmatpush1.msra.mxu0 0.0
    %4664 = vmatprep.subr.mxu0 0.0
    %4665 = vmatpush1.msra.mxu0 0.0
    %4666 = vmatprep.subr.mxu0 0.0
    %4667 = vmatpush1.msra.mxu0 0.0
    %4668 = vmatprep.subr.mxu0 0.0
    %4669 = vmatpush1.msra.mxu0 0.0
    %4670 = vmatprep.subr.mxu0 0.0
    %4671 = vmatpush1.msra.mxu0 0.0
    %4672 = vmatprep.subr.mxu0 0.0
    %4673 = vmatpush1.msra.mxu0 0.0
    %4674 = vmatprep.subr.mxu0 0.0
    %4675 = vmatpush1.msra.mxu0 0.0
    %4676 = vmatprep.mubr.f32.mxu0 0.0
    %4677 = vmatmul.mubr.f32.gmra.mrb[0].mxu0 %v4607
    %v4678 = vpop.f32.mrb[0].mxu0
    %v4679 = vadd.f32 0.0, %v4678
    %v4680 = vpop.f32.mrb[0].mxu0
    %4681 = vmatprep.mubr.f32.mxu0 0.0
    %4682 = vmatmul.mubr.f32.gmra.mrb[0].mxu0 %v4610
    %v4683 = vpop.f32.mrb[0].mxu0
    %v4684 = vadd.f32 0.0, %v4683
    %v4685 = vpop.f32.mrb[0].mxu0
    %4686 = vdwg.mxu0
    %v4687 = vsub.f32 %v4679, %v180
    %v4688 = vsub.f32 %v4684, %v181
    %v4689 = vmul.f32 %v4687, %v183
    %v4690 = vmul.f32 %v4688, %v184
    %v4691 = vxor.u32 %v4689, 2147483648
    %v4692 = vxor.u32 %v4690, 2147483648
    %v4693 = vmul.f32 %v4691, 1.442695
    %v4694 = vpow.pop %v4693
    %v4695 = vmul.f32 %v4692, 1.442695
    %v4696 = vpow.pop %v4695
    %v4697 = vadd.f32 %v4694, 1.0
    %v4698 = vadd.f32 %v4696, 1.0
    %v4699 = vrcp.pop %v4697
    %v4700 = vmul.f32 1.0, %v4699
    %v4701 = vrcp.pop %v4698
    %v4702 = vmul.f32 1.0, %v4701
    %v4703 = vmul.f32 %v186, %v4700
    %v4704 = vmul.f32 %v187, %v4702
    %v4705 = vadd.f32 %v4703, %v4704
    %v4706 = vrot.slane %v4705, 4
    %v4707 = vadd.f32 %v4705, %v4706
    %v4708 = vrot.slane %v4707, 2
    %v4709 = vadd.f32 %v4707, %v4708
    %v4710 = vrot.slane %v4709, 1
    %v4711 = vadd.f32 %v4709, %v4710
    %v4712 = vmul.f32 %v188, %v4599
    %v4713 = vadd.f32 %v4712, %v850
    %v4714 = vadd.f32 %v4713, %v4711
    %v4715 = vadd.f32 %v850, %v4711
    %v4716 = vrcp.pop %v4715
    %v4717 = vmul.f32 %v4715, %v4716
    %v4718 = vsub.f32 2.0, %v4717
    %v4719 = vmul.f32 %v4716, %v4718
    %4721 = vrot.lane.b32.xlu0 %v4719, 64
    %v4722 = vpop.permute.xlu0 %4721
    %v4724 = vmul.f32 %v4714, %v4722
    %v4725 = vlaneseq
    %v4726 = vshrl.u32 %v4725, 7
    %v4727 = vsub.s32 0, %v4726
    %v4728 = vrot.slane %v4724, %v4727
    %v4729 = vmul.f32 %v4728, %v189
    %v4730 = vmul.f32 %v4728, %v190
    %v4732 = vsel %vm855, %v4729, 0
    %v4735 = vsel %vm855, %v4730, 0
    %4737 = vmatprep.subr.mxu0 0.0
    %4738 = vmatpush1.msra.mxu0 %v191
    %4739 = vmatprep.subr.mxu0 0.0
    %4740 = vmatpush1.msra.mxu0 %v192
    %4741 = vmatprep.subr.mxu0 0.0
    %4742 = vmatpush1.msra.mxu0 %v193
    %4743 = vmatprep.subr.mxu0 0.0
    %4744 = vmatpush1.msra.mxu0 %v194
    %4745 = vmatprep.subr.mxu0 0.0
    %4746 = vmatpush1.msra.mxu0 %v195
    %4747 = vmatprep.subr.mxu0 0.0
    %4748 = vmatpush1.msra.mxu0 %v196
    %4749 = vmatprep.subr.mxu0 0.0
    %4750 = vmatpush1.msra.mxu0 %v197
    %4751 = vmatprep.subr.mxu0 0.0
    %4752 = vmatpush1.msra.mxu0 %v198
    %4753 = vmatprep.subr.mxu0 0.0
    %4754 = vmatpush1.msra.mxu0 0.0
    %4755 = vmatprep.subr.mxu0 0.0
    %4756 = vmatpush1.msra.mxu0 0.0
    %4757 = vmatprep.subr.mxu0 0.0
    %4758 = vmatpush1.msra.mxu0 0.0
    %4759 = vmatprep.subr.mxu0 0.0
    %4760 = vmatpush1.msra.mxu0 0.0
    %4761 = vmatprep.subr.mxu0 0.0
    %4762 = vmatpush1.msra.mxu0 0.0
    %4763 = vmatprep.subr.mxu0 0.0
    %4764 = vmatpush1.msra.mxu0 0.0
    %4765 = vmatprep.subr.mxu0 0.0
    %4766 = vmatpush1.msra.mxu0 0.0
    %4767 = vmatprep.subr.mxu0 0.0
    %4768 = vmatpush1.msra.mxu0 0.0
    %4769 = vmatprep.subr.mxu0 0.0
    %4770 = vmatpush1.msra.mxu0 0.0
    %4771 = vmatprep.subr.mxu0 0.0
    %4772 = vmatpush1.msra.mxu0 0.0
    %4773 = vmatprep.subr.mxu0 0.0
    %4774 = vmatpush1.msra.mxu0 0.0
    %4775 = vmatprep.subr.mxu0 0.0
    %4776 = vmatpush1.msra.mxu0 0.0
    %4777 = vmatprep.subr.mxu0 0.0
    %4778 = vmatpush1.msra.mxu0 0.0
    %4779 = vmatprep.subr.mxu0 0.0
    %4780 = vmatpush1.msra.mxu0 0.0
    %4781 = vmatprep.subr.mxu0 0.0
    %4782 = vmatpush1.msra.mxu0 0.0
    %4783 = vmatprep.subr.mxu0 0.0
    %4784 = vmatpush1.msra.mxu0 0.0
    %4785 = vmatprep.subr.mxu0 0.0
    %4786 = vmatpush1.msra.mxu0 0.0
    %4787 = vmatprep.subr.mxu0 0.0
    %4788 = vmatpush1.msra.mxu0 0.0
    %4789 = vmatprep.subr.mxu0 0.0
    %4790 = vmatpush1.msra.mxu0 0.0
    %4791 = vmatprep.subr.mxu0 0.0
    %4792 = vmatpush1.msra.mxu0 0.0
    %4793 = vmatprep.subr.mxu0 0.0
    %4794 = vmatpush1.msra.mxu0 0.0
    %4795 = vmatprep.subr.mxu0 0.0
    %4796 = vmatpush1.msra.mxu0 0.0
    %4797 = vmatprep.subr.mxu0 0.0
    %4798 = vmatpush1.msra.mxu0 0.0
    %4799 = vmatprep.subr.mxu0 0.0
    %4800 = vmatpush1.msra.mxu0 0.0
    %4801 = vmatprep.mubr.f32.mxu0 0.0
    %4802 = vmatmul.mubr.f32.gmra.mrb[0].mxu0 %v4732
    %v4803 = vpop.f32.mrb[0].mxu0
    %v4804 = vadd.f32 0.0, %v4803
    %v4805 = vpop.f32.mrb[0].mxu0
    %4806 = vmatprep.mubr.f32.mxu0 0.0
    %4807 = vmatmul.mubr.f32.gmra.mrb[0].mxu0 %v4735
    %v4808 = vpop.f32.mrb[0].mxu0
    %v4809 = vadd.f32 0.0, %v4808
    %v4810 = vpop.f32.mrb[0].mxu0
    %4811 = vdwg.mxu0
    %v4812 = vsub.f32 %v4804, %v180
    %v4813 = vsub.f32 %v4809, %v181
    %v4814 = vmul.f32 %v4812, %v183
    %v4815 = vmul.f32 %v4813, %v184
    %v4816 = vxor.u32 %v4814, 2147483648
    %v4817 = vxor.u32 %v4815, 2147483648
    %v4818 = vmul.f32 %v4816, 1.442695
    %v4819 = vpow.pop %v4818
    %v4820 = vmul.f32 %v4817, 1.442695
    %v4821 = vpow.pop %v4820
    %v4822 = vadd.f32 %v4819, 1.0
    %v4823 = vadd.f32 %v4821, 1.0
    %v4824 = vrcp.pop %v4822
    %v4825 = vmul.f32 1.0, %v4824
    %v4826 = vrcp.pop %v4823
    %v4827 = vmul.f32 1.0, %v4826
    %v4828 = vmul.f32 %v186, %v4825
    %v4829 = vmul.f32 %v187, %v4827
    %v4830 = vadd.f32 %v4828, %v4829
    %v4831 = vrot.slane %v4830, 4
    %v4832 = vadd.f32 %v4830, %v4831
    %v4833 = vrot.slane %v4832, 2
    %v4834 = vadd.f32 %v4832, %v4833
    %v4835 = vrot.slane %v4834, 1
    %v4836 = vadd.f32 %v4834, %v4835
    %v4837 = vmul.f32 %v188, %v4724
    %v4838 = vadd.f32 %v4837, %v850
    %v4839 = vadd.f32 %v4838, %v4836
    %v4840 = vadd.f32 %v850, %v4836
    %v4841 = vrcp.pop %v4840
    %v4842 = vmul.f32 %v4840, %v4841
    %v4843 = vsub.f32 2.0, %v4842
    %v4844 = vmul.f32 %v4841, %v4843
    %4846 = vrot.lane.b32.xlu0 %v4844, 64
    %v4847 = vpop.permute.xlu0 %4846
    %v4849 = vmul.f32 %v4839, %v4847
    %v4850 = vlaneseq
    %v4851 = vshrl.u32 %v4850, 7
    %v4852 = vsub.s32 0, %v4851
    %v4853 = vrot.slane %v4849, %v4852
    %v4854 = vmul.f32 %v4853, %v189
    %v4855 = vmul.f32 %v4853, %v190
    %v4857 = vsel %vm855, %v4854, 0
    %v4860 = vsel %vm855, %v4855, 0
    %4862 = vmatprep.subr.mxu0 0.0
    %4863 = vmatpush1.msra.mxu0 %v191
    %4864 = vmatprep.subr.mxu0 0.0
    %4865 = vmatpush1.msra.mxu0 %v192
    %4866 = vmatprep.subr.mxu0 0.0
    %4867 = vmatpush1.msra.mxu0 %v193
    %4868 = vmatprep.subr.mxu0 0.0
    %4869 = vmatpush1.msra.mxu0 %v194
    %4870 = vmatprep.subr.mxu0 0.0
    %4871 = vmatpush1.msra.mxu0 %v195
    %4872 = vmatprep.subr.mxu0 0.0
    %4873 = vmatpush1.msra.mxu0 %v196
    %4874 = vmatprep.subr.mxu0 0.0
    %4875 = vmatpush1.msra.mxu0 %v197
    %4876 = vmatprep.subr.mxu0 0.0
    %4877 = vmatpush1.msra.mxu0 %v198
    %4878 = vmatprep.subr.mxu0 0.0
    %4879 = vmatpush1.msra.mxu0 0.0
    %4880 = vmatprep.subr.mxu0 0.0
    %4881 = vmatpush1.msra.mxu0 0.0
    %4882 = vmatprep.subr.mxu0 0.0
    %4883 = vmatpush1.msra.mxu0 0.0
    %4884 = vmatprep.subr.mxu0 0.0
    %4885 = vmatpush1.msra.mxu0 0.0
    %4886 = vmatprep.subr.mxu0 0.0
    %4887 = vmatpush1.msra.mxu0 0.0
    %4888 = vmatprep.subr.mxu0 0.0
    %4889 = vmatpush1.msra.mxu0 0.0
    %4890 = vmatprep.subr.mxu0 0.0
    %4891 = vmatpush1.msra.mxu0 0.0
    %4892 = vmatprep.subr.mxu0 0.0
    %4893 = vmatpush1.msra.mxu0 0.0
    %4894 = vmatprep.subr.mxu0 0.0
    %4895 = vmatpush1.msra.mxu0 0.0
    %4896 = vmatprep.subr.mxu0 0.0
    %4897 = vmatpush1.msra.mxu0 0.0
    %4898 = vmatprep.subr.mxu0 0.0
    %4899 = vmatpush1.msra.mxu0 0.0
    %4900 = vmatprep.subr.mxu0 0.0
    %4901 = vmatpush1.msra.mxu0 0.0
    %4902 = vmatprep.subr.mxu0 0.0
    %4903 = vmatpush1.msra.mxu0 0.0
    %4904 = vmatprep.subr.mxu0 0.0
    %4905 = vmatpush1.msra.mxu0 0.0
    %4906 = vmatprep.subr.mxu0 0.0
    %4907 = vmatpush1.msra.mxu0 0.0
    %4908 = vmatprep.subr.mxu0 0.0
    %4909 = vmatpush1.msra.mxu0 0.0
    %4910 = vmatprep.subr.mxu0 0.0
    %4911 = vmatpush1.msra.mxu0 0.0
    %4912 = vmatprep.subr.mxu0 0.0
    %4913 = vmatpush1.msra.mxu0 0.0
    %4914 = vmatprep.subr.mxu0 0.0
    %4915 = vmatpush1.msra.mxu0 0.0
    %4916 = vmatprep.subr.mxu0 0.0
    %4917 = vmatpush1.msra.mxu0 0.0
    %4918 = vmatprep.subr.mxu0 0.0
    %4919 = vmatpush1.msra.mxu0 0.0
    %4920 = vmatprep.subr.mxu0 0.0
    %4921 = vmatpush1.msra.mxu0 0.0
    %4922 = vmatprep.subr.mxu0 0.0
    %4923 = vmatpush1.msra.mxu0 0.0
    %4924 = vmatprep.subr.mxu0 0.0
    %4925 = vmatpush1.msra.mxu0 0.0
    %4926 = vmatprep.mubr.f32.mxu0 0.0
    %4927 = vmatmul.mubr.f32.gmra.mrb[0].mxu0 %v4857
    %v4928 = vpop.f32.mrb[0].mxu0
    %v4929 = vadd.f32 0.0, %v4928
    %v4930 = vpop.f32.mrb[0].mxu0
    %4931 = vmatprep.mubr.f32.mxu0 0.0
    %4932 = vmatmul.mubr.f32.gmra.mrb[0].mxu0 %v4860
    %v4933 = vpop.f32.mrb[0].mxu0
    %v4934 = vadd.f32 0.0, %v4933
    %v4935 = vpop.f32.mrb[0].mxu0
    %4936 = vdwg.mxu0
    %v4937 = vsub.f32 %v4929, %v180
    %v4938 = vsub.f32 %v4934, %v181
    %v4939 = vmul.f32 %v4937, %v183
    %v4940 = vmul.f32 %v4938, %v184
    %v4941 = vxor.u32 %v4939, 2147483648
    %v4942 = vxor.u32 %v4940, 2147483648
    %v4943 = vmul.f32 %v4941, 1.442695
    %v4944 = vpow.pop %v4943
    %v4945 = vmul.f32 %v4942, 1.442695
    %v4946 = vpow.pop %v4945
    %v4947 = vadd.f32 %v4944, 1.0
    %v4948 = vadd.f32 %v4946, 1.0
    %v4949 = vrcp.pop %v4947
    %v4950 = vmul.f32 1.0, %v4949
    %v4951 = vrcp.pop %v4948
    %v4952 = vmul.f32 1.0, %v4951
    %v4953 = vmul.f32 %v186, %v4950
    %v4954 = vmul.f32 %v187, %v4952
    %v4955 = vadd.f32 %v4953, %v4954
    %v4956 = vrot.slane %v4955, 4
    %v4957 = vadd.f32 %v4955, %v4956
    %v4958 = vrot.slane %v4957, 2
    %v4959 = vadd.f32 %v4957, %v4958
    %v4960 = vrot.slane %v4959, 1
    %v4961 = vadd.f32 %v4959, %v4960
    %v4962 = vmul.f32 %v188, %v4849
    %v4963 = vadd.f32 %v4962, %v850
    %v4964 = vadd.f32 %v4963, %v4961
    %v4965 = vadd.f32 %v850, %v4961
    %v4966 = vrcp.pop %v4965
    %v4967 = vmul.f32 %v4965, %v4966
    %v4968 = vsub.f32 2.0, %v4967
    %v4969 = vmul.f32 %v4966, %v4968
    %4971 = vrot.lane.b32.xlu0 %v4969, 64
    %v4972 = vpop.permute.xlu0 %4971
    %v4974 = vmul.f32 %v4964, %v4972
    %v4975 = vlaneseq
    %v4976 = vshrl.u32 %v4975, 7
    %v4977 = vsub.s32 0, %v4976
    %v4978 = vrot.slane %v4974, %v4977
    %v4979 = vmul.f32 %v4978, %v189
    %v4980 = vmul.f32 %v4978, %v190
    %v4982 = vsel %vm855, %v4979, 0
    %v4985 = vsel %vm855, %v4980, 0
    %4987 = vmatprep.subr.mxu0 0.0
    %4988 = vmatpush1.msra.mxu0 %v191
    %4989 = vmatprep.subr.mxu0 0.0
    %4990 = vmatpush1.msra.mxu0 %v192
    %4991 = vmatprep.subr.mxu0 0.0
    %4992 = vmatpush1.msra.mxu0 %v193
    %4993 = vmatprep.subr.mxu0 0.0
    %4994 = vmatpush1.msra.mxu0 %v194
    %4995 = vmatprep.subr.mxu0 0.0
    %4996 = vmatpush1.msra.mxu0 %v195
    %4997 = vmatprep.subr.mxu0 0.0
    %4998 = vmatpush1.msra.mxu0 %v196
    %4999 = vmatprep.subr.mxu0 0.0
    %5000 = vmatpush1.msra.mxu0 %v197
    %5001 = vmatprep.subr.mxu0 0.0
    %5002 = vmatpush1.msra.mxu0 %v198
    %5003 = vmatprep.subr.mxu0 0.0
    %5004 = vmatpush1.msra.mxu0 0.0
    %5005 = vmatprep.subr.mxu0 0.0
    %5006 = vmatpush1.msra.mxu0 0.0
    %5007 = vmatprep.subr.mxu0 0.0
    %5008 = vmatpush1.msra.mxu0 0.0
    %5009 = vmatprep.subr.mxu0 0.0
    %5010 = vmatpush1.msra.mxu0 0.0
    %5011 = vmatprep.subr.mxu0 0.0
    %5012 = vmatpush1.msra.mxu0 0.0
    %5013 = vmatprep.subr.mxu0 0.0
    %5014 = vmatpush1.msra.mxu0 0.0
    %5015 = vmatprep.subr.mxu0 0.0
    %5016 = vmatpush1.msra.mxu0 0.0
    %5017 = vmatprep.subr.mxu0 0.0
    %5018 = vmatpush1.msra.mxu0 0.0
    %5019 = vmatprep.subr.mxu0 0.0
    %5020 = vmatpush1.msra.mxu0 0.0
    %5021 = vmatprep.subr.mxu0 0.0
    %5022 = vmatpush1.msra.mxu0 0.0
    %5023 = vmatprep.subr.mxu0 0.0
    %5024 = vmatpush1.msra.mxu0 0.0
    %5025 = vmatprep.subr.mxu0 0.0
    %5026 = vmatpush1.msra.mxu0 0.0
    %5027 = vmatprep.subr.mxu0 0.0
    %5028 = vmatpush1.msra.mxu0 0.0
    %5029 = vmatprep.subr.mxu0 0.0
    %5030 = vmatpush1.msra.mxu0 0.0
    %5031 = vmatprep.subr.mxu0 0.0
    %5032 = vmatpush1.msra.mxu0 0.0
    %5033 = vmatprep.subr.mxu0 0.0
    %5034 = vmatpush1.msra.mxu0 0.0
    %5035 = vmatprep.subr.mxu0 0.0
    %5036 = vmatpush1.msra.mxu0 0.0
    %5037 = vmatprep.subr.mxu0 0.0
    %5038 = vmatpush1.msra.mxu0 0.0
    %5039 = vmatprep.subr.mxu0 0.0
    %5040 = vmatpush1.msra.mxu0 0.0
    %5041 = vmatprep.subr.mxu0 0.0
    %5042 = vmatpush1.msra.mxu0 0.0
    %5043 = vmatprep.subr.mxu0 0.0
    %5044 = vmatpush1.msra.mxu0 0.0
    %5045 = vmatprep.subr.mxu0 0.0
    %5046 = vmatpush1.msra.mxu0 0.0
    %5047 = vmatprep.subr.mxu0 0.0
    %5048 = vmatpush1.msra.mxu0 0.0
    %5049 = vmatprep.subr.mxu0 0.0
    %5050 = vmatpush1.msra.mxu0 0.0
    %5051 = vmatprep.mubr.f32.mxu0 0.0
    %5052 = vmatmul.mubr.f32.gmra.mrb[0].mxu0 %v4982
    %v5053 = vpop.f32.mrb[0].mxu0
    %v5054 = vadd.f32 0.0, %v5053
    %v5055 = vpop.f32.mrb[0].mxu0
    %5056 = vmatprep.mubr.f32.mxu0 0.0
    %5057 = vmatmul.mubr.f32.gmra.mrb[0].mxu0 %v4985
    %v5058 = vpop.f32.mrb[0].mxu0
    %v5059 = vadd.f32 0.0, %v5058
    %v5060 = vpop.f32.mrb[0].mxu0
    %5061 = vdwg.mxu0
    %v5062 = vsub.f32 %v5054, %v180
    %v5063 = vsub.f32 %v5059, %v181
    %v5064 = vmul.f32 %v5062, %v183
    %v5065 = vmul.f32 %v5063, %v184
    %v5066 = vxor.u32 %v5064, 2147483648
    %v5067 = vxor.u32 %v5065, 2147483648
    %v5068 = vmul.f32 %v5066, 1.442695
    %v5069 = vpow.pop %v5068
    %v5070 = vmul.f32 %v5067, 1.442695
    %v5071 = vpow.pop %v5070
    %v5072 = vadd.f32 %v5069, 1.0
    %v5073 = vadd.f32 %v5071, 1.0
    %v5074 = vrcp.pop %v5072
    %v5075 = vmul.f32 1.0, %v5074
    %v5076 = vrcp.pop %v5073
    %v5077 = vmul.f32 1.0, %v5076
    %v5078 = vmul.f32 %v186, %v5075
    %v5079 = vmul.f32 %v187, %v5077
    %v5080 = vadd.f32 %v5078, %v5079
    %v5081 = vrot.slane %v5080, 4
    %v5082 = vadd.f32 %v5080, %v5081
    %v5083 = vrot.slane %v5082, 2
    %v5084 = vadd.f32 %v5082, %v5083
    %v5085 = vrot.slane %v5084, 1
    %v5086 = vadd.f32 %v5084, %v5085
    %v5087 = vmul.f32 %v188, %v4974
    %v5088 = vadd.f32 %v5087, %v850
    %v5089 = vadd.f32 %v5088, %v5086
    %v5090 = vadd.f32 %v850, %v5086
    %v5091 = vrcp.pop %v5090
    %v5092 = vmul.f32 %v5090, %v5091
    %v5093 = vsub.f32 2.0, %v5092
    %v5094 = vmul.f32 %v5091, %v5093
    %5096 = vrot.lane.b32.xlu0 %v5094, 64
    %v5097 = vpop.permute.xlu0 %5096
    %v5099 = vmul.f32 %v5089, %v5097
    %v5100 = vlaneseq
    %v5101 = vshrl.u32 %v5100, 7
    %v5102 = vsub.s32 0, %v5101
    %v5103 = vrot.slane %v5099, %v5102
    %v5104 = vmul.f32 %v5103, %v189
    %v5105 = vmul.f32 %v5103, %v190
    %v5107 = vsel %vm855, %v5104, 0
    %v5110 = vsel %vm855, %v5105, 0
    %5112 = vmatprep.subr.mxu0 0.0
    %5113 = vmatpush1.msra.mxu0 %v191
    %5114 = vmatprep.subr.mxu0 0.0
    %5115 = vmatpush1.msra.mxu0 %v192
    %5116 = vmatprep.subr.mxu0 0.0
    %5117 = vmatpush1.msra.mxu0 %v193
    %5118 = vmatprep.subr.mxu0 0.0
    %5119 = vmatpush1.msra.mxu0 %v194
    %5120 = vmatprep.subr.mxu0 0.0
    %5121 = vmatpush1.msra.mxu0 %v195
    %5122 = vmatprep.subr.mxu0 0.0
    %5123 = vmatpush1.msra.mxu0 %v196
    %5124 = vmatprep.subr.mxu0 0.0
    %5125 = vmatpush1.msra.mxu0 %v197
    %5126 = vmatprep.subr.mxu0 0.0
    %5127 = vmatpush1.msra.mxu0 %v198
    %5128 = vmatprep.subr.mxu0 0.0
    %5129 = vmatpush1.msra.mxu0 0.0
    %5130 = vmatprep.subr.mxu0 0.0
    %5131 = vmatpush1.msra.mxu0 0.0
    %5132 = vmatprep.subr.mxu0 0.0
    %5133 = vmatpush1.msra.mxu0 0.0
    %5134 = vmatprep.subr.mxu0 0.0
    %5135 = vmatpush1.msra.mxu0 0.0
    %5136 = vmatprep.subr.mxu0 0.0
    %5137 = vmatpush1.msra.mxu0 0.0
    %5138 = vmatprep.subr.mxu0 0.0
    %5139 = vmatpush1.msra.mxu0 0.0
    %5140 = vmatprep.subr.mxu0 0.0
    %5141 = vmatpush1.msra.mxu0 0.0
    %5142 = vmatprep.subr.mxu0 0.0
    %5143 = vmatpush1.msra.mxu0 0.0
    %5144 = vmatprep.subr.mxu0 0.0
    %5145 = vmatpush1.msra.mxu0 0.0
    %5146 = vmatprep.subr.mxu0 0.0
    %5147 = vmatpush1.msra.mxu0 0.0
    %5148 = vmatprep.subr.mxu0 0.0
    %5149 = vmatpush1.msra.mxu0 0.0
    %5150 = vmatprep.subr.mxu0 0.0
    %5151 = vmatpush1.msra.mxu0 0.0
    %5152 = vmatprep.subr.mxu0 0.0
    %5153 = vmatpush1.msra.mxu0 0.0
    %5154 = vmatprep.subr.mxu0 0.0
    %5155 = vmatpush1.msra.mxu0 0.0
    %5156 = vmatprep.subr.mxu0 0.0
    %5157 = vmatpush1.msra.mxu0 0.0
    %5158 = vmatprep.subr.mxu0 0.0
    %5159 = vmatpush1.msra.mxu0 0.0
    %5160 = vmatprep.subr.mxu0 0.0
    %5161 = vmatpush1.msra.mxu0 0.0
    %5162 = vmatprep.subr.mxu0 0.0
    %5163 = vmatpush1.msra.mxu0 0.0
    %5164 = vmatprep.subr.mxu0 0.0
    %5165 = vmatpush1.msra.mxu0 0.0
    %5166 = vmatprep.subr.mxu0 0.0
    %5167 = vmatpush1.msra.mxu0 0.0
    %5168 = vmatprep.subr.mxu0 0.0
    %5169 = vmatpush1.msra.mxu0 0.0
    %5170 = vmatprep.subr.mxu0 0.0
    %5171 = vmatpush1.msra.mxu0 0.0
    %5172 = vmatprep.subr.mxu0 0.0
    %5173 = vmatpush1.msra.mxu0 0.0
    %5174 = vmatprep.subr.mxu0 0.0
    %5175 = vmatpush1.msra.mxu0 0.0
    %5176 = vmatprep.mubr.f32.mxu0 0.0
    %5177 = vmatmul.mubr.f32.gmra.mrb[0].mxu0 %v5107
    %v5178 = vpop.f32.mrb[0].mxu0
    %v5179 = vadd.f32 0.0, %v5178
    %v5180 = vpop.f32.mrb[0].mxu0
    %5181 = vmatprep.mubr.f32.mxu0 0.0
    %5182 = vmatmul.mubr.f32.gmra.mrb[0].mxu0 %v5110
    %v5183 = vpop.f32.mrb[0].mxu0
    %v5184 = vadd.f32 0.0, %v5183
    %v5185 = vpop.f32.mrb[0].mxu0
    %5186 = vdwg.mxu0
    %v5187 = vsub.f32 %v5179, %v180
    %v5188 = vsub.f32 %v5184, %v181
    %v5189 = vmul.f32 %v5187, %v183
    %v5190 = vmul.f32 %v5188, %v184
    %v5191 = vxor.u32 %v5189, 2147483648
    %v5192 = vxor.u32 %v5190, 2147483648
    %v5193 = vmul.f32 %v5191, 1.442695
    %v5194 = vpow.pop %v5193
    %v5195 = vmul.f32 %v5192, 1.442695
    %v5196 = vpow.pop %v5195
    %v5197 = vadd.f32 %v5194, 1.0
    %v5198 = vadd.f32 %v5196, 1.0
    %v5199 = vrcp.pop %v5197
    %v5200 = vmul.f32 1.0, %v5199
    %v5201 = vrcp.pop %v5198
    %v5202 = vmul.f32 1.0, %v5201
    %v5203 = vmul.f32 %v186, %v5200
    %v5204 = vmul.f32 %v187, %v5202
    %v5205 = vadd.f32 %v5203, %v5204
    %v5206 = vrot.slane %v5205, 4
    %v5207 = vadd.f32 %v5205, %v5206
    %v5208 = vrot.slane %v5207, 2
    %v5209 = vadd.f32 %v5207, %v5208
    %v5210 = vrot.slane %v5209, 1
    %v5211 = vadd.f32 %v5209, %v5210
    %v5212 = vmul.f32 %v188, %v5099
    %v5213 = vadd.f32 %v5212, %v850
    %v5214 = vadd.f32 %v5213, %v5211
    %v5215 = vadd.f32 %v850, %v5211
    %v5216 = vrcp.pop %v5215
    %v5217 = vmul.f32 %v5215, %v5216
    %v5218 = vsub.f32 2.0, %v5217
    %v5219 = vmul.f32 %v5216, %v5218
    %5221 = vrot.lane.b32.xlu0 %v5219, 64
    %v5222 = vpop.permute.xlu0 %5221
    %v5224 = vmul.f32 %v5214, %v5222
    %v5225 = vlaneseq
    %v5226 = vshrl.u32 %v5225, 7
    %v5227 = vsub.s32 0, %v5226
    %v5228 = vrot.slane %v5224, %v5227
    %v5229 = vmul.f32 %v5228, %v189
    %v5230 = vmul.f32 %v5228, %v190
    %v5232 = vsel %vm855, %v5229, 0
    %v5235 = vsel %vm855, %v5230, 0
    %5237 = vmatprep.subr.mxu0 0.0
    %5238 = vmatpush1.msra.mxu0 %v191
    %5239 = vmatprep.subr.mxu0 0.0
    %5240 = vmatpush1.msra.mxu0 %v192
    %5241 = vmatprep.subr.mxu0 0.0
    %5242 = vmatpush1.msra.mxu0 %v193
    %5243 = vmatprep.subr.mxu0 0.0
    %5244 = vmatpush1.msra.mxu0 %v194
    %5245 = vmatprep.subr.mxu0 0.0
    %5246 = vmatpush1.msra.mxu0 %v195
    %5247 = vmatprep.subr.mxu0 0.0
    %5248 = vmatpush1.msra.mxu0 %v196
    %5249 = vmatprep.subr.mxu0 0.0
    %5250 = vmatpush1.msra.mxu0 %v197
    %5251 = vmatprep.subr.mxu0 0.0
    %5252 = vmatpush1.msra.mxu0 %v198
    %5253 = vmatprep.subr.mxu0 0.0
    %5254 = vmatpush1.msra.mxu0 0.0
    %5255 = vmatprep.subr.mxu0 0.0
    %5256 = vmatpush1.msra.mxu0 0.0
    %5257 = vmatprep.subr.mxu0 0.0
    %5258 = vmatpush1.msra.mxu0 0.0
    %5259 = vmatprep.subr.mxu0 0.0
    %5260 = vmatpush1.msra.mxu0 0.0
    %5261 = vmatprep.subr.mxu0 0.0
    %5262 = vmatpush1.msra.mxu0 0.0
    %5263 = vmatprep.subr.mxu0 0.0
    %5264 = vmatpush1.msra.mxu0 0.0
    %5265 = vmatprep.subr.mxu0 0.0
    %5266 = vmatpush1.msra.mxu0 0.0
    %5267 = vmatprep.subr.mxu0 0.0
    %5268 = vmatpush1.msra.mxu0 0.0
    %5269 = vmatprep.subr.mxu0 0.0
    %5270 = vmatpush1.msra.mxu0 0.0
    %5271 = vmatprep.subr.mxu0 0.0
    %5272 = vmatpush1.msra.mxu0 0.0
    %5273 = vmatprep.subr.mxu0 0.0
    %5274 = vmatpush1.msra.mxu0 0.0
    %5275 = vmatprep.subr.mxu0 0.0
    %5276 = vmatpush1.msra.mxu0 0.0
    %5277 = vmatprep.subr.mxu0 0.0
    %5278 = vmatpush1.msra.mxu0 0.0
    %5279 = vmatprep.subr.mxu0 0.0
    %5280 = vmatpush1.msra.mxu0 0.0
    %5281 = vmatprep.subr.mxu0 0.0
    %5282 = vmatpush1.msra.mxu0 0.0
    %5283 = vmatprep.subr.mxu0 0.0
    %5284 = vmatpush1.msra.mxu0 0.0
    %5285 = vmatprep.subr.mxu0 0.0
    %5286 = vmatpush1.msra.mxu0 0.0
    %5287 = vmatprep.subr.mxu0 0.0
    %5288 = vmatpush1.msra.mxu0 0.0
    %5289 = vmatprep.subr.mxu0 0.0
    %5290 = vmatpush1.msra.mxu0 0.0
    %5291 = vmatprep.subr.mxu0 0.0
    %5292 = vmatpush1.msra.mxu0 0.0
    %5293 = vmatprep.subr.mxu0 0.0
    %5294 = vmatpush1.msra.mxu0 0.0
    %5295 = vmatprep.subr.mxu0 0.0
    %5296 = vmatpush1.msra.mxu0 0.0
    %5297 = vmatprep.subr.mxu0 0.0
    %5298 = vmatpush1.msra.mxu0 0.0
    %5299 = vmatprep.subr.mxu0 0.0
    %5300 = vmatpush1.msra.mxu0 0.0
    %5301 = vmatprep.mubr.f32.mxu0 0.0
    %5302 = vmatmul.mubr.f32.gmra.mrb[0].mxu0 %v5232
    %v5303 = vpop.f32.mrb[0].mxu0
    %v5304 = vadd.f32 0.0, %v5303
    %v5305 = vpop.f32.mrb[0].mxu0
    %5306 = vmatprep.mubr.f32.mxu0 0.0
    %5307 = vmatmul.mubr.f32.gmra.mrb[0].mxu0 %v5235
    %v5308 = vpop.f32.mrb[0].mxu0
    %v5309 = vadd.f32 0.0, %v5308
    %v5310 = vpop.f32.mrb[0].mxu0
    %5311 = vdwg.mxu0
    %v5312 = vsub.f32 %v5304, %v180
    %v5313 = vsub.f32 %v5309, %v181
    %v5314 = vmul.f32 %v5312, %v183
    %v5315 = vmul.f32 %v5313, %v184
    %v5316 = vxor.u32 %v5314, 2147483648
    %v5317 = vxor.u32 %v5315, 2147483648
    %v5318 = vmul.f32 %v5316, 1.442695
    %v5319 = vpow.pop %v5318
    %v5320 = vmul.f32 %v5317, 1.442695
    %v5321 = vpow.pop %v5320
    %v5322 = vadd.f32 %v5319, 1.0
    %v5323 = vadd.f32 %v5321, 1.0
    %v5324 = vrcp.pop %v5322
    %v5325 = vmul.f32 1.0, %v5324
    %v5326 = vrcp.pop %v5323
    %v5327 = vmul.f32 1.0, %v5326
    %v5328 = vmul.f32 %v186, %v5325
    %v5329 = vmul.f32 %v187, %v5327
    %v5330 = vadd.f32 %v5328, %v5329
    %v5331 = vrot.slane %v5330, 4
    %v5332 = vadd.f32 %v5330, %v5331
    %v5333 = vrot.slane %v5332, 2
    %v5334 = vadd.f32 %v5332, %v5333
    %v5335 = vrot.slane %v5334, 1
    %v5336 = vadd.f32 %v5334, %v5335
    %v5337 = vmul.f32 %v188, %v5224
    %v5338 = vadd.f32 %v5337, %v850
    %v5339 = vadd.f32 %v5338, %v5336
    %v5340 = vadd.f32 %v850, %v5336
    %v5341 = vrcp.pop %v5340
    %v5342 = vmul.f32 %v5340, %v5341
    %v5343 = vsub.f32 2.0, %v5342
    %v5344 = vmul.f32 %v5341, %v5343
    %5346 = vrot.lane.b32.xlu0 %v5344, 64
    %v5347 = vpop.permute.xlu0 %5346
    %v5349 = vmul.f32 %v5339, %v5347
    %v5350 = vlaneseq
    %v5351 = vshrl.u32 %v5350, 7
    %v5352 = vsub.s32 0, %v5351
    %v5353 = vrot.slane %v5349, %v5352
    %v5354 = vmul.f32 %v5353, %v189
    %v5355 = vmul.f32 %v5353, %v190
    %v5357 = vsel %vm855, %v5354, 0
    %v5360 = vsel %vm855, %v5355, 0
    %5362 = vmatprep.subr.mxu0 0.0
    %5363 = vmatpush1.msra.mxu0 %v191
    %5364 = vmatprep.subr.mxu0 0.0
    %5365 = vmatpush1.msra.mxu0 %v192
    %5366 = vmatprep.subr.mxu0 0.0
    %5367 = vmatpush1.msra.mxu0 %v193
    %5368 = vmatprep.subr.mxu0 0.0
    %5369 = vmatpush1.msra.mxu0 %v194
    %5370 = vmatprep.subr.mxu0 0.0
    %5371 = vmatpush1.msra.mxu0 %v195
    %5372 = vmatprep.subr.mxu0 0.0
    %5373 = vmatpush1.msra.mxu0 %v196
    %5374 = vmatprep.subr.mxu0 0.0
    %5375 = vmatpush1.msra.mxu0 %v197
    %5376 = vmatprep.subr.mxu0 0.0
    %5377 = vmatpush1.msra.mxu0 %v198
    %5378 = vmatprep.subr.mxu0 0.0
    %5379 = vmatpush1.msra.mxu0 0.0
    %5380 = vmatprep.subr.mxu0 0.0
    %5381 = vmatpush1.msra.mxu0 0.0
    %5382 = vmatprep.subr.mxu0 0.0
    %5383 = vmatpush1.msra.mxu0 0.0
    %5384 = vmatprep.subr.mxu0 0.0
    %5385 = vmatpush1.msra.mxu0 0.0
    %5386 = vmatprep.subr.mxu0 0.0
    %5387 = vmatpush1.msra.mxu0 0.0
    %5388 = vmatprep.subr.mxu0 0.0
    %5389 = vmatpush1.msra.mxu0 0.0
    %5390 = vmatprep.subr.mxu0 0.0
    %5391 = vmatpush1.msra.mxu0 0.0
    %5392 = vmatprep.subr.mxu0 0.0
    %5393 = vmatpush1.msra.mxu0 0.0
    %5394 = vmatprep.subr.mxu0 0.0
    %5395 = vmatpush1.msra.mxu0 0.0
    %5396 = vmatprep.subr.mxu0 0.0
    %5397 = vmatpush1.msra.mxu0 0.0
    %5398 = vmatprep.subr.mxu0 0.0
    %5399 = vmatpush1.msra.mxu0 0.0
    %5400 = vmatprep.subr.mxu0 0.0
    %5401 = vmatpush1.msra.mxu0 0.0
    %5402 = vmatprep.subr.mxu0 0.0
    %5403 = vmatpush1.msra.mxu0 0.0
    %5404 = vmatprep.subr.mxu0 0.0
    %5405 = vmatpush1.msra.mxu0 0.0
    %5406 = vmatprep.subr.mxu0 0.0
    %5407 = vmatpush1.msra.mxu0 0.0
    %5408 = vmatprep.subr.mxu0 0.0
    %5409 = vmatpush1.msra.mxu0 0.0
    %5410 = vmatprep.subr.mxu0 0.0
    %5411 = vmatpush1.msra.mxu0 0.0
    %5412 = vmatprep.subr.mxu0 0.0
    %5413 = vmatpush1.msra.mxu0 0.0
    %5414 = vmatprep.subr.mxu0 0.0
    %5415 = vmatpush1.msra.mxu0 0.0
    %5416 = vmatprep.subr.mxu0 0.0
    %5417 = vmatpush1.msra.mxu0 0.0
    %5418 = vmatprep.subr.mxu0 0.0
    %5419 = vmatpush1.msra.mxu0 0.0
    %5420 = vmatprep.subr.mxu0 0.0
    %5421 = vmatpush1.msra.mxu0 0.0
    %5422 = vmatprep.subr.mxu0 0.0
    %5423 = vmatpush1.msra.mxu0 0.0
    %5424 = vmatprep.subr.mxu0 0.0
    %5425 = vmatpush1.msra.mxu0 0.0
    %5426 = vmatprep.mubr.f32.mxu0 0.0
    %5427 = vmatmul.mubr.f32.gmra.mrb[0].mxu0 %v5357
    %v5428 = vpop.f32.mrb[0].mxu0
    %v5429 = vadd.f32 0.0, %v5428
    %v5430 = vpop.f32.mrb[0].mxu0
    %5431 = vmatprep.mubr.f32.mxu0 0.0
    %5432 = vmatmul.mubr.f32.gmra.mrb[0].mxu0 %v5360
    %v5433 = vpop.f32.mrb[0].mxu0
    %v5434 = vadd.f32 0.0, %v5433
    %v5435 = vpop.f32.mrb[0].mxu0
    %5436 = vdwg.mxu0
    %v5437 = vsub.f32 %v5429, %v180
    %v5438 = vsub.f32 %v5434, %v181
    %v5439 = vmul.f32 %v5437, %v183
    %v5440 = vmul.f32 %v5438, %v184
    %v5441 = vxor.u32 %v5439, 2147483648
    %v5442 = vxor.u32 %v5440, 2147483648
    %v5443 = vmul.f32 %v5441, 1.442695
    %v5444 = vpow.pop %v5443
    %v5445 = vmul.f32 %v5442, 1.442695
    %v5446 = vpow.pop %v5445
    %v5447 = vadd.f32 %v5444, 1.0
    %v5448 = vadd.f32 %v5446, 1.0
    %v5449 = vrcp.pop %v5447
    %v5450 = vmul.f32 1.0, %v5449
    %v5451 = vrcp.pop %v5448
    %v5452 = vmul.f32 1.0, %v5451
    %v5453 = vmul.f32 %v186, %v5450
    %v5454 = vmul.f32 %v187, %v5452
    %v5455 = vadd.f32 %v5453, %v5454
    %v5456 = vrot.slane %v5455, 4
    %v5457 = vadd.f32 %v5455, %v5456
    %v5458 = vrot.slane %v5457, 2
    %v5459 = vadd.f32 %v5457, %v5458
    %v5460 = vrot.slane %v5459, 1
    %v5461 = vadd.f32 %v5459, %v5460
    %v5462 = vmul.f32 %v188, %v5349
    %v5463 = vadd.f32 %v5462, %v851
    %v5464 = vadd.f32 %v5463, %v5461
    %v5465 = vadd.f32 %v851, %v5461
    %v5466 = vrcp.pop %v5465
    %v5467 = vmul.f32 %v5465, %v5466
    %v5468 = vsub.f32 2.0, %v5467
    %v5469 = vmul.f32 %v5466, %v5468
    %5471 = vrot.lane.b32.xlu0 %v5469, 64
    %v5472 = vpop.permute.xlu0 %5471
    %v5474 = vmul.f32 %v5464, %v5472
    %v5475 = vlaneseq
    %v5476 = vshrl.u32 %v5475, 7
    %v5477 = vsub.s32 0, %v5476
    %v5478 = vrot.slane %v5474, %v5477
    %v5479 = vmul.f32 %v5478, %v189
    %v5480 = vmul.f32 %v5478, %v190
    %v5482 = vsel %vm855, %v5479, 0
    %v5485 = vsel %vm855, %v5480, 0
    %5487 = vmatprep.subr.mxu0 0.0
    %5488 = vmatpush1.msra.mxu0 %v191
    %5489 = vmatprep.subr.mxu0 0.0
    %5490 = vmatpush1.msra.mxu0 %v192
    %5491 = vmatprep.subr.mxu0 0.0
    %5492 = vmatpush1.msra.mxu0 %v193
    %5493 = vmatprep.subr.mxu0 0.0
    %5494 = vmatpush1.msra.mxu0 %v194
    %5495 = vmatprep.subr.mxu0 0.0
    %5496 = vmatpush1.msra.mxu0 %v195
    %5497 = vmatprep.subr.mxu0 0.0
    %5498 = vmatpush1.msra.mxu0 %v196
    %5499 = vmatprep.subr.mxu0 0.0
    %5500 = vmatpush1.msra.mxu0 %v197
    %5501 = vmatprep.subr.mxu0 0.0
    %5502 = vmatpush1.msra.mxu0 %v198
    %5503 = vmatprep.subr.mxu0 0.0
    %5504 = vmatpush1.msra.mxu0 0.0
    %5505 = vmatprep.subr.mxu0 0.0
    %5506 = vmatpush1.msra.mxu0 0.0
    %5507 = vmatprep.subr.mxu0 0.0
    %5508 = vmatpush1.msra.mxu0 0.0
    %5509 = vmatprep.subr.mxu0 0.0
    %5510 = vmatpush1.msra.mxu0 0.0
    %5511 = vmatprep.subr.mxu0 0.0
    %5512 = vmatpush1.msra.mxu0 0.0
    %5513 = vmatprep.subr.mxu0 0.0
    %5514 = vmatpush1.msra.mxu0 0.0
    %5515 = vmatprep.subr.mxu0 0.0
    %5516 = vmatpush1.msra.mxu0 0.0
    %5517 = vmatprep.subr.mxu0 0.0
    %5518 = vmatpush1.msra.mxu0 0.0
    %5519 = vmatprep.subr.mxu0 0.0
    %5520 = vmatpush1.msra.mxu0 0.0
    %5521 = vmatprep.subr.mxu0 0.0
    %5522 = vmatpush1.msra.mxu0 0.0
    %5523 = vmatprep.subr.mxu0 0.0
    %5524 = vmatpush1.msra.mxu0 0.0
    %5525 = vmatprep.subr.mxu0 0.0
    %5526 = vmatpush1.msra.mxu0 0.0
    %5527 = vmatprep.subr.mxu0 0.0
    %5528 = vmatpush1.msra.mxu0 0.0
    %5529 = vmatprep.subr.mxu0 0.0
    %5530 = vmatpush1.msra.mxu0 0.0
    %5531 = vmatprep.subr.mxu0 0.0
    %5532 = vmatpush1.msra.mxu0 0.0
    %5533 = vmatprep.subr.mxu0 0.0
    %5534 = vmatpush1.msra.mxu0 0.0
    %5535 = vmatprep.subr.mxu0 0.0
    %5536 = vmatpush1.msra.mxu0 0.0
    %5537 = vmatprep.subr.mxu0 0.0
    %5538 = vmatpush1.msra.mxu0 0.0
    %5539 = vmatprep.subr.mxu0 0.0
    %5540 = vmatpush1.msra.mxu0 0.0
    %5541 = vmatprep.subr.mxu0 0.0
    %5542 = vmatpush1.msra.mxu0 0.0
    %5543 = vmatprep.subr.mxu0 0.0
    %5544 = vmatpush1.msra.mxu0 0.0
    %5545 = vmatprep.subr.mxu0 0.0
    %5546 = vmatpush1.msra.mxu0 0.0
    %5547 = vmatprep.subr.mxu0 0.0
    %5548 = vmatpush1.msra.mxu0 0.0
    %5549 = vmatprep.subr.mxu0 0.0
    %5550 = vmatpush1.msra.mxu0 0.0
    %5551 = vmatprep.mubr.f32.mxu0 0.0
    %5552 = vmatmul.mubr.f32.gmra.mrb[0].mxu0 %v5482
    %v5553 = vpop.f32.mrb[0].mxu0
    %v5554 = vadd.f32 0.0, %v5553
    %v5555 = vpop.f32.mrb[0].mxu0
    %5556 = vmatprep.mubr.f32.mxu0 0.0
    %5557 = vmatmul.mubr.f32.gmra.mrb[0].mxu0 %v5485
    %v5558 = vpop.f32.mrb[0].mxu0
    %v5559 = vadd.f32 0.0, %v5558
    %v5560 = vpop.f32.mrb[0].mxu0
    %5561 = vdwg.mxu0
    %v5562 = vsub.f32 %v5554, %v180
    %v5563 = vsub.f32 %v5559, %v181
    %v5564 = vmul.f32 %v5562, %v183
    %v5565 = vmul.f32 %v5563, %v184
    %v5566 = vxor.u32 %v5564, 2147483648
    %v5567 = vxor.u32 %v5565, 2147483648
    %v5568 = vmul.f32 %v5566, 1.442695
    %v5569 = vpow.pop %v5568
    %v5570 = vmul.f32 %v5567, 1.442695
    %v5571 = vpow.pop %v5570
    %v5572 = vadd.f32 %v5569, 1.0
    %v5573 = vadd.f32 %v5571, 1.0
    %v5574 = vrcp.pop %v5572
    %v5575 = vmul.f32 1.0, %v5574
    %v5576 = vrcp.pop %v5573
    %v5577 = vmul.f32 1.0, %v5576
    %v5578 = vmul.f32 %v186, %v5575
    %v5579 = vmul.f32 %v187, %v5577
    %v5580 = vadd.f32 %v5578, %v5579
    %v5581 = vrot.slane %v5580, 4
    %v5582 = vadd.f32 %v5580, %v5581
    %v5583 = vrot.slane %v5582, 2
    %v5584 = vadd.f32 %v5582, %v5583
    %v5585 = vrot.slane %v5584, 1
    %v5586 = vadd.f32 %v5584, %v5585
    %v5587 = vmul.f32 %v188, %v5474
    %v5588 = vadd.f32 %v5587, %v851
    %v5589 = vadd.f32 %v5588, %v5586
    %v5590 = vadd.f32 %v851, %v5586
    %v5591 = vrcp.pop %v5590
    %v5592 = vmul.f32 %v5590, %v5591
    %v5593 = vsub.f32 2.0, %v5592
    %v5594 = vmul.f32 %v5591, %v5593
    %5596 = vrot.lane.b32.xlu0 %v5594, 64
    %v5597 = vpop.permute.xlu0 %5596
    %v5599 = vmul.f32 %v5589, %v5597
    %v5600 = vlaneseq
    %v5601 = vshrl.u32 %v5600, 7
    %v5602 = vsub.s32 0, %v5601
    %v5603 = vrot.slane %v5599, %v5602
    %v5604 = vmul.f32 %v5603, %v189
    %v5605 = vmul.f32 %v5603, %v190
    %v5607 = vsel %vm855, %v5604, 0
    %v5610 = vsel %vm855, %v5605, 0
    %5612 = vmatprep.subr.mxu0 0.0
    %5613 = vmatpush1.msra.mxu0 %v191
    %5614 = vmatprep.subr.mxu0 0.0
    %5615 = vmatpush1.msra.mxu0 %v192
    %5616 = vmatprep.subr.mxu0 0.0
    %5617 = vmatpush1.msra.mxu0 %v193
    %5618 = vmatprep.subr.mxu0 0.0
    %5619 = vmatpush1.msra.mxu0 %v194
    %5620 = vmatprep.subr.mxu0 0.0
    %5621 = vmatpush1.msra.mxu0 %v195
    %5622 = vmatprep.subr.mxu0 0.0
    %5623 = vmatpush1.msra.mxu0 %v196
    %5624 = vmatprep.subr.mxu0 0.0
    %5625 = vmatpush1.msra.mxu0 %v197
    %5626 = vmatprep.subr.mxu0 0.0
    %5627 = vmatpush1.msra.mxu0 %v198
    %5628 = vmatprep.subr.mxu0 0.0
    %5629 = vmatpush1.msra.mxu0 0.0
    %5630 = vmatprep.subr.mxu0 0.0
    %5631 = vmatpush1.msra.mxu0 0.0
    %5632 = vmatprep.subr.mxu0 0.0
    %5633 = vmatpush1.msra.mxu0 0.0
    %5634 = vmatprep.subr.mxu0 0.0
    %5635 = vmatpush1.msra.mxu0 0.0
    %5636 = vmatprep.subr.mxu0 0.0
    %5637 = vmatpush1.msra.mxu0 0.0
    %5638 = vmatprep.subr.mxu0 0.0
    %5639 = vmatpush1.msra.mxu0 0.0
    %5640 = vmatprep.subr.mxu0 0.0
    %5641 = vmatpush1.msra.mxu0 0.0
    %5642 = vmatprep.subr.mxu0 0.0
    %5643 = vmatpush1.msra.mxu0 0.0
    %5644 = vmatprep.subr.mxu0 0.0
    %5645 = vmatpush1.msra.mxu0 0.0
    %5646 = vmatprep.subr.mxu0 0.0
    %5647 = vmatpush1.msra.mxu0 0.0
    %5648 = vmatprep.subr.mxu0 0.0
    %5649 = vmatpush1.msra.mxu0 0.0
    %5650 = vmatprep.subr.mxu0 0.0
    %5651 = vmatpush1.msra.mxu0 0.0
    %5652 = vmatprep.subr.mxu0 0.0
    %5653 = vmatpush1.msra.mxu0 0.0
    %5654 = vmatprep.subr.mxu0 0.0
    %5655 = vmatpush1.msra.mxu0 0.0
    %5656 = vmatprep.subr.mxu0 0.0
    %5657 = vmatpush1.msra.mxu0 0.0
    %5658 = vmatprep.subr.mxu0 0.0
    %5659 = vmatpush1.msra.mxu0 0.0
    %5660 = vmatprep.subr.mxu0 0.0
    %5661 = vmatpush1.msra.mxu0 0.0
    %5662 = vmatprep.subr.mxu0 0.0
    %5663 = vmatpush1.msra.mxu0 0.0
    %5664 = vmatprep.subr.mxu0 0.0
    %5665 = vmatpush1.msra.mxu0 0.0
    %5666 = vmatprep.subr.mxu0 0.0
    %5667 = vmatpush1.msra.mxu0 0.0
    %5668 = vmatprep.subr.mxu0 0.0
    %5669 = vmatpush1.msra.mxu0 0.0
    %5670 = vmatprep.subr.mxu0 0.0
    %5671 = vmatpush1.msra.mxu0 0.0
    %5672 = vmatprep.subr.mxu0 0.0
    %5673 = vmatpush1.msra.mxu0 0.0
    %5674 = vmatprep.subr.mxu0 0.0
    %5675 = vmatpush1.msra.mxu0 0.0
    %5676 = vmatprep.mubr.f32.mxu0 0.0
    %5677 = vmatmul.mubr.f32.gmra.mrb[0].mxu0 %v5607
    %v5678 = vpop.f32.mrb[0].mxu0
    %v5679 = vadd.f32 0.0, %v5678
    %v5680 = vpop.f32.mrb[0].mxu0
    %5681 = vmatprep.mubr.f32.mxu0 0.0
    %5682 = vmatmul.mubr.f32.gmra.mrb[0].mxu0 %v5610
    %v5683 = vpop.f32.mrb[0].mxu0
    %v5684 = vadd.f32 0.0, %v5683
    %v5685 = vpop.f32.mrb[0].mxu0
    %5686 = vdwg.mxu0
    %v5687 = vsub.f32 %v5679, %v180
    %v5688 = vsub.f32 %v5684, %v181
    %v5689 = vmul.f32 %v5687, %v183
    %v5690 = vmul.f32 %v5688, %v184
    %v5691 = vxor.u32 %v5689, 2147483648
    %v5692 = vxor.u32 %v5690, 2147483648
    %v5693 = vmul.f32 %v5691, 1.442695
    %v5694 = vpow.pop %v5693
    %v5695 = vmul.f32 %v5692, 1.442695
    %v5696 = vpow.pop %v5695
    %v5697 = vadd.f32 %v5694, 1.0
    %v5698 = vadd.f32 %v5696, 1.0
    %v5699 = vrcp.pop %v5697
    %v5700 = vmul.f32 1.0, %v5699
    %v5701 = vrcp.pop %v5698
    %v5702 = vmul.f32 1.0, %v5701
    %v5703 = vmul.f32 %v186, %v5700
    %v5704 = vmul.f32 %v187, %v5702
    %v5705 = vadd.f32 %v5703, %v5704
    %v5706 = vrot.slane %v5705, 4
    %v5707 = vadd.f32 %v5705, %v5706
    %v5708 = vrot.slane %v5707, 2
    %v5709 = vadd.f32 %v5707, %v5708
    %v5710 = vrot.slane %v5709, 1
    %v5711 = vadd.f32 %v5709, %v5710
    %v5712 = vmul.f32 %v188, %v5599
    %v5713 = vadd.f32 %v5712, %v851
    %v5714 = vadd.f32 %v5713, %v5711
    %v5715 = vadd.f32 %v851, %v5711
    %v5716 = vrcp.pop %v5715
    %v5717 = vmul.f32 %v5715, %v5716
    %v5718 = vsub.f32 2.0, %v5717
    %v5719 = vmul.f32 %v5716, %v5718
    %5721 = vrot.lane.b32.xlu0 %v5719, 64
    %v5722 = vpop.permute.xlu0 %5721
    %v5724 = vmul.f32 %v5714, %v5722
    %v5725 = vlaneseq
    %v5726 = vshrl.u32 %v5725, 7
    %v5727 = vsub.s32 0, %v5726
    %v5728 = vrot.slane %v5724, %v5727
    %v5729 = vmul.f32 %v5728, %v189
    %v5730 = vmul.f32 %v5728, %v190
    %v5732 = vsel %vm855, %v5729, 0
    %v5735 = vsel %vm855, %v5730, 0
    %5737 = vmatprep.subr.mxu0 0.0
    %5738 = vmatpush1.msra.mxu0 %v191
    %5739 = vmatprep.subr.mxu0 0.0
    %5740 = vmatpush1.msra.mxu0 %v192
    %5741 = vmatprep.subr.mxu0 0.0
    %5742 = vmatpush1.msra.mxu0 %v193
    %5743 = vmatprep.subr.mxu0 0.0
    %5744 = vmatpush1.msra.mxu0 %v194
    %5745 = vmatprep.subr.mxu0 0.0
    %5746 = vmatpush1.msra.mxu0 %v195
    %5747 = vmatprep.subr.mxu0 0.0
    %5748 = vmatpush1.msra.mxu0 %v196
    %5749 = vmatprep.subr.mxu0 0.0
    %5750 = vmatpush1.msra.mxu0 %v197
    %5751 = vmatprep.subr.mxu0 0.0
    %5752 = vmatpush1.msra.mxu0 %v198
    %5753 = vmatprep.subr.mxu0 0.0
    %5754 = vmatpush1.msra.mxu0 0.0
    %5755 = vmatprep.subr.mxu0 0.0
    %5756 = vmatpush1.msra.mxu0 0.0
    %5757 = vmatprep.subr.mxu0 0.0
    %5758 = vmatpush1.msra.mxu0 0.0
    %5759 = vmatprep.subr.mxu0 0.0
    %5760 = vmatpush1.msra.mxu0 0.0
    %5761 = vmatprep.subr.mxu0 0.0
    %5762 = vmatpush1.msra.mxu0 0.0
    %5763 = vmatprep.subr.mxu0 0.0
    %5764 = vmatpush1.msra.mxu0 0.0
    %5765 = vmatprep.subr.mxu0 0.0
    %5766 = vmatpush1.msra.mxu0 0.0
    %5767 = vmatprep.subr.mxu0 0.0
    %5768 = vmatpush1.msra.mxu0 0.0
    %5769 = vmatprep.subr.mxu0 0.0
    %5770 = vmatpush1.msra.mxu0 0.0
    %5771 = vmatprep.subr.mxu0 0.0
    %5772 = vmatpush1.msra.mxu0 0.0
    %5773 = vmatprep.subr.mxu0 0.0
    %5774 = vmatpush1.msra.mxu0 0.0
    %5775 = vmatprep.subr.mxu0 0.0
    %5776 = vmatpush1.msra.mxu0 0.0
    %5777 = vmatprep.subr.mxu0 0.0
    %5778 = vmatpush1.msra.mxu0 0.0
    %5779 = vmatprep.subr.mxu0 0.0
    %5780 = vmatpush1.msra.mxu0 0.0
    %5781 = vmatprep.subr.mxu0 0.0
    %5782 = vmatpush1.msra.mxu0 0.0
    %5783 = vmatprep.subr.mxu0 0.0
    %5784 = vmatpush1.msra.mxu0 0.0
    %5785 = vmatprep.subr.mxu0 0.0
    %5786 = vmatpush1.msra.mxu0 0.0
    %5787 = vmatprep.subr.mxu0 0.0
    %5788 = vmatpush1.msra.mxu0 0.0
    %5789 = vmatprep.subr.mxu0 0.0
    %5790 = vmatpush1.msra.mxu0 0.0
    %5791 = vmatprep.subr.mxu0 0.0
    %5792 = vmatpush1.msra.mxu0 0.0
    %5793 = vmatprep.subr.mxu0 0.0
    %5794 = vmatpush1.msra.mxu0 0.0
    %5795 = vmatprep.subr.mxu0 0.0
    %5796 = vmatpush1.msra.mxu0 0.0
    %5797 = vmatprep.subr.mxu0 0.0
    %5798 = vmatpush1.msra.mxu0 0.0
    %5799 = vmatprep.subr.mxu0 0.0
    %5800 = vmatpush1.msra.mxu0 0.0
    %5801 = vmatprep.mubr.f32.mxu0 0.0
    %5802 = vmatmul.mubr.f32.gmra.mrb[0].mxu0 %v5732
    %v5803 = vpop.f32.mrb[0].mxu0
    %v5804 = vadd.f32 0.0, %v5803
    %v5805 = vpop.f32.mrb[0].mxu0
    %5806 = vmatprep.mubr.f32.mxu0 0.0
    %5807 = vmatmul.mubr.f32.gmra.mrb[0].mxu0 %v5735
    %v5808 = vpop.f32.mrb[0].mxu0
    %v5809 = vadd.f32 0.0, %v5808
    %v5810 = vpop.f32.mrb[0].mxu0
    %5811 = vdwg.mxu0
    %v5812 = vsub.f32 %v5804, %v180
    %v5813 = vsub.f32 %v5809, %v181
    %v5814 = vmul.f32 %v5812, %v183
    %v5815 = vmul.f32 %v5813, %v184
    %v5816 = vxor.u32 %v5814, 2147483648
    %v5817 = vxor.u32 %v5815, 2147483648
    %v5818 = vmul.f32 %v5816, 1.442695
    %v5819 = vpow.pop %v5818
    %v5820 = vmul.f32 %v5817, 1.442695
    %v5821 = vpow.pop %v5820
    %v5822 = vadd.f32 %v5819, 1.0
    %v5823 = vadd.f32 %v5821, 1.0
    %v5824 = vrcp.pop %v5822
    %v5825 = vmul.f32 1.0, %v5824
    %v5826 = vrcp.pop %v5823
    %v5827 = vmul.f32 1.0, %v5826
    %v5828 = vmul.f32 %v186, %v5825
    %v5829 = vmul.f32 %v187, %v5827
    %v5830 = vadd.f32 %v5828, %v5829
    %v5831 = vrot.slane %v5830, 4
    %v5832 = vadd.f32 %v5830, %v5831
    %v5833 = vrot.slane %v5832, 2
    %v5834 = vadd.f32 %v5832, %v5833
    %v5835 = vrot.slane %v5834, 1
    %v5836 = vadd.f32 %v5834, %v5835
    %v5837 = vmul.f32 %v188, %v5724
    %v5838 = vadd.f32 %v5837, %v851
    %v5839 = vadd.f32 %v5838, %v5836
    %v5840 = vadd.f32 %v851, %v5836
    %v5841 = vrcp.pop %v5840
    %v5842 = vmul.f32 %v5840, %v5841
    %v5843 = vsub.f32 2.0, %v5842
    %v5844 = vmul.f32 %v5841, %v5843
    %5846 = vrot.lane.b32.xlu0 %v5844, 64
    %v5847 = vpop.permute.xlu0 %5846
    %v5849 = vmul.f32 %v5839, %v5847
    %v5850 = vlaneseq
    %v5851 = vshrl.u32 %v5850, 7
    %v5852 = vsub.s32 0, %v5851
    %v5853 = vrot.slane %v5849, %v5852
    %v5854 = vmul.f32 %v5853, %v189
    %v5855 = vmul.f32 %v5853, %v190
    %v5857 = vsel %vm855, %v5854, 0
    %v5860 = vsel %vm855, %v5855, 0
    %5862 = vmatprep.subr.mxu0 0.0
    %5863 = vmatpush1.msra.mxu0 %v191
    %5864 = vmatprep.subr.mxu0 0.0
    %5865 = vmatpush1.msra.mxu0 %v192
    %5866 = vmatprep.subr.mxu0 0.0
    %5867 = vmatpush1.msra.mxu0 %v193
    %5868 = vmatprep.subr.mxu0 0.0
    %5869 = vmatpush1.msra.mxu0 %v194
    %5870 = vmatprep.subr.mxu0 0.0
    %5871 = vmatpush1.msra.mxu0 %v195
    %5872 = vmatprep.subr.mxu0 0.0
    %5873 = vmatpush1.msra.mxu0 %v196
    %5874 = vmatprep.subr.mxu0 0.0
    %5875 = vmatpush1.msra.mxu0 %v197
    %5876 = vmatprep.subr.mxu0 0.0
    %5877 = vmatpush1.msra.mxu0 %v198
    %5878 = vmatprep.subr.mxu0 0.0
    %5879 = vmatpush1.msra.mxu0 0.0
    %5880 = vmatprep.subr.mxu0 0.0
    %5881 = vmatpush1.msra.mxu0 0.0
    %5882 = vmatprep.subr.mxu0 0.0
    %5883 = vmatpush1.msra.mxu0 0.0
    %5884 = vmatprep.subr.mxu0 0.0
    %5885 = vmatpush1.msra.mxu0 0.0
    %5886 = vmatprep.subr.mxu0 0.0
    %5887 = vmatpush1.msra.mxu0 0.0
    %5888 = vmatprep.subr.mxu0 0.0
    %5889 = vmatpush1.msra.mxu0 0.0
    %5890 = vmatprep.subr.mxu0 0.0
    %5891 = vmatpush1.msra.mxu0 0.0
    %5892 = vmatprep.subr.mxu0 0.0
    %5893 = vmatpush1.msra.mxu0 0.0
    %5894 = vmatprep.subr.mxu0 0.0
    %5895 = vmatpush1.msra.mxu0 0.0
    %5896 = vmatprep.subr.mxu0 0.0
    %5897 = vmatpush1.msra.mxu0 0.0
    %5898 = vmatprep.subr.mxu0 0.0
    %5899 = vmatpush1.msra.mxu0 0.0
    %5900 = vmatprep.subr.mxu0 0.0
    %5901 = vmatpush1.msra.mxu0 0.0
    %5902 = vmatprep.subr.mxu0 0.0
    %5903 = vmatpush1.msra.mxu0 0.0
    %5904 = vmatprep.subr.mxu0 0.0
    %5905 = vmatpush1.msra.mxu0 0.0
    %5906 = vmatprep.subr.mxu0 0.0
    %5907 = vmatpush1.msra.mxu0 0.0
    %5908 = vmatprep.subr.mxu0 0.0
    %5909 = vmatpush1.msra.mxu0 0.0
    %5910 = vmatprep.subr.mxu0 0.0
    %5911 = vmatpush1.msra.mxu0 0.0
    %5912 = vmatprep.subr.mxu0 0.0
    %5913 = vmatpush1.msra.mxu0 0.0
    %5914 = vmatprep.subr.mxu0 0.0
    %5915 = vmatpush1.msra.mxu0 0.0
    %5916 = vmatprep.subr.mxu0 0.0
    %5917 = vmatpush1.msra.mxu0 0.0
    %5918 = vmatprep.subr.mxu0 0.0
    %5919 = vmatpush1.msra.mxu0 0.0
    %5920 = vmatprep.subr.mxu0 0.0
    %5921 = vmatpush1.msra.mxu0 0.0
    %5922 = vmatprep.subr.mxu0 0.0
    %5923 = vmatpush1.msra.mxu0 0.0
    %5924 = vmatprep.subr.mxu0 0.0
    %5925 = vmatpush1.msra.mxu0 0.0
    %5926 = vmatprep.mubr.f32.mxu0 0.0
    %5927 = vmatmul.mubr.f32.gmra.mrb[0].mxu0 %v5857
    %v5928 = vpop.f32.mrb[0].mxu0
    %v5929 = vadd.f32 0.0, %v5928
    %v5930 = vpop.f32.mrb[0].mxu0
    %5931 = vmatprep.mubr.f32.mxu0 0.0
    %5932 = vmatmul.mubr.f32.gmra.mrb[0].mxu0 %v5860
    %v5933 = vpop.f32.mrb[0].mxu0
    %v5934 = vadd.f32 0.0, %v5933
    %v5935 = vpop.f32.mrb[0].mxu0
    %5936 = vdwg.mxu0
    %v5937 = vsub.f32 %v5929, %v180
    %v5938 = vsub.f32 %v5934, %v181
    %v5939 = vmul.f32 %v5937, %v183
    %v5940 = vmul.f32 %v5938, %v184
    %v5941 = vxor.u32 %v5939, 2147483648
    %v5942 = vxor.u32 %v5940, 2147483648
    %v5943 = vmul.f32 %v5941, 1.442695
    %v5944 = vpow.pop %v5943
    %v5945 = vmul.f32 %v5942, 1.442695
    %v5946 = vpow.pop %v5945
    %v5947 = vadd.f32 %v5944, 1.0
    %v5948 = vadd.f32 %v5946, 1.0
    %v5949 = vrcp.pop %v5947
    %v5950 = vmul.f32 1.0, %v5949
    %v5951 = vrcp.pop %v5948
    %v5952 = vmul.f32 1.0, %v5951
    %v5953 = vmul.f32 %v186, %v5950
    %v5954 = vmul.f32 %v187, %v5952
    %v5955 = vadd.f32 %v5953, %v5954
    %v5956 = vrot.slane %v5955, 4
    %v5957 = vadd.f32 %v5955, %v5956
    %v5958 = vrot.slane %v5957, 2
    %v5959 = vadd.f32 %v5957, %v5958
    %v5960 = vrot.slane %v5959, 1
    %v5961 = vadd.f32 %v5959, %v5960
    %v5962 = vmul.f32 %v188, %v5849
    %v5963 = vadd.f32 %v5962, %v851
    %v5964 = vadd.f32 %v5963, %v5961
    %v5965 = vadd.f32 %v851, %v5961
    %v5966 = vrcp.pop %v5965
    %v5967 = vmul.f32 %v5965, %v5966
    %v5968 = vsub.f32 2.0, %v5967
    %v5969 = vmul.f32 %v5966, %v5968
    %5971 = vrot.lane.b32.xlu0 %v5969, 64
    %v5972 = vpop.permute.xlu0 %5971
    %v5974 = vmul.f32 %v5964, %v5972
    %v5975 = vlaneseq
    %v5976 = vshrl.u32 %v5975, 7
    %v5977 = vsub.s32 0, %v5976
    %v5978 = vrot.slane %v5974, %v5977
    %v5979 = vmul.f32 %v5978, %v189
    %v5980 = vmul.f32 %v5978, %v190
    %v5982 = vsel %vm855, %v5979, 0
    %v5985 = vsel %vm855, %v5980, 0
    %5987 = vmatprep.subr.mxu0 0.0
    %5988 = vmatpush1.msra.mxu0 %v191
    %5989 = vmatprep.subr.mxu0 0.0
    %5990 = vmatpush1.msra.mxu0 %v192
    %5991 = vmatprep.subr.mxu0 0.0
    %5992 = vmatpush1.msra.mxu0 %v193
    %5993 = vmatprep.subr.mxu0 0.0
    %5994 = vmatpush1.msra.mxu0 %v194
    %5995 = vmatprep.subr.mxu0 0.0
    %5996 = vmatpush1.msra.mxu0 %v195
    %5997 = vmatprep.subr.mxu0 0.0
    %5998 = vmatpush1.msra.mxu0 %v196
    %5999 = vmatprep.subr.mxu0 0.0
    %6000 = vmatpush1.msra.mxu0 %v197
    %6001 = vmatprep.subr.mxu0 0.0
    %6002 = vmatpush1.msra.mxu0 %v198
    %6003 = vmatprep.subr.mxu0 0.0
    %6004 = vmatpush1.msra.mxu0 0.0
    %6005 = vmatprep.subr.mxu0 0.0
    %6006 = vmatpush1.msra.mxu0 0.0
    %6007 = vmatprep.subr.mxu0 0.0
    %6008 = vmatpush1.msra.mxu0 0.0
    %6009 = vmatprep.subr.mxu0 0.0
    %6010 = vmatpush1.msra.mxu0 0.0
    %6011 = vmatprep.subr.mxu0 0.0
    %6012 = vmatpush1.msra.mxu0 0.0
    %6013 = vmatprep.subr.mxu0 0.0
    %6014 = vmatpush1.msra.mxu0 0.0
    %6015 = vmatprep.subr.mxu0 0.0
    %6016 = vmatpush1.msra.mxu0 0.0
    %6017 = vmatprep.subr.mxu0 0.0
    %6018 = vmatpush1.msra.mxu0 0.0
    %6019 = vmatprep.subr.mxu0 0.0
    %6020 = vmatpush1.msra.mxu0 0.0
    %6021 = vmatprep.subr.mxu0 0.0
    %6022 = vmatpush1.msra.mxu0 0.0
    %6023 = vmatprep.subr.mxu0 0.0
    %6024 = vmatpush1.msra.mxu0 0.0
    %6025 = vmatprep.subr.mxu0 0.0
    %6026 = vmatpush1.msra.mxu0 0.0
    %6027 = vmatprep.subr.mxu0 0.0
    %6028 = vmatpush1.msra.mxu0 0.0
    %6029 = vmatprep.subr.mxu0 0.0
    %6030 = vmatpush1.msra.mxu0 0.0
    %6031 = vmatprep.subr.mxu0 0.0
    %6032 = vmatpush1.msra.mxu0 0.0
    %6033 = vmatprep.subr.mxu0 0.0
    %6034 = vmatpush1.msra.mxu0 0.0
    %6035 = vmatprep.subr.mxu0 0.0
    %6036 = vmatpush1.msra.mxu0 0.0
    %6037 = vmatprep.subr.mxu0 0.0
    %6038 = vmatpush1.msra.mxu0 0.0
    %6039 = vmatprep.subr.mxu0 0.0
    %6040 = vmatpush1.msra.mxu0 0.0
    %6041 = vmatprep.subr.mxu0 0.0
    %6042 = vmatpush1.msra.mxu0 0.0
    %6043 = vmatprep.subr.mxu0 0.0
    %6044 = vmatpush1.msra.mxu0 0.0
    %6045 = vmatprep.subr.mxu0 0.0
    %6046 = vmatpush1.msra.mxu0 0.0
    %6047 = vmatprep.subr.mxu0 0.0
    %6048 = vmatpush1.msra.mxu0 0.0
    %6049 = vmatprep.subr.mxu0 0.0
    %6050 = vmatpush1.msra.mxu0 0.0
    %6051 = vmatprep.mubr.f32.mxu0 0.0
    %6052 = vmatmul.mubr.f32.gmra.mrb[0].mxu0 %v5982
    %v6053 = vpop.f32.mrb[0].mxu0
    %v6054 = vadd.f32 0.0, %v6053
    %v6055 = vpop.f32.mrb[0].mxu0
    %6056 = vmatprep.mubr.f32.mxu0 0.0
    %6057 = vmatmul.mubr.f32.gmra.mrb[0].mxu0 %v5985
    %v6058 = vpop.f32.mrb[0].mxu0
    %v6059 = vadd.f32 0.0, %v6058
    %v6060 = vpop.f32.mrb[0].mxu0
    %6061 = vdwg.mxu0
    %v6062 = vsub.f32 %v6054, %v180
    %v6063 = vsub.f32 %v6059, %v181
    %v6064 = vmul.f32 %v6062, %v183
    %v6065 = vmul.f32 %v6063, %v184
    %v6066 = vxor.u32 %v6064, 2147483648
    %v6067 = vxor.u32 %v6065, 2147483648
    %v6068 = vmul.f32 %v6066, 1.442695
    %v6069 = vpow.pop %v6068
    %v6070 = vmul.f32 %v6067, 1.442695
    %v6071 = vpow.pop %v6070
    %v6072 = vadd.f32 %v6069, 1.0
    %v6073 = vadd.f32 %v6071, 1.0
    %v6074 = vrcp.pop %v6072
    %v6075 = vmul.f32 1.0, %v6074
    %v6076 = vrcp.pop %v6073
    %v6077 = vmul.f32 1.0, %v6076
    %v6078 = vmul.f32 %v186, %v6075
    %v6079 = vmul.f32 %v187, %v6077
    %v6080 = vadd.f32 %v6078, %v6079
    %v6081 = vrot.slane %v6080, 4
    %v6082 = vadd.f32 %v6080, %v6081
    %v6083 = vrot.slane %v6082, 2
    %v6084 = vadd.f32 %v6082, %v6083
    %v6085 = vrot.slane %v6084, 1
    %v6086 = vadd.f32 %v6084, %v6085
    %v6087 = vmul.f32 %v188, %v5974
    %v6088 = vadd.f32 %v6087, %v851
    %v6089 = vadd.f32 %v6088, %v6086
    %v6090 = vadd.f32 %v851, %v6086
    %v6091 = vrcp.pop %v6090
    %v6092 = vmul.f32 %v6090, %v6091
    %v6093 = vsub.f32 2.0, %v6092
    %v6094 = vmul.f32 %v6091, %v6093
    %6096 = vrot.lane.b32.xlu0 %v6094, 64
    %v6097 = vpop.permute.xlu0 %6096
    %v6099 = vmul.f32 %v6089, %v6097
    %v6100 = vlaneseq
    %v6101 = vshrl.u32 %v6100, 7
    %v6102 = vsub.s32 0, %v6101
    %v6103 = vrot.slane %v6099, %v6102
    %v6104 = vmul.f32 %v6103, %v189
    %v6105 = vmul.f32 %v6103, %v190
    %v6107 = vsel %vm855, %v6104, 0
    %v6110 = vsel %vm855, %v6105, 0
    %6112 = vmatprep.subr.mxu0 0.0
    %6113 = vmatpush1.msra.mxu0 %v191
    %6114 = vmatprep.subr.mxu0 0.0
    %6115 = vmatpush1.msra.mxu0 %v192
    %6116 = vmatprep.subr.mxu0 0.0
    %6117 = vmatpush1.msra.mxu0 %v193
    %6118 = vmatprep.subr.mxu0 0.0
    %6119 = vmatpush1.msra.mxu0 %v194
    %6120 = vmatprep.subr.mxu0 0.0
    %6121 = vmatpush1.msra.mxu0 %v195
    %6122 = vmatprep.subr.mxu0 0.0
    %6123 = vmatpush1.msra.mxu0 %v196
    %6124 = vmatprep.subr.mxu0 0.0
    %6125 = vmatpush1.msra.mxu0 %v197
    %6126 = vmatprep.subr.mxu0 0.0
    %6127 = vmatpush1.msra.mxu0 %v198
    %6128 = vmatprep.subr.mxu0 0.0
    %6129 = vmatpush1.msra.mxu0 0.0
    %6130 = vmatprep.subr.mxu0 0.0
    %6131 = vmatpush1.msra.mxu0 0.0
    %6132 = vmatprep.subr.mxu0 0.0
    %6133 = vmatpush1.msra.mxu0 0.0
    %6134 = vmatprep.subr.mxu0 0.0
    %6135 = vmatpush1.msra.mxu0 0.0
    %6136 = vmatprep.subr.mxu0 0.0
    %6137 = vmatpush1.msra.mxu0 0.0
    %6138 = vmatprep.subr.mxu0 0.0
    %6139 = vmatpush1.msra.mxu0 0.0
    %6140 = vmatprep.subr.mxu0 0.0
    %6141 = vmatpush1.msra.mxu0 0.0
    %6142 = vmatprep.subr.mxu0 0.0
    %6143 = vmatpush1.msra.mxu0 0.0
    %6144 = vmatprep.subr.mxu0 0.0
    %6145 = vmatpush1.msra.mxu0 0.0
    %6146 = vmatprep.subr.mxu0 0.0
    %6147 = vmatpush1.msra.mxu0 0.0
    %6148 = vmatprep.subr.mxu0 0.0
    %6149 = vmatpush1.msra.mxu0 0.0
    %6150 = vmatprep.subr.mxu0 0.0
    %6151 = vmatpush1.msra.mxu0 0.0
    %6152 = vmatprep.subr.mxu0 0.0
    %6153 = vmatpush1.msra.mxu0 0.0
    %6154 = vmatprep.subr.mxu0 0.0
    %6155 = vmatpush1.msra.mxu0 0.0
    %6156 = vmatprep.subr.mxu0 0.0
    %6157 = vmatpush1.msra.mxu0 0.0
    %6158 = vmatprep.subr.mxu0 0.0
    %6159 = vmatpush1.msra.mxu0 0.0
    %6160 = vmatprep.subr.mxu0 0.0
    %6161 = vmatpush1.msra.mxu0 0.0
    %6162 = vmatprep.subr.mxu0 0.0
    %6163 = vmatpush1.msra.mxu0 0.0
    %6164 = vmatprep.subr.mxu0 0.0
    %6165 = vmatpush1.msra.mxu0 0.0
    %6166 = vmatprep.subr.mxu0 0.0
    %6167 = vmatpush1.msra.mxu0 0.0
    %6168 = vmatprep.subr.mxu0 0.0
    %6169 = vmatpush1.msra.mxu0 0.0
    %6170 = vmatprep.subr.mxu0 0.0
    %6171 = vmatpush1.msra.mxu0 0.0
    %6172 = vmatprep.subr.mxu0 0.0
    %6173 = vmatpush1.msra.mxu0 0.0
    %6174 = vmatprep.subr.mxu0 0.0
    %6175 = vmatpush1.msra.mxu0 0.0
    %6176 = vmatprep.mubr.f32.mxu0 0.0
    %6177 = vmatmul.mubr.f32.gmra.mrb[0].mxu0 %v6107
    %v6178 = vpop.f32.mrb[0].mxu0
    %v6179 = vadd.f32 0.0, %v6178
    %v6180 = vpop.f32.mrb[0].mxu0
    %6181 = vmatprep.mubr.f32.mxu0 0.0
    %6182 = vmatmul.mubr.f32.gmra.mrb[0].mxu0 %v6110
    %v6183 = vpop.f32.mrb[0].mxu0
    %v6184 = vadd.f32 0.0, %v6183
    %v6185 = vpop.f32.mrb[0].mxu0
    %6186 = vdwg.mxu0
    %v6187 = vsub.f32 %v6179, %v180
    %v6188 = vsub.f32 %v6184, %v181
    %v6189 = vmul.f32 %v6187, %v183
    %v6190 = vmul.f32 %v6188, %v184
    %v6191 = vxor.u32 %v6189, 2147483648
    %v6192 = vxor.u32 %v6190, 2147483648
    %v6193 = vmul.f32 %v6191, 1.442695
    %v6194 = vpow.pop %v6193
    %v6195 = vmul.f32 %v6192, 1.442695
    %v6196 = vpow.pop %v6195
    %v6197 = vadd.f32 %v6194, 1.0
    %v6198 = vadd.f32 %v6196, 1.0
    %v6199 = vrcp.pop %v6197
    %v6200 = vmul.f32 1.0, %v6199
    %v6201 = vrcp.pop %v6198
    %v6202 = vmul.f32 1.0, %v6201
    %v6203 = vmul.f32 %v186, %v6200
    %v6204 = vmul.f32 %v187, %v6202
    %v6205 = vadd.f32 %v6203, %v6204
    %v6206 = vrot.slane %v6205, 4
    %v6207 = vadd.f32 %v6205, %v6206
    %v6208 = vrot.slane %v6207, 2
    %v6209 = vadd.f32 %v6207, %v6208
    %v6210 = vrot.slane %v6209, 1
    %v6211 = vadd.f32 %v6209, %v6210
    %v6212 = vmul.f32 %v188, %v6099
    %v6213 = vadd.f32 %v6212, %v852
    %v6214 = vadd.f32 %v6213, %v6211
    %v6215 = vadd.f32 %v852, %v6211
    %v6216 = vrcp.pop %v6215
    %v6217 = vmul.f32 %v6215, %v6216
    %v6218 = vsub.f32 2.0, %v6217
    %v6219 = vmul.f32 %v6216, %v6218
    %6221 = vrot.lane.b32.xlu0 %v6219, 64
    %v6222 = vpop.permute.xlu0 %6221
    %v6224 = vmul.f32 %v6214, %v6222
    %v6225 = vlaneseq
    %v6226 = vshrl.u32 %v6225, 7
    %v6227 = vsub.s32 0, %v6226
    %v6228 = vrot.slane %v6224, %v6227
    %v6229 = vmul.f32 %v6228, %v189
    %v6230 = vmul.f32 %v6228, %v190
    %v6232 = vsel %vm855, %v6229, 0
    %v6235 = vsel %vm855, %v6230, 0
    %6237 = vmatprep.subr.mxu0 0.0
    %6238 = vmatpush1.msra.mxu0 %v191
    %6239 = vmatprep.subr.mxu0 0.0
    %6240 = vmatpush1.msra.mxu0 %v192
    %6241 = vmatprep.subr.mxu0 0.0
    %6242 = vmatpush1.msra.mxu0 %v193
    %6243 = vmatprep.subr.mxu0 0.0
    %6244 = vmatpush1.msra.mxu0 %v194
    %6245 = vmatprep.subr.mxu0 0.0
    %6246 = vmatpush1.msra.mxu0 %v195
    %6247 = vmatprep.subr.mxu0 0.0
    %6248 = vmatpush1.msra.mxu0 %v196
    %6249 = vmatprep.subr.mxu0 0.0
    %6250 = vmatpush1.msra.mxu0 %v197
    %6251 = vmatprep.subr.mxu0 0.0
    %6252 = vmatpush1.msra.mxu0 %v198
    %6253 = vmatprep.subr.mxu0 0.0
    %6254 = vmatpush1.msra.mxu0 0.0
    %6255 = vmatprep.subr.mxu0 0.0
    %6256 = vmatpush1.msra.mxu0 0.0
    %6257 = vmatprep.subr.mxu0 0.0
    %6258 = vmatpush1.msra.mxu0 0.0
    %6259 = vmatprep.subr.mxu0 0.0
    %6260 = vmatpush1.msra.mxu0 0.0
    %6261 = vmatprep.subr.mxu0 0.0
    %6262 = vmatpush1.msra.mxu0 0.0
    %6263 = vmatprep.subr.mxu0 0.0
    %6264 = vmatpush1.msra.mxu0 0.0
    %6265 = vmatprep.subr.mxu0 0.0
    %6266 = vmatpush1.msra.mxu0 0.0
    %6267 = vmatprep.subr.mxu0 0.0
    %6268 = vmatpush1.msra.mxu0 0.0
    %6269 = vmatprep.subr.mxu0 0.0
    %6270 = vmatpush1.msra.mxu0 0.0
    %6271 = vmatprep.subr.mxu0 0.0
    %6272 = vmatpush1.msra.mxu0 0.0
    %6273 = vmatprep.subr.mxu0 0.0
    %6274 = vmatpush1.msra.mxu0 0.0
    %6275 = vmatprep.subr.mxu0 0.0
    %6276 = vmatpush1.msra.mxu0 0.0
    %6277 = vmatprep.subr.mxu0 0.0
    %6278 = vmatpush1.msra.mxu0 0.0
    %6279 = vmatprep.subr.mxu0 0.0
    %6280 = vmatpush1.msra.mxu0 0.0
    %6281 = vmatprep.subr.mxu0 0.0
    %6282 = vmatpush1.msra.mxu0 0.0
    %6283 = vmatprep.subr.mxu0 0.0
    %6284 = vmatpush1.msra.mxu0 0.0
    %6285 = vmatprep.subr.mxu0 0.0
    %6286 = vmatpush1.msra.mxu0 0.0
    %6287 = vmatprep.subr.mxu0 0.0
    %6288 = vmatpush1.msra.mxu0 0.0
    %6289 = vmatprep.subr.mxu0 0.0
    %6290 = vmatpush1.msra.mxu0 0.0
    %6291 = vmatprep.subr.mxu0 0.0
    %6292 = vmatpush1.msra.mxu0 0.0
    %6293 = vmatprep.subr.mxu0 0.0
    %6294 = vmatpush1.msra.mxu0 0.0
    %6295 = vmatprep.subr.mxu0 0.0
    %6296 = vmatpush1.msra.mxu0 0.0
    %6297 = vmatprep.subr.mxu0 0.0
    %6298 = vmatpush1.msra.mxu0 0.0
    %6299 = vmatprep.subr.mxu0 0.0
    %6300 = vmatpush1.msra.mxu0 0.0
    %6301 = vmatprep.mubr.f32.mxu0 0.0
    %6302 = vmatmul.mubr.f32.gmra.mrb[0].mxu0 %v6232
    %v6303 = vpop.f32.mrb[0].mxu0
    %v6304 = vadd.f32 0.0, %v6303
    %v6305 = vpop.f32.mrb[0].mxu0
    %6306 = vmatprep.mubr.f32.mxu0 0.0
    %6307 = vmatmul.mubr.f32.gmra.mrb[0].mxu0 %v6235
    %v6308 = vpop.f32.mrb[0].mxu0
    %v6309 = vadd.f32 0.0, %v6308
    %v6310 = vpop.f32.mrb[0].mxu0
    %6311 = vdwg.mxu0
    %v6312 = vsub.f32 %v6304, %v180
    %v6313 = vsub.f32 %v6309, %v181
    %v6314 = vmul.f32 %v6312, %v183
    %v6315 = vmul.f32 %v6313, %v184
    %v6316 = vxor.u32 %v6314, 2147483648
    %v6317 = vxor.u32 %v6315, 2147483648
    %v6318 = vmul.f32 %v6316, 1.442695
    %v6319 = vpow.pop %v6318
    %v6320 = vmul.f32 %v6317, 1.442695
    %v6321 = vpow.pop %v6320
    %v6322 = vadd.f32 %v6319, 1.0
    %v6323 = vadd.f32 %v6321, 1.0
    %v6324 = vrcp.pop %v6322
    %v6325 = vmul.f32 1.0, %v6324
    %v6326 = vrcp.pop %v6323
    %v6327 = vmul.f32 1.0, %v6326
    %v6328 = vmul.f32 %v186, %v6325
    %v6329 = vmul.f32 %v187, %v6327
    %v6330 = vadd.f32 %v6328, %v6329
    %v6331 = vrot.slane %v6330, 4
    %v6332 = vadd.f32 %v6330, %v6331
    %v6333 = vrot.slane %v6332, 2
    %v6334 = vadd.f32 %v6332, %v6333
    %v6335 = vrot.slane %v6334, 1
    %v6336 = vadd.f32 %v6334, %v6335
    %v6337 = vmul.f32 %v188, %v6224
    %v6338 = vadd.f32 %v6337, %v852
    %v6339 = vadd.f32 %v6338, %v6336
    %v6340 = vadd.f32 %v852, %v6336
    %v6341 = vrcp.pop %v6340
    %v6342 = vmul.f32 %v6340, %v6341
    %v6343 = vsub.f32 2.0, %v6342
    %v6344 = vmul.f32 %v6341, %v6343
    %6346 = vrot.lane.b32.xlu0 %v6344, 64
    %v6347 = vpop.permute.xlu0 %6346
    %v6349 = vmul.f32 %v6339, %v6347
    %v6350 = vlaneseq
    %v6351 = vshrl.u32 %v6350, 7
    %v6352 = vsub.s32 0, %v6351
    %v6353 = vrot.slane %v6349, %v6352
    %v6354 = vmul.f32 %v6353, %v189
    %v6355 = vmul.f32 %v6353, %v190
    %v6357 = vsel %vm855, %v6354, 0
    %v6360 = vsel %vm855, %v6355, 0
    %6362 = vmatprep.subr.mxu0 0.0
    %6363 = vmatpush1.msra.mxu0 %v191
    %6364 = vmatprep.subr.mxu0 0.0
    %6365 = vmatpush1.msra.mxu0 %v192
    %6366 = vmatprep.subr.mxu0 0.0
    %6367 = vmatpush1.msra.mxu0 %v193
    %6368 = vmatprep.subr.mxu0 0.0
    %6369 = vmatpush1.msra.mxu0 %v194
    %6370 = vmatprep.subr.mxu0 0.0
    %6371 = vmatpush1.msra.mxu0 %v195
    %6372 = vmatprep.subr.mxu0 0.0
    %6373 = vmatpush1.msra.mxu0 %v196
    %6374 = vmatprep.subr.mxu0 0.0
    %6375 = vmatpush1.msra.mxu0 %v197
    %6376 = vmatprep.subr.mxu0 0.0
    %6377 = vmatpush1.msra.mxu0 %v198
    %6378 = vmatprep.subr.mxu0 0.0
    %6379 = vmatpush1.msra.mxu0 0.0
    %6380 = vmatprep.subr.mxu0 0.0
    %6381 = vmatpush1.msra.mxu0 0.0
    %6382 = vmatprep.subr.mxu0 0.0
    %6383 = vmatpush1.msra.mxu0 0.0
    %6384 = vmatprep.subr.mxu0 0.0
    %6385 = vmatpush1.msra.mxu0 0.0
    %6386 = vmatprep.subr.mxu0 0.0
    %6387 = vmatpush1.msra.mxu0 0.0
    %6388 = vmatprep.subr.mxu0 0.0
    %6389 = vmatpush1.msra.mxu0 0.0
    %6390 = vmatprep.subr.mxu0 0.0
    %6391 = vmatpush1.msra.mxu0 0.0
    %6392 = vmatprep.subr.mxu0 0.0
    %6393 = vmatpush1.msra.mxu0 0.0
    %6394 = vmatprep.subr.mxu0 0.0
    %6395 = vmatpush1.msra.mxu0 0.0
    %6396 = vmatprep.subr.mxu0 0.0
    %6397 = vmatpush1.msra.mxu0 0.0
    %6398 = vmatprep.subr.mxu0 0.0
    %6399 = vmatpush1.msra.mxu0 0.0
    %6400 = vmatprep.subr.mxu0 0.0
    %6401 = vmatpush1.msra.mxu0 0.0
    %6402 = vmatprep.subr.mxu0 0.0
    %6403 = vmatpush1.msra.mxu0 0.0
    %6404 = vmatprep.subr.mxu0 0.0
    %6405 = vmatpush1.msra.mxu0 0.0
    %6406 = vmatprep.subr.mxu0 0.0
    %6407 = vmatpush1.msra.mxu0 0.0
    %6408 = vmatprep.subr.mxu0 0.0
    %6409 = vmatpush1.msra.mxu0 0.0
    %6410 = vmatprep.subr.mxu0 0.0
    %6411 = vmatpush1.msra.mxu0 0.0
    %6412 = vmatprep.subr.mxu0 0.0
    %6413 = vmatpush1.msra.mxu0 0.0
    %6414 = vmatprep.subr.mxu0 0.0
    %6415 = vmatpush1.msra.mxu0 0.0
    %6416 = vmatprep.subr.mxu0 0.0
    %6417 = vmatpush1.msra.mxu0 0.0
    %6418 = vmatprep.subr.mxu0 0.0
    %6419 = vmatpush1.msra.mxu0 0.0
    %6420 = vmatprep.subr.mxu0 0.0
    %6421 = vmatpush1.msra.mxu0 0.0
    %6422 = vmatprep.subr.mxu0 0.0
    %6423 = vmatpush1.msra.mxu0 0.0
    %6424 = vmatprep.subr.mxu0 0.0
    %6425 = vmatpush1.msra.mxu0 0.0
    %6426 = vmatprep.mubr.f32.mxu0 0.0
    %6427 = vmatmul.mubr.f32.gmra.mrb[0].mxu0 %v6357
    %v6428 = vpop.f32.mrb[0].mxu0
    %v6429 = vadd.f32 0.0, %v6428
    %v6430 = vpop.f32.mrb[0].mxu0
    %6431 = vmatprep.mubr.f32.mxu0 0.0
    %6432 = vmatmul.mubr.f32.gmra.mrb[0].mxu0 %v6360
    %v6433 = vpop.f32.mrb[0].mxu0
    %v6434 = vadd.f32 0.0, %v6433
    %v6435 = vpop.f32.mrb[0].mxu0
    %6436 = vdwg.mxu0
    %v6437 = vsub.f32 %v6429, %v180
    %v6438 = vsub.f32 %v6434, %v181
    %v6439 = vmul.f32 %v6437, %v183
    %v6440 = vmul.f32 %v6438, %v184
    %v6441 = vxor.u32 %v6439, 2147483648
    %v6442 = vxor.u32 %v6440, 2147483648
    %v6443 = vmul.f32 %v6441, 1.442695
    %v6444 = vpow.pop %v6443
    %v6445 = vmul.f32 %v6442, 1.442695
    %v6446 = vpow.pop %v6445
    %v6447 = vadd.f32 %v6444, 1.0
    %v6448 = vadd.f32 %v6446, 1.0
    %v6449 = vrcp.pop %v6447
    %v6450 = vmul.f32 1.0, %v6449
    %v6451 = vrcp.pop %v6448
    %v6452 = vmul.f32 1.0, %v6451
    %v6453 = vmul.f32 %v186, %v6450
    %v6454 = vmul.f32 %v187, %v6452
    %v6455 = vadd.f32 %v6453, %v6454
    %v6456 = vrot.slane %v6455, 4
    %v6457 = vadd.f32 %v6455, %v6456
    %v6458 = vrot.slane %v6457, 2
    %v6459 = vadd.f32 %v6457, %v6458
    %v6460 = vrot.slane %v6459, 1
    %v6461 = vadd.f32 %v6459, %v6460
    %v6462 = vmul.f32 %v188, %v6349
    %v6463 = vadd.f32 %v6462, %v852
    %v6464 = vadd.f32 %v6463, %v6461
    %v6465 = vadd.f32 %v852, %v6461
    %v6466 = vrcp.pop %v6465
    %v6467 = vmul.f32 %v6465, %v6466
    %v6468 = vsub.f32 2.0, %v6467
    %v6469 = vmul.f32 %v6466, %v6468
    %6471 = vrot.lane.b32.xlu0 %v6469, 64
    %v6472 = vpop.permute.xlu0 %6471
    %v6474 = vmul.f32 %v6464, %v6472
    %v6475 = vlaneseq
    %v6476 = vshrl.u32 %v6475, 7
    %v6477 = vsub.s32 0, %v6476
    %v6478 = vrot.slane %v6474, %v6477
    %v6479 = vmul.f32 %v6478, %v189
    %v6480 = vmul.f32 %v6478, %v190
    %v6482 = vsel %vm855, %v6479, 0
    %v6485 = vsel %vm855, %v6480, 0
    %6487 = vmatprep.subr.mxu0 0.0
    %6488 = vmatpush1.msra.mxu0 %v191
    %6489 = vmatprep.subr.mxu0 0.0
    %6490 = vmatpush1.msra.mxu0 %v192
    %6491 = vmatprep.subr.mxu0 0.0
    %6492 = vmatpush1.msra.mxu0 %v193
    %6493 = vmatprep.subr.mxu0 0.0
    %6494 = vmatpush1.msra.mxu0 %v194
    %6495 = vmatprep.subr.mxu0 0.0
    %6496 = vmatpush1.msra.mxu0 %v195
    %6497 = vmatprep.subr.mxu0 0.0
    %6498 = vmatpush1.msra.mxu0 %v196
    %6499 = vmatprep.subr.mxu0 0.0
    %6500 = vmatpush1.msra.mxu0 %v197
    %6501 = vmatprep.subr.mxu0 0.0
    %6502 = vmatpush1.msra.mxu0 %v198
    %6503 = vmatprep.subr.mxu0 0.0
    %6504 = vmatpush1.msra.mxu0 0.0
    %6505 = vmatprep.subr.mxu0 0.0
    %6506 = vmatpush1.msra.mxu0 0.0
    %6507 = vmatprep.subr.mxu0 0.0
    %6508 = vmatpush1.msra.mxu0 0.0
    %6509 = vmatprep.subr.mxu0 0.0
    %6510 = vmatpush1.msra.mxu0 0.0
    %6511 = vmatprep.subr.mxu0 0.0
    %6512 = vmatpush1.msra.mxu0 0.0
    %6513 = vmatprep.subr.mxu0 0.0
    %6514 = vmatpush1.msra.mxu0 0.0
    %6515 = vmatprep.subr.mxu0 0.0
    %6516 = vmatpush1.msra.mxu0 0.0
    %6517 = vmatprep.subr.mxu0 0.0
    %6518 = vmatpush1.msra.mxu0 0.0
    %6519 = vmatprep.subr.mxu0 0.0
    %6520 = vmatpush1.msra.mxu0 0.0
    %6521 = vmatprep.subr.mxu0 0.0
    %6522 = vmatpush1.msra.mxu0 0.0
    %6523 = vmatprep.subr.mxu0 0.0
    %6524 = vmatpush1.msra.mxu0 0.0
    %6525 = vmatprep.subr.mxu0 0.0
    %6526 = vmatpush1.msra.mxu0 0.0
    %6527 = vmatprep.subr.mxu0 0.0
    %6528 = vmatpush1.msra.mxu0 0.0
    %6529 = vmatprep.subr.mxu0 0.0
    %6530 = vmatpush1.msra.mxu0 0.0
    %6531 = vmatprep.subr.mxu0 0.0
    %6532 = vmatpush1.msra.mxu0 0.0
    %6533 = vmatprep.subr.mxu0 0.0
    %6534 = vmatpush1.msra.mxu0 0.0
    %6535 = vmatprep.subr.mxu0 0.0
    %6536 = vmatpush1.msra.mxu0 0.0
    %6537 = vmatprep.subr.mxu0 0.0
    %6538 = vmatpush1.msra.mxu0 0.0
    %6539 = vmatprep.subr.mxu0 0.0
    %6540 = vmatpush1.msra.mxu0 0.0
    %6541 = vmatprep.subr.mxu0 0.0
    %6542 = vmatpush1.msra.mxu0 0.0
    %6543 = vmatprep.subr.mxu0 0.0
    %6544 = vmatpush1.msra.mxu0 0.0
    %6545 = vmatprep.subr.mxu0 0.0
    %6546 = vmatpush1.msra.mxu0 0.0
    %6547 = vmatprep.subr.mxu0 0.0
    %6548 = vmatpush1.msra.mxu0 0.0
    %6549 = vmatprep.subr.mxu0 0.0
    %6550 = vmatpush1.msra.mxu0 0.0
    %6551 = vmatprep.mubr.f32.mxu0 0.0
    %6552 = vmatmul.mubr.f32.gmra.mrb[0].mxu0 %v6482
    %v6553 = vpop.f32.mrb[0].mxu0
    %v6554 = vadd.f32 0.0, %v6553
    %v6555 = vpop.f32.mrb[0].mxu0
    %6556 = vmatprep.mubr.f32.mxu0 0.0
    %6557 = vmatmul.mubr.f32.gmra.mrb[0].mxu0 %v6485
    %v6558 = vpop.f32.mrb[0].mxu0
    %v6559 = vadd.f32 0.0, %v6558
    %v6560 = vpop.f32.mrb[0].mxu0
    %6561 = vdwg.mxu0
    %v6562 = vsub.f32 %v6554, %v180
    %v6563 = vsub.f32 %v6559, %v181
    %v6564 = vmul.f32 %v6562, %v183
    %v6565 = vmul.f32 %v6563, %v184
    %v6566 = vxor.u32 %v6564, 2147483648
    %v6567 = vxor.u32 %v6565, 2147483648
    %v6568 = vmul.f32 %v6566, 1.442695
    %v6569 = vpow.pop %v6568
    %v6570 = vmul.f32 %v6567, 1.442695
    %v6571 = vpow.pop %v6570
    %v6572 = vadd.f32 %v6569, 1.0
    %v6573 = vadd.f32 %v6571, 1.0
    %v6574 = vrcp.pop %v6572
    %v6575 = vmul.f32 1.0, %v6574
    %v6576 = vrcp.pop %v6573
    %v6577 = vmul.f32 1.0, %v6576
    %v6578 = vmul.f32 %v186, %v6575
    %v6579 = vmul.f32 %v187, %v6577
    %v6580 = vadd.f32 %v6578, %v6579
    %v6581 = vrot.slane %v6580, 4
    %v6582 = vadd.f32 %v6580, %v6581
    %v6583 = vrot.slane %v6582, 2
    %v6584 = vadd.f32 %v6582, %v6583
    %v6585 = vrot.slane %v6584, 1
    %v6586 = vadd.f32 %v6584, %v6585
    %v6587 = vmul.f32 %v188, %v6474
    %v6588 = vadd.f32 %v6587, %v852
    %v6589 = vadd.f32 %v6588, %v6586
    %v6590 = vadd.f32 %v852, %v6586
    %v6591 = vrcp.pop %v6590
    %v6592 = vmul.f32 %v6590, %v6591
    %v6593 = vsub.f32 2.0, %v6592
    %v6594 = vmul.f32 %v6591, %v6593
    %6596 = vrot.lane.b32.xlu0 %v6594, 64
    %v6597 = vpop.permute.xlu0 %6596
    %v6599 = vmul.f32 %v6589, %v6597
    %v6600 = vlaneseq
    %v6601 = vshrl.u32 %v6600, 7
    %v6602 = vsub.s32 0, %v6601
    %v6603 = vrot.slane %v6599, %v6602
    %v6604 = vmul.f32 %v6603, %v189
    %v6605 = vmul.f32 %v6603, %v190
    %v6607 = vsel %vm855, %v6604, 0
    %v6610 = vsel %vm855, %v6605, 0
    %6612 = vmatprep.subr.mxu0 0.0
    %6613 = vmatpush1.msra.mxu0 %v191
    %6614 = vmatprep.subr.mxu0 0.0
    %6615 = vmatpush1.msra.mxu0 %v192
    %6616 = vmatprep.subr.mxu0 0.0
    %6617 = vmatpush1.msra.mxu0 %v193
    %6618 = vmatprep.subr.mxu0 0.0
    %6619 = vmatpush1.msra.mxu0 %v194
    %6620 = vmatprep.subr.mxu0 0.0
    %6621 = vmatpush1.msra.mxu0 %v195
    %6622 = vmatprep.subr.mxu0 0.0
    %6623 = vmatpush1.msra.mxu0 %v196
    %6624 = vmatprep.subr.mxu0 0.0
    %6625 = vmatpush1.msra.mxu0 %v197
    %6626 = vmatprep.subr.mxu0 0.0
    %6627 = vmatpush1.msra.mxu0 %v198
    %6628 = vmatprep.subr.mxu0 0.0
    %6629 = vmatpush1.msra.mxu0 0.0
    %6630 = vmatprep.subr.mxu0 0.0
    %6631 = vmatpush1.msra.mxu0 0.0
    %6632 = vmatprep.subr.mxu0 0.0
    %6633 = vmatpush1.msra.mxu0 0.0
    %6634 = vmatprep.subr.mxu0 0.0
    %6635 = vmatpush1.msra.mxu0 0.0
    %6636 = vmatprep.subr.mxu0 0.0
    %6637 = vmatpush1.msra.mxu0 0.0
    %6638 = vmatprep.subr.mxu0 0.0
    %6639 = vmatpush1.msra.mxu0 0.0
    %6640 = vmatprep.subr.mxu0 0.0
    %6641 = vmatpush1.msra.mxu0 0.0
    %6642 = vmatprep.subr.mxu0 0.0
    %6643 = vmatpush1.msra.mxu0 0.0
    %6644 = vmatprep.subr.mxu0 0.0
    %6645 = vmatpush1.msra.mxu0 0.0
    %6646 = vmatprep.subr.mxu0 0.0
    %6647 = vmatpush1.msra.mxu0 0.0
    %6648 = vmatprep.subr.mxu0 0.0
    %6649 = vmatpush1.msra.mxu0 0.0
    %6650 = vmatprep.subr.mxu0 0.0
    %6651 = vmatpush1.msra.mxu0 0.0
    %6652 = vmatprep.subr.mxu0 0.0
    %6653 = vmatpush1.msra.mxu0 0.0
    %6654 = vmatprep.subr.mxu0 0.0
    %6655 = vmatpush1.msra.mxu0 0.0
    %6656 = vmatprep.subr.mxu0 0.0
    %6657 = vmatpush1.msra.mxu0 0.0
    %6658 = vmatprep.subr.mxu0 0.0
    %6659 = vmatpush1.msra.mxu0 0.0
    %6660 = vmatprep.subr.mxu0 0.0
    %6661 = vmatpush1.msra.mxu0 0.0
    %6662 = vmatprep.subr.mxu0 0.0
    %6663 = vmatpush1.msra.mxu0 0.0
    %6664 = vmatprep.subr.mxu0 0.0
    %6665 = vmatpush1.msra.mxu0 0.0
    %6666 = vmatprep.subr.mxu0 0.0
    %6667 = vmatpush1.msra.mxu0 0.0
    %6668 = vmatprep.subr.mxu0 0.0
    %6669 = vmatpush1.msra.mxu0 0.0
    %6670 = vmatprep.subr.mxu0 0.0
    %6671 = vmatpush1.msra.mxu0 0.0
    %6672 = vmatprep.subr.mxu0 0.0
    %6673 = vmatpush1.msra.mxu0 0.0
    %6674 = vmatprep.subr.mxu0 0.0
    %6675 = vmatpush1.msra.mxu0 0.0
    %6676 = vmatprep.mubr.f32.mxu0 0.0
    %6677 = vmatmul.mubr.f32.gmra.mrb[0].mxu0 %v6607
    %v6678 = vpop.f32.mrb[0].mxu0
    %v6679 = vadd.f32 0.0, %v6678
    %v6680 = vpop.f32.mrb[0].mxu0
    %6681 = vmatprep.mubr.f32.mxu0 0.0
    %6682 = vmatmul.mubr.f32.gmra.mrb[0].mxu0 %v6610
    %v6683 = vpop.f32.mrb[0].mxu0
    %v6684 = vadd.f32 0.0, %v6683
    %v6685 = vpop.f32.mrb[0].mxu0
    %6686 = vdwg.mxu0
    %v6687 = vsub.f32 %v6679, %v180
    %v6688 = vsub.f32 %v6684, %v181
    %v6689 = vmul.f32 %v6687, %v183
    %v6690 = vmul.f32 %v6688, %v184
    %v6691 = vxor.u32 %v6689, 2147483648
    %v6692 = vxor.u32 %v6690, 2147483648
    %v6693 = vmul.f32 %v6691, 1.442695
    %v6694 = vpow.pop %v6693
    %v6695 = vmul.f32 %v6692, 1.442695
    %v6696 = vpow.pop %v6695
    %v6697 = vadd.f32 %v6694, 1.0
    %v6698 = vadd.f32 %v6696, 1.0
    %v6699 = vrcp.pop %v6697
    %v6700 = vmul.f32 1.0, %v6699
    %v6701 = vrcp.pop %v6698
    %v6702 = vmul.f32 1.0, %v6701
    %v6703 = vmul.f32 %v186, %v6700
    %v6704 = vmul.f32 %v187, %v6702
    %v6705 = vadd.f32 %v6703, %v6704
    %v6706 = vrot.slane %v6705, 4
    %v6707 = vadd.f32 %v6705, %v6706
    %v6708 = vrot.slane %v6707, 2
    %v6709 = vadd.f32 %v6707, %v6708
    %v6710 = vrot.slane %v6709, 1
    %v6711 = vadd.f32 %v6709, %v6710
    %v6712 = vmul.f32 %v188, %v6599
    %v6713 = vadd.f32 %v6712, %v852
    %v6714 = vadd.f32 %v6713, %v6711
    %v6715 = vadd.f32 %v852, %v6711
    %v6716 = vrcp.pop %v6715
    %v6717 = vmul.f32 %v6715, %v6716
    %v6718 = vsub.f32 2.0, %v6717
    %v6719 = vmul.f32 %v6716, %v6718
    %6721 = vrot.lane.b32.xlu0 %v6719, 64
    %v6722 = vpop.permute.xlu0 %6721
    %v6724 = vmul.f32 %v6714, %v6722
    %v6725 = vlaneseq
    %v6726 = vshrl.u32 %v6725, 7
    %v6727 = vsub.s32 0, %v6726
    %v6728 = vrot.slane %v6724, %v6727
    %v6729 = vmul.f32 %v6728, %v189
    %v6730 = vmul.f32 %v6728, %v190
    %v6732 = vsel %vm855, %v6729, 0
    %v6735 = vsel %vm855, %v6730, 0
    %6737 = vmatprep.subr.mxu0 0.0
    %6738 = vmatpush1.msra.mxu0 %v191
    %6739 = vmatprep.subr.mxu0 0.0
    %6740 = vmatpush1.msra.mxu0 %v192
    %6741 = vmatprep.subr.mxu0 0.0
    %6742 = vmatpush1.msra.mxu0 %v193
    %6743 = vmatprep.subr.mxu0 0.0
    %6744 = vmatpush1.msra.mxu0 %v194
    %6745 = vmatprep.subr.mxu0 0.0
    %6746 = vmatpush1.msra.mxu0 %v195
    %6747 = vmatprep.subr.mxu0 0.0
    %6748 = vmatpush1.msra.mxu0 %v196
    %6749 = vmatprep.subr.mxu0 0.0
    %6750 = vmatpush1.msra.mxu0 %v197
    %6751 = vmatprep.subr.mxu0 0.0
    %6752 = vmatpush1.msra.mxu0 %v198
    %6753 = vmatprep.subr.mxu0 0.0
    %6754 = vmatpush1.msra.mxu0 0.0
    %6755 = vmatprep.subr.mxu0 0.0
    %6756 = vmatpush1.msra.mxu0 0.0
    %6757 = vmatprep.subr.mxu0 0.0
    %6758 = vmatpush1.msra.mxu0 0.0
    %6759 = vmatprep.subr.mxu0 0.0
    %6760 = vmatpush1.msra.mxu0 0.0
    %6761 = vmatprep.subr.mxu0 0.0
    %6762 = vmatpush1.msra.mxu0 0.0
    %6763 = vmatprep.subr.mxu0 0.0
    %6764 = vmatpush1.msra.mxu0 0.0
    %6765 = vmatprep.subr.mxu0 0.0
    %6766 = vmatpush1.msra.mxu0 0.0
    %6767 = vmatprep.subr.mxu0 0.0
    %6768 = vmatpush1.msra.mxu0 0.0
    %6769 = vmatprep.subr.mxu0 0.0
    %6770 = vmatpush1.msra.mxu0 0.0
    %6771 = vmatprep.subr.mxu0 0.0
    %6772 = vmatpush1.msra.mxu0 0.0
    %6773 = vmatprep.subr.mxu0 0.0
    %6774 = vmatpush1.msra.mxu0 0.0
    %6775 = vmatprep.subr.mxu0 0.0
    %6776 = vmatpush1.msra.mxu0 0.0
    %6777 = vmatprep.subr.mxu0 0.0
    %6778 = vmatpush1.msra.mxu0 0.0
    %6779 = vmatprep.subr.mxu0 0.0
    %6780 = vmatpush1.msra.mxu0 0.0
    %6781 = vmatprep.subr.mxu0 0.0
    %6782 = vmatpush1.msra.mxu0 0.0
    %6783 = vmatprep.subr.mxu0 0.0
    %6784 = vmatpush1.msra.mxu0 0.0
    %6785 = vmatprep.subr.mxu0 0.0
    %6786 = vmatpush1.msra.mxu0 0.0
    %6787 = vmatprep.subr.mxu0 0.0
    %6788 = vmatpush1.msra.mxu0 0.0
    %6789 = vmatprep.subr.mxu0 0.0
    %6790 = vmatpush1.msra.mxu0 0.0
    %6791 = vmatprep.subr.mxu0 0.0
    %6792 = vmatpush1.msra.mxu0 0.0
    %6793 = vmatprep.subr.mxu0 0.0
    %6794 = vmatpush1.msra.mxu0 0.0
    %6795 = vmatprep.subr.mxu0 0.0
    %6796 = vmatpush1.msra.mxu0 0.0
    %6797 = vmatprep.subr.mxu0 0.0
    %6798 = vmatpush1.msra.mxu0 0.0
    %6799 = vmatprep.subr.mxu0 0.0
    %6800 = vmatpush1.msra.mxu0 0.0
    %6801 = vmatprep.mubr.f32.mxu0 0.0
    %6802 = vmatmul.mubr.f32.gmra.mrb[0].mxu0 %v6732
    %v6803 = vpop.f32.mrb[0].mxu0
    %v6804 = vadd.f32 0.0, %v6803
    %v6805 = vpop.f32.mrb[0].mxu0
    %6806 = vmatprep.mubr.f32.mxu0 0.0
    %6807 = vmatmul.mubr.f32.gmra.mrb[0].mxu0 %v6735
    %v6808 = vpop.f32.mrb[0].mxu0
    %v6809 = vadd.f32 0.0, %v6808
    %v6810 = vpop.f32.mrb[0].mxu0
    %6811 = vdwg.mxu0
    %v6812 = vsub.f32 %v6804, %v180
    %v6813 = vsub.f32 %v6809, %v181
    %v6814 = vmul.f32 %v6812, %v183
    %v6815 = vmul.f32 %v6813, %v184
    %v6816 = vxor.u32 %v6814, 2147483648
    %v6817 = vxor.u32 %v6815, 2147483648
    %v6818 = vmul.f32 %v6816, 1.442695
    %v6819 = vpow.pop %v6818
    %v6820 = vmul.f32 %v6817, 1.442695
    %v6821 = vpow.pop %v6820
    %v6822 = vadd.f32 %v6819, 1.0
    %v6823 = vadd.f32 %v6821, 1.0
    %v6824 = vrcp.pop %v6822
    %v6825 = vmul.f32 1.0, %v6824
    %v6826 = vrcp.pop %v6823
    %v6827 = vmul.f32 1.0, %v6826
    %v6828 = vmul.f32 %v186, %v6825
    %v6829 = vmul.f32 %v187, %v6827
    %v6830 = vadd.f32 %v6828, %v6829
    %v6831 = vrot.slane %v6830, 4
    %v6832 = vadd.f32 %v6830, %v6831
    %v6833 = vrot.slane %v6832, 2
    %v6834 = vadd.f32 %v6832, %v6833
    %v6835 = vrot.slane %v6834, 1
    %v6836 = vadd.f32 %v6834, %v6835
    %v6837 = vmul.f32 %v188, %v6724
    %v6838 = vadd.f32 %v6837, %v852
    %v6839 = vadd.f32 %v6838, %v6836
    %v6840 = vadd.f32 %v852, %v6836
    %v6841 = vrcp.pop %v6840
    %v6842 = vmul.f32 %v6840, %v6841
    %v6843 = vsub.f32 2.0, %v6842
    %v6844 = vmul.f32 %v6841, %v6843
    %6846 = vrot.lane.b32.xlu0 %v6844, 64
    %v6847 = vpop.permute.xlu0 %6846
    %v6849 = vmul.f32 %v6839, %v6847
    %v6851 = vrot.slane %v2349, 7
    %v6854 = vrot.slane %v3099, 6
    %v6857 = vrot.slane %v3849, 5
    %v6860 = vrot.slane %v4599, 4
    %v6863 = vrot.slane %v5349, 3
    %v6866 = vrot.slane %v6099, 2
    %v6869 = vrot.slane %v6849, 1
    %vm6871 = vcmask 1040384
    %v6872 = vsel %vm6871, %v1599, %v6851
    %vm6873 = vcmask 1041408
    %v6874 = vsel %vm6873, %v6872, %v6854
    %vm6875 = vcmask 1042432
    %v6876 = vsel %vm6875, %v6874, %v6857
    %vm6877 = vcmask 1043456
    %v6878 = vsel %vm6877, %v6876, %v6860
    %vm6879 = vcmask 1044480
    %v6880 = vsel %vm6879, %v6878, %v6863
    %v6881 = vsel %vm226, %v6880, %v6866
    %vm6882 = vcmask 1046528
    %v6883 = vsel %vm6882, %v6881, %v6869
    %v6884 = vlaneseq
    %v6885 = vshrl.u32 %v6884, 7
    %v6886 = vsub.s32 1, %v6885
    %v6887 = vrot.slane %v188, %v6886
    %v6888 = vmul.f32 %v6883, %v6887
    %6890 = vrot.lane.b32.xlu0 %v6887, 64
    %v6891 = vpop.permute.xlu0 %6890
    %v6893 = vadd.f32 %v6888, %v6891
    %6894 = vst.msk [vmem:[#allocation13] sm:$0xff] %vm855, %v6893
    // Predicated region
    $region70: #{tpu_custom_call.1} parent=1 // pred_check
      _
    $region71: #{tpu_custom_call.1} parent=1 // pred_check_branch
      %6896 = sbr.rel (0) target = $region73
    $region72: #{tpu_custom_call.1} parent=1 // pred_region
      %s6898 = ssub.s32 128, 128
      %6899 = vsyncadd [#allocation4], %s6898
      %s6901 = sshll.u32 [#allocation13], 4
      %s6902 = int_to_ptr.vmem [resolvable:$true] %s6901
      %6904 = dma.vmem_to_hbm [thread:$0]  %s6902, 128, %s11, [#allocation4]
    $region73: #{tpu_custom_call.1} parent=1 // pred_fallthru
      _
    // Predicated region
    $region74: #{tpu_custom_call.1} parent=1 // pred_check
      _
    $region75: #{tpu_custom_call.1} parent=1 // pred_check_branch
      %6906 = sbr.rel (0) target = $region77
    $region76: #{tpu_custom_call.1} parent=1 // pred_region
      %6907 = dma.done [#allocation4], 128
    $region77: #{tpu_custom_call.1} parent=1 // pred_fallthru
      _
    %6908 = vsyncpa [#allocation3], 1
    %6909 = vsyncpa [#allocation6], 1
    %6910 = vsyncpa [#allocation9], 1
    %6911 = vsyncpa [#allocation12], 1
    %6912 = vsyncpa [#allocation4], 1

</llo_original>
